<compile_context>
chip_gen: v7x
topology: tpu7x:2x2x1
jax: 0.10.0
libtpu: 0.0.40
codegen_flags: <defaults>
</compile_context>

<pallas_src>
import math
import numpy as np
import jax
import jax.numpy as jnp
from jax.experimental import pallas as pl
from jax.experimental.pallas import tpu as pltpu

# ----------------------------------------------------------------------------------
# configuration (small shapes consistent with the module)
# ----------------------------------------------------------------------------------
ENC_CFG = dict(feature_num=4, hidden=32, hidden_ff=64, seq_len=8,
               n_heads=4, n_layers=2, emb_norm=True)
CLS_CFG = dict(
    num_cnn=2, conv_io=[(1, 4, 3, 1), (4, 8, 3, 1)],   # (cin, cout, kernel, pad)
    pool=(2, 2, 0),
    num_linear=2, linear_io=[(8 * 2 * 8, 32), (32, 10)],
    activ=True, dropout=True,
    # ReLU after the hidden linear only; logits are NOT activated (conventional head).
    activ_last=False,
)
LN_EPS = 1e-12          # TF-style LayerNorm epsilon from the PyTorch module
BN_EPS = 1e-5           # nn.BatchNorm2d default
OUT_PAD_ROWS = 8        # logits emitted as a dense (8, 128) tile, sliced in wrapper
OUT_PAD_COLS = 128
F_PAD = 8               # input features zero-padded to 8 lanes (exact: zero contraction)


# ----------------------------------------------------------------------------------
# value-level helpers used inside the kernel (Mosaic-safe ops only)
# ----------------------------------------------------------------------------------
def _erf(z):
    # Abramowitz & Stegun 7.1.26 rational approximation (|err| ~ 1e-7 before the
    # approximate reciprocal); uses only mul/add/recip/exp/abs/where.
    a1, a2, a3, a4, a5 = (0.254829592, -0.284496736, 1.421413741,
                          -1.453152027, 1.061405429)
    p = 0.3275911
    az = jnp.abs(z)
    t = pl.reciprocal(1.0 + p * az, approx=True)          # EUP slot
    poly = ((((a5 * t + a4) * t + a3) * t + a2) * t + a1) * t
    y = 1.0 - poly * jnp.exp(-az * az)
    return jnp.where(z >= 0.0, y, -y)


def _gelu(x):
    return x * 0.5 * (1.0 + _erf(x * (1.0 / math.sqrt(2.0))))


# ----------------------------------------------------------------------------------
# wrapper-side constant-matrix builders (pure parameter / index prepacking)
# ----------------------------------------------------------------------------------
def _vshift_mats(B, H):
    # (SH[dy] @ X)[b*H+y, :] = X[b*H + y+dy-1, :] (zero outside) -> vertical taps + padding.
    sh = np.zeros((3, B * H, B * H), np.float32)
    for dy in range(3):
        for b in range(B):
            for y in range(H):
                yi = y + dy - 1
                if 0 <= yi < H:
                    sh[dy, b * H + y, b * H + yi] = 1.0
    return sh


def _hmix_mats(weight, W):
    # For vertical tap dy, G[dy] applies the horizontal taps + channel mixing on a
    # (rows, W*Cin) slab -> (rows, W*Cout); horizontal zero padding is built in.
    cout, cin, _, _ = weight.shape
    g = np.zeros((3, W * cin, W * cout), np.float32)
    for dy in range(3):
        for xo in range(W):
            for dx in range(3):
                xi = xo + dx - 1
                if 0 <= xi < W:
                    g[dy, xi * cin:(xi + 1) * cin, xo * cout:(xo + 1) * cout] = \
                        weight[:, :, dy, dx].T
    return g


def _pool_row_mats(B, H):
    h2 = H // 2
    p = np.zeros((2, B * h2, B * H), np.float32)
    for b in range(B):
        for i in range(h2):
            p[0, b * h2 + i, b * H + 2 * i] = 1.0
            p[1, b * h2 + i, b * H + 2 * i + 1] = 1.0
    return p


def _pool_col_mats(W, C):
    w2 = W // 2
    e = np.zeros((2, W * C, w2 * C), np.float32)
    for j in range(w2):
        for c in range(C):
            e[0, (2 * j) * C + c, j * C + c] = 1.0
            e[1, (2 * j + 1) * C + c, j * C + c] = 1.0
    return e


def _bn_rows(bn, W, C):
    # inference BatchNorm folded to per-lane scale/shift rows for a (rows, W*C) slab.
    gamma = np.asarray(bn["gamma"], np.float32)
    beta = np.asarray(bn["beta"], np.float32)
    mean = np.asarray(bn["mean"], np.float32)
    var = np.asarray(bn["var"], np.float32)
    scale = gamma / np.sqrt(var + BN_EPS)
    shift = beta - mean * scale
    return np.tile(scale, W), np.tile(shift, W)


class _SlabPacker:
    """Packs many small 2-D f32 constants into ONE lane-dense (rows, 128) slab.

    Every piece starts at an 8-aligned row offset and at lane 0, so the in-kernel
    carve is a static `slab_ref[r0:r0+nr, 0:nc]` slice (zero-cost Ref view + cheap
    masked load).  One operand => one DMA descriptor for all parameters.
    """
    WIDTH = 128

    def __init__(self):
        self._chunks, self._offsets, self._rows = [], {}, 0

    def add(self, name, arr):
        a = np.asarray(arr, np.float32)
        if a.ndim == 1:
            a = a.reshape(1, -1)
        assert a.ndim == 2 and a.shape[1] <= self.WIDTH and name not in self._offsets
        rpad = ((a.shape[0] + 7) // 8) * 8
        buf = np.zeros((rpad, self.WIDTH), np.float32)
        buf[:a.shape[0], :a.shape[1]] = a
        self._offsets[name] = (self._rows, a.shape[0], a.shape[1])
        self._chunks.append(buf)
        self._rows += rpad

    def finalize(self):
        return np.concatenate(self._chunks, axis=0), dict(self._offsets)


# ----------------------------------------------------------------------------------
# forward pass: one fused Pallas kernel, 2 operands (input slab + parameter slab)
# ----------------------------------------------------------------------------------
def composite_classifier_forward(params, x, enc_cfg=ENC_CFG, cls_cfg=CLS_CFG, training=False):
    """x: (B, seq_len, feature_num) == PyTorch input_seqs.  Inference forward."""
    B, S, F = x.shape
    D, Dff = enc_cfg["hidden"], enc_cfg["hidden_ff"]
    nH, n_layers = enc_cfg["n_heads"], enc_cfg["n_layers"]
    emb_norm = enc_cfg["emb_norm"]
    Wd = D // nH
    assert D % nH == 0 and S <= enc_cfg["seq_len"] and F <= F_PAD

    enc, cls = params["enc"], params["cls"]

    # classifier geometry: encoder output (B, S, D) viewed as a 1-channel (S x D) image
    H1, W1 = S, D
    (ci1, C1, k1, pd1) = cls_cfg["conv_io"][0]
    (ci2, C2, k2, pd2) = cls_cfg["conv_io"][1]
    assert (ci1, k1, pd1) == (1, 3, 1) and (ci2, k2, pd2) == (C1, 3, 1)
    H2, W2 = H1 // 2, W1 // 2
    H3, W3 = H2 // 2, W2 // 2
    (fin1, N1), (fin2, NCLS) = cls_cfg["linear_io"]
    assert fin1 == C2 * H3 * W3 and fin2 == N1
    assert NCLS <= OUT_PAD_COLS and B <= OUT_PAD_ROWS and B * H3 <= OUT_PAD_ROWS
    assert B * H2 <= OUT_PAD_ROWS
    activ = cls_cfg["activ"]
    activ_last = cls_cfg.get("activ_last", False)

    npf = lambda a: np.asarray(a, np.float32)
    pk = _SlabPacker()

    # ------------------------------ encoder params ---------------------------------
    w_emb = np.zeros((F_PAD, D), np.float32)
    w_emb[:F] = npf(enc["emb_lin"]["w"]).T
    pk.add("w_emb", w_emb)
    pk.add("b_emb", npf(enc["emb_lin"]["b"]))
    pk.add("lne_g", npf(enc["norm_emb"]["gamma"]))
    pk.add("lne_b", npf(enc["norm_emb"]["beta"]))
    pk.add("pos", np.tile(npf(enc["pos_embed"])[:S], (B, 1)))            # (B*S, D)

    wq_f, bq_f = npf(enc["proj_q"]["w"]).T, npf(enc["proj_q"]["b"])
    wk_f, bk_f = npf(enc["proj_k"]["w"]).T, npf(enc["proj_k"]["b"])
    wv_f, bv_f = npf(enc["proj_v"]["w"]).T, npf(enc["proj_v"]["b"])
    inv_sqrt_wd = 1.0 / math.sqrt(Wd)
    for hd in range(nH):
        sl = slice(hd * Wd, (hd + 1) * Wd)
        pk.add(f"wq{hd}", wq_f[:, sl] * inv_sqrt_wd)        # softmax scale folded in
        pk.add(f"bq{hd}", bq_f[sl] * inv_sqrt_wd)
        pk.add(f"wk{hd}", wk_f[:, sl])
        pk.add(f"bk{hd}", bk_f[sl])
        wv_placed = np.zeros((D, D), np.float32)            # merge_last folded in
        wv_placed[:, sl] = wv_f[:, sl]
        pk.add(f"wv{hd}", wv_placed)
    pk.add("bv", bv_f)                                       # added once after head sum

    pk.add("w_proj", np.eye(D, dtype=np.float32) + npf(enc["proj"]["w"]).T)  # h+proj(h)
    pk.add("b_proj", npf(enc["proj"]["b"]))
    pk.add("ln1_g", npf(enc["norm1"]["gamma"]))
    pk.add("ln1_b", npf(enc["norm1"]["beta"]))
    pk.add("w_ff1", npf(enc["fc1"]["w"]).T)
    pk.add("b_ff1", npf(enc["fc1"]["b"]))
    pk.add("w_ff2", npf(enc["fc2"]["w"]).T)
    pk.add("b_ff2", npf(enc["fc2"]["b"]))
    pk.add("ln2_g", npf(enc["norm2"]["gamma"]))
    pk.add("ln2_b", npf(enc["norm2"]["beta"]))

    amask = np.full((B * S, B * S), -1e30, np.float32)       # block-diag batch mask
    for b in range(B):
        amask[b * S:(b + 1) * S, b * S:(b + 1) * S] = 0.0
    pk.add("amask", amask)

    # ---------------------------- classifier params ---------------------------------
    sh1 = _vshift_mats(B, H1)
    g1 = _hmix_mats(npf(cls["cnn"][0]["w"]), W1)
    for dy in range(3):
        pk.add(f"sh1_{dy}", sh1[dy])
        pk.add(f"g1_{dy}", g1[dy])
    pk.add("b1row", np.tile(npf(cls["cnn"][0]["b"]), W1))
    p1 = _pool_row_mats(B, H1)
    e1 = _pool_col_mats(W1, C1)
    for ph in range(2):
        pk.add(f"p1_{ph}", p1[ph])
        pk.add(f"e1_{ph}", e1[ph])
    bn1_s, bn1_b = _bn_rows(cls["bn"][0], W2, C1)
    pk.add("bn1_s", bn1_s)
    pk.add("bn1_b", bn1_b)

    sh2 = _vshift_mats(B, H2)
    g2 = _hmix_mats(npf(cls["cnn"][1]["w"]), W2)
    for dy in range(3):
        pk.add(f"sh2_{dy}", sh2[dy])
        pk.add(f"g2_{dy}", g2[dy])
    pk.add("b2row", np.tile(npf(cls["cnn"][1]["b"]), W2))
    p2 = _pool_row_mats(B, H2)
    e2 = _pool_col_mats(W2, C2)
    for ph in range(2):
        p2pad = np.zeros((OUT_PAD_ROWS, B * H2), np.float32)   # z2 row-padded to 8
        p2pad[:B * H3] = p2[ph]
        pk.add(f"p2_{ph}", p2pad)
        pk.add(f"e2_{ph}", e2[ph])
    bn2_s, bn2_b = _bn_rows(cls["bn"][1], W3, C2)
    pk.add("bn2_s", bn2_s)
    pk.add("bn2_b", bn2_b)

    # NCHW flatten order folded into Linear-0 weight blocks (no in-kernel flatten).
    wl1 = npf(cls["lin"][0]["w"])                             # (N1, C2*H3*W3)
    for hh in range(H3):
        sel = np.zeros((OUT_PAD_ROWS, OUT_PAD_ROWS), np.float32)
        for b in range(B):
            sel[b, b * H3 + hh] = 1.0
        pk.add(f"sel{hh}", sel)
        wblk = np.zeros((W3 * C2, N1), np.float32)
        for xx in range(W3):
            for cc in range(C2):
                wblk[xx * C2 + cc, :] = wl1[:, cc * (H3 * W3) + hh * W3 + xx]
        pk.add(f"wl1_{hh}", wblk)
    pk.add("bl1", npf(cls["lin"][0]["b"]))
    wlast = np.zeros((N1, OUT_PAD_COLS), np.float32)
    wlast[:, :NCLS] = npf(cls["lin"][1]["w"]).T
    pk.add("wlast", wlast)
    blast = np.zeros((OUT_PAD_COLS,), np.float32)
    blast[:NCLS] = npf(cls["lin"][1]["b"])
    pk.add("blast", blast)

    slab_np, offs = pk.finalize()
    slab = jnp.asarray(slab_np)                               # single (rows, 128) operand

    # input reshape/pad done wrapper-side (free layout plumbing, no in-kernel relayout)
    xp = jnp.pad(jnp.asarray(x, jnp.float32).reshape(B * S, F),
                 ((0, 0), (0, F_PAD - F)))

    nbytes = int(slab_np.nbytes) + int(B * S * F_PAD * 4) + OUT_PAD_ROWS * OUT_PAD_COLS * 4
    cost = pl.CostEstimate(flops=2_500_000, transcendentals=8_192, bytes_accessed=nbytes)

    # ------------------------------- fused kernel ----------------------------------
    def kernel(x_ref, p_ref, out_ref):
        def P(name):                                   # static carve from the slab
            r0, nr, nc = offs[name]
            return p_ref[r0:r0 + nr, 0:nc]

        def mm(a, b):
            return jnp.dot(a, b, preferred_element_type=jnp.float32)

        def ln(v, g, b):
            u = jnp.mean(v, axis=-1, keepdims=True)
            d = v - u
            var = jnp.mean(d * d, axis=-1, keepdims=True)
            return g * (d * jax.lax.rsqrt(var + LN_EPS)) + b

        # ---------------- Transformer encoder (weights shared across layers) -------
        pos = P("pos")
        lne_g, lne_b = P("lne_g"), P("lne_b")
        wq = [P(f"wq{hd}") for hd in range(nH)]
        bq = [P(f"bq{hd}") for hd in range(nH)]
        wk = [P(f"wk{hd}") for hd in range(nH)]
        bk = [P(f"bk{hd}") for hd in range(nH)]
        wv = [P(f"wv{hd}") for hd in range(nH)]
        bv = P("bv")
        w_proj, b_proj = P("w_proj"), P("b_proj")
        ln1_g, ln1_b = P("ln1_g"), P("ln1_b")
        w_ff1, b_ff1 = P("w_ff1"), P("b_ff1")
        w_ff2, b_ff2 = P("w_ff2"), P("b_ff2")
        ln2_g, ln2_b = P("ln2_g"), P("ln2_b")
        amask = P("amask")

        e = mm(x_ref[...], P("w_emb")) + P("b_emb")            # (B*S, D)
        if emb_norm:
            e = ln(e, lne_g, lne_b)
        h = ln(e + pos, lne_g, lne_b)

        for _ in range(n_layers):
            attn = None
            for hd in range(nH):                               # all 2-D, no reshapes
                q = mm(h, wq[hd]) + bq[hd]                     # (B*S, Wd), scale folded
                k = mm(h, wk[hd]) + bk[hd]
                s = jax.lax.dot_general(q, k, (((1,), (1,)), ((), ())),
                                        preferred_element_type=jnp.float32) + amask
                s = s - jnp.max(s, axis=-1, keepdims=True)
                pexp = jnp.exp(s)
                pr = pexp * pl.reciprocal(jnp.sum(pexp, axis=-1, keepdims=True),
                                          approx=True)
                ctx = mm(pr, mm(h, wv[hd]))                    # head-placed (B*S, D)
                attn = ctx if attn is None else attn + ctx
            attn = attn + bv                                   # v bias, once
            h = ln(mm(attn, w_proj) + b_proj, ln1_g, ln1_b)    # attn + proj(attn)
            ffo = mm(_gelu(mm(h, w_ff1) + b_ff1), w_ff2) + b_ff2
            h = ln(h + ffo, ln2_g, ln2_b)

        # ---------------- CNN-2D classifier head -----------------------------------
        # Feature maps are lane-dense 2-D slabs (rows, W*C); conv taps / pooling /
        # flatten index work is baked into the precomputed slab matrices.
        def conv_relu(xin, sh, g, brow):
            acc = P(brow)                                      # bias row broadcast
            for dy in range(3):
                acc = acc + mm(mm(P(f"{sh}{dy}"), xin), P(f"{g}{dy}"))
            return jnp.maximum(acc, 0.0) if activ else acc

        def pool_bn(y, p, ee, s_name, b_name):
            m = jnp.maximum(mm(P(f"{p}0"), y), mm(P(f"{p}1"), y))      # pool rows (H)
            m = jnp.maximum(mm(m, P(f"{ee}0")), mm(m, P(f"{ee}1")))    # pool cols (W)
            return m * P(s_name) + P(b_name)                           # folded BatchNorm

        y1 = conv_relu(h, "sh1_", "g1_", "b1row")              # (B*H1, W1*C1)
        z1 = pool_bn(y1, "p1_", "e1_", "bn1_s", "bn1_b")       # (B*H2, W2*C1)
        y2 = conv_relu(z1, "sh2_", "g2_", "b2row")             # (B*H2, W2*C2)
        z2 = pool_bn(y2, "p2_", "e2_", "bn2_s", "bn2_b")       # (8, W3*C2), rows>=B*H3 pad

        # TODO(synk): dropout / BatchNorm batch-stats for training=True not implemented.
        o1 = P("bl1")                                          # start from bias broadcast
        for hh in range(H3):
            o1 = o1 + mm(mm(P(f"sel{hh}"), z2), P(f"wl1_{hh}"))
        if activ:
            o1 = jnp.maximum(o1, 0.0)
        o2 = mm(o1, P("wlast")) + P("blast")
        if activ and activ_last:
            o2 = jnp.maximum(o2, 0.0)
        out_ref[...] = o2                                      # dense (8, 128) store

    vmem = pl.BlockSpec(memory_space=pltpu.MemorySpace.VMEM)
    out = pl.pallas_call(
        kernel,
        out_shape=jax.ShapeDtypeStruct((OUT_PAD_ROWS, OUT_PAD_COLS), jnp.float32),
        in_specs=[vmem, vmem],
        out_specs=vmem,
        cost_estimate=cost,
        # NOTE(v7x): for batch >= ~16 rows/core, add a leading "parallel" grid axis over
        # batch rows (parameter slab un-blocked via an index_map returning block 0) so
        # both TensorCores are used; at B=2 a single invocation is latency-optimal.
    )(xp, slab)
    return out[:B, :NCLS]


# ----------------------------------------------------------------------------------
# deterministic synthetic parameters (no checkpoint load)
# ----------------------------------------------------------------------------------
def init_params(key, enc_cfg, cls_cfg):
    D, F, Dff, S = enc_cfg["hidden"], enc_cfg["feature_num"], enc_cfg["hidden_ff"], enc_cfg["seq_len"]

    def linear(k, fan_out, fan_in):
        k1, k2 = jax.random.split(k)
        bound = 1.0 / math.sqrt(fan_in)
        return {"w": jax.random.uniform(k1, (fan_out, fan_in), jnp.float32, -bound, bound),
                "b": jax.random.uniform(k2, (fan_out,), jnp.float32, -bound, bound)}

    keys = jax.random.split(key, 16)
    ln_init = lambda: {"gamma": jnp.ones((D,), jnp.float32), "beta": jnp.zeros((D,), jnp.float32)}
    enc = {
        "emb_lin": linear(keys[0], D, F),
        "pos_embed": jax.random.normal(keys[1], (S, D), jnp.float32),
        "norm_emb": ln_init(),
        "proj_q": linear(keys[2], D, D),
        "proj_k": linear(keys[3], D, D),
        "proj_v": linear(keys[4], D, D),
        "proj": linear(keys[5], D, D),
        "norm1": ln_init(),
        "fc1": linear(keys[6], Dff, D),
        "fc2": linear(keys[7], D, Dff),
        "norm2": ln_init(),
    }
    cnn, bn, lin = [], [], []
    kidx = 8
    for (cin, cout, k, _pad) in cls_cfg["conv_io"]:
        kw, kb, kg, kbe, km, kv = jax.random.split(keys[kidx], 6); kidx += 1
        bound = 1.0 / math.sqrt(cin * k * k)
        cnn.append({"w": jax.random.uniform(kw, (cout, cin, k, k), jnp.float32, -bound, bound),
                    "b": jax.random.uniform(kb, (cout,), jnp.float32, -bound, bound)})
        bn.append({"gamma": jax.random.uniform(kg, (cout,), jnp.float32, 0.5, 1.5),
                   "beta": jax.random.uniform(kbe, (cout,), jnp.float32, -0.1, 0.1),
                   "mean": jax.random.uniform(km, (cout,), jnp.float32, -0.1, 0.1),
                   "var": jax.random.uniform(kv, (cout,), jnp.float32, 0.5, 1.5)})
    for (fin, fout) in cls_cfg["linear_io"]:
        kw, kb = jax.random.split(keys[kidx], 2); kidx += 1
        bound = 1.0 / math.sqrt(fin)
        lin.append({"w": jax.random.uniform(kw, (fout, fin), jnp.float32, -bound, bound),
                    "b": jax.random.uniform(kb, (fout,), jnp.float32, -bound, bound)})
    return {"enc": enc, "cls": {"cnn": cnn, "bn": bn, "lin": lin}}


if __name__ == "__main__":
    key = jax.random.PRNGKey(0)
    kp, kx = jax.random.split(key)
    params = init_params(kp, ENC_CFG, CLS_CFG)
    x = jax.random.normal(kx, (2, ENC_CFG["seq_len"], ENC_CFG["feature_num"]), jnp.float32)

    out = composite_classifier_forward(params, x, training=False)
    out = jax.block_until_ready(out)
    assert out.shape == (2, CLS_CFG["linear_io"][-1][1]) and out.dtype == jnp.float32
    assert bool(jnp.all(jnp.isfinite(out)))
    print("KERNEL_OK")
</pallas_src>

<mosaic_0001>
module attributes {stable_mosaic.version = 11 : i64} {
  func.func @kernel(%arg0: memref<16x8xf32, #tpu.memory_space<vmem>>, %arg1: memref<1848x128xf32, #tpu.memory_space<vmem>>, %arg2: memref<8x128xf32, #tpu.memory_space<vmem>>) attributes {dimension_semantics = [], scalar_prefetch = 0 : i64, scratch_operands = 0 : i64, tpu.core_type = #tpu.core_type<tc>} {
    %c32 = arith.constant 32 : index
    %c0 = arith.constant 0 : index
    %0 = vector.load %arg1[%c32, %c0] : memref<1848x128xf32, #tpu.memory_space<vmem>>, vector<16x32xf32>
    %c16 = arith.constant 16 : index
    %c0_0 = arith.constant 0 : index
    %1 = vector.load %arg1[%c16, %c0_0] : memref<1848x128xf32, #tpu.memory_space<vmem>>, vector<1x32xf32>
    %c24 = arith.constant 24 : index
    %c0_1 = arith.constant 0 : index
    %2 = vector.load %arg1[%c24, %c0_1] : memref<1848x128xf32, #tpu.memory_space<vmem>>, vector<1x32xf32>
    %c48 = arith.constant 48 : index
    %c0_2 = arith.constant 0 : index
    %3 = vector.load %arg1[%c48, %c0_2] : memref<1848x128xf32, #tpu.memory_space<vmem>>, vector<32x8xf32>
    %c160 = arith.constant 160 : index
    %c0_3 = arith.constant 0 : index
    %4 = vector.load %arg1[%c160, %c0_3] : memref<1848x128xf32, #tpu.memory_space<vmem>>, vector<32x8xf32>
    %c272 = arith.constant 272 : index
    %c0_4 = arith.constant 0 : index
    %5 = vector.load %arg1[%c272, %c0_4] : memref<1848x128xf32, #tpu.memory_space<vmem>>, vector<32x8xf32>
    %c384 = arith.constant 384 : index
    %c0_5 = arith.constant 0 : index
    %6 = vector.load %arg1[%c384, %c0_5] : memref<1848x128xf32, #tpu.memory_space<vmem>>, vector<32x8xf32>
    %c80 = arith.constant 80 : index
    %c0_6 = arith.constant 0 : index
    %7 = vector.load %arg1[%c80, %c0_6] : memref<1848x128xf32, #tpu.memory_space<vmem>>, vector<1x8xf32>
    %c192 = arith.constant 192 : index
    %c0_7 = arith.constant 0 : index
    %8 = vector.load %arg1[%c192, %c0_7] : memref<1848x128xf32, #tpu.memory_space<vmem>>, vector<1x8xf32>
    %c304 = arith.constant 304 : index
    %c0_8 = arith.constant 0 : index
    %9 = vector.load %arg1[%c304, %c0_8] : memref<1848x128xf32, #tpu.memory_space<vmem>>, vector<1x8xf32>
    %c416 = arith.constant 416 : index
    %c0_9 = arith.constant 0 : index
    %10 = vector.load %arg1[%c416, %c0_9] : memref<1848x128xf32, #tpu.memory_space<vmem>>, vector<1x8xf32>
    %c88 = arith.constant 88 : index
    %c0_10 = arith.constant 0 : index
    %11 = vector.load %arg1[%c88, %c0_10] : memref<1848x128xf32, #tpu.memory_space<vmem>>, vector<32x8xf32>
    %c200 = arith.constant 200 : index
    %c0_11 = arith.constant 0 : index
    %12 = vector.load %arg1[%c200, %c0_11] : memref<1848x128xf32, #tpu.memory_space<vmem>>, vector<32x8xf32>
    %c312 = arith.constant 312 : index
    %c0_12 = arith.constant 0 : index
    %13 = vector.load %arg1[%c312, %c0_12] : memref<1848x128xf32, #tpu.memory_space<vmem>>, vector<32x8xf32>
    %c424 = arith.constant 424 : index
    %c0_13 = arith.constant 0 : index
    %14 = vector.load %arg1[%c424, %c0_13] : memref<1848x128xf32, #tpu.memory_space<vmem>>, vector<32x8xf32>
    %c120 = arith.constant 120 : index
    %c0_14 = arith.constant 0 : index
    %15 = vector.load %arg1[%c120, %c0_14] : memref<1848x128xf32, #tpu.memory_space<vmem>>, vector<1x8xf32>
    %c232 = arith.constant 232 : index
    %c0_15 = arith.constant 0 : index
    %16 = vector.load %arg1[%c232, %c0_15] : memref<1848x128xf32, #tpu.memory_space<vmem>>, vector<1x8xf32>
    %c344 = arith.constant 344 : index
    %c0_16 = arith.constant 0 : index
    %17 = vector.load %arg1[%c344, %c0_16] : memref<1848x128xf32, #tpu.memory_space<vmem>>, vector<1x8xf32>
    %c456 = arith.constant 456 : index
    %c0_17 = arith.constant 0 : index
    %18 = vector.load %arg1[%c456, %c0_17] : memref<1848x128xf32, #tpu.memory_space<vmem>>, vector<1x8xf32>
    %c128 = arith.constant 128 : index
    %c0_18 = arith.constant 0 : index
    %19 = vector.load %arg1[%c128, %c0_18] : memref<1848x128xf32, #tpu.memory_space<vmem>>, vector<32x32xf32>
    %c240 = arith.constant 240 : index
    %c0_19 = arith.constant 0 : index
    %20 = vector.load %arg1[%c240, %c0_19] : memref<1848x128xf32, #tpu.memory_space<vmem>>, vector<32x32xf32>
    %c352 = arith.constant 352 : index
    %c0_20 = arith.constant 0 : index
    %21 = vector.load %arg1[%c352, %c0_20] : memref<1848x128xf32, #tpu.memory_space<vmem>>, vector<32x32xf32>
    %c464 = arith.constant 464 : index
    %c0_21 = arith.constant 0 : index
    %22 = vector.load %arg1[%c464, %c0_21] : memref<1848x128xf32, #tpu.memory_space<vmem>>, vector<32x32xf32>
    %c496 = arith.constant 496 : index
    %c0_22 = arith.constant 0 : index
    %23 = vector.load %arg1[%c496, %c0_22] : memref<1848x128xf32, #tpu.memory_space<vmem>>, vector<1x32xf32>
    %c504 = arith.constant 504 : index
    %c0_23 = arith.constant 0 : index
    %24 = vector.load %arg1[%c504, %c0_23] : memref<1848x128xf32, #tpu.memory_space<vmem>>, vector<32x32xf32>
    %c536 = arith.constant 536 : index
    %c0_24 = arith.constant 0 : index
    %25 = vector.load %arg1[%c536, %c0_24] : memref<1848x128xf32, #tpu.memory_space<vmem>>, vector<1x32xf32>
    %c544 = arith.constant 544 : index
    %c0_25 = arith.constant 0 : index
    %26 = vector.load %arg1[%c544, %c0_25] : memref<1848x128xf32, #tpu.memory_space<vmem>>, vector<1x32xf32>
    %c552 = arith.constant 552 : index
    %c0_26 = arith.constant 0 : index
    %27 = vector.load %arg1[%c552, %c0_26] : memref<1848x128xf32, #tpu.memory_space<vmem>>, vector<1x32xf32>
    %c560 = arith.constant 560 : index
    %c0_27 = arith.constant 0 : index
    %28 = vector.load %arg1[%c560, %c0_27] : memref<1848x128xf32, #tpu.memory_space<vmem>>, vector<32x64xf32>
    %c592 = arith.constant 592 : index
    %c0_28 = arith.constant 0 : index
    %29 = vector.load %arg1[%c592, %c0_28] : memref<1848x128xf32, #tpu.memory_space<vmem>>, vector<1x64xf32>
    %c600 = arith.constant 600 : index
    %c0_29 = arith.constant 0 : index
    %30 = vector.load %arg1[%c600, %c0_29] : memref<1848x128xf32, #tpu.memory_space<vmem>>, vector<64x32xf32>
    %c664 = arith.constant 664 : index
    %c0_30 = arith.constant 0 : index
    %31 = vector.load %arg1[%c664, %c0_30] : memref<1848x128xf32, #tpu.memory_space<vmem>>, vector<1x32xf32>
    %c672 = arith.constant 672 : index
    %c0_31 = arith.constant 0 : index
    %32 = vector.load %arg1[%c672, %c0_31] : memref<1848x128xf32, #tpu.memory_space<vmem>>, vector<1x32xf32>
    %c680 = arith.constant 680 : index
    %c0_32 = arith.constant 0 : index
    %33 = vector.load %arg1[%c680, %c0_32] : memref<1848x128xf32, #tpu.memory_space<vmem>>, vector<1x32xf32>
    %c688 = arith.constant 688 : index
    %c0_33 = arith.constant 0 : index
    %34 = vector.load %arg1[%c688, %c0_33] : memref<1848x128xf32, #tpu.memory_space<vmem>>, vector<16x16xf32>
    %c0_34 = arith.constant 0 : index
    %c0_35 = arith.constant 0 : index
    %35 = vector.load %arg0[%c0_34, %c0_35] : memref<16x8xf32, #tpu.memory_space<vmem>>, vector<16x8xf32>
    %c0_36 = arith.constant 0 : index
    %c0_37 = arith.constant 0 : index
    %36 = vector.load %arg1[%c0_36, %c0_37] : memref<1848x128xf32, #tpu.memory_space<vmem>>, vector<8x32xf32>
    %cst = arith.constant dense<0.000000e+00> : vector<16x32xf32>
    %37 = tpu.matmul %35, %36, %cst {dimension_numbers = #tpu.dot_dimension_numbers<[1], [0], [0], [1], [0, 0, 1, 1], [], []>} : vector<16x8xf32>, vector<8x32xf32>, vector<16x32xf32> -> vector<16x32xf32>
    %c8 = arith.constant 8 : index
    %c0_38 = arith.constant 0 : index
    %38 = vector.load %arg1[%c8, %c0_38] : memref<1848x128xf32, #tpu.memory_space<vmem>>, vector<1x32xf32>
    %39 = vector.broadcast %38 : vector<1x32xf32> to vector<16x32xf32>
    %40 = arith.addf %37, %39 : vector<16x32xf32>
    %cst_39 = arith.constant dense<0.000000e+00> : vector<16xf32>
    %41 = vector.multi_reduction <add>, %40, %cst_39 [1] : vector<16x32xf32> to vector<16xf32>
    %42 = vector.shape_cast %41 : vector<16xf32> to vector<16x1xf32>
    %cst_40 = arith.constant 3.200000e+01 : f32
    %43 = vector.broadcast %cst_40 : f32 to vector<16x1xf32>
    %44 = arith.divf %42, %43 : vector<16x1xf32>
    %45 = vector.broadcast %44 : vector<16x1xf32> to vector<16x32xf32>
    %46 = arith.subf %40, %45 : vector<16x32xf32>
    %47 = arith.mulf %46, %46 : vector<16x32xf32>
    %cst_41 = arith.constant dense<0.000000e+00> : vector<16xf32>
    %48 = vector.multi_reduction <add>, %47, %cst_41 [1] : vector<16x32xf32> to vector<16xf32>
    %49 = vector.shape_cast %48 : vector<16xf32> to vector<16x1xf32>
    %cst_42 = arith.constant 3.200000e+01 : f32
    %50 = vector.broadcast %cst_42 : f32 to vector<16x1xf32>
    %51 = arith.divf %49, %50 : vector<16x1xf32>
    %cst_43 = arith.constant 9.99999996E-13 : f32
    %52 = vector.broadcast %cst_43 : f32 to vector<16x1xf32>
    %53 = arith.addf %51, %52 : vector<16x1xf32>
    %54 = math.rsqrt %53 : vector<16x1xf32>
    %55 = vector.broadcast %54 : vector<16x1xf32> to vector<16x32xf32>
    %56 = arith.mulf %46, %55 : vector<16x32xf32>
    %57 = vector.broadcast %1 : vector<1x32xf32> to vector<16x32xf32>
    %58 = arith.mulf %57, %56 : vector<16x32xf32>
    %59 = vector.broadcast %2 : vector<1x32xf32> to vector<16x32xf32>
    %60 = arith.addf %58, %59 : vector<16x32xf32>
    %61 = arith.addf %60, %0 : vector<16x32xf32>
    %cst_44 = arith.constant dense<0.000000e+00> : vector<16xf32>
    %62 = vector.multi_reduction <add>, %61, %cst_44 [1] : vector<16x32xf32> to vector<16xf32>
    %63 = vector.shape_cast %62 : vector<16xf32> to vector<16x1xf32>
    %cst_45 = arith.constant 3.200000e+01 : f32
    %64 = vector.broadcast %cst_45 : f32 to vector<16x1xf32>
    %65 = arith.divf %63, %64 : vector<16x1xf32>
    %66 = vector.broadcast %65 : vector<16x1xf32> to vector<16x32xf32>
    %67 = arith.subf %61, %66 : vector<16x32xf32>
    %68 = arith.mulf %67, %67 : vector<16x32xf32>
    %cst_46 = arith.constant dense<0.000000e+00> : vector<16xf32>
    %69 = vector.multi_reduction <add>, %68, %cst_46 [1] : vector<16x32xf32> to vector<16xf32>
    %70 = vector.shape_cast %69 : vector<16xf32> to vector<16x1xf32>
    %cst_47 = arith.constant 3.200000e+01 : f32
    %71 = vector.broadcast %cst_47 : f32 to vector<16x1xf32>
    %72 = arith.divf %70, %71 : vector<16x1xf32>
    %cst_48 = arith.constant 9.99999996E-13 : f32
    %73 = vector.broadcast %cst_48 : f32 to vector<16x1xf32>
    %74 = arith.addf %72, %73 : vector<16x1xf32>
    %75 = math.rsqrt %74 : vector<16x1xf32>
    %76 = vector.broadcast %75 : vector<16x1xf32> to vector<16x32xf32>
    %77 = arith.mulf %67, %76 : vector<16x32xf32>
    %78 = vector.broadcast %1 : vector<1x32xf32> to vector<16x32xf32>
    %79 = arith.mulf %78, %77 : vector<16x32xf32>
    %80 = vector.broadcast %2 : vector<1x32xf32> to vector<16x32xf32>
    %81 = arith.addf %79, %80 : vector<16x32xf32>
    %cst_49 = arith.constant dense<0.000000e+00> : vector<16x8xf32>
    %82 = tpu.matmul %81, %3, %cst_49 {dimension_numbers = #tpu.dot_dimension_numbers<[1], [0], [0], [1], [0, 0, 1, 1], [], []>} : vector<16x32xf32>, vector<32x8xf32>, vector<16x8xf32> -> vector<16x8xf32>
    %83 = vector.broadcast %7 : vector<1x8xf32> to vector<16x8xf32>
    %84 = arith.addf %82, %83 : vector<16x8xf32>
    %cst_50 = arith.constant dense<0.000000e+00> : vector<16x8xf32>
    %85 = tpu.matmul %81, %11, %cst_50 {dimension_numbers = #tpu.dot_dimension_numbers<[1], [0], [0], [1], [0, 0, 1, 1], [], []>} : vector<16x32xf32>, vector<32x8xf32>, vector<16x8xf32> -> vector<16x8xf32>
    %86 = vector.broadcast %15 : vector<1x8xf32> to vector<16x8xf32>
    %87 = arith.addf %85, %86 : vector<16x8xf32>
    %cst_51 = arith.constant dense<0.000000e+00> : vector<16x16xf32>
    %88 = tpu.matmul %84, %87, %cst_51 {dimension_numbers = #tpu.dot_dimension_numbers<[1], [1], [0], [0], [0, 0, 1, 0], [], []>} : vector<16x8xf32>, vector<16x8xf32>, vector<16x16xf32> -> vector<16x16xf32>
    %89 = arith.addf %88, %34 : vector<16x16xf32>
    %cst_52 = arith.constant dense<0xFF800000> : vector<16xf32>
    %90 = vector.multi_reduction <maximumf>, %89, %cst_52 [1] : vector<16x16xf32> to vector<16xf32>
    %91 = vector.shape_cast %90 : vector<16xf32> to vector<16x1xf32>
    %92 = vector.broadcast %91 : vector<16x1xf32> to vector<16x16xf32>
    %93 = arith.subf %89, %92 : vector<16x16xf32>
    %94 = math.exp %93 : vector<16x16xf32>
    %cst_53 = arith.constant dense<0.000000e+00> : vector<16xf32>
    %95 = vector.multi_reduction <add>, %94, %cst_53 [1] : vector<16x16xf32> to vector<16xf32>
    %96 = vector.shape_cast %95 : vector<16xf32> to vector<16x1xf32>
    %97 = tpu.reciprocal %96 {approx = true} : vector<16x1xf32> -> vector<16x1xf32>
    %98 = vector.broadcast %97 : vector<16x1xf32> to vector<16x16xf32>
    %99 = arith.mulf %94, %98 : vector<16x16xf32>
    %cst_54 = arith.constant dense<0.000000e+00> : vector<16x32xf32>
    %100 = tpu.matmul %81, %19, %cst_54 {dimension_numbers = #tpu.dot_dimension_numbers<[1], [0], [0], [1], [0, 0, 1, 1], [], []>} : vector<16x32xf32>, vector<32x32xf32>, vector<16x32xf32> -> vector<16x32xf32>
    %cst_55 = arith.constant dense<0.000000e+00> : vector<16x32xf32>
    %101 = tpu.matmul %99, %100, %cst_55 {dimension_numbers = #tpu.dot_dimension_numbers<[1], [0], [0], [1], [0, 0, 1, 1], [], []>} : vector<16x16xf32>, vector<16x32xf32>, vector<16x32xf32> -> vector<16x32xf32>
    %cst_56 = arith.constant dense<0.000000e+00> : vector<16x8xf32>
    %102 = tpu.matmul %81, %4, %cst_56 {dimension_numbers = #tpu.dot_dimension_numbers<[1], [0], [0], [1], [0, 0, 1, 1], [], []>} : vector<16x32xf32>, vector<32x8xf32>, vector<16x8xf32> -> vector<16x8xf32>
    %103 = vector.broadcast %8 : vector<1x8xf32> to vector<16x8xf32>
    %104 = arith.addf %102, %103 : vector<16x8xf32>
    %cst_57 = arith.constant dense<0.000000e+00> : vector<16x8xf32>
    %105 = tpu.matmul %81, %12, %cst_57 {dimension_numbers = #tpu.dot_dimension_numbers<[1], [0], [0], [1], [0, 0, 1, 1], [], []>} : vector<16x32xf32>, vector<32x8xf32>, vector<16x8xf32> -> vector<16x8xf32>
    %106 = vector.broadcast %16 : vector<1x8xf32> to vector<16x8xf32>
    %107 = arith.addf %105, %106 : vector<16x8xf32>
    %cst_58 = arith.constant dense<0.000000e+00> : vector<16x16xf32>
    %108 = tpu.matmul %104, %107, %cst_58 {dimension_numbers = #tpu.dot_dimension_numbers<[1], [1], [0], [0], [0, 0, 1, 0], [], []>} : vector<16x8xf32>, vector<16x8xf32>, vector<16x16xf32> -> vector<16x16xf32>
    %109 = arith.addf %108, %34 : vector<16x16xf32>
    %cst_59 = arith.constant dense<0xFF800000> : vector<16xf32>
    %110 = vector.multi_reduction <maximumf>, %109, %cst_59 [1] : vector<16x16xf32> to vector<16xf32>
    %111 = vector.shape_cast %110 : vector<16xf32> to vector<16x1xf32>
    %112 = vector.broadcast %111 : vector<16x1xf32> to vector<16x16xf32>
    %113 = arith.subf %109, %112 : vector<16x16xf32>
    %114 = math.exp %113 : vector<16x16xf32>
    %cst_60 = arith.constant dense<0.000000e+00> : vector<16xf32>
    %115 = vector.multi_reduction <add>, %114, %cst_60 [1] : vector<16x16xf32> to vector<16xf32>
    %116 = vector.shape_cast %115 : vector<16xf32> to vector<16x1xf32>
    %117 = tpu.reciprocal %116 {approx = true} : vector<16x1xf32> -> vector<16x1xf32>
    %118 = vector.broadcast %117 : vector<16x1xf32> to vector<16x16xf32>
    %119 = arith.mulf %114, %118 : vector<16x16xf32>
    %cst_61 = arith.constant dense<0.000000e+00> : vector<16x32xf32>
    %120 = tpu.matmul %81, %20, %cst_61 {dimension_numbers = #tpu.dot_dimension_numbers<[1], [0], [0], [1], [0, 0, 1, 1], [], []>} : vector<16x32xf32>, vector<32x32xf32>, vector<16x32xf32> -> vector<16x32xf32>
    %cst_62 = arith.constant dense<0.000000e+00> : vector<16x32xf32>
    %121 = tpu.matmul %119, %120, %cst_62 {dimension_numbers = #tpu.dot_dimension_numbers<[1], [0], [0], [1], [0, 0, 1, 1], [], []>} : vector<16x16xf32>, vector<16x32xf32>, vector<16x32xf32> -> vector<16x32xf32>
    %122 = arith.addf %101, %121 : vector<16x32xf32>
    %cst_63 = arith.constant dense<0.000000e+00> : vector<16x8xf32>
    %123 = tpu.matmul %81, %5, %cst_63 {dimension_numbers = #tpu.dot_dimension_numbers<[1], [0], [0], [1], [0, 0, 1, 1], [], []>} : vector<16x32xf32>, vector<32x8xf32>, vector<16x8xf32> -> vector<16x8xf32>
    %124 = vector.broadcast %9 : vector<1x8xf32> to vector<16x8xf32>
    %125 = arith.addf %123, %124 : vector<16x8xf32>
    %cst_64 = arith.constant dense<0.000000e+00> : vector<16x8xf32>
    %126 = tpu.matmul %81, %13, %cst_64 {dimension_numbers = #tpu.dot_dimension_numbers<[1], [0], [0], [1], [0, 0, 1, 1], [], []>} : vector<16x32xf32>, vector<32x8xf32>, vector<16x8xf32> -> vector<16x8xf32>
    %127 = vector.broadcast %17 : vector<1x8xf32> to vector<16x8xf32>
    %128 = arith.addf %126, %127 : vector<16x8xf32>
    %cst_65 = arith.constant dense<0.000000e+00> : vector<16x16xf32>
    %129 = tpu.matmul %125, %128, %cst_65 {dimension_numbers = #tpu.dot_dimension_numbers<[1], [1], [0], [0], [0, 0, 1, 0], [], []>} : vector<16x8xf32>, vector<16x8xf32>, vector<16x16xf32> -> vector<16x16xf32>
    %130 = arith.addf %129, %34 : vector<16x16xf32>
    %cst_66 = arith.constant dense<0xFF800000> : vector<16xf32>
    %131 = vector.multi_reduction <maximumf>, %130, %cst_66 [1] : vector<16x16xf32> to vector<16xf32>
    %132 = vector.shape_cast %131 : vector<16xf32> to vector<16x1xf32>
    %133 = vector.broadcast %132 : vector<16x1xf32> to vector<16x16xf32>
    %134 = arith.subf %130, %133 : vector<16x16xf32>
    %135 = math.exp %134 : vector<16x16xf32>
    %cst_67 = arith.constant dense<0.000000e+00> : vector<16xf32>
    %136 = vector.multi_reduction <add>, %135, %cst_67 [1] : vector<16x16xf32> to vector<16xf32>
    %137 = vector.shape_cast %136 : vector<16xf32> to vector<16x1xf32>
    %138 = tpu.reciprocal %137 {approx = true} : vector<16x1xf32> -> vector<16x1xf32>
    %139 = vector.broadcast %138 : vector<16x1xf32> to vector<16x16xf32>
    %140 = arith.mulf %135, %139 : vector<16x16xf32>
    %cst_68 = arith.constant dense<0.000000e+00> : vector<16x32xf32>
    %141 = tpu.matmul %81, %21, %cst_68 {dimension_numbers = #tpu.dot_dimension_numbers<[1], [0], [0], [1], [0, 0, 1, 1], [], []>} : vector<16x32xf32>, vector<32x32xf32>, vector<16x32xf32> -> vector<16x32xf32>
    %cst_69 = arith.constant dense<0.000000e+00> : vector<16x32xf32>
    %142 = tpu.matmul %140, %141, %cst_69 {dimension_numbers = #tpu.dot_dimension_numbers<[1], [0], [0], [1], [0, 0, 1, 1], [], []>} : vector<16x16xf32>, vector<16x32xf32>, vector<16x32xf32> -> vector<16x32xf32>
    %143 = arith.addf %122, %142 : vector<16x32xf32>
    %cst_70 = arith.constant dense<0.000000e+00> : vector<16x8xf32>
    %144 = tpu.matmul %81, %6, %cst_70 {dimension_numbers = #tpu.dot_dimension_numbers<[1], [0], [0], [1], [0, 0, 1, 1], [], []>} : vector<16x32xf32>, vector<32x8xf32>, vector<16x8xf32> -> vector<16x8xf32>
    %145 = vector.broadcast %10 : vector<1x8xf32> to vector<16x8xf32>
    %146 = arith.addf %144, %145 : vector<16x8xf32>
    %cst_71 = arith.constant dense<0.000000e+00> : vector<16x8xf32>
    %147 = tpu.matmul %81, %14, %cst_71 {dimension_numbers = #tpu.dot_dimension_numbers<[1], [0], [0], [1], [0, 0, 1, 1], [], []>} : vector<16x32xf32>, vector<32x8xf32>, vector<16x8xf32> -> vector<16x8xf32>
    %148 = vector.broadcast %18 : vector<1x8xf32> to vector<16x8xf32>
    %149 = arith.addf %147, %148 : vector<16x8xf32>
    %cst_72 = arith.constant dense<0.000000e+00> : vector<16x16xf32>
    %150 = tpu.matmul %146, %149, %cst_72 {dimension_numbers = #tpu.dot_dimension_numbers<[1], [1], [0], [0], [0, 0, 1, 0], [], []>} : vector<16x8xf32>, vector<16x8xf32>, vector<16x16xf32> -> vector<16x16xf32>
    %151 = arith.addf %150, %34 : vector<16x16xf32>
    %cst_73 = arith.constant dense<0xFF800000> : vector<16xf32>
    %152 = vector.multi_reduction <maximumf>, %151, %cst_73 [1] : vector<16x16xf32> to vector<16xf32>
    %153 = vector.shape_cast %152 : vector<16xf32> to vector<16x1xf32>
    %154 = vector.broadcast %153 : vector<16x1xf32> to vector<16x16xf32>
    %155 = arith.subf %151, %154 : vector<16x16xf32>
    %156 = math.exp %155 : vector<16x16xf32>
    %cst_74 = arith.constant dense<0.000000e+00> : vector<16xf32>
    %157 = vector.multi_reduction <add>, %156, %cst_74 [1] : vector<16x16xf32> to vector<16xf32>
    %158 = vector.shape_cast %157 : vector<16xf32> to vector<16x1xf32>
    %159 = tpu.reciprocal %158 {approx = true} : vector<16x1xf32> -> vector<16x1xf32>
    %160 = vector.broadcast %159 : vector<16x1xf32> to vector<16x16xf32>
    %161 = arith.mulf %156, %160 : vector<16x16xf32>
    %cst_75 = arith.constant dense<0.000000e+00> : vector<16x32xf32>
    %162 = tpu.matmul %81, %22, %cst_75 {dimension_numbers = #tpu.dot_dimension_numbers<[1], [0], [0], [1], [0, 0, 1, 1], [], []>} : vector<16x32xf32>, vector<32x32xf32>, vector<16x32xf32> -> vector<16x32xf32>
    %cst_76 = arith.constant dense<0.000000e+00> : vector<16x32xf32>
    %163 = tpu.matmul %161, %162, %cst_76 {dimension_numbers = #tpu.dot_dimension_numbers<[1], [0], [0], [1], [0, 0, 1, 1], [], []>} : vector<16x16xf32>, vector<16x32xf32>, vector<16x32xf32> -> vector<16x32xf32>
    %164 = arith.addf %143, %163 : vector<16x32xf32>
    %165 = vector.broadcast %23 : vector<1x32xf32> to vector<16x32xf32>
    %166 = arith.addf %164, %165 : vector<16x32xf32>
    %cst_77 = arith.constant dense<0.000000e+00> : vector<16x32xf32>
    %167 = tpu.matmul %166, %24, %cst_77 {dimension_numbers = #tpu.dot_dimension_numbers<[1], [0], [0], [1], [0, 0, 1, 1], [], []>} : vector<16x32xf32>, vector<32x32xf32>, vector<16x32xf32> -> vector<16x32xf32>
    %168 = vector.broadcast %25 : vector<1x32xf32> to vector<16x32xf32>
    %169 = arith.addf %167, %168 : vector<16x32xf32>
    %cst_78 = arith.constant dense<0.000000e+00> : vector<16xf32>
    %170 = vector.multi_reduction <add>, %169, %cst_78 [1] : vector<16x32xf32> to vector<16xf32>
    %171 = vector.shape_cast %170 : vector<16xf32> to vector<16x1xf32>
    %cst_79 = arith.constant 3.200000e+01 : f32
    %172 = vector.broadcast %cst_79 : f32 to vector<16x1xf32>
    %173 = arith.divf %171, %172 : vector<16x1xf32>
    %174 = vector.broadcast %173 : vector<16x1xf32> to vector<16x32xf32>
    %175 = arith.subf %169, %174 : vector<16x32xf32>
    %176 = arith.mulf %175, %175 : vector<16x32xf32>
    %cst_80 = arith.constant dense<0.000000e+00> : vector<16xf32>
    %177 = vector.multi_reduction <add>, %176, %cst_80 [1] : vector<16x32xf32> to vector<16xf32>
    %178 = vector.shape_cast %177 : vector<16xf32> to vector<16x1xf32>
    %cst_81 = arith.constant 3.200000e+01 : f32
    %179 = vector.broadcast %cst_81 : f32 to vector<16x1xf32>
    %180 = arith.divf %178, %179 : vector<16x1xf32>
    %cst_82 = arith.constant 9.99999996E-13 : f32
    %181 = vector.broadcast %cst_82 : f32 to vector<16x1xf32>
    %182 = arith.addf %180, %181 : vector<16x1xf32>
    %183 = math.rsqrt %182 : vector<16x1xf32>
    %184 = vector.broadcast %183 : vector<16x1xf32> to vector<16x32xf32>
    %185 = arith.mulf %175, %184 : vector<16x32xf32>
    %186 = vector.broadcast %26 : vector<1x32xf32> to vector<16x32xf32>
    %187 = arith.mulf %186, %185 : vector<16x32xf32>
    %188 = vector.broadcast %27 : vector<1x32xf32> to vector<16x32xf32>
    %189 = arith.addf %187, %188 : vector<16x32xf32>
    %cst_83 = arith.constant dense<0.000000e+00> : vector<16x64xf32>
    %190 = tpu.matmul %189, %28, %cst_83 {dimension_numbers = #tpu.dot_dimension_numbers<[1], [0], [0], [1], [0, 0, 1, 1], [], []>} : vector<16x32xf32>, vector<32x64xf32>, vector<16x64xf32> -> vector<16x64xf32>
    %191 = vector.broadcast %29 : vector<1x64xf32> to vector<16x64xf32>
    %192 = arith.addf %190, %191 : vector<16x64xf32>
    %cst_84 = arith.constant 5.000000e-01 : f32
    %193 = vector.broadcast %cst_84 : f32 to vector<16x64xf32>
    %194 = arith.mulf %192, %193 : vector<16x64xf32>
    %cst_85 = arith.constant 0.707106769 : f32
    %195 = vector.broadcast %cst_85 : f32 to vector<16x64xf32>
    %196 = arith.mulf %192, %195 : vector<16x64xf32>
    %197 = math.absf %196 : vector<16x64xf32>
    %cst_86 = arith.constant 0.327591091 : f32
    %198 = vector.broadcast %cst_86 : f32 to vector<16x64xf32>
    %199 = arith.mulf %198, %197 : vector<16x64xf32>
    %cst_87 = arith.constant 1.000000e+00 : f32
    %200 = vector.broadcast %cst_87 : f32 to vector<16x64xf32>
    %201 = arith.addf %200, %199 : vector<16x64xf32>
    %202 = tpu.reciprocal %201 {approx = true} : vector<16x64xf32> -> vector<16x64xf32>
    %cst_88 = arith.constant 1.06140542 : f32
    %203 = vector.broadcast %cst_88 : f32 to vector<16x64xf32>
    %204 = arith.mulf %203, %202 : vector<16x64xf32>
    %cst_89 = arith.constant -1.45315206 : f32
    %205 = vector.broadcast %cst_89 : f32 to vector<16x64xf32>
    %206 = arith.addf %204, %205 : vector<16x64xf32>
    %207 = arith.mulf %206, %202 : vector<16x64xf32>
    %cst_90 = arith.constant 1.42141378 : f32
    %208 = vector.broadcast %cst_90 : f32 to vector<16x64xf32>
    %209 = arith.addf %207, %208 : vector<16x64xf32>
    %210 = arith.mulf %209, %202 : vector<16x64xf32>
    %cst_91 = arith.constant -0.284496725 : f32
    %211 = vector.broadcast %cst_91 : f32 to vector<16x64xf32>
    %212 = arith.addf %210, %211 : vector<16x64xf32>
    %213 = arith.mulf %212, %202 : vector<16x64xf32>
    %cst_92 = arith.constant 0.254829586 : f32
    %214 = vector.broadcast %cst_92 : f32 to vector<16x64xf32>
    %215 = arith.addf %213, %214 : vector<16x64xf32>
    %216 = arith.mulf %215, %202 : vector<16x64xf32>
    %cst_93 = arith.constant 0.000000e+00 : f32
    %217 = vector.broadcast %cst_93 : f32 to vector<16x64xf32>
    %218 = arith.subf %217, %197 : vector<16x64xf32>
    %219 = arith.mulf %218, %197 : vector<16x64xf32>
    %220 = math.exp %219 : vector<16x64xf32>
    %221 = arith.mulf %216, %220 : vector<16x64xf32>
    %cst_94 = arith.constant 1.000000e+00 : f32
    %222 = vector.broadcast %cst_94 : f32 to vector<16x64xf32>
    %223 = arith.subf %222, %221 : vector<16x64xf32>
    %cst_95 = arith.constant 0.000000e+00 : f32
    %224 = vector.broadcast %cst_95 : f32 to vector<16x64xf32>
    %225 = arith.cmpf oge, %196, %224 : vector<16x64xf32>
    %cst_96 = arith.constant 0.000000e+00 : f32
    %226 = vector.broadcast %cst_96 : f32 to vector<16x64xf32>
    %227 = arith.subf %226, %223 : vector<16x64xf32>
    %228 = arith.select %225, %223, %227 : vector<16x64xi1>, vector<16x64xf32>
    %cst_97 = arith.constant 1.000000e+00 : f32
    %229 = vector.broadcast %cst_97 : f32 to vector<16x64xf32>
    %230 = arith.addf %229, %228 : vector<16x64xf32>
    %231 = arith.mulf %194, %230 : vector<16x64xf32>
    %cst_98 = arith.constant dense<0.000000e+00> : vector<16x32xf32>
    %232 = tpu.matmul %231, %30, %cst_98 {dimension_numbers = #tpu.dot_dimension_numbers<[1], [0], [0], [1], [0, 0, 1, 1], [], []>} : vector<16x64xf32>, vector<64x32xf32>, vector<16x32xf32> -> vector<16x32xf32>
    %233 = vector.broadcast %31 : vector<1x32xf32> to vector<16x32xf32>
    %234 = arith.addf %232, %233 : vector<16x32xf32>
    %235 = arith.addf %189, %234 : vector<16x32xf32>
    %cst_99 = arith.constant dense<0.000000e+00> : vector<16xf32>
    %236 = vector.multi_reduction <add>, %235, %cst_99 [1] : vector<16x32xf32> to vector<16xf32>
    %237 = vector.shape_cast %236 : vector<16xf32> to vector<16x1xf32>
    %cst_100 = arith.constant 3.200000e+01 : f32
    %238 = vector.broadcast %cst_100 : f32 to vector<16x1xf32>
    %239 = arith.divf %237, %238 : vector<16x1xf32>
    %240 = vector.broadcast %239 : vector<16x1xf32> to vector<16x32xf32>
    %241 = arith.subf %235, %240 : vector<16x32xf32>
    %242 = arith.mulf %241, %241 : vector<16x32xf32>
    %cst_101 = arith.constant dense<0.000000e+00> : vector<16xf32>
    %243 = vector.multi_reduction <add>, %242, %cst_101 [1] : vector<16x32xf32> to vector<16xf32>
    %244 = vector.shape_cast %243 : vector<16xf32> to vector<16x1xf32>
    %cst_102 = arith.constant 3.200000e+01 : f32
    %245 = vector.broadcast %cst_102 : f32 to vector<16x1xf32>
    %246 = arith.divf %244, %245 : vector<16x1xf32>
    %cst_103 = arith.constant 9.99999996E-13 : f32
    %247 = vector.broadcast %cst_103 : f32 to vector<16x1xf32>
    %248 = arith.addf %246, %247 : vector<16x1xf32>
    %249 = math.rsqrt %248 : vector<16x1xf32>
    %250 = vector.broadcast %249 : vector<16x1xf32> to vector<16x32xf32>
    %251 = arith.mulf %241, %250 : vector<16x32xf32>
    %252 = vector.broadcast %32 : vector<1x32xf32> to vector<16x32xf32>
    %253 = arith.mulf %252, %251 : vector<16x32xf32>
    %254 = vector.broadcast %33 : vector<1x32xf32> to vector<16x32xf32>
    %255 = arith.addf %253, %254 : vector<16x32xf32>
    %cst_104 = arith.constant dense<0.000000e+00> : vector<16x8xf32>
    %256 = tpu.matmul %255, %3, %cst_104 {dimension_numbers = #tpu.dot_dimension_numbers<[1], [0], [0], [1], [0, 0, 1, 1], [], []>} : vector<16x32xf32>, vector<32x8xf32>, vector<16x8xf32> -> vector<16x8xf32>
    %257 = vector.broadcast %7 : vector<1x8xf32> to vector<16x8xf32>
    %258 = arith.addf %256, %257 : vector<16x8xf32>
    %cst_105 = arith.constant dense<0.000000e+00> : vector<16x8xf32>
    %259 = tpu.matmul %255, %11, %cst_105 {dimension_numbers = #tpu.dot_dimension_numbers<[1], [0], [0], [1], [0, 0, 1, 1], [], []>} : vector<16x32xf32>, vector<32x8xf32>, vector<16x8xf32> -> vector<16x8xf32>
    %260 = vector.broadcast %15 : vector<1x8xf32> to vector<16x8xf32>
    %261 = arith.addf %259, %260 : vector<16x8xf32>
    %cst_106 = arith.constant dense<0.000000e+00> : vector<16x16xf32>
    %262 = tpu.matmul %258, %261, %cst_106 {dimension_numbers = #tpu.dot_dimension_numbers<[1], [1], [0], [0], [0, 0, 1, 0], [], []>} : vector<16x8xf32>, vector<16x8xf32>, vector<16x16xf32> -> vector<16x16xf32>
    %263 = arith.addf %262, %34 : vector<16x16xf32>
    %cst_107 = arith.constant dense<0xFF800000> : vector<16xf32>
    %264 = vector.multi_reduction <maximumf>, %263, %cst_107 [1] : vector<16x16xf32> to vector<16xf32>
    %265 = vector.shape_cast %264 : vector<16xf32> to vector<16x1xf32>
    %266 = vector.broadcast %265 : vector<16x1xf32> to vector<16x16xf32>
    %267 = arith.subf %263, %266 : vector<16x16xf32>
    %268 = math.exp %267 : vector<16x16xf32>
    %cst_108 = arith.constant dense<0.000000e+00> : vector<16xf32>
    %269 = vector.multi_reduction <add>, %268, %cst_108 [1] : vector<16x16xf32> to vector<16xf32>
    %270 = vector.shape_cast %269 : vector<16xf32> to vector<16x1xf32>
    %271 = tpu.reciprocal %270 {approx = true} : vector<16x1xf32> -> vector<16x1xf32>
    %272 = vector.broadcast %271 : vector<16x1xf32> to vector<16x16xf32>
    %273 = arith.mulf %268, %272 : vector<16x16xf32>
    %cst_109 = arith.constant dense<0.000000e+00> : vector<16x32xf32>
    %274 = tpu.matmul %255, %19, %cst_109 {dimension_numbers = #tpu.dot_dimension_numbers<[1], [0], [0], [1], [0, 0, 1, 1], [], []>} : vector<16x32xf32>, vector<32x32xf32>, vector<16x32xf32> -> vector<16x32xf32>
    %cst_110 = arith.constant dense<0.000000e+00> : vector<16x32xf32>
    %275 = tpu.matmul %273, %274, %cst_110 {dimension_numbers = #tpu.dot_dimension_numbers<[1], [0], [0], [1], [0, 0, 1, 1], [], []>} : vector<16x16xf32>, vector<16x32xf32>, vector<16x32xf32> -> vector<16x32xf32>
    %cst_111 = arith.constant dense<0.000000e+00> : vector<16x8xf32>
    %276 = tpu.matmul %255, %4, %cst_111 {dimension_numbers = #tpu.dot_dimension_numbers<[1], [0], [0], [1], [0, 0, 1, 1], [], []>} : vector<16x32xf32>, vector<32x8xf32>, vector<16x8xf32> -> vector<16x8xf32>
    %277 = vector.broadcast %8 : vector<1x8xf32> to vector<16x8xf32>
    %278 = arith.addf %276, %277 : vector<16x8xf32>
    %cst_112 = arith.constant dense<0.000000e+00> : vector<16x8xf32>
    %279 = tpu.matmul %255, %12, %cst_112 {dimension_numbers = #tpu.dot_dimension_numbers<[1], [0], [0], [1], [0, 0, 1, 1], [], []>} : vector<16x32xf32>, vector<32x8xf32>, vector<16x8xf32> -> vector<16x8xf32>
    %280 = vector.broadcast %16 : vector<1x8xf32> to vector<16x8xf32>
    %281 = arith.addf %279, %280 : vector<16x8xf32>
    %cst_113 = arith.constant dense<0.000000e+00> : vector<16x16xf32>
    %282 = tpu.matmul %278, %281, %cst_113 {dimension_numbers = #tpu.dot_dimension_numbers<[1], [1], [0], [0], [0, 0, 1, 0], [], []>} : vector<16x8xf32>, vector<16x8xf32>, vector<16x16xf32> -> vector<16x16xf32>
    %283 = arith.addf %282, %34 : vector<16x16xf32>
    %cst_114 = arith.constant dense<0xFF800000> : vector<16xf32>
    %284 = vector.multi_reduction <maximumf>, %283, %cst_114 [1] : vector<16x16xf32> to vector<16xf32>
    %285 = vector.shape_cast %284 : vector<16xf32> to vector<16x1xf32>
    %286 = vector.broadcast %285 : vector<16x1xf32> to vector<16x16xf32>
    %287 = arith.subf %283, %286 : vector<16x16xf32>
    %288 = math.exp %287 : vector<16x16xf32>
    %cst_115 = arith.constant dense<0.000000e+00> : vector<16xf32>
    %289 = vector.multi_reduction <add>, %288, %cst_115 [1] : vector<16x16xf32> to vector<16xf32>
    %290 = vector.shape_cast %289 : vector<16xf32> to vector<16x1xf32>
    %291 = tpu.reciprocal %290 {approx = true} : vector<16x1xf32> -> vector<16x1xf32>
    %292 = vector.broadcast %291 : vector<16x1xf32> to vector<16x16xf32>
    %293 = arith.mulf %288, %292 : vector<16x16xf32>
    %cst_116 = arith.constant dense<0.000000e+00> : vector<16x32xf32>
    %294 = tpu.matmul %255, %20, %cst_116 {dimension_numbers = #tpu.dot_dimension_numbers<[1], [0], [0], [1], [0, 0, 1, 1], [], []>} : vector<16x32xf32>, vector<32x32xf32>, vector<16x32xf32> -> vector<16x32xf32>
    %cst_117 = arith.constant dense<0.000000e+00> : vector<16x32xf32>
    %295 = tpu.matmul %293, %294, %cst_117 {dimension_numbers = #tpu.dot_dimension_numbers<[1], [0], [0], [1], [0, 0, 1, 1], [], []>} : vector<16x16xf32>, vector<16x32xf32>, vector<16x32xf32> -> vector<16x32xf32>
    %296 = arith.addf %275, %295 : vector<16x32xf32>
    %cst_118 = arith.constant dense<0.000000e+00> : vector<16x8xf32>
    %297 = tpu.matmul %255, %5, %cst_118 {dimension_numbers = #tpu.dot_dimension_numbers<[1], [0], [0], [1], [0, 0, 1, 1], [], []>} : vector<16x32xf32>, vector<32x8xf32>, vector<16x8xf32> -> vector<16x8xf32>
    %298 = vector.broadcast %9 : vector<1x8xf32> to vector<16x8xf32>
    %299 = arith.addf %297, %298 : vector<16x8xf32>
    %cst_119 = arith.constant dense<0.000000e+00> : vector<16x8xf32>
    %300 = tpu.matmul %255, %13, %cst_119 {dimension_numbers = #tpu.dot_dimension_numbers<[1], [0], [0], [1], [0, 0, 1, 1], [], []>} : vector<16x32xf32>, vector<32x8xf32>, vector<16x8xf32> -> vector<16x8xf32>
    %301 = vector.broadcast %17 : vector<1x8xf32> to vector<16x8xf32>
    %302 = arith.addf %300, %301 : vector<16x8xf32>
    %cst_120 = arith.constant dense<0.000000e+00> : vector<16x16xf32>
    %303 = tpu.matmul %299, %302, %cst_120 {dimension_numbers = #tpu.dot_dimension_numbers<[1], [1], [0], [0], [0, 0, 1, 0], [], []>} : vector<16x8xf32>, vector<16x8xf32>, vector<16x16xf32> -> vector<16x16xf32>
    %304 = arith.addf %303, %34 : vector<16x16xf32>
    %cst_121 = arith.constant dense<0xFF800000> : vector<16xf32>
    %305 = vector.multi_reduction <maximumf>, %304, %cst_121 [1] : vector<16x16xf32> to vector<16xf32>
    %306 = vector.shape_cast %305 : vector<16xf32> to vector<16x1xf32>
    %307 = vector.broadcast %306 : vector<16x1xf32> to vector<16x16xf32>
    %308 = arith.subf %304, %307 : vector<16x16xf32>
    %309 = math.exp %308 : vector<16x16xf32>
    %cst_122 = arith.constant dense<0.000000e+00> : vector<16xf32>
    %310 = vector.multi_reduction <add>, %309, %cst_122 [1] : vector<16x16xf32> to vector<16xf32>
    %311 = vector.shape_cast %310 : vector<16xf32> to vector<16x1xf32>
    %312 = tpu.reciprocal %311 {approx = true} : vector<16x1xf32> -> vector<16x1xf32>
    %313 = vector.broadcast %312 : vector<16x1xf32> to vector<16x16xf32>
    %314 = arith.mulf %309, %313 : vector<16x16xf32>
    %cst_123 = arith.constant dense<0.000000e+00> : vector<16x32xf32>
    %315 = tpu.matmul %255, %21, %cst_123 {dimension_numbers = #tpu.dot_dimension_numbers<[1], [0], [0], [1], [0, 0, 1, 1], [], []>} : vector<16x32xf32>, vector<32x32xf32>, vector<16x32xf32> -> vector<16x32xf32>
    %cst_124 = arith.constant dense<0.000000e+00> : vector<16x32xf32>
    %316 = tpu.matmul %314, %315, %cst_124 {dimension_numbers = #tpu.dot_dimension_numbers<[1], [0], [0], [1], [0, 0, 1, 1], [], []>} : vector<16x16xf32>, vector<16x32xf32>, vector<16x32xf32> -> vector<16x32xf32>
    %317 = arith.addf %296, %316 : vector<16x32xf32>
    %cst_125 = arith.constant dense<0.000000e+00> : vector<16x8xf32>
    %318 = tpu.matmul %255, %6, %cst_125 {dimension_numbers = #tpu.dot_dimension_numbers<[1], [0], [0], [1], [0, 0, 1, 1], [], []>} : vector<16x32xf32>, vector<32x8xf32>, vector<16x8xf32> -> vector<16x8xf32>
    %319 = vector.broadcast %10 : vector<1x8xf32> to vector<16x8xf32>
    %320 = arith.addf %318, %319 : vector<16x8xf32>
    %cst_126 = arith.constant dense<0.000000e+00> : vector<16x8xf32>
    %321 = tpu.matmul %255, %14, %cst_126 {dimension_numbers = #tpu.dot_dimension_numbers<[1], [0], [0], [1], [0, 0, 1, 1], [], []>} : vector<16x32xf32>, vector<32x8xf32>, vector<16x8xf32> -> vector<16x8xf32>
    %322 = vector.broadcast %18 : vector<1x8xf32> to vector<16x8xf32>
    %323 = arith.addf %321, %322 : vector<16x8xf32>
    %cst_127 = arith.constant dense<0.000000e+00> : vector<16x16xf32>
    %324 = tpu.matmul %320, %323, %cst_127 {dimension_numbers = #tpu.dot_dimension_numbers<[1], [1], [0], [0], [0, 0, 1, 0], [], []>} : vector<16x8xf32>, vector<16x8xf32>, vector<16x16xf32> -> vector<16x16xf32>
    %325 = arith.addf %324, %34 : vector<16x16xf32>
    %cst_128 = arith.constant dense<0xFF800000> : vector<16xf32>
    %326 = vector.multi_reduction <maximumf>, %325, %cst_128 [1] : vector<16x16xf32> to vector<16xf32>
    %327 = vector.shape_cast %326 : vector<16xf32> to vector<16x1xf32>
    %328 = vector.broadcast %327 : vector<16x1xf32> to vector<16x16xf32>
    %329 = arith.subf %325, %328 : vector<16x16xf32>
    %330 = math.exp %329 : vector<16x16xf32>
    %cst_129 = arith.constant dense<0.000000e+00> : vector<16xf32>
    %331 = vector.multi_reduction <add>, %330, %cst_129 [1] : vector<16x16xf32> to vector<16xf32>
    %332 = vector.shape_cast %331 : vector<16xf32> to vector<16x1xf32>
    %333 = tpu.reciprocal %332 {approx = true} : vector<16x1xf32> -> vector<16x1xf32>
    %334 = vector.broadcast %333 : vector<16x1xf32> to vector<16x16xf32>
    %335 = arith.mulf %330, %334 : vector<16x16xf32>
    %cst_130 = arith.constant dense<0.000000e+00> : vector<16x32xf32>
    %336 = tpu.matmul %255, %22, %cst_130 {dimension_numbers = #tpu.dot_dimension_numbers<[1], [0], [0], [1], [0, 0, 1, 1], [], []>} : vector<16x32xf32>, vector<32x32xf32>, vector<16x32xf32> -> vector<16x32xf32>
    %cst_131 = arith.constant dense<0.000000e+00> : vector<16x32xf32>
    %337 = tpu.matmul %335, %336, %cst_131 {dimension_numbers = #tpu.dot_dimension_numbers<[1], [0], [0], [1], [0, 0, 1, 1], [], []>} : vector<16x16xf32>, vector<16x32xf32>, vector<16x32xf32> -> vector<16x32xf32>
    %338 = arith.addf %317, %337 : vector<16x32xf32>
    %339 = vector.broadcast %23 : vector<1x32xf32> to vector<16x32xf32>
    %340 = arith.addf %338, %339 : vector<16x32xf32>
    %cst_132 = arith.constant dense<0.000000e+00> : vector<16x32xf32>
    %341 = tpu.matmul %340, %24, %cst_132 {dimension_numbers = #tpu.dot_dimension_numbers<[1], [0], [0], [1], [0, 0, 1, 1], [], []>} : vector<16x32xf32>, vector<32x32xf32>, vector<16x32xf32> -> vector<16x32xf32>
    %342 = vector.broadcast %25 : vector<1x32xf32> to vector<16x32xf32>
    %343 = arith.addf %341, %342 : vector<16x32xf32>
    %cst_133 = arith.constant dense<0.000000e+00> : vector<16xf32>
    %344 = vector.multi_reduction <add>, %343, %cst_133 [1] : vector<16x32xf32> to vector<16xf32>
    %345 = vector.shape_cast %344 : vector<16xf32> to vector<16x1xf32>
    %cst_134 = arith.constant 3.200000e+01 : f32
    %346 = vector.broadcast %cst_134 : f32 to vector<16x1xf32>
    %347 = arith.divf %345, %346 : vector<16x1xf32>
    %348 = vector.broadcast %347 : vector<16x1xf32> to vector<16x32xf32>
    %349 = arith.subf %343, %348 : vector<16x32xf32>
    %350 = arith.mulf %349, %349 : vector<16x32xf32>
    %cst_135 = arith.constant dense<0.000000e+00> : vector<16xf32>
    %351 = vector.multi_reduction <add>, %350, %cst_135 [1] : vector<16x32xf32> to vector<16xf32>
    %352 = vector.shape_cast %351 : vector<16xf32> to vector<16x1xf32>
    %cst_136 = arith.constant 3.200000e+01 : f32
    %353 = vector.broadcast %cst_136 : f32 to vector<16x1xf32>
    %354 = arith.divf %352, %353 : vector<16x1xf32>
    %cst_137 = arith.constant 9.99999996E-13 : f32
    %355 = vector.broadcast %cst_137 : f32 to vector<16x1xf32>
    %356 = arith.addf %354, %355 : vector<16x1xf32>
    %357 = math.rsqrt %356 : vector<16x1xf32>
    %358 = vector.broadcast %357 : vector<16x1xf32> to vector<16x32xf32>
    %359 = arith.mulf %349, %358 : vector<16x32xf32>
    %360 = vector.broadcast %26 : vector<1x32xf32> to vector<16x32xf32>
    %361 = arith.mulf %360, %359 : vector<16x32xf32>
    %362 = vector.broadcast %27 : vector<1x32xf32> to vector<16x32xf32>
    %363 = arith.addf %361, %362 : vector<16x32xf32>
    %cst_138 = arith.constant dense<0.000000e+00> : vector<16x64xf32>
    %364 = tpu.matmul %363, %28, %cst_138 {dimension_numbers = #tpu.dot_dimension_numbers<[1], [0], [0], [1], [0, 0, 1, 1], [], []>} : vector<16x32xf32>, vector<32x64xf32>, vector<16x64xf32> -> vector<16x64xf32>
    %365 = vector.broadcast %29 : vector<1x64xf32> to vector<16x64xf32>
    %366 = arith.addf %364, %365 : vector<16x64xf32>
    %cst_139 = arith.constant 5.000000e-01 : f32
    %367 = vector.broadcast %cst_139 : f32 to vector<16x64xf32>
    %368 = arith.mulf %366, %367 : vector<16x64xf32>
    %cst_140 = arith.constant 0.707106769 : f32
    %369 = vector.broadcast %cst_140 : f32 to vector<16x64xf32>
    %370 = arith.mulf %366, %369 : vector<16x64xf32>
    %371 = math.absf %370 : vector<16x64xf32>
    %cst_141 = arith.constant 0.327591091 : f32
    %372 = vector.broadcast %cst_141 : f32 to vector<16x64xf32>
    %373 = arith.mulf %372, %371 : vector<16x64xf32>
    %cst_142 = arith.constant 1.000000e+00 : f32
    %374 = vector.broadcast %cst_142 : f32 to vector<16x64xf32>
    %375 = arith.addf %374, %373 : vector<16x64xf32>
    %376 = tpu.reciprocal %375 {approx = true} : vector<16x64xf32> -> vector<16x64xf32>
    %cst_143 = arith.constant 1.06140542 : f32
    %377 = vector.broadcast %cst_143 : f32 to vector<16x64xf32>
    %378 = arith.mulf %377, %376 : vector<16x64xf32>
    %cst_144 = arith.constant -1.45315206 : f32
    %379 = vector.broadcast %cst_144 : f32 to vector<16x64xf32>
    %380 = arith.addf %378, %379 : vector<16x64xf32>
    %381 = arith.mulf %380, %376 : vector<16x64xf32>
    %cst_145 = arith.constant 1.42141378 : f32
    %382 = vector.broadcast %cst_145 : f32 to vector<16x64xf32>
    %383 = arith.addf %381, %382 : vector<16x64xf32>
    %384 = arith.mulf %383, %376 : vector<16x64xf32>
    %cst_146 = arith.constant -0.284496725 : f32
    %385 = vector.broadcast %cst_146 : f32 to vector<16x64xf32>
    %386 = arith.addf %384, %385 : vector<16x64xf32>
    %387 = arith.mulf %386, %376 : vector<16x64xf32>
    %cst_147 = arith.constant 0.254829586 : f32
    %388 = vector.broadcast %cst_147 : f32 to vector<16x64xf32>
    %389 = arith.addf %387, %388 : vector<16x64xf32>
    %390 = arith.mulf %389, %376 : vector<16x64xf32>
    %cst_148 = arith.constant 0.000000e+00 : f32
    %391 = vector.broadcast %cst_148 : f32 to vector<16x64xf32>
    %392 = arith.subf %391, %371 : vector<16x64xf32>
    %393 = arith.mulf %392, %371 : vector<16x64xf32>
    %394 = math.exp %393 : vector<16x64xf32>
    %395 = arith.mulf %390, %394 : vector<16x64xf32>
    %cst_149 = arith.constant 1.000000e+00 : f32
    %396 = vector.broadcast %cst_149 : f32 to vector<16x64xf32>
    %397 = arith.subf %396, %395 : vector<16x64xf32>
    %cst_150 = arith.constant 0.000000e+00 : f32
    %398 = vector.broadcast %cst_150 : f32 to vector<16x64xf32>
    %399 = arith.cmpf oge, %370, %398 : vector<16x64xf32>
    %cst_151 = arith.constant 0.000000e+00 : f32
    %400 = vector.broadcast %cst_151 : f32 to vector<16x64xf32>
    %401 = arith.subf %400, %397 : vector<16x64xf32>
    %402 = arith.select %399, %397, %401 : vector<16x64xi1>, vector<16x64xf32>
    %cst_152 = arith.constant 1.000000e+00 : f32
    %403 = vector.broadcast %cst_152 : f32 to vector<16x64xf32>
    %404 = arith.addf %403, %402 : vector<16x64xf32>
    %405 = arith.mulf %368, %404 : vector<16x64xf32>
    %cst_153 = arith.constant dense<0.000000e+00> : vector<16x32xf32>
    %406 = tpu.matmul %405, %30, %cst_153 {dimension_numbers = #tpu.dot_dimension_numbers<[1], [0], [0], [1], [0, 0, 1, 1], [], []>} : vector<16x64xf32>, vector<64x32xf32>, vector<16x32xf32> -> vector<16x32xf32>
    %407 = vector.broadcast %31 : vector<1x32xf32> to vector<16x32xf32>
    %408 = arith.addf %406, %407 : vector<16x32xf32>
    %409 = arith.addf %363, %408 : vector<16x32xf32>
    %cst_154 = arith.constant dense<0.000000e+00> : vector<16xf32>
    %410 = vector.multi_reduction <add>, %409, %cst_154 [1] : vector<16x32xf32> to vector<16xf32>
    %411 = vector.shape_cast %410 : vector<16xf32> to vector<16x1xf32>
    %cst_155 = arith.constant 3.200000e+01 : f32
    %412 = vector.broadcast %cst_155 : f32 to vector<16x1xf32>
    %413 = arith.divf %411, %412 : vector<16x1xf32>
    %414 = vector.broadcast %413 : vector<16x1xf32> to vector<16x32xf32>
    %415 = arith.subf %409, %414 : vector<16x32xf32>
    %416 = arith.mulf %415, %415 : vector<16x32xf32>
    %cst_156 = arith.constant dense<0.000000e+00> : vector<16xf32>
    %417 = vector.multi_reduction <add>, %416, %cst_156 [1] : vector<16x32xf32> to vector<16xf32>
    %418 = vector.shape_cast %417 : vector<16xf32> to vector<16x1xf32>
    %cst_157 = arith.constant 3.200000e+01 : f32
    %419 = vector.broadcast %cst_157 : f32 to vector<16x1xf32>
    %420 = arith.divf %418, %419 : vector<16x1xf32>
    %cst_158 = arith.constant 9.99999996E-13 : f32
    %421 = vector.broadcast %cst_158 : f32 to vector<16x1xf32>
    %422 = arith.addf %420, %421 : vector<16x1xf32>
    %423 = math.rsqrt %422 : vector<16x1xf32>
    %424 = vector.broadcast %423 : vector<16x1xf32> to vector<16x32xf32>
    %425 = arith.mulf %415, %424 : vector<16x32xf32>
    %426 = vector.broadcast %32 : vector<1x32xf32> to vector<16x32xf32>
    %427 = arith.mulf %426, %425 : vector<16x32xf32>
    %428 = vector.broadcast %33 : vector<1x32xf32> to vector<16x32xf32>
    %429 = arith.addf %427, %428 : vector<16x32xf32>
    %c848 = arith.constant 848 : index
    %c0_159 = arith.constant 0 : index
    %430 = vector.load %arg1[%c848, %c0_159] : memref<1848x128xf32, #tpu.memory_space<vmem>>, vector<1x128xf32>
    %c704 = arith.constant 704 : index
    %c0_160 = arith.constant 0 : index
    %431 = vector.load %arg1[%c704, %c0_160] : memref<1848x128xf32, #tpu.memory_space<vmem>>, vector<16x16xf32>
    %cst_161 = arith.constant dense<0.000000e+00> : vector<16x32xf32>
    %432 = tpu.matmul %431, %429, %cst_161 {dimension_numbers = #tpu.dot_dimension_numbers<[1], [0], [0], [1], [0, 0, 1, 1], [], []>} : vector<16x16xf32>, vector<16x32xf32>, vector<16x32xf32> -> vector<16x32xf32>
    %c720 = arith.constant 720 : index
    %c0_162 = arith.constant 0 : index
    %433 = vector.load %arg1[%c720, %c0_162] : memref<1848x128xf32, #tpu.memory_space<vmem>>, vector<32x128xf32>
    %cst_163 = arith.constant dense<0.000000e+00> : vector<16x128xf32>
    %434 = tpu.matmul %432, %433, %cst_163 {dimension_numbers = #tpu.dot_dimension_numbers<[1], [0], [0], [1], [0, 0, 1, 1], [], []>} : vector<16x32xf32>, vector<32x128xf32>, vector<16x128xf32> -> vector<16x128xf32>
    %435 = vector.broadcast %430 : vector<1x128xf32> to vector<16x128xf32>
    %436 = arith.addf %435, %434 : vector<16x128xf32>
    %c752 = arith.constant 752 : index
    %c0_164 = arith.constant 0 : index
    %437 = vector.load %arg1[%c752, %c0_164] : memref<1848x128xf32, #tpu.memory_space<vmem>>, vector<16x16xf32>
    %cst_165 = arith.constant dense<0.000000e+00> : vector<16x32xf32>
    %438 = tpu.matmul %437, %429, %cst_165 {dimension_numbers = #tpu.dot_dimension_numbers<[1], [0], [0], [1], [0, 0, 1, 1], [], []>} : vector<16x16xf32>, vector<16x32xf32>, vector<16x32xf32> -> vector<16x32xf32>
    %c768 = arith.constant 768 : index
    %c0_166 = arith.constant 0 : index
    %439 = vector.load %arg1[%c768, %c0_166] : memref<1848x128xf32, #tpu.memory_space<vmem>>, vector<32x128xf32>
    %cst_167 = arith.constant dense<0.000000e+00> : vector<16x128xf32>
    %440 = tpu.matmul %438, %439, %cst_167 {dimension_numbers = #tpu.dot_dimension_numbers<[1], [0], [0], [1], [0, 0, 1, 1], [], []>} : vector<16x32xf32>, vector<32x128xf32>, vector<16x128xf32> -> vector<16x128xf32>
    %441 = arith.addf %436, %440 : vector<16x128xf32>
    %c800 = arith.constant 800 : index
    %c0_168 = arith.constant 0 : index
    %442 = vector.load %arg1[%c800, %c0_168] : memref<1848x128xf32, #tpu.memory_space<vmem>>, vector<16x16xf32>
    %cst_169 = arith.constant dense<0.000000e+00> : vector<16x32xf32>
    %443 = tpu.matmul %442, %429, %cst_169 {dimension_numbers = #tpu.dot_dimension_numbers<[1], [0], [0], [1], [0, 0, 1, 1], [], []>} : vector<16x16xf32>, vector<16x32xf32>, vector<16x32xf32> -> vector<16x32xf32>
    %c816 = arith.constant 816 : index
    %c0_170 = arith.constant 0 : index
    %444 = vector.load %arg1[%c816, %c0_170] : memref<1848x128xf32, #tpu.memory_space<vmem>>, vector<32x128xf32>
    %cst_171 = arith.constant dense<0.000000e+00> : vector<16x128xf32>
    %445 = tpu.matmul %443, %444, %cst_171 {dimension_numbers = #tpu.dot_dimension_numbers<[1], [0], [0], [1], [0, 0, 1, 1], [], []>} : vector<16x32xf32>, vector<32x128xf32>, vector<16x128xf32> -> vector<16x128xf32>
    %446 = arith.addf %441, %445 : vector<16x128xf32>
    %cst_172 = arith.constant 0.000000e+00 : f32
    %447 = vector.broadcast %cst_172 : f32 to vector<16x128xf32>
    %448 = arith.maximumf %446, %447 : vector<16x128xf32>
    %c856 = arith.constant 856 : index
    %c0_173 = arith.constant 0 : index
    %449 = vector.load %arg1[%c856, %c0_173] : memref<1848x128xf32, #tpu.memory_space<vmem>>, vector<8x16xf32>
    %cst_174 = arith.constant dense<0.000000e+00> : vector<8x128xf32>
    %450 = tpu.matmul %449, %448, %cst_174 {dimension_numbers = #tpu.dot_dimension_numbers<[1], [0], [0], [1], [0, 0, 1, 1], [], []>} : vector<8x16xf32>, vector<16x128xf32>, vector<8x128xf32> -> vector<8x128xf32>
    %c992 = arith.constant 992 : index
    %c0_175 = arith.constant 0 : index
    %451 = vector.load %arg1[%c992, %c0_175] : memref<1848x128xf32, #tpu.memory_space<vmem>>, vector<8x16xf32>
    %cst_176 = arith.constant dense<0.000000e+00> : vector<8x128xf32>
    %452 = tpu.matmul %451, %448, %cst_176 {dimension_numbers = #tpu.dot_dimension_numbers<[1], [0], [0], [1], [0, 0, 1, 1], [], []>} : vector<8x16xf32>, vector<16x128xf32>, vector<8x128xf32> -> vector<8x128xf32>
    %453 = arith.maximumf %450, %452 : vector<8x128xf32>
    %c864 = arith.constant 864 : index
    %c0_177 = arith.constant 0 : index
    %454 = vector.load %arg1[%c864, %c0_177] : memref<1848x128xf32, #tpu.memory_space<vmem>>, vector<128x64xf32>
    %cst_178 = arith.constant dense<0.000000e+00> : vector<8x64xf32>
    %455 = tpu.matmul %453, %454, %cst_178 {dimension_numbers = #tpu.dot_dimension_numbers<[1], [0], [0], [1], [0, 0, 1, 1], [], []>} : vector<8x128xf32>, vector<128x64xf32>, vector<8x64xf32> -> vector<8x64xf32>
    %c1000 = arith.constant 1000 : index
    %c0_179 = arith.constant 0 : index
    %456 = vector.load %arg1[%c1000, %c0_179] : memref<1848x128xf32, #tpu.memory_space<vmem>>, vector<128x64xf32>
    %cst_180 = arith.constant dense<0.000000e+00> : vector<8x64xf32>
    %457 = tpu.matmul %453, %456, %cst_180 {dimension_numbers = #tpu.dot_dimension_numbers<[1], [0], [0], [1], [0, 0, 1, 1], [], []>} : vector<8x128xf32>, vector<128x64xf32>, vector<8x64xf32> -> vector<8x64xf32>
    %458 = arith.maximumf %455, %457 : vector<8x64xf32>
    %c1128 = arith.constant 1128 : index
    %c0_181 = arith.constant 0 : index
    %459 = vector.load %arg1[%c1128, %c0_181] : memref<1848x128xf32, #tpu.memory_space<vmem>>, vector<1x64xf32>
    %460 = vector.broadcast %459 : vector<1x64xf32> to vector<8x64xf32>
    %461 = arith.mulf %458, %460 : vector<8x64xf32>
    %c1136 = arith.constant 1136 : index
    %c0_182 = arith.constant 0 : index
    %462 = vector.load %arg1[%c1136, %c0_182] : memref<1848x128xf32, #tpu.memory_space<vmem>>, vector<1x64xf32>
    %463 = vector.broadcast %462 : vector<1x64xf32> to vector<8x64xf32>
    %464 = arith.addf %461, %463 : vector<8x64xf32>
    %c1360 = arith.constant 1360 : index
    %c0_183 = arith.constant 0 : index
    %465 = vector.load %arg1[%c1360, %c0_183] : memref<1848x128xf32, #tpu.memory_space<vmem>>, vector<1x128xf32>
    %c1144 = arith.constant 1144 : index
    %c0_184 = arith.constant 0 : index
    %466 = vector.load %arg1[%c1144, %c0_184] : memref<1848x128xf32, #tpu.memory_space<vmem>>, vector<8x8xf32>
    %cst_185 = arith.constant dense<0.000000e+00> : vector<8x64xf32>
    %467 = tpu.matmul %466, %464, %cst_185 {dimension_numbers = #tpu.dot_dimension_numbers<[1], [0], [0], [1], [0, 0, 1, 1], [], []>} : vector<8x8xf32>, vector<8x64xf32>, vector<8x64xf32> -> vector<8x64xf32>
    %c1152 = arith.constant 1152 : index
    %c0_186 = arith.constant 0 : index
    %468 = vector.load %arg1[%c1152, %c0_186] : memref<1848x128xf32, #tpu.memory_space<vmem>>, vector<64x128xf32>
    %cst_187 = arith.constant dense<0.000000e+00> : vector<8x128xf32>
    %469 = tpu.matmul %467, %468, %cst_187 {dimension_numbers = #tpu.dot_dimension_numbers<[1], [0], [0], [1], [0, 0, 1, 1], [], []>} : vector<8x64xf32>, vector<64x128xf32>, vector<8x128xf32> -> vector<8x128xf32>
    %470 = vector.broadcast %465 : vector<1x128xf32> to vector<8x128xf32>
    %471 = arith.addf %470, %469 : vector<8x128xf32>
    %c1216 = arith.constant 1216 : index
    %c0_188 = arith.constant 0 : index
    %472 = vector.load %arg1[%c1216, %c0_188] : memref<1848x128xf32, #tpu.memory_space<vmem>>, vector<8x8xf32>
    %cst_189 = arith.constant dense<0.000000e+00> : vector<8x64xf32>
    %473 = tpu.matmul %472, %464, %cst_189 {dimension_numbers = #tpu.dot_dimension_numbers<[1], [0], [0], [1], [0, 0, 1, 1], [], []>} : vector<8x8xf32>, vector<8x64xf32>, vector<8x64xf32> -> vector<8x64xf32>
    %c1224 = arith.constant 1224 : index
    %c0_190 = arith.constant 0 : index
    %474 = vector.load %arg1[%c1224, %c0_190] : memref<1848x128xf32, #tpu.memory_space<vmem>>, vector<64x128xf32>
    %cst_191 = arith.constant dense<0.000000e+00> : vector<8x128xf32>
    %475 = tpu.matmul %473, %474, %cst_191 {dimension_numbers = #tpu.dot_dimension_numbers<[1], [0], [0], [1], [0, 0, 1, 1], [], []>} : vector<8x64xf32>, vector<64x128xf32>, vector<8x128xf32> -> vector<8x128xf32>
    %476 = arith.addf %471, %475 : vector<8x128xf32>
    %c1288 = arith.constant 1288 : index
    %c0_192 = arith.constant 0 : index
    %477 = vector.load %arg1[%c1288, %c0_192] : memref<1848x128xf32, #tpu.memory_space<vmem>>, vector<8x8xf32>
    %cst_193 = arith.constant dense<0.000000e+00> : vector<8x64xf32>
    %478 = tpu.matmul %477, %464, %cst_193 {dimension_numbers = #tpu.dot_dimension_numbers<[1], [0], [0], [1], [0, 0, 1, 1], [], []>} : vector<8x8xf32>, vector<8x64xf32>, vector<8x64xf32> -> vector<8x64xf32>
    %c1296 = arith.constant 1296 : index
    %c0_194 = arith.constant 0 : index
    %479 = vector.load %arg1[%c1296, %c0_194] : memref<1848x128xf32, #tpu.memory_space<vmem>>, vector<64x128xf32>
    %cst_195 = arith.constant dense<0.000000e+00> : vector<8x128xf32>
    %480 = tpu.matmul %478, %479, %cst_195 {dimension_numbers = #tpu.dot_dimension_numbers<[1], [0], [0], [1], [0, 0, 1, 1], [], []>} : vector<8x64xf32>, vector<64x128xf32>, vector<8x128xf32> -> vector<8x128xf32>
    %481 = arith.addf %476, %480 : vector<8x128xf32>
    %cst_196 = arith.constant 0.000000e+00 : f32
    %482 = vector.broadcast %cst_196 : f32 to vector<8x128xf32>
    %483 = arith.maximumf %481, %482 : vector<8x128xf32>
    %c1368 = arith.constant 1368 : index
    %c0_197 = arith.constant 0 : index
    %484 = vector.load %arg1[%c1368, %c0_197] : memref<1848x128xf32, #tpu.memory_space<vmem>>, vector<8x8xf32>
    %cst_198 = arith.constant dense<0.000000e+00> : vector<8x128xf32>
    %485 = tpu.matmul %484, %483, %cst_198 {dimension_numbers = #tpu.dot_dimension_numbers<[1], [0], [0], [1], [0, 0, 1, 1], [], []>} : vector<8x8xf32>, vector<8x128xf32>, vector<8x128xf32> -> vector<8x128xf32>
    %c1504 = arith.constant 1504 : index
    %c0_199 = arith.constant 0 : index
    %486 = vector.load %arg1[%c1504, %c0_199] : memref<1848x128xf32, #tpu.memory_space<vmem>>, vector<8x8xf32>
    %cst_200 = arith.constant dense<0.000000e+00> : vector<8x128xf32>
    %487 = tpu.matmul %486, %483, %cst_200 {dimension_numbers = #tpu.dot_dimension_numbers<[1], [0], [0], [1], [0, 0, 1, 1], [], []>} : vector<8x8xf32>, vector<8x128xf32>, vector<8x128xf32> -> vector<8x128xf32>
    %488 = arith.maximumf %485, %487 : vector<8x128xf32>
    %c1376 = arith.constant 1376 : index
    %c0_201 = arith.constant 0 : index
    %489 = vector.load %arg1[%c1376, %c0_201] : memref<1848x128xf32, #tpu.memory_space<vmem>>, vector<128x64xf32>
    %cst_202 = arith.constant dense<0.000000e+00> : vector<8x64xf32>
    %490 = tpu.matmul %488, %489, %cst_202 {dimension_numbers = #tpu.dot_dimension_numbers<[1], [0], [0], [1], [0, 0, 1, 1], [], []>} : vector<8x128xf32>, vector<128x64xf32>, vector<8x64xf32> -> vector<8x64xf32>
    %c1512 = arith.constant 1512 : index
    %c0_203 = arith.constant 0 : index
    %491 = vector.load %arg1[%c1512, %c0_203] : memref<1848x128xf32, #tpu.memory_space<vmem>>, vector<128x64xf32>
    %cst_204 = arith.constant dense<0.000000e+00> : vector<8x64xf32>
    %492 = tpu.matmul %488, %491, %cst_204 {dimension_numbers = #tpu.dot_dimension_numbers<[1], [0], [0], [1], [0, 0, 1, 1], [], []>} : vector<8x128xf32>, vector<128x64xf32>, vector<8x64xf32> -> vector<8x64xf32>
    %493 = arith.maximumf %490, %492 : vector<8x64xf32>
    %c1640 = arith.constant 1640 : index
    %c0_205 = arith.constant 0 : index
    %494 = vector.load %arg1[%c1640, %c0_205] : memref<1848x128xf32, #tpu.memory_space<vmem>>, vector<1x64xf32>
    %495 = vector.broadcast %494 : vector<1x64xf32> to vector<8x64xf32>
    %496 = arith.mulf %493, %495 : vector<8x64xf32>
    %c1648 = arith.constant 1648 : index
    %c0_206 = arith.constant 0 : index
    %497 = vector.load %arg1[%c1648, %c0_206] : memref<1848x128xf32, #tpu.memory_space<vmem>>, vector<1x64xf32>
    %498 = vector.broadcast %497 : vector<1x64xf32> to vector<8x64xf32>
    %499 = arith.addf %496, %498 : vector<8x64xf32>
    %c1800 = arith.constant 1800 : index
    %c0_207 = arith.constant 0 : index
    %500 = vector.load %arg1[%c1800, %c0_207] : memref<1848x128xf32, #tpu.memory_space<vmem>>, vector<1x32xf32>
    %c1656 = arith.constant 1656 : index
    %c0_208 = arith.constant 0 : index
    %501 = vector.load %arg1[%c1656, %c0_208] : memref<1848x128xf32, #tpu.memory_space<vmem>>, vector<8x8xf32>
    %cst_209 = arith.constant dense<0.000000e+00> : vector<8x64xf32>
    %502 = tpu.matmul %501, %499, %cst_209 {dimension_numbers = #tpu.dot_dimension_numbers<[1], [0], [0], [1], [0, 0, 1, 1], [], []>} : vector<8x8xf32>, vector<8x64xf32>, vector<8x64xf32> -> vector<8x64xf32>
    %c1664 = arith.constant 1664 : index
    %c0_210 = arith.constant 0 : index
    %503 = vector.load %arg1[%c1664, %c0_210] : memref<1848x128xf32, #tpu.memory_space<vmem>>, vector<64x32xf32>
    %cst_211 = arith.constant dense<0.000000e+00> : vector<8x32xf32>
    %504 = tpu.matmul %502, %503, %cst_211 {dimension_numbers = #tpu.dot_dimension_numbers<[1], [0], [0], [1], [0, 0, 1, 1], [], []>} : vector<8x64xf32>, vector<64x32xf32>, vector<8x32xf32> -> vector<8x32xf32>
    %505 = vector.broadcast %500 : vector<1x32xf32> to vector<8x32xf32>
    %506 = arith.addf %505, %504 : vector<8x32xf32>
    %c1728 = arith.constant 1728 : index
    %c0_212 = arith.constant 0 : index
    %507 = vector.load %arg1[%c1728, %c0_212] : memref<1848x128xf32, #tpu.memory_space<vmem>>, vector<8x8xf32>
    %cst_213 = arith.constant dense<0.000000e+00> : vector<8x64xf32>
    %508 = tpu.matmul %507, %499, %cst_213 {dimension_numbers = #tpu.dot_dimension_numbers<[1], [0], [0], [1], [0, 0, 1, 1], [], []>} : vector<8x8xf32>, vector<8x64xf32>, vector<8x64xf32> -> vector<8x64xf32>
    %c1736 = arith.constant 1736 : index
    %c0_214 = arith.constant 0 : index
    %509 = vector.load %arg1[%c1736, %c0_214] : memref<1848x128xf32, #tpu.memory_space<vmem>>, vector<64x32xf32>
    %cst_215 = arith.constant dense<0.000000e+00> : vector<8x32xf32>
    %510 = tpu.matmul %508, %509, %cst_215 {dimension_numbers = #tpu.dot_dimension_numbers<[1], [0], [0], [1], [0, 0, 1, 1], [], []>} : vector<8x64xf32>, vector<64x32xf32>, vector<8x32xf32> -> vector<8x32xf32>
    %511 = arith.addf %506, %510 : vector<8x32xf32>
    %cst_216 = arith.constant 0.000000e+00 : f32
    %512 = vector.broadcast %cst_216 : f32 to vector<8x32xf32>
    %513 = arith.maximumf %511, %512 : vector<8x32xf32>
    %c1808 = arith.constant 1808 : index
    %c0_217 = arith.constant 0 : index
    %514 = vector.load %arg1[%c1808, %c0_217] : memref<1848x128xf32, #tpu.memory_space<vmem>>, vector<32x128xf32>
    %cst_218 = arith.constant dense<0.000000e+00> : vector<8x128xf32>
    %515 = tpu.matmul %513, %514, %cst_218 {dimension_numbers = #tpu.dot_dimension_numbers<[1], [0], [0], [1], [0, 0, 1, 1], [], []>} : vector<8x32xf32>, vector<32x128xf32>, vector<8x128xf32> -> vector<8x128xf32>
    %c1840 = arith.constant 1840 : index
    %c0_219 = arith.constant 0 : index
    %516 = vector.load %arg1[%c1840, %c0_219] : memref<1848x128xf32, #tpu.memory_space<vmem>>, vector<1x128xf32>
    %517 = vector.broadcast %516 : vector<1x128xf32> to vector<8x128xf32>
    %518 = arith.addf %515, %517 : vector<8x128xf32>
    %c0_220 = arith.constant 0 : index
    %c0_221 = arith.constant 0 : index
    %519 = vector.load %arg2[%c0_220, %c0_221] : memref<8x128xf32, #tpu.memory_space<vmem>>, vector<8x128xf32>
    tpu.vector_store %arg2[%c0_220, %c0_221], %518 {strides = array<i32>} : memref<8x128xf32, #tpu.memory_space<vmem>>, vector<8x128xf32>,
    return
  }
}

</mosaic_0001>

<llo_original>
// kernel: tpu_custom_call.1
$region0: #{tpu_custom_call.1}
  #allocation0 [shape = 'u32[]', space=smem, size = 0x4, offset = 0x4, fixed_abs, tag = 'smem constant byte address 0x4 - core index']
  #allocation1 [shape = 'u32[144,128]{1,0:T(1,128)}', space=vmem, size = 0x12000, scoped, tag = 'internal scratch']
  %s0 = inlined_call_operand.vmem [shape: f32[16,8], index: 0, kind: input, shape index: {}]
  %s1 = inlined_call_operand.hbm [shape: f32[1848,128], index: 1, kind: input, shape index: {}]
  %s2 = inlined_call_operand.hbm [shape: f32[8,128], index: 2, kind: output, shape index: {}]
  %s3 = sld [smem:[#allocation0]]
  $region22: #{tpu_custom_call.1} parent=0
    _
  %s5 = ssub.s32 1, %s3
  %s6 = scalar_select 0, %s5, %s3
  $region1: #{tpu_custom_call.1} parent=0
    #allocation2 [shape = 'u8[946176]{0}', space=vmem, size = 0xe7000, scoped, tag = 'input window, operand 1, single buffered']
    #allocation3 [shape = 's32[1]{0}', space=sflag, size = 0x4, scoped, tag = 'scoped memory for tpu_custom_call.1']
    #allocation4 [shape = 's32[1]{0}', space=sflag, size = 0x4, scoped, tag = 'scoped memory for tpu_custom_call.1']
    #allocation5 [shape = 'u8[4096]{0}', space=vmem, size = 0x1000, scoped, tag = 'output window, operand 0, single buffered']
    %7 = vsyncpa [#allocation3], 0
    %8 = vsyncpa [#allocation4], 0
    // Predicated region
    $region2: #{tpu_custom_call.1} parent=1 // pred_check
      _
    $region3: #{tpu_custom_call.1} parent=1 // pred_check_branch
      %10 = sbr.rel (0) target = $region5
    $region4: #{tpu_custom_call.1} parent=1 // pred_region
      _
    $region5: #{tpu_custom_call.1} parent=1 // pred_fallthru
      _
    // Predicated region
    $region6: #{tpu_custom_call.1} parent=1 // pred_check
      _
    $region7: #{tpu_custom_call.1} parent=1 // pred_check_branch
      %12 = sbr.rel (0) target = $region9
    $region8: #{tpu_custom_call.1} parent=1 // pred_region
      %s14 = ssub.s32 29568, 29568
      %15 = vsyncadd [#allocation3], %s14
      %s16 = sshll.u32 [#allocation2], 4
      %s17 = int_to_ptr.vmem [resolvable:$true] %s16
      %22 = dma.hbm_to_vmem [thread:$0]  %s1, 29568, %s17, [#allocation3], 128, 128, 8
    $region9: #{tpu_custom_call.1} parent=1 // pred_fallthru
      _
    // Predicated region
    $region10: #{tpu_custom_call.1} parent=1 // pred_check
      _
    $region11: #{tpu_custom_call.1} parent=1 // pred_check_branch
      %24 = sbr.rel (0) target = $region13
    $region12: #{tpu_custom_call.1} parent=1 // pred_region
      %25 = dma.done [#allocation3], 29568
    $region13: #{tpu_custom_call.1} parent=1 // pred_fallthru
      _
    %v26 = vld [vmem:[#allocation2 + $0x20] sm:$0xff]
    %v27 = vld [vmem:[#allocation2 + $0x28] sm:$0xff]
    %v28 = vld [vmem:[#allocation2 + $0x10] sm:$0x1]
    %v29 = vld [vmem:[#allocation2 + $0x18] sm:$0x1]
    %v30 = vld [vmem:[#allocation2 + $0x30] sm:$0xff]
    %v31 = vld [vmem:[#allocation2 + $0x38] sm:$0xff]
    %v32 = vld [vmem:[#allocation2 + $0x40] sm:$0xff]
    %v33 = vld [vmem:[#allocation2 + $0x48] sm:$0xff]
    %v34 = vld [vmem:[#allocation2 + $0xa0] sm:$0xff]
    %v35 = vld [vmem:[#allocation2 + $0xa8] sm:$0xff]
    %v36 = vld [vmem:[#allocation2 + $0xb0] sm:$0xff]
    %v37 = vld [vmem:[#allocation2 + $0xb8] sm:$0xff]
    %v38 = vld [vmem:[#allocation2 + $0x110] sm:$0xff]
    %v39 = vld [vmem:[#allocation2 + $0x118] sm:$0xff]
    %v40 = vld [vmem:[#allocation2 + $0x120] sm:$0xff]
    %v41 = vld [vmem:[#allocation2 + $0x128] sm:$0xff]
    %v42 = vld [vmem:[#allocation2 + $0x180] sm:$0xff]
    %v43 = vld [vmem:[#allocation2 + $0x188] sm:$0xff]
    %v44 = vld [vmem:[#allocation2 + $0x190] sm:$0xff]
    %v45 = vld [vmem:[#allocation2 + $0x198] sm:$0xff]
    %v46 = vld [vmem:[#allocation2 + $0x50] sm:$0x1]
    %v47 = vld [vmem:[#allocation2 + $0xc0] sm:$0x1]
    %v48 = vld [vmem:[#allocation2 + $0x130] sm:$0x1]
    %v49 = vld [vmem:[#allocation2 + $0x1a0] sm:$0x1]
    %v50 = vld [vmem:[#allocation2 + $0x58] sm:$0xff]
    %v51 = vld [vmem:[#allocation2 + $0x60] sm:$0xff]
    %v52 = vld [vmem:[#allocation2 + $0x68] sm:$0xff]
    %v53 = vld [vmem:[#allocation2 + $0x70] sm:$0xff]
    %v54 = vld [vmem:[#allocation2 + $0xc8] sm:$0xff]
    %v55 = vld [vmem:[#allocation2 + $0xd0] sm:$0xff]
    %v56 = vld [vmem:[#allocation2 + $0xd8] sm:$0xff]
    %v57 = vld [vmem:[#allocation2 + $0xe0] sm:$0xff]
    %v58 = vld [vmem:[#allocation2 + $0x138] sm:$0xff]
    %v59 = vld [vmem:[#allocation2 + $0x140] sm:$0xff]
    %v60 = vld [vmem:[#allocation2 + $0x148] sm:$0xff]
    %v61 = vld [vmem:[#allocation2 + $0x150] sm:$0xff]
    %v62 = vld [vmem:[#allocation2 + $0x1a8] sm:$0xff]
    %v63 = vld [vmem:[#allocation2 + $0x1b0] sm:$0xff]
    %v64 = vld [vmem:[#allocation2 + $0x1b8] sm:$0xff]
    %v65 = vld [vmem:[#allocation2 + $0x1c0] sm:$0xff]
    %v66 = vld [vmem:[#allocation2 + $0x78] sm:$0x1]
    %v67 = vld [vmem:[#allocation2 + $0xe8] sm:$0x1]
    %v68 = vld [vmem:[#allocation2 + $0x158] sm:$0x1]
    %v69 = vld [vmem:[#allocation2 + $0x1c8] sm:$0x1]
    %v70 = vld [vmem:[#allocation2 + $0x80] sm:$0xff]
    %v71 = vld [vmem:[#allocation2 + $0x88] sm:$0xff]
    %v72 = vld [vmem:[#allocation2 + $0x90] sm:$0xff]
    %v73 = vld [vmem:[#allocation2 + $0x98] sm:$0xff]
    %v74 = vld [vmem:[#allocation2 + $0xf0] sm:$0xff]
    %v75 = vld [vmem:[#allocation2 + $0xf8] sm:$0xff]
    %v76 = vld [vmem:[#allocation2 + $0x100] sm:$0xff]
    %v77 = vld [vmem:[#allocation2 + $0x108] sm:$0xff]
    %v78 = vld [vmem:[#allocation2 + $0x160] sm:$0xff]
    %v79 = vld [vmem:[#allocation2 + $0x168] sm:$0xff]
    %v80 = vld [vmem:[#allocation2 + $0x170] sm:$0xff]
    %v81 = vld [vmem:[#allocation2 + $0x178] sm:$0xff]
    %v82 = vld [vmem:[#allocation2 + $0x1d0] sm:$0xff]
    %v83 = vld [vmem:[#allocation2 + $0x1d8] sm:$0xff]
    %v84 = vld [vmem:[#allocation2 + $0x1e0] sm:$0xff]
    %v85 = vld [vmem:[#allocation2 + $0x1e8] sm:$0xff]
    %v86 = vld [vmem:[#allocation2 + $0x1f0] sm:$0x1]
    %v87 = vld [vmem:[#allocation2 + $0x1f8] sm:$0xff]
    %v88 = vld [vmem:[#allocation2 + $0x200] sm:$0xff]
    %v89 = vld [vmem:[#allocation2 + $0x208] sm:$0xff]
    %v90 = vld [vmem:[#allocation2 + $0x210] sm:$0xff]
    %v91 = vld [vmem:[#allocation2 + $0x218] sm:$0x1]
    %v92 = vld [vmem:[#allocation2 + $0x220] sm:$0x1]
    %v93 = vld [vmem:[#allocation2 + $0x228] sm:$0x1]
    %v94 = vld [vmem:[#allocation2 + $0x230] sm:$0xff]
    %v95 = vld [vmem:[#allocation2 + $0x238] sm:$0xff]
    %v96 = vld [vmem:[#allocation2 + $0x240] sm:$0xff]
    %v97 = vld [vmem:[#allocation2 + $0x248] sm:$0xff]
    %v98 = vld [vmem:[#allocation2 + $0x250] sm:$0x1]
    %v99 = vld [vmem:[#allocation2 + $0x258] sm:$0xff]
    %v100 = vld [vmem:[#allocation2 + $0x260] sm:$0xff]
    %v101 = vld [vmem:[#allocation2 + $0x268] sm:$0xff]
    %v102 = vld [vmem:[#allocation2 + $0x270] sm:$0xff]
    %v103 = vld [vmem:[#allocation2 + $0x278] sm:$0xff]
    %v104 = vld [vmem:[#allocation2 + $0x280] sm:$0xff]
    %v105 = vld [vmem:[#allocation2 + $0x288] sm:$0xff]
    %v106 = vld [vmem:[#allocation2 + $0x290] sm:$0xff]
    %v107 = vld [vmem:[#allocation2 + $0x298] sm:$0x1]
    %v108 = vld [vmem:[#allocation2 + $0x2a0] sm:$0x1]
    %v109 = vld [vmem:[#allocation2 + $0x2a8] sm:$0x1]
    %v110 = vld [vmem:[#allocation2 + $0x2b0] sm:$0xff]
    %v111 = vld [vmem:[#allocation2 + $0x2b8] sm:$0xff]
    %v112 = vld [vmem:[%s0] sm:$0xff]
    %v113 = vld [vmem:[%s0 + $0x8] sm:$0xff]
    %v114 = vld [vmem:[#allocation2] sm:$0xff]
    %v115 = vld [vmem:[#allocation2 + $0x8] sm:$0x1]
    %v116 = vlaneseq
    %v117 = vshrl.u32 %v116, 7
    %v118 = vsub.s32 0, %v117
    %v119 = vrot.slane %v115, %v118
    %vm120 = vcmask 64512
    %v122 = vsel %vm120, %v112, 0
    %v125 = vsel %vm120, %v113, 0
    %127 = vmatprep.subr.mxu0 0.0
    %128 = vmatpush1.msra.mxu0 %v114
    %129 = vmatprep.subr.mxu0 0.0
    %130 = vmatpush1.msra.mxu0 0.0
    %131 = vmatprep.subr.mxu0 0.0
    %132 = vmatpush1.msra.mxu0 0.0
    %133 = vmatprep.subr.mxu0 0.0
    %134 = vmatpush1.msra.mxu0 0.0
    %135 = vmatprep.subr.mxu0 0.0
    %136 = vmatpush1.msra.mxu0 0.0
    %137 = vmatprep.subr.mxu0 0.0
    %138 = vmatpush1.msra.mxu0 0.0
    %139 = vmatprep.subr.mxu0 0.0
    %140 = vmatpush1.msra.mxu0 0.0
    %141 = vmatprep.subr.mxu0 0.0
    %142 = vmatpush1.msra.mxu0 0.0
    %143 = vmatprep.subr.mxu0 0.0
    %144 = vmatpush1.msra.mxu0 0.0
    %145 = vmatprep.subr.mxu0 0.0
    %146 = vmatpush1.msra.mxu0 0.0
    %147 = vmatprep.subr.mxu0 0.0
    %148 = vmatpush1.msra.mxu0 0.0
    %149 = vmatprep.subr.mxu0 0.0
    %150 = vmatpush1.msra.mxu0 0.0
    %151 = vmatprep.subr.mxu0 0.0
    %152 = vmatpush1.msra.mxu0 0.0
    %153 = vmatprep.subr.mxu0 0.0
    %154 = vmatpush1.msra.mxu0 0.0
    %155 = vmatprep.subr.mxu0 0.0
    %156 = vmatpush1.msra.mxu0 0.0
    %157 = vmatprep.subr.mxu0 0.0
    %158 = vmatpush1.msra.mxu0 0.0
    %159 = vmatprep.subr.mxu0 0.0
    %160 = vmatpush1.msra.mxu0 0.0
    %161 = vmatprep.subr.mxu0 0.0
    %162 = vmatpush1.msra.mxu0 0.0
    %163 = vmatprep.subr.mxu0 0.0
    %164 = vmatpush1.msra.mxu0 0.0
    %165 = vmatprep.subr.mxu0 0.0
    %166 = vmatpush1.msra.mxu0 0.0
    %167 = vmatprep.subr.mxu0 0.0
    %168 = vmatpush1.msra.mxu0 0.0
    %169 = vmatprep.subr.mxu0 0.0
    %170 = vmatpush1.msra.mxu0 0.0
    %171 = vmatprep.subr.mxu0 0.0
    %172 = vmatpush1.msra.mxu0 0.0
    %173 = vmatprep.subr.mxu0 0.0
    %174 = vmatpush1.msra.mxu0 0.0
    %175 = vmatprep.subr.mxu0 0.0
    %176 = vmatpush1.msra.mxu0 0.0
    %177 = vmatprep.subr.mxu0 0.0
    %178 = vmatpush1.msra.mxu0 0.0
    %179 = vmatprep.subr.mxu0 0.0
    %180 = vmatpush1.msra.mxu0 0.0
    %181 = vmatprep.subr.mxu0 0.0
    %182 = vmatpush1.msra.mxu0 0.0
    %183 = vmatprep.subr.mxu0 0.0
    %184 = vmatpush1.msra.mxu0 0.0
    %185 = vmatprep.subr.mxu0 0.0
    %186 = vmatpush1.msra.mxu0 0.0
    %187 = vmatprep.subr.mxu0 0.0
    %188 = vmatpush1.msra.mxu0 0.0
    %189 = vmatprep.subr.mxu0 0.0
    %190 = vmatpush1.msra.mxu0 0.0
    %191 = vmatprep.mubr.f32.mxu0 0.0
    %192 = vmatmul.mubr.f32.gmra.mrb[0].mxu0 %v122
    %v193 = vpop.f32.mrb[0].mxu0
    %v194 = vadd.f32 %v119, %v193
    %v195 = vpop.f32.mrb[0].mxu0
    %196 = vmatprep.mubr.f32.mxu0 0.0
    %197 = vmatmul.mubr.f32.gmra.mrb[0].mxu0 %v125
    %v198 = vpop.f32.mrb[0].mxu0
    %v199 = vadd.f32 %v119, %v198
    %v200 = vpop.f32.mrb[0].mxu0
    %201 = vdwg.mxu0
    %vm202 = vcmask 261120
    %v203 = vsel %vm202, %v194, 0.0
    %204 = vadd.xlane.f32.xlu0 %v203
    %v205 = vpop.xlane.xlu0 %204
    %v206 = vsel %vm202, %v199, 0.0
    %207 = vadd.xlane.f32.xlu0 %v206
    %v208 = vpop.xlane.xlu0 %207
    %v209 = vrcp.pop 32.0
    %v210 = vmul.f32 %v205, %v209
    %v211 = vmul.f32 %v208, %v209
    %v212 = vsub.f32 %v194, %v210
    %v213 = vsub.f32 %v199, %v211
    %v214 = vmul.f32 %v212, %v212
    %v215 = vmul.f32 %v213, %v213
    %v216 = vsel %vm202, %v214, 0.0
    %217 = vadd.xlane.f32.xlu0 %v216
    %v218 = vpop.xlane.xlu0 %217
    %v219 = vsel %vm202, %v215, 0.0
    %220 = vadd.xlane.f32.xlu0 %v219
    %v221 = vpop.xlane.xlu0 %220
    %v222 = vmul.f32 %v218, %v209
    %v223 = vmul.f32 %v221, %v209
    %v224 = vadd.f32 %v222, 1e-12
    %v225 = vadd.f32 %v223, 1e-12
    %v226 = vrsqrt.pop %v224
    %v227 = vrsqrt.pop %v225
    %v228 = vmul.f32 %v212, %v226
    %v229 = vmul.f32 %v213, %v227
    %v230 = vlaneseq
    %v231 = vshrl.u32 %v230, 7
    %v232 = vsub.s32 0, %v231
    %v233 = vrot.slane %v28, %v232
    %v234 = vmul.f32 %v233, %v228
    %v235 = vmul.f32 %v233, %v229
    %v236 = vlaneseq
    %v237 = vshrl.u32 %v236, 7
    %v238 = vsub.s32 0, %v237
    %v239 = vrot.slane %v29, %v238
    %v240 = vadd.f32 %v234, %v239
    %v241 = vadd.f32 %v235, %v239
    %v242 = vadd.f32 %v240, %v26
    %v243 = vadd.f32 %v241, %v27
    %v244 = vsel %vm202, %v242, 0.0
    %245 = vadd.xlane.f32.xlu0 %v244
    %v246 = vpop.xlane.xlu0 %245
    %v247 = vsel %vm202, %v243, 0.0
    %248 = vadd.xlane.f32.xlu0 %v247
    %v249 = vpop.xlane.xlu0 %248
    %v250 = vmul.f32 %v246, %v209
    %v251 = vmul.f32 %v249, %v209
    %v252 = vsub.f32 %v242, %v250
    %v253 = vsub.f32 %v243, %v251
    %v254 = vmul.f32 %v252, %v252
    %v255 = vmul.f32 %v253, %v253
    %v256 = vsel %vm202, %v254, 0.0
    %257 = vadd.xlane.f32.xlu0 %v256
    %v258 = vpop.xlane.xlu0 %257
    %v259 = vsel %vm202, %v255, 0.0
    %260 = vadd.xlane.f32.xlu0 %v259
    %v261 = vpop.xlane.xlu0 %260
    %v262 = vmul.f32 %v258, %v209
    %v263 = vmul.f32 %v261, %v209
    %v264 = vadd.f32 %v262, 1e-12
    %v265 = vadd.f32 %v263, 1e-12
    %v266 = vrsqrt.pop %v264
    %v267 = vrsqrt.pop %v265
    %v268 = vmul.f32 %v252, %v266
    %v269 = vmul.f32 %v253, %v267
    %v270 = vmul.f32 %v233, %v268
    %v271 = vmul.f32 %v233, %v269
    %v272 = vadd.f32 %v270, %v239
    %v273 = vadd.f32 %v271, %v239
    %v274 = vlaneseq
    %v275 = vshrl.u32 %v274, 7
    %v276 = vsub.s32 0, %v275
    %v277 = vrot.slane %v46, %v276
    %v279 = vsel %vm202, %v272, 0
    %v282 = vsel %vm202, %v273, 0
    %284 = vmatprep.subr.mxu0 0.0
    %285 = vmatpush1.msra.mxu0 %v30
    %286 = vmatprep.subr.mxu0 0.0
    %287 = vmatpush1.msra.mxu0 %v31
    %288 = vmatprep.subr.mxu0 0.0
    %289 = vmatpush1.msra.mxu0 %v32
    %290 = vmatprep.subr.mxu0 0.0
    %291 = vmatpush1.msra.mxu0 %v33
    %292 = vmatprep.subr.mxu0 0.0
    %293 = vmatpush1.msra.mxu0 0.0
    %294 = vmatprep.subr.mxu0 0.0
    %295 = vmatpush1.msra.mxu0 0.0
    %296 = vmatprep.subr.mxu0 0.0
    %297 = vmatpush1.msra.mxu0 0.0
    %298 = vmatprep.subr.mxu0 0.0
    %299 = vmatpush1.msra.mxu0 0.0
    %300 = vmatprep.subr.mxu0 0.0
    %301 = vmatpush1.msra.mxu0 0.0
    %302 = vmatprep.subr.mxu0 0.0
    %303 = vmatpush1.msra.mxu0 0.0
    %304 = vmatprep.subr.mxu0 0.0
    %305 = vmatpush1.msra.mxu0 0.0
    %306 = vmatprep.subr.mxu0 0.0
    %307 = vmatpush1.msra.mxu0 0.0
    %308 = vmatprep.subr.mxu0 0.0
    %309 = vmatpush1.msra.mxu0 0.0
    %310 = vmatprep.subr.mxu0 0.0
    %311 = vmatpush1.msra.mxu0 0.0
    %312 = vmatprep.subr.mxu0 0.0
    %313 = vmatpush1.msra.mxu0 0.0
    %314 = vmatprep.subr.mxu0 0.0
    %315 = vmatpush1.msra.mxu0 0.0
    %316 = vmatprep.subr.mxu0 0.0
    %317 = vmatpush1.msra.mxu0 0.0
    %318 = vmatprep.subr.mxu0 0.0
    %319 = vmatpush1.msra.mxu0 0.0
    %320 = vmatprep.subr.mxu0 0.0
    %321 = vmatpush1.msra.mxu0 0.0
    %322 = vmatprep.subr.mxu0 0.0
    %323 = vmatpush1.msra.mxu0 0.0
    %324 = vmatprep.subr.mxu0 0.0
    %325 = vmatpush1.msra.mxu0 0.0
    %326 = vmatprep.subr.mxu0 0.0
    %327 = vmatpush1.msra.mxu0 0.0
    %328 = vmatprep.subr.mxu0 0.0
    %329 = vmatpush1.msra.mxu0 0.0
    %330 = vmatprep.subr.mxu0 0.0
    %331 = vmatpush1.msra.mxu0 0.0
    %332 = vmatprep.subr.mxu0 0.0
    %333 = vmatpush1.msra.mxu0 0.0
    %334 = vmatprep.subr.mxu0 0.0
    %335 = vmatpush1.msra.mxu0 0.0
    %336 = vmatprep.subr.mxu0 0.0
    %337 = vmatpush1.msra.mxu0 0.0
    %338 = vmatprep.subr.mxu0 0.0
    %339 = vmatpush1.msra.mxu0 0.0
    %340 = vmatprep.subr.mxu0 0.0
    %341 = vmatpush1.msra.mxu0 0.0
    %342 = vmatprep.subr.mxu0 0.0
    %343 = vmatpush1.msra.mxu0 0.0
    %344 = vmatprep.subr.mxu0 0.0
    %345 = vmatpush1.msra.mxu0 0.0
    %346 = vmatprep.subr.mxu0 0.0
    %347 = vmatpush1.msra.mxu0 0.0
    %348 = vmatprep.mubr.f32.mxu0 0.0
    %349 = vmatmul.mubr.f32.gmra.mrb[0].mxu0 %v279
    %v350 = vpop.f32.mrb[0].mxu0
    %v351 = vadd.f32 %v277, %v350
    %v352 = vpop.f32.mrb[0].mxu0
    %353 = vmatprep.mubr.f32.mxu0 0.0
    %354 = vmatmul.mubr.f32.gmra.mrb[0].mxu0 %v282
    %v355 = vpop.f32.mrb[0].mxu0
    %v356 = vadd.f32 %v277, %v355
    %v357 = vpop.f32.mrb[0].mxu0
    %358 = vdwg.mxu0
    %v359 = vlaneseq
    %v360 = vshrl.u32 %v359, 7
    %v361 = vsub.s32 0, %v360
    %v362 = vrot.slane %v66, %v361
    %363 = vmatprep.subr.mxu0 0.0
    %364 = vmatpush1.msra.mxu0 %v50
    %365 = vmatprep.subr.mxu0 0.0
    %366 = vmatpush1.msra.mxu0 %v51
    %367 = vmatprep.subr.mxu0 0.0
    %368 = vmatpush1.msra.mxu0 %v52
    %369 = vmatprep.subr.mxu0 0.0
    %370 = vmatpush1.msra.mxu0 %v53
    %371 = vmatprep.subr.mxu0 0.0
    %372 = vmatpush1.msra.mxu0 0.0
    %373 = vmatprep.subr.mxu0 0.0
    %374 = vmatpush1.msra.mxu0 0.0
    %375 = vmatprep.subr.mxu0 0.0
    %376 = vmatpush1.msra.mxu0 0.0
    %377 = vmatprep.subr.mxu0 0.0
    %378 = vmatpush1.msra.mxu0 0.0
    %379 = vmatprep.subr.mxu0 0.0
    %380 = vmatpush1.msra.mxu0 0.0
    %381 = vmatprep.subr.mxu0 0.0
    %382 = vmatpush1.msra.mxu0 0.0
    %383 = vmatprep.subr.mxu0 0.0
    %384 = vmatpush1.msra.mxu0 0.0
    %385 = vmatprep.subr.mxu0 0.0
    %386 = vmatpush1.msra.mxu0 0.0
    %387 = vmatprep.subr.mxu0 0.0
    %388 = vmatpush1.msra.mxu0 0.0
    %389 = vmatprep.subr.mxu0 0.0
    %390 = vmatpush1.msra.mxu0 0.0
    %391 = vmatprep.subr.mxu0 0.0
    %392 = vmatpush1.msra.mxu0 0.0
    %393 = vmatprep.subr.mxu0 0.0
    %394 = vmatpush1.msra.mxu0 0.0
    %395 = vmatprep.subr.mxu0 0.0
    %396 = vmatpush1.msra.mxu0 0.0
    %397 = vmatprep.subr.mxu0 0.0
    %398 = vmatpush1.msra.mxu0 0.0
    %399 = vmatprep.subr.mxu0 0.0
    %400 = vmatpush1.msra.mxu0 0.0
    %401 = vmatprep.subr.mxu0 0.0
    %402 = vmatpush1.msra.mxu0 0.0
    %403 = vmatprep.subr.mxu0 0.0
    %404 = vmatpush1.msra.mxu0 0.0
    %405 = vmatprep.subr.mxu0 0.0
    %406 = vmatpush1.msra.mxu0 0.0
    %407 = vmatprep.subr.mxu0 0.0
    %408 = vmatpush1.msra.mxu0 0.0
    %409 = vmatprep.subr.mxu0 0.0
    %410 = vmatpush1.msra.mxu0 0.0
    %411 = vmatprep.subr.mxu0 0.0
    %412 = vmatpush1.msra.mxu0 0.0
    %413 = vmatprep.subr.mxu0 0.0
    %414 = vmatpush1.msra.mxu0 0.0
    %415 = vmatprep.subr.mxu0 0.0
    %416 = vmatpush1.msra.mxu0 0.0
    %417 = vmatprep.subr.mxu0 0.0
    %418 = vmatpush1.msra.mxu0 0.0
    %419 = vmatprep.subr.mxu0 0.0
    %420 = vmatpush1.msra.mxu0 0.0
    %421 = vmatprep.subr.mxu0 0.0
    %422 = vmatpush1.msra.mxu0 0.0
    %423 = vmatprep.subr.mxu0 0.0
    %424 = vmatpush1.msra.mxu0 0.0
    %425 = vmatprep.subr.mxu0 0.0
    %426 = vmatpush1.msra.mxu0 0.0
    %427 = vmatprep.mubr.f32.mxu0 0.0
    %428 = vmatmul.mubr.f32.gmra.mrb[0].mxu0 %v279
    %v429 = vpop.f32.mrb[0].mxu0
    %v430 = vadd.f32 %v362, %v429
    %v431 = vpop.f32.mrb[0].mxu0
    %432 = vmatprep.mubr.f32.mxu0 0.0
    %433 = vmatmul.mubr.f32.gmra.mrb[0].mxu0 %v282
    %v434 = vpop.f32.mrb[0].mxu0
    %v435 = vadd.f32 %v362, %v434
    %v436 = vpop.f32.mrb[0].mxu0
    %437 = vdwg.mxu0
    %v439 = vsel %vm120, %v351, 0
    %v442 = vsel %vm120, %v356, 0
    %v445 = vsel %vm120, %v430, 0
    %v448 = vsel %vm120, %v435, 0
    %450 = vmatprep.subr.mxu0 0.0
    %451 = vmatpush1.xpose.msra.mxu0 %v445
    %452 = vmatprep.subr.mxu0 0.0
    %453 = vmatpush1.xpose.msra.mxu0 %v448
    %454 = vmatprep.subr.mxu0 0.0
    %455 = vmatpush1.xpose.msra.mxu0 0.0
    %456 = vmatprep.subr.mxu0 0.0
    %457 = vmatpush1.xpose.msra.mxu0 0.0
    %458 = vmatprep.subr.mxu0 0.0
    %459 = vmatpush1.xpose.msra.mxu0 0.0
    %460 = vmatprep.subr.mxu0 0.0
    %461 = vmatpush1.xpose.msra.mxu0 0.0
    %462 = vmatprep.subr.mxu0 0.0
    %463 = vmatpush1.xpose.msra.mxu0 0.0
    %464 = vmatprep.subr.mxu0 0.0
    %465 = vmatpush1.xpose.msra.mxu0 0.0
    %466 = vmatprep.subr.mxu0 0.0
    %467 = vmatpush1.xpose.msra.mxu0 0.0
    %468 = vmatprep.subr.mxu0 0.0
    %469 = vmatpush1.xpose.msra.mxu0 0.0
    %470 = vmatprep.subr.mxu0 0.0
    %471 = vmatpush1.xpose.msra.mxu0 0.0
    %472 = vmatprep.subr.mxu0 0.0
    %473 = vmatpush1.xpose.msra.mxu0 0.0
    %474 = vmatprep.subr.mxu0 0.0
    %475 = vmatpush1.xpose.msra.mxu0 0.0
    %476 = vmatprep.subr.mxu0 0.0
    %477 = vmatpush1.xpose.msra.mxu0 0.0
    %478 = vmatprep.subr.mxu0 0.0
    %479 = vmatpush1.xpose.msra.mxu0 0.0
    %480 = vmatprep.subr.mxu0 0.0
    %481 = vmatpush1.xpose.msra.mxu0 0.0
    %482 = vmatprep.subr.mxu0 0.0
    %483 = vmatpush1.xpose.msra.mxu0 0.0
    %484 = vmatprep.subr.mxu0 0.0
    %485 = vmatpush1.xpose.msra.mxu0 0.0
    %486 = vmatprep.subr.mxu0 0.0
    %487 = vmatpush1.xpose.msra.mxu0 0.0
    %488 = vmatprep.subr.mxu0 0.0
    %489 = vmatpush1.xpose.msra.mxu0 0.0
    %490 = vmatprep.subr.mxu0 0.0
    %491 = vmatpush1.xpose.msra.mxu0 0.0
    %492 = vmatprep.subr.mxu0 0.0
    %493 = vmatpush1.xpose.msra.mxu0 0.0
    %494 = vmatprep.subr.mxu0 0.0
    %495 = vmatpush1.xpose.msra.mxu0 0.0
    %496 = vmatprep.subr.mxu0 0.0
    %497 = vmatpush1.xpose.msra.mxu0 0.0
    %498 = vmatprep.subr.mxu0 0.0
    %499 = vmatpush1.xpose.msra.mxu0 0.0
    %500 = vmatprep.subr.mxu0 0.0
    %501 = vmatpush1.xpose.msra.mxu0 0.0
    %502 = vmatprep.subr.mxu0 0.0
    %503 = vmatpush1.xpose.msra.mxu0 0.0
    %504 = vmatprep.subr.mxu0 0.0
    %505 = vmatpush1.xpose.msra.mxu0 0.0
    %506 = vmatprep.subr.mxu0 0.0
    %507 = vmatpush1.xpose.msra.mxu0 0.0
    %508 = vmatprep.subr.mxu0 0.0
    %509 = vmatpush1.xpose.msra.mxu0 0.0
    %510 = vmatprep.subr.mxu0 0.0
    %511 = vmatpush1.xpose.msra.mxu0 0.0
    %512 = vmatprep.subr.mxu0 0.0
    %513 = vmatpush1.xpose.msra.mxu0 0.0
    %514 = vmatprep.mubr.f32.mxu0 0.0
    %515 = vmatmul.mubr.f32.gmra.mrb[0].mxu0 %v439
    %v516 = vpop.f32.mrb[0].mxu0
    %v517 = vadd.f32 %v110, %v516
    %v518 = vpop.f32.mrb[0].mxu0
    %519 = vmatprep.mubr.f32.mxu0 0.0
    %520 = vmatmul.mubr.f32.gmra.mrb[0].mxu0 %v442
    %v521 = vpop.f32.mrb[0].mxu0
    %v522 = vadd.f32 %v111, %v521
    %v523 = vpop.f32.mrb[0].mxu0
    %524 = vdwg.mxu0
    %vm525 = vcmask 130048
    %v526 = vsel %vm525, %v517, -inf
    %527 = vmax.xlane.f32.xlu0 %v526
    %v528 = vpop.xlane.xlu0 %527
    %v529 = vsel %vm525, %v522, -inf
    %530 = vmax.xlane.f32.xlu0 %v529
    %v531 = vpop.xlane.xlu0 %530
    %v532 = vsub.f32 %v517, %v528
    %v533 = vsub.f32 %v522, %v531
    %v534 = vmul.f32 %v532, 1.442695
    %v535 = vpow.pop %v534
    %v536 = vmul.f32 %v533, 1.442695
    %v537 = vpow.pop %v536
    %v538 = vsel %vm525, %v535, 0.0
    %539 = vadd.xlane.f32.xlu0 %v538
    %v540 = vpop.xlane.xlu0 %539
    %v541 = vsel %vm525, %v537, 0.0
    %542 = vadd.xlane.f32.xlu0 %v541
    %v543 = vpop.xlane.xlu0 %542
    %v544 = vrcp.pop %v540
    %v545 = vrcp.pop %v543
    %v546 = vmul.f32 %v535, %v544
    %v547 = vmul.f32 %v537, %v545
    %548 = vmatprep.subr.mxu0 0.0
    %549 = vmatpush1.msra.mxu0 %v70
    %550 = vmatprep.subr.mxu0 0.0
    %551 = vmatpush1.msra.mxu0 %v71
    %552 = vmatprep.subr.mxu0 0.0
    %553 = vmatpush1.msra.mxu0 %v72
    %554 = vmatprep.subr.mxu0 0.0
    %555 = vmatpush1.msra.mxu0 %v73
    %556 = vmatprep.subr.mxu0 0.0
    %557 = vmatpush1.msra.mxu0 0.0
    %558 = vmatprep.subr.mxu0 0.0
    %559 = vmatpush1.msra.mxu0 0.0
    %560 = vmatprep.subr.mxu0 0.0
    %561 = vmatpush1.msra.mxu0 0.0
    %562 = vmatprep.subr.mxu0 0.0
    %563 = vmatpush1.msra.mxu0 0.0
    %564 = vmatprep.subr.mxu0 0.0
    %565 = vmatpush1.msra.mxu0 0.0
    %566 = vmatprep.subr.mxu0 0.0
    %567 = vmatpush1.msra.mxu0 0.0
    %568 = vmatprep.subr.mxu0 0.0
    %569 = vmatpush1.msra.mxu0 0.0
    %570 = vmatprep.subr.mxu0 0.0
    %571 = vmatpush1.msra.mxu0 0.0
    %572 = vmatprep.subr.mxu0 0.0
    %573 = vmatpush1.msra.mxu0 0.0
    %574 = vmatprep.subr.mxu0 0.0
    %575 = vmatpush1.msra.mxu0 0.0
    %576 = vmatprep.subr.mxu0 0.0
    %577 = vmatpush1.msra.mxu0 0.0
    %578 = vmatprep.subr.mxu0 0.0
    %579 = vmatpush1.msra.mxu0 0.0
    %580 = vmatprep.subr.mxu0 0.0
    %581 = vmatpush1.msra.mxu0 0.0
    %582 = vmatprep.subr.mxu0 0.0
    %583 = vmatpush1.msra.mxu0 0.0
    %584 = vmatprep.subr.mxu0 0.0
    %585 = vmatpush1.msra.mxu0 0.0
    %586 = vmatprep.subr.mxu0 0.0
    %587 = vmatpush1.msra.mxu0 0.0
    %588 = vmatprep.subr.mxu0 0.0
    %589 = vmatpush1.msra.mxu0 0.0
    %590 = vmatprep.subr.mxu0 0.0
    %591 = vmatpush1.msra.mxu0 0.0
    %592 = vmatprep.subr.mxu0 0.0
    %593 = vmatpush1.msra.mxu0 0.0
    %594 = vmatprep.subr.mxu0 0.0
    %595 = vmatpush1.msra.mxu0 0.0
    %596 = vmatprep.subr.mxu0 0.0
    %597 = vmatpush1.msra.mxu0 0.0
    %598 = vmatprep.subr.mxu0 0.0
    %599 = vmatpush1.msra.mxu0 0.0
    %600 = vmatprep.subr.mxu0 0.0
    %601 = vmatpush1.msra.mxu0 0.0
    %602 = vmatprep.subr.mxu0 0.0
    %603 = vmatpush1.msra.mxu0 0.0
    %604 = vmatprep.subr.mxu0 0.0
    %605 = vmatpush1.msra.mxu0 0.0
    %606 = vmatprep.subr.mxu0 0.0
    %607 = vmatpush1.msra.mxu0 0.0
    %608 = vmatprep.subr.mxu0 0.0
    %609 = vmatpush1.msra.mxu0 0.0
    %610 = vmatprep.subr.mxu0 0.0
    %611 = vmatpush1.msra.mxu0 0.0
    %612 = vmatprep.mubr.f32.mxu0 0.0
    %613 = vmatmul.mubr.f32.gmra.mrb[0].mxu0 %v279
    %v614 = vpop.f32.mrb[0].mxu0
    %v615 = vadd.f32 0.0, %v614
    %v616 = vpop.f32.mrb[0].mxu0
    %617 = vmatprep.mubr.f32.mxu0 0.0
    %618 = vmatmul.mubr.f32.gmra.mrb[0].mxu0 %v282
    %v619 = vpop.f32.mrb[0].mxu0
    %v620 = vadd.f32 0.0, %v619
    %v621 = vpop.f32.mrb[0].mxu0
    %622 = vdwg.mxu0
    %v623 = vlaneseq
    %v624 = vshrl.u32 %v623, 7
    %v625 = vsub.s32 0, %v624
    %v626 = vrot.slane %v47, %v625
    %627 = vmatprep.subr.mxu0 0.0
    %628 = vmatpush1.msra.mxu0 %v34
    %629 = vmatprep.subr.mxu0 0.0
    %630 = vmatpush1.msra.mxu0 %v35
    %631 = vmatprep.subr.mxu0 0.0
    %632 = vmatpush1.msra.mxu0 %v36
    %633 = vmatprep.subr.mxu0 0.0
    %634 = vmatpush1.msra.mxu0 %v37
    %635 = vmatprep.subr.mxu0 0.0
    %636 = vmatpush1.msra.mxu0 0.0
    %637 = vmatprep.subr.mxu0 0.0
    %638 = vmatpush1.msra.mxu0 0.0
    %639 = vmatprep.subr.mxu0 0.0
    %640 = vmatpush1.msra.mxu0 0.0
    %641 = vmatprep.subr.mxu0 0.0
    %642 = vmatpush1.msra.mxu0 0.0
    %643 = vmatprep.subr.mxu0 0.0
    %644 = vmatpush1.msra.mxu0 0.0
    %645 = vmatprep.subr.mxu0 0.0
    %646 = vmatpush1.msra.mxu0 0.0
    %647 = vmatprep.subr.mxu0 0.0
    %648 = vmatpush1.msra.mxu0 0.0
    %649 = vmatprep.subr.mxu0 0.0
    %650 = vmatpush1.msra.mxu0 0.0
    %651 = vmatprep.subr.mxu0 0.0
    %652 = vmatpush1.msra.mxu0 0.0
    %653 = vmatprep.subr.mxu0 0.0
    %654 = vmatpush1.msra.mxu0 0.0
    %655 = vmatprep.subr.mxu0 0.0
    %656 = vmatpush1.msra.mxu0 0.0
    %657 = vmatprep.subr.mxu0 0.0
    %658 = vmatpush1.msra.mxu0 0.0
    %659 = vmatprep.subr.mxu0 0.0
    %660 = vmatpush1.msra.mxu0 0.0
    %661 = vmatprep.subr.mxu0 0.0
    %662 = vmatpush1.msra.mxu0 0.0
    %663 = vmatprep.subr.mxu0 0.0
    %664 = vmatpush1.msra.mxu0 0.0
    %665 = vmatprep.subr.mxu0 0.0
    %666 = vmatpush1.msra.mxu0 0.0
    %667 = vmatprep.subr.mxu0 0.0
    %668 = vmatpush1.msra.mxu0 0.0
    %669 = vmatprep.subr.mxu0 0.0
    %670 = vmatpush1.msra.mxu0 0.0
    %671 = vmatprep.subr.mxu0 0.0
    %672 = vmatpush1.msra.mxu0 0.0
    %673 = vmatprep.subr.mxu0 0.0
    %674 = vmatpush1.msra.mxu0 0.0
    %675 = vmatprep.subr.mxu0 0.0
    %676 = vmatpush1.msra.mxu0 0.0
    %677 = vmatprep.subr.mxu0 0.0
    %678 = vmatpush1.msra.mxu0 0.0
    %679 = vmatprep.subr.mxu0 0.0
    %680 = vmatpush1.msra.mxu0 0.0
    %681 = vmatprep.subr.mxu0 0.0
    %682 = vmatpush1.msra.mxu0 0.0
    %683 = vmatprep.subr.mxu0 0.0
    %684 = vmatpush1.msra.mxu0 0.0
    %685 = vmatprep.subr.mxu0 0.0
    %686 = vmatpush1.msra.mxu0 0.0
    %687 = vmatprep.subr.mxu0 0.0
    %688 = vmatpush1.msra.mxu0 0.0
    %689 = vmatprep.subr.mxu0 0.0
    %690 = vmatpush1.msra.mxu0 0.0
    %691 = vmatprep.mubr.f32.mxu0 0.0
    %692 = vmatmul.mubr.f32.gmra.mrb[0].mxu0 %v279
    %v693 = vpop.f32.mrb[0].mxu0
    %v694 = vadd.f32 %v626, %v693
    %v695 = vpop.f32.mrb[0].mxu0
    %696 = vmatprep.mubr.f32.mxu0 0.0
    %697 = vmatmul.mubr.f32.gmra.mrb[0].mxu0 %v282
    %v698 = vpop.f32.mrb[0].mxu0
    %v699 = vadd.f32 %v626, %v698
    %v700 = vpop.f32.mrb[0].mxu0
    %701 = vdwg.mxu0
    %v702 = vlaneseq
    %v703 = vshrl.u32 %v702, 7
    %v704 = vsub.s32 0, %v703
    %v705 = vrot.slane %v67, %v704
    %706 = vmatprep.subr.mxu0 0.0
    %707 = vmatpush1.msra.mxu0 %v54
    %708 = vmatprep.subr.mxu0 0.0
    %709 = vmatpush1.msra.mxu0 %v55
    %710 = vmatprep.subr.mxu0 0.0
    %711 = vmatpush1.msra.mxu0 %v56
    %712 = vmatprep.subr.mxu0 0.0
    %713 = vmatpush1.msra.mxu0 %v57
    %714 = vmatprep.subr.mxu0 0.0
    %715 = vmatpush1.msra.mxu0 0.0
    %716 = vmatprep.subr.mxu0 0.0
    %717 = vmatpush1.msra.mxu0 0.0
    %718 = vmatprep.subr.mxu0 0.0
    %719 = vmatpush1.msra.mxu0 0.0
    %720 = vmatprep.subr.mxu0 0.0
    %721 = vmatpush1.msra.mxu0 0.0
    %722 = vmatprep.subr.mxu0 0.0
    %723 = vmatpush1.msra.mxu0 0.0
    %724 = vmatprep.subr.mxu0 0.0
    %725 = vmatpush1.msra.mxu0 0.0
    %726 = vmatprep.subr.mxu0 0.0
    %727 = vmatpush1.msra.mxu0 0.0
    %728 = vmatprep.subr.mxu0 0.0
    %729 = vmatpush1.msra.mxu0 0.0
    %730 = vmatprep.subr.mxu0 0.0
    %731 = vmatpush1.msra.mxu0 0.0
    %732 = vmatprep.subr.mxu0 0.0
    %733 = vmatpush1.msra.mxu0 0.0
    %734 = vmatprep.subr.mxu0 0.0
    %735 = vmatpush1.msra.mxu0 0.0
    %736 = vmatprep.subr.mxu0 0.0
    %737 = vmatpush1.msra.mxu0 0.0
    %738 = vmatprep.subr.mxu0 0.0
    %739 = vmatpush1.msra.mxu0 0.0
    %740 = vmatprep.subr.mxu0 0.0
    %741 = vmatpush1.msra.mxu0 0.0
    %742 = vmatprep.subr.mxu0 0.0
    %743 = vmatpush1.msra.mxu0 0.0
    %744 = vmatprep.subr.mxu0 0.0
    %745 = vmatpush1.msra.mxu0 0.0
    %746 = vmatprep.subr.mxu0 0.0
    %747 = vmatpush1.msra.mxu0 0.0
    %748 = vmatprep.subr.mxu0 0.0
    %749 = vmatpush1.msra.mxu0 0.0
    %750 = vmatprep.subr.mxu0 0.0
    %751 = vmatpush1.msra.mxu0 0.0
    %752 = vmatprep.subr.mxu0 0.0
    %753 = vmatpush1.msra.mxu0 0.0
    %754 = vmatprep.subr.mxu0 0.0
    %755 = vmatpush1.msra.mxu0 0.0
    %756 = vmatprep.subr.mxu0 0.0
    %757 = vmatpush1.msra.mxu0 0.0
    %758 = vmatprep.subr.mxu0 0.0
    %759 = vmatpush1.msra.mxu0 0.0
    %760 = vmatprep.subr.mxu0 0.0
    %761 = vmatpush1.msra.mxu0 0.0
    %762 = vmatprep.subr.mxu0 0.0
    %763 = vmatpush1.msra.mxu0 0.0
    %764 = vmatprep.subr.mxu0 0.0
    %765 = vmatpush1.msra.mxu0 0.0
    %766 = vmatprep.subr.mxu0 0.0
    %767 = vmatpush1.msra.mxu0 0.0
    %768 = vmatprep.subr.mxu0 0.0
    %769 = vmatpush1.msra.mxu0 0.0
    %770 = vmatprep.mubr.f32.mxu0 0.0
    %771 = vmatmul.mubr.f32.gmra.mrb[0].mxu0 %v279
    %v772 = vpop.f32.mrb[0].mxu0
    %v773 = vadd.f32 %v705, %v772
    %v774 = vpop.f32.mrb[0].mxu0
    %775 = vmatprep.mubr.f32.mxu0 0.0
    %776 = vmatmul.mubr.f32.gmra.mrb[0].mxu0 %v282
    %v777 = vpop.f32.mrb[0].mxu0
    %v778 = vadd.f32 %v705, %v777
    %v779 = vpop.f32.mrb[0].mxu0
    %780 = vdwg.mxu0
    %v782 = vsel %vm120, %v694, 0
    %v785 = vsel %vm120, %v699, 0
    %v788 = vsel %vm120, %v773, 0
    %v791 = vsel %vm120, %v778, 0
    %793 = vmatprep.subr.mxu0 0.0
    %794 = vmatpush1.xpose.msra.mxu0 %v788
    %795 = vmatprep.subr.mxu0 0.0
    %796 = vmatpush1.xpose.msra.mxu0 %v791
    %797 = vmatprep.subr.mxu0 0.0
    %798 = vmatpush1.xpose.msra.mxu0 0.0
    %799 = vmatprep.subr.mxu0 0.0
    %800 = vmatpush1.xpose.msra.mxu0 0.0
    %801 = vmatprep.subr.mxu0 0.0
    %802 = vmatpush1.xpose.msra.mxu0 0.0
    %803 = vmatprep.subr.mxu0 0.0
    %804 = vmatpush1.xpose.msra.mxu0 0.0
    %805 = vmatprep.subr.mxu0 0.0
    %806 = vmatpush1.xpose.msra.mxu0 0.0
    %807 = vmatprep.subr.mxu0 0.0
    %808 = vmatpush1.xpose.msra.mxu0 0.0
    %809 = vmatprep.subr.mxu0 0.0
    %810 = vmatpush1.xpose.msra.mxu0 0.0
    %811 = vmatprep.subr.mxu0 0.0
    %812 = vmatpush1.xpose.msra.mxu0 0.0
    %813 = vmatprep.subr.mxu0 0.0
    %814 = vmatpush1.xpose.msra.mxu0 0.0
    %815 = vmatprep.subr.mxu0 0.0
    %816 = vmatpush1.xpose.msra.mxu0 0.0
    %817 = vmatprep.subr.mxu0 0.0
    %818 = vmatpush1.xpose.msra.mxu0 0.0
    %819 = vmatprep.subr.mxu0 0.0
    %820 = vmatpush1.xpose.msra.mxu0 0.0
    %821 = vmatprep.subr.mxu0 0.0
    %822 = vmatpush1.xpose.msra.mxu0 0.0
    %823 = vmatprep.subr.mxu0 0.0
    %824 = vmatpush1.xpose.msra.mxu0 0.0
    %825 = vmatprep.subr.mxu0 0.0
    %826 = vmatpush1.xpose.msra.mxu0 0.0
    %827 = vmatprep.subr.mxu0 0.0
    %828 = vmatpush1.xpose.msra.mxu0 0.0
    %829 = vmatprep.subr.mxu0 0.0
    %830 = vmatpush1.xpose.msra.mxu0 0.0
    %831 = vmatprep.subr.mxu0 0.0
    %832 = vmatpush1.xpose.msra.mxu0 0.0
    %833 = vmatprep.subr.mxu0 0.0
    %834 = vmatpush1.xpose.msra.mxu0 0.0
    %835 = vmatprep.subr.mxu0 0.0
    %836 = vmatpush1.xpose.msra.mxu0 0.0
    %837 = vmatprep.subr.mxu0 0.0
    %838 = vmatpush1.xpose.msra.mxu0 0.0
    %839 = vmatprep.subr.mxu0 0.0
    %840 = vmatpush1.xpose.msra.mxu0 0.0
    %841 = vmatprep.subr.mxu0 0.0
    %842 = vmatpush1.xpose.msra.mxu0 0.0
    %843 = vmatprep.subr.mxu0 0.0
    %844 = vmatpush1.xpose.msra.mxu0 0.0
    %845 = vmatprep.subr.mxu0 0.0
    %846 = vmatpush1.xpose.msra.mxu0 0.0
    %847 = vmatprep.subr.mxu0 0.0
    %848 = vmatpush1.xpose.msra.mxu0 0.0
    %849 = vmatprep.subr.mxu0 0.0
    %850 = vmatpush1.xpose.msra.mxu0 0.0
    %851 = vmatprep.subr.mxu0 0.0
    %852 = vmatpush1.xpose.msra.mxu0 0.0
    %853 = vmatprep.subr.mxu0 0.0
    %854 = vmatpush1.xpose.msra.mxu0 0.0
    %855 = vmatprep.subr.mxu0 0.0
    %856 = vmatpush1.xpose.msra.mxu0 0.0
    %857 = vmatprep.mubr.f32.mxu0 0.0
    %858 = vmatmul.mubr.f32.gmra.mrb[0].mxu0 %v782
    %v859 = vpop.f32.mrb[0].mxu0
    %v860 = vadd.f32 %v110, %v859
    %v861 = vpop.f32.mrb[0].mxu0
    %862 = vmatprep.mubr.f32.mxu0 0.0
    %863 = vmatmul.mubr.f32.gmra.mrb[0].mxu0 %v785
    %v864 = vpop.f32.mrb[0].mxu0
    %v865 = vadd.f32 %v111, %v864
    %v866 = vpop.f32.mrb[0].mxu0
    %867 = vdwg.mxu0
    %v868 = vsel %vm525, %v860, -inf
    %869 = vmax.xlane.f32.xlu0 %v868
    %v870 = vpop.xlane.xlu0 %869
    %v871 = vsel %vm525, %v865, -inf
    %872 = vmax.xlane.f32.xlu0 %v871
    %v873 = vpop.xlane.xlu0 %872
    %v874 = vsub.f32 %v860, %v870
    %v875 = vsub.f32 %v865, %v873
    %v876 = vmul.f32 %v874, 1.442695
    %v877 = vpow.pop %v876
    %v878 = vmul.f32 %v875, 1.442695
    %v879 = vpow.pop %v878
    %v880 = vsel %vm525, %v877, 0.0
    %881 = vadd.xlane.f32.xlu0 %v880
    %v882 = vpop.xlane.xlu0 %881
    %v883 = vsel %vm525, %v879, 0.0
    %884 = vadd.xlane.f32.xlu0 %v883
    %v885 = vpop.xlane.xlu0 %884
    %v886 = vrcp.pop %v882
    %v887 = vrcp.pop %v885
    %v888 = vmul.f32 %v877, %v886
    %v889 = vmul.f32 %v879, %v887
    %890 = vmatprep.subr.mxu0 0.0
    %891 = vmatpush1.msra.mxu0 %v74
    %892 = vmatprep.subr.mxu0 0.0
    %893 = vmatpush1.msra.mxu0 %v75
    %894 = vmatprep.subr.mxu0 0.0
    %895 = vmatpush1.msra.mxu0 %v76
    %896 = vmatprep.subr.mxu0 0.0
    %897 = vmatpush1.msra.mxu0 %v77
    %898 = vmatprep.subr.mxu0 0.0
    %899 = vmatpush1.msra.mxu0 0.0
    %900 = vmatprep.subr.mxu0 0.0
    %901 = vmatpush1.msra.mxu0 0.0
    %902 = vmatprep.subr.mxu0 0.0
    %903 = vmatpush1.msra.mxu0 0.0
    %904 = vmatprep.subr.mxu0 0.0
    %905 = vmatpush1.msra.mxu0 0.0
    %906 = vmatprep.subr.mxu0 0.0
    %907 = vmatpush1.msra.mxu0 0.0
    %908 = vmatprep.subr.mxu0 0.0
    %909 = vmatpush1.msra.mxu0 0.0
    %910 = vmatprep.subr.mxu0 0.0
    %911 = vmatpush1.msra.mxu0 0.0
    %912 = vmatprep.subr.mxu0 0.0
    %913 = vmatpush1.msra.mxu0 0.0
    %914 = vmatprep.subr.mxu0 0.0
    %915 = vmatpush1.msra.mxu0 0.0
    %916 = vmatprep.subr.mxu0 0.0
    %917 = vmatpush1.msra.mxu0 0.0
    %918 = vmatprep.subr.mxu0 0.0
    %919 = vmatpush1.msra.mxu0 0.0
    %920 = vmatprep.subr.mxu0 0.0
    %921 = vmatpush1.msra.mxu0 0.0
    %922 = vmatprep.subr.mxu0 0.0
    %923 = vmatpush1.msra.mxu0 0.0
    %924 = vmatprep.subr.mxu0 0.0
    %925 = vmatpush1.msra.mxu0 0.0
    %926 = vmatprep.subr.mxu0 0.0
    %927 = vmatpush1.msra.mxu0 0.0
    %928 = vmatprep.subr.mxu0 0.0
    %929 = vmatpush1.msra.mxu0 0.0
    %930 = vmatprep.subr.mxu0 0.0
    %931 = vmatpush1.msra.mxu0 0.0
    %932 = vmatprep.subr.mxu0 0.0
    %933 = vmatpush1.msra.mxu0 0.0
    %934 = vmatprep.subr.mxu0 0.0
    %935 = vmatpush1.msra.mxu0 0.0
    %936 = vmatprep.subr.mxu0 0.0
    %937 = vmatpush1.msra.mxu0 0.0
    %938 = vmatprep.subr.mxu0 0.0
    %939 = vmatpush1.msra.mxu0 0.0
    %940 = vmatprep.subr.mxu0 0.0
    %941 = vmatpush1.msra.mxu0 0.0
    %942 = vmatprep.subr.mxu0 0.0
    %943 = vmatpush1.msra.mxu0 0.0
    %944 = vmatprep.subr.mxu0 0.0
    %945 = vmatpush1.msra.mxu0 0.0
    %946 = vmatprep.subr.mxu0 0.0
    %947 = vmatpush1.msra.mxu0 0.0
    %948 = vmatprep.subr.mxu0 0.0
    %949 = vmatpush1.msra.mxu0 0.0
    %950 = vmatprep.subr.mxu0 0.0
    %951 = vmatpush1.msra.mxu0 0.0
    %952 = vmatprep.subr.mxu0 0.0
    %953 = vmatpush1.msra.mxu0 0.0
    %954 = vmatprep.mubr.f32.mxu0 0.0
    %955 = vmatmul.mubr.f32.gmra.mrb[0].mxu0 %v279
    %v956 = vpop.f32.mrb[0].mxu0
    %v957 = vadd.f32 0.0, %v956
    %v958 = vpop.f32.mrb[0].mxu0
    %959 = vmatprep.mubr.f32.mxu0 0.0
    %960 = vmatmul.mubr.f32.gmra.mrb[0].mxu0 %v282
    %v961 = vpop.f32.mrb[0].mxu0
    %v962 = vadd.f32 0.0, %v961
    %v963 = vpop.f32.mrb[0].mxu0
    %964 = vdwg.mxu0
    %v966 = vsel %vm525, %v888, 0
    %v969 = vsel %vm525, %v889, 0
    %971 = vmatprep.subr.mxu0 0.0
    %972 = vmatpush1.msra.mxu0 %v957
    %973 = vmatprep.subr.mxu0 0.0
    %974 = vmatpush1.msra.mxu0 %v962
    %975 = vmatprep.subr.mxu0 0.0
    %976 = vmatpush1.msra.mxu0 0.0
    %977 = vmatprep.subr.mxu0 0.0
    %978 = vmatpush1.msra.mxu0 0.0
    %979 = vmatprep.subr.mxu0 0.0
    %980 = vmatpush1.msra.mxu0 0.0
    %981 = vmatprep.subr.mxu0 0.0
    %982 = vmatpush1.msra.mxu0 0.0
    %983 = vmatprep.subr.mxu0 0.0
    %984 = vmatpush1.msra.mxu0 0.0
    %985 = vmatprep.subr.mxu0 0.0
    %986 = vmatpush1.msra.mxu0 0.0
    %987 = vmatprep.subr.mxu0 0.0
    %988 = vmatpush1.msra.mxu0 0.0
    %989 = vmatprep.subr.mxu0 0.0
    %990 = vmatpush1.msra.mxu0 0.0
    %991 = vmatprep.subr.mxu0 0.0
    %992 = vmatpush1.msra.mxu0 0.0
    %993 = vmatprep.subr.mxu0 0.0
    %994 = vmatpush1.msra.mxu0 0.0
    %995 = vmatprep.subr.mxu0 0.0
    %996 = vmatpush1.msra.mxu0 0.0
    %997 = vmatprep.subr.mxu0 0.0
    %998 = vmatpush1.msra.mxu0 0.0
    %999 = vmatprep.subr.mxu0 0.0
    %1000 = vmatpush1.msra.mxu0 0.0
    %1001 = vmatprep.subr.mxu0 0.0
    %1002 = vmatpush1.msra.mxu0 0.0
    %1003 = vmatprep.subr.mxu0 0.0
    %1004 = vmatpush1.msra.mxu0 0.0
    %1005 = vmatprep.subr.mxu0 0.0
    %1006 = vmatpush1.msra.mxu0 0.0
    %1007 = vmatprep.subr.mxu0 0.0
    %1008 = vmatpush1.msra.mxu0 0.0
    %1009 = vmatprep.subr.mxu0 0.0
    %1010 = vmatpush1.msra.mxu0 0.0
    %1011 = vmatprep.subr.mxu0 0.0
    %1012 = vmatpush1.msra.mxu0 0.0
    %1013 = vmatprep.subr.mxu0 0.0
    %1014 = vmatpush1.msra.mxu0 0.0
    %1015 = vmatprep.subr.mxu0 0.0
    %1016 = vmatpush1.msra.mxu0 0.0
    %1017 = vmatprep.subr.mxu0 0.0
    %1018 = vmatpush1.msra.mxu0 0.0
    %1019 = vmatprep.subr.mxu0 0.0
    %1020 = vmatpush1.msra.mxu0 0.0
    %1021 = vmatprep.subr.mxu0 0.0
    %1022 = vmatpush1.msra.mxu0 0.0
    %1023 = vmatprep.subr.mxu0 0.0
    %1024 = vmatpush1.msra.mxu0 0.0
    %1025 = vmatprep.subr.mxu0 0.0
    %1026 = vmatpush1.msra.mxu0 0.0
    %1027 = vmatprep.subr.mxu0 0.0
    %1028 = vmatpush1.msra.mxu0 0.0
    %1029 = vmatprep.subr.mxu0 0.0
    %1030 = vmatpush1.msra.mxu0 0.0
    %1031 = vmatprep.subr.mxu0 0.0
    %1032 = vmatpush1.msra.mxu0 0.0
    %1033 = vmatprep.subr.mxu0 0.0
    %1034 = vmatpush1.msra.mxu0 0.0
    %1035 = vmatprep.mubr.f32.mxu0 0.0
    %1036 = vmatmul.mubr.f32.gmra.mrb[0].mxu0 %v966
    %v1037 = vpop.f32.mrb[0].mxu0
    %v1038 = vadd.f32 0.0, %v1037
    %v1039 = vpop.f32.mrb[0].mxu0
    %1040 = vmatprep.mubr.f32.mxu0 0.0
    %1041 = vmatmul.mubr.f32.gmra.mrb[0].mxu0 %v969
    %v1042 = vpop.f32.mrb[0].mxu0
    %v1043 = vadd.f32 0.0, %v1042
    %v1044 = vpop.f32.mrb[0].mxu0
    %1045 = vdwg.mxu0
    %v1047 = vsel %vm525, %v546, 0
    %v1050 = vsel %vm525, %v547, 0
    %1052 = vmatprep.subr.mxu0 0.0
    %1053 = vmatpush1.msra.mxu0 %v615
    %1054 = vmatprep.subr.mxu0 0.0
    %1055 = vmatpush1.msra.mxu0 %v620
    %1056 = vmatprep.subr.mxu0 0.0
    %1057 = vmatpush1.msra.mxu0 0.0
    %1058 = vmatprep.subr.mxu0 0.0
    %1059 = vmatpush1.msra.mxu0 0.0
    %1060 = vmatprep.subr.mxu0 0.0
    %1061 = vmatpush1.msra.mxu0 0.0
    %1062 = vmatprep.subr.mxu0 0.0
    %1063 = vmatpush1.msra.mxu0 0.0
    %1064 = vmatprep.subr.mxu0 0.0
    %1065 = vmatpush1.msra.mxu0 0.0
    %1066 = vmatprep.subr.mxu0 0.0
    %1067 = vmatpush1.msra.mxu0 0.0
    %1068 = vmatprep.subr.mxu0 0.0
    %1069 = vmatpush1.msra.mxu0 0.0
    %1070 = vmatprep.subr.mxu0 0.0
    %1071 = vmatpush1.msra.mxu0 0.0
    %1072 = vmatprep.subr.mxu0 0.0
    %1073 = vmatpush1.msra.mxu0 0.0
    %1074 = vmatprep.subr.mxu0 0.0
    %1075 = vmatpush1.msra.mxu0 0.0
    %1076 = vmatprep.subr.mxu0 0.0
    %1077 = vmatpush1.msra.mxu0 0.0
    %1078 = vmatprep.subr.mxu0 0.0
    %1079 = vmatpush1.msra.mxu0 0.0
    %1080 = vmatprep.subr.mxu0 0.0
    %1081 = vmatpush1.msra.mxu0 0.0
    %1082 = vmatprep.subr.mxu0 0.0
    %1083 = vmatpush1.msra.mxu0 0.0
    %1084 = vmatprep.subr.mxu0 0.0
    %1085 = vmatpush1.msra.mxu0 0.0
    %1086 = vmatprep.subr.mxu0 0.0
    %1087 = vmatpush1.msra.mxu0 0.0
    %1088 = vmatprep.subr.mxu0 0.0
    %1089 = vmatpush1.msra.mxu0 0.0
    %1090 = vmatprep.subr.mxu0 0.0
    %1091 = vmatpush1.msra.mxu0 0.0
    %1092 = vmatprep.subr.mxu0 0.0
    %1093 = vmatpush1.msra.mxu0 0.0
    %1094 = vmatprep.subr.mxu0 0.0
    %1095 = vmatpush1.msra.mxu0 0.0
    %1096 = vmatprep.subr.mxu0 0.0
    %1097 = vmatpush1.msra.mxu0 0.0
    %1098 = vmatprep.subr.mxu0 0.0
    %1099 = vmatpush1.msra.mxu0 0.0
    %1100 = vmatprep.subr.mxu0 0.0
    %1101 = vmatpush1.msra.mxu0 0.0
    %1102 = vmatprep.subr.mxu0 0.0
    %1103 = vmatpush1.msra.mxu0 0.0
    %1104 = vmatprep.subr.mxu0 0.0
    %1105 = vmatpush1.msra.mxu0 0.0
    %1106 = vmatprep.subr.mxu0 0.0
    %1107 = vmatpush1.msra.mxu0 0.0
    %1108 = vmatprep.subr.mxu0 0.0
    %1109 = vmatpush1.msra.mxu0 0.0
    %1110 = vmatprep.subr.mxu0 0.0
    %1111 = vmatpush1.msra.mxu0 0.0
    %1112 = vmatprep.subr.mxu0 0.0
    %1113 = vmatpush1.msra.mxu0 0.0
    %1114 = vmatprep.subr.mxu0 0.0
    %1115 = vmatpush1.msra.mxu0 0.0
    %1116 = vmatprep.mubr.f32.mxu0 0.0
    %1117 = vmatmul.mubr.f32.gmra.mrb[0].mxu0 %v1047
    %v1118 = vpop.f32.mrb[0].mxu0
    %v1119 = vadd.f32 %v1038, %v1118
    %v1120 = vpop.f32.mrb[0].mxu0
    %1121 = vmatprep.mubr.f32.mxu0 0.0
    %1122 = vmatmul.mubr.f32.gmra.mrb[0].mxu0 %v1050
    %v1123 = vpop.f32.mrb[0].mxu0
    %v1124 = vadd.f32 %v1043, %v1123
    %v1125 = vpop.f32.mrb[0].mxu0
    %1126 = vdwg.mxu0
    %v1127 = vlaneseq
    %v1128 = vshrl.u32 %v1127, 7
    %v1129 = vsub.s32 0, %v1128
    %v1130 = vrot.slane %v48, %v1129
    %1131 = vmatprep.subr.mxu0 0.0
    %1132 = vmatpush1.msra.mxu0 %v38
    %1133 = vmatprep.subr.mxu0 0.0
    %1134 = vmatpush1.msra.mxu0 %v39
    %1135 = vmatprep.subr.mxu0 0.0
    %1136 = vmatpush1.msra.mxu0 %v40
    %1137 = vmatprep.subr.mxu0 0.0
    %1138 = vmatpush1.msra.mxu0 %v41
    %1139 = vmatprep.subr.mxu0 0.0
    %1140 = vmatpush1.msra.mxu0 0.0
    %1141 = vmatprep.subr.mxu0 0.0
    %1142 = vmatpush1.msra.mxu0 0.0
    %1143 = vmatprep.subr.mxu0 0.0
    %1144 = vmatpush1.msra.mxu0 0.0
    %1145 = vmatprep.subr.mxu0 0.0
    %1146 = vmatpush1.msra.mxu0 0.0
    %1147 = vmatprep.subr.mxu0 0.0
    %1148 = vmatpush1.msra.mxu0 0.0
    %1149 = vmatprep.subr.mxu0 0.0
    %1150 = vmatpush1.msra.mxu0 0.0
    %1151 = vmatprep.subr.mxu0 0.0
    %1152 = vmatpush1.msra.mxu0 0.0
    %1153 = vmatprep.subr.mxu0 0.0
    %1154 = vmatpush1.msra.mxu0 0.0
    %1155 = vmatprep.subr.mxu0 0.0
    %1156 = vmatpush1.msra.mxu0 0.0
    %1157 = vmatprep.subr.mxu0 0.0
    %1158 = vmatpush1.msra.mxu0 0.0
    %1159 = vmatprep.subr.mxu0 0.0
    %1160 = vmatpush1.msra.mxu0 0.0
    %1161 = vmatprep.subr.mxu0 0.0
    %1162 = vmatpush1.msra.mxu0 0.0
    %1163 = vmatprep.subr.mxu0 0.0
    %1164 = vmatpush1.msra.mxu0 0.0
    %1165 = vmatprep.subr.mxu0 0.0
    %1166 = vmatpush1.msra.mxu0 0.0
    %1167 = vmatprep.subr.mxu0 0.0
    %1168 = vmatpush1.msra.mxu0 0.0
    %1169 = vmatprep.subr.mxu0 0.0
    %1170 = vmatpush1.msra.mxu0 0.0
    %1171 = vmatprep.subr.mxu0 0.0
    %1172 = vmatpush1.msra.mxu0 0.0
    %1173 = vmatprep.subr.mxu0 0.0
    %1174 = vmatpush1.msra.mxu0 0.0
    %1175 = vmatprep.subr.mxu0 0.0
    %1176 = vmatpush1.msra.mxu0 0.0
    %1177 = vmatprep.subr.mxu0 0.0
    %1178 = vmatpush1.msra.mxu0 0.0
    %1179 = vmatprep.subr.mxu0 0.0
    %1180 = vmatpush1.msra.mxu0 0.0
    %1181 = vmatprep.subr.mxu0 0.0
    %1182 = vmatpush1.msra.mxu0 0.0
    %1183 = vmatprep.subr.mxu0 0.0
    %1184 = vmatpush1.msra.mxu0 0.0
    %1185 = vmatprep.subr.mxu0 0.0
    %1186 = vmatpush1.msra.mxu0 0.0
    %1187 = vmatprep.subr.mxu0 0.0
    %1188 = vmatpush1.msra.mxu0 0.0
    %1189 = vmatprep.subr.mxu0 0.0
    %1190 = vmatpush1.msra.mxu0 0.0
    %1191 = vmatprep.subr.mxu0 0.0
    %1192 = vmatpush1.msra.mxu0 0.0
    %1193 = vmatprep.subr.mxu0 0.0
    %1194 = vmatpush1.msra.mxu0 0.0
    %1195 = vmatprep.mubr.f32.mxu0 0.0
    %1196 = vmatmul.mubr.f32.gmra.mrb[0].mxu0 %v279
    %v1197 = vpop.f32.mrb[0].mxu0
    %v1198 = vadd.f32 %v1130, %v1197
    %v1199 = vpop.f32.mrb[0].mxu0
    %1200 = vmatprep.mubr.f32.mxu0 0.0
    %1201 = vmatmul.mubr.f32.gmra.mrb[0].mxu0 %v282
    %v1202 = vpop.f32.mrb[0].mxu0
    %v1203 = vadd.f32 %v1130, %v1202
    %v1204 = vpop.f32.mrb[0].mxu0
    %1205 = vdwg.mxu0
    %v1206 = vlaneseq
    %v1207 = vshrl.u32 %v1206, 7
    %v1208 = vsub.s32 0, %v1207
    %v1209 = vrot.slane %v68, %v1208
    %1210 = vmatprep.subr.mxu0 0.0
    %1211 = vmatpush1.msra.mxu0 %v58
    %1212 = vmatprep.subr.mxu0 0.0
    %1213 = vmatpush1.msra.mxu0 %v59
    %1214 = vmatprep.subr.mxu0 0.0
    %1215 = vmatpush1.msra.mxu0 %v60
    %1216 = vmatprep.subr.mxu0 0.0
    %1217 = vmatpush1.msra.mxu0 %v61
    %1218 = vmatprep.subr.mxu0 0.0
    %1219 = vmatpush1.msra.mxu0 0.0
    %1220 = vmatprep.subr.mxu0 0.0
    %1221 = vmatpush1.msra.mxu0 0.0
    %1222 = vmatprep.subr.mxu0 0.0
    %1223 = vmatpush1.msra.mxu0 0.0
    %1224 = vmatprep.subr.mxu0 0.0
    %1225 = vmatpush1.msra.mxu0 0.0
    %1226 = vmatprep.subr.mxu0 0.0
    %1227 = vmatpush1.msra.mxu0 0.0
    %1228 = vmatprep.subr.mxu0 0.0
    %1229 = vmatpush1.msra.mxu0 0.0
    %1230 = vmatprep.subr.mxu0 0.0
    %1231 = vmatpush1.msra.mxu0 0.0
    %1232 = vmatprep.subr.mxu0 0.0
    %1233 = vmatpush1.msra.mxu0 0.0
    %1234 = vmatprep.subr.mxu0 0.0
    %1235 = vmatpush1.msra.mxu0 0.0
    %1236 = vmatprep.subr.mxu0 0.0
    %1237 = vmatpush1.msra.mxu0 0.0
    %1238 = vmatprep.subr.mxu0 0.0
    %1239 = vmatpush1.msra.mxu0 0.0
    %1240 = vmatprep.subr.mxu0 0.0
    %1241 = vmatpush1.msra.mxu0 0.0
    %1242 = vmatprep.subr.mxu0 0.0
    %1243 = vmatpush1.msra.mxu0 0.0
    %1244 = vmatprep.subr.mxu0 0.0
    %1245 = vmatpush1.msra.mxu0 0.0
    %1246 = vmatprep.subr.mxu0 0.0
    %1247 = vmatpush1.msra.mxu0 0.0
    %1248 = vmatprep.subr.mxu0 0.0
    %1249 = vmatpush1.msra.mxu0 0.0
    %1250 = vmatprep.subr.mxu0 0.0
    %1251 = vmatpush1.msra.mxu0 0.0
    %1252 = vmatprep.subr.mxu0 0.0
    %1253 = vmatpush1.msra.mxu0 0.0
    %1254 = vmatprep.subr.mxu0 0.0
    %1255 = vmatpush1.msra.mxu0 0.0
    %1256 = vmatprep.subr.mxu0 0.0
    %1257 = vmatpush1.msra.mxu0 0.0
    %1258 = vmatprep.subr.mxu0 0.0
    %1259 = vmatpush1.msra.mxu0 0.0
    %1260 = vmatprep.subr.mxu0 0.0
    %1261 = vmatpush1.msra.mxu0 0.0
    %1262 = vmatprep.subr.mxu0 0.0
    %1263 = vmatpush1.msra.mxu0 0.0
    %1264 = vmatprep.subr.mxu0 0.0
    %1265 = vmatpush1.msra.mxu0 0.0
    %1266 = vmatprep.subr.mxu0 0.0
    %1267 = vmatpush1.msra.mxu0 0.0
    %1268 = vmatprep.subr.mxu0 0.0
    %1269 = vmatpush1.msra.mxu0 0.0
    %1270 = vmatprep.subr.mxu0 0.0
    %1271 = vmatpush1.msra.mxu0 0.0
    %1272 = vmatprep.subr.mxu0 0.0
    %1273 = vmatpush1.msra.mxu0 0.0
    %1274 = vmatprep.mubr.f32.mxu0 0.0
    %1275 = vmatmul.mubr.f32.gmra.mrb[0].mxu0 %v279
    %v1276 = vpop.f32.mrb[0].mxu0
    %v1277 = vadd.f32 %v1209, %v1276
    %v1278 = vpop.f32.mrb[0].mxu0
    %1279 = vmatprep.mubr.f32.mxu0 0.0
    %1280 = vmatmul.mubr.f32.gmra.mrb[0].mxu0 %v282
    %v1281 = vpop.f32.mrb[0].mxu0
    %v1282 = vadd.f32 %v1209, %v1281
    %v1283 = vpop.f32.mrb[0].mxu0
    %1284 = vdwg.mxu0
    %v1286 = vsel %vm120, %v1198, 0
    %v1289 = vsel %vm120, %v1203, 0
    %v1292 = vsel %vm120, %v1277, 0
    %v1295 = vsel %vm120, %v1282, 0
    %1297 = vmatprep.subr.mxu0 0.0
    %1298 = vmatpush1.xpose.msra.mxu0 %v1292
    %1299 = vmatprep.subr.mxu0 0.0
    %1300 = vmatpush1.xpose.msra.mxu0 %v1295
    %1301 = vmatprep.subr.mxu0 0.0
    %1302 = vmatpush1.xpose.msra.mxu0 0.0
    %1303 = vmatprep.subr.mxu0 0.0
    %1304 = vmatpush1.xpose.msra.mxu0 0.0
    %1305 = vmatprep.subr.mxu0 0.0
    %1306 = vmatpush1.xpose.msra.mxu0 0.0
    %1307 = vmatprep.subr.mxu0 0.0
    %1308 = vmatpush1.xpose.msra.mxu0 0.0
    %1309 = vmatprep.subr.mxu0 0.0
    %1310 = vmatpush1.xpose.msra.mxu0 0.0
    %1311 = vmatprep.subr.mxu0 0.0
    %1312 = vmatpush1.xpose.msra.mxu0 0.0
    %1313 = vmatprep.subr.mxu0 0.0
    %1314 = vmatpush1.xpose.msra.mxu0 0.0
    %1315 = vmatprep.subr.mxu0 0.0
    %1316 = vmatpush1.xpose.msra.mxu0 0.0
    %1317 = vmatprep.subr.mxu0 0.0
    %1318 = vmatpush1.xpose.msra.mxu0 0.0
    %1319 = vmatprep.subr.mxu0 0.0
    %1320 = vmatpush1.xpose.msra.mxu0 0.0
    %1321 = vmatprep.subr.mxu0 0.0
    %1322 = vmatpush1.xpose.msra.mxu0 0.0
    %1323 = vmatprep.subr.mxu0 0.0
    %1324 = vmatpush1.xpose.msra.mxu0 0.0
    %1325 = vmatprep.subr.mxu0 0.0
    %1326 = vmatpush1.xpose.msra.mxu0 0.0
    %1327 = vmatprep.subr.mxu0 0.0
    %1328 = vmatpush1.xpose.msra.mxu0 0.0
    %1329 = vmatprep.subr.mxu0 0.0
    %1330 = vmatpush1.xpose.msra.mxu0 0.0
    %1331 = vmatprep.subr.mxu0 0.0
    %1332 = vmatpush1.xpose.msra.mxu0 0.0
    %1333 = vmatprep.subr.mxu0 0.0
    %1334 = vmatpush1.xpose.msra.mxu0 0.0
    %1335 = vmatprep.subr.mxu0 0.0
    %1336 = vmatpush1.xpose.msra.mxu0 0.0
    %1337 = vmatprep.subr.mxu0 0.0
    %1338 = vmatpush1.xpose.msra.mxu0 0.0
    %1339 = vmatprep.subr.mxu0 0.0
    %1340 = vmatpush1.xpose.msra.mxu0 0.0
    %1341 = vmatprep.subr.mxu0 0.0
    %1342 = vmatpush1.xpose.msra.mxu0 0.0
    %1343 = vmatprep.subr.mxu0 0.0
    %1344 = vmatpush1.xpose.msra.mxu0 0.0
    %1345 = vmatprep.subr.mxu0 0.0
    %1346 = vmatpush1.xpose.msra.mxu0 0.0
    %1347 = vmatprep.subr.mxu0 0.0
    %1348 = vmatpush1.xpose.msra.mxu0 0.0
    %1349 = vmatprep.subr.mxu0 0.0
    %1350 = vmatpush1.xpose.msra.mxu0 0.0
    %1351 = vmatprep.subr.mxu0 0.0
    %1352 = vmatpush1.xpose.msra.mxu0 0.0
    %1353 = vmatprep.subr.mxu0 0.0
    %1354 = vmatpush1.xpose.msra.mxu0 0.0
    %1355 = vmatprep.subr.mxu0 0.0
    %1356 = vmatpush1.xpose.msra.mxu0 0.0
    %1357 = vmatprep.subr.mxu0 0.0
    %1358 = vmatpush1.xpose.msra.mxu0 0.0
    %1359 = vmatprep.subr.mxu0 0.0
    %1360 = vmatpush1.xpose.msra.mxu0 0.0
    %1361 = vmatprep.mubr.f32.mxu0 0.0
    %1362 = vmatmul.mubr.f32.gmra.mrb[0].mxu0 %v1286
    %v1363 = vpop.f32.mrb[0].mxu0
    %v1364 = vadd.f32 %v110, %v1363
    %v1365 = vpop.f32.mrb[0].mxu0
    %1366 = vmatprep.mubr.f32.mxu0 0.0
    %1367 = vmatmul.mubr.f32.gmra.mrb[0].mxu0 %v1289
    %v1368 = vpop.f32.mrb[0].mxu0
    %v1369 = vadd.f32 %v111, %v1368
    %v1370 = vpop.f32.mrb[0].mxu0
    %1371 = vdwg.mxu0
    %v1372 = vsel %vm525, %v1364, -inf
    %1373 = vmax.xlane.f32.xlu0 %v1372
    %v1374 = vpop.xlane.xlu0 %1373
    %v1375 = vsel %vm525, %v1369, -inf
    %1376 = vmax.xlane.f32.xlu0 %v1375
    %v1377 = vpop.xlane.xlu0 %1376
    %v1378 = vsub.f32 %v1364, %v1374
    %v1379 = vsub.f32 %v1369, %v1377
    %v1380 = vmul.f32 %v1378, 1.442695
    %v1381 = vpow.pop %v1380
    %v1382 = vmul.f32 %v1379, 1.442695
    %v1383 = vpow.pop %v1382
    %v1384 = vsel %vm525, %v1381, 0.0
    %1385 = vadd.xlane.f32.xlu0 %v1384
    %v1386 = vpop.xlane.xlu0 %1385
    %v1387 = vsel %vm525, %v1383, 0.0
    %1388 = vadd.xlane.f32.xlu0 %v1387
    %v1389 = vpop.xlane.xlu0 %1388
    %v1390 = vrcp.pop %v1386
    %v1391 = vrcp.pop %v1389
    %v1392 = vmul.f32 %v1381, %v1390
    %v1393 = vmul.f32 %v1383, %v1391
    %1394 = vmatprep.subr.mxu0 0.0
    %1395 = vmatpush1.msra.mxu0 %v78
    %1396 = vmatprep.subr.mxu0 0.0
    %1397 = vmatpush1.msra.mxu0 %v79
    %1398 = vmatprep.subr.mxu0 0.0
    %1399 = vmatpush1.msra.mxu0 %v80
    %1400 = vmatprep.subr.mxu0 0.0
    %1401 = vmatpush1.msra.mxu0 %v81
    %1402 = vmatprep.subr.mxu0 0.0
    %1403 = vmatpush1.msra.mxu0 0.0
    %1404 = vmatprep.subr.mxu0 0.0
    %1405 = vmatpush1.msra.mxu0 0.0
    %1406 = vmatprep.subr.mxu0 0.0
    %1407 = vmatpush1.msra.mxu0 0.0
    %1408 = vmatprep.subr.mxu0 0.0
    %1409 = vmatpush1.msra.mxu0 0.0
    %1410 = vmatprep.subr.mxu0 0.0
    %1411 = vmatpush1.msra.mxu0 0.0
    %1412 = vmatprep.subr.mxu0 0.0
    %1413 = vmatpush1.msra.mxu0 0.0
    %1414 = vmatprep.subr.mxu0 0.0
    %1415 = vmatpush1.msra.mxu0 0.0
    %1416 = vmatprep.subr.mxu0 0.0
    %1417 = vmatpush1.msra.mxu0 0.0
    %1418 = vmatprep.subr.mxu0 0.0
    %1419 = vmatpush1.msra.mxu0 0.0
    %1420 = vmatprep.subr.mxu0 0.0
    %1421 = vmatpush1.msra.mxu0 0.0
    %1422 = vmatprep.subr.mxu0 0.0
    %1423 = vmatpush1.msra.mxu0 0.0
    %1424 = vmatprep.subr.mxu0 0.0
    %1425 = vmatpush1.msra.mxu0 0.0
    %1426 = vmatprep.subr.mxu0 0.0
    %1427 = vmatpush1.msra.mxu0 0.0
    %1428 = vmatprep.subr.mxu0 0.0
    %1429 = vmatpush1.msra.mxu0 0.0
    %1430 = vmatprep.subr.mxu0 0.0
    %1431 = vmatpush1.msra.mxu0 0.0
    %1432 = vmatprep.subr.mxu0 0.0
    %1433 = vmatpush1.msra.mxu0 0.0
    %1434 = vmatprep.subr.mxu0 0.0
    %1435 = vmatpush1.msra.mxu0 0.0
    %1436 = vmatprep.subr.mxu0 0.0
    %1437 = vmatpush1.msra.mxu0 0.0
    %1438 = vmatprep.subr.mxu0 0.0
    %1439 = vmatpush1.msra.mxu0 0.0
    %1440 = vmatprep.subr.mxu0 0.0
    %1441 = vmatpush1.msra.mxu0 0.0
    %1442 = vmatprep.subr.mxu0 0.0
    %1443 = vmatpush1.msra.mxu0 0.0
    %1444 = vmatprep.subr.mxu0 0.0
    %1445 = vmatpush1.msra.mxu0 0.0
    %1446 = vmatprep.subr.mxu0 0.0
    %1447 = vmatpush1.msra.mxu0 0.0
    %1448 = vmatprep.subr.mxu0 0.0
    %1449 = vmatpush1.msra.mxu0 0.0
    %1450 = vmatprep.subr.mxu0 0.0
    %1451 = vmatpush1.msra.mxu0 0.0
    %1452 = vmatprep.subr.mxu0 0.0
    %1453 = vmatpush1.msra.mxu0 0.0
    %1454 = vmatprep.subr.mxu0 0.0
    %1455 = vmatpush1.msra.mxu0 0.0
    %1456 = vmatprep.subr.mxu0 0.0
    %1457 = vmatpush1.msra.mxu0 0.0
    %1458 = vmatprep.mubr.f32.mxu0 0.0
    %1459 = vmatmul.mubr.f32.gmra.mrb[0].mxu0 %v279
    %v1460 = vpop.f32.mrb[0].mxu0
    %v1461 = vadd.f32 0.0, %v1460
    %v1462 = vpop.f32.mrb[0].mxu0
    %1463 = vmatprep.mubr.f32.mxu0 0.0
    %1464 = vmatmul.mubr.f32.gmra.mrb[0].mxu0 %v282
    %v1465 = vpop.f32.mrb[0].mxu0
    %v1466 = vadd.f32 0.0, %v1465
    %v1467 = vpop.f32.mrb[0].mxu0
    %1468 = vdwg.mxu0
    %v1470 = vsel %vm525, %v1392, 0
    %v1473 = vsel %vm525, %v1393, 0
    %1475 = vmatprep.subr.mxu0 0.0
    %1476 = vmatpush1.msra.mxu0 %v1461
    %1477 = vmatprep.subr.mxu0 0.0
    %1478 = vmatpush1.msra.mxu0 %v1466
    %1479 = vmatprep.subr.mxu0 0.0
    %1480 = vmatpush1.msra.mxu0 0.0
    %1481 = vmatprep.subr.mxu0 0.0
    %1482 = vmatpush1.msra.mxu0 0.0
    %1483 = vmatprep.subr.mxu0 0.0
    %1484 = vmatpush1.msra.mxu0 0.0
    %1485 = vmatprep.subr.mxu0 0.0
    %1486 = vmatpush1.msra.mxu0 0.0
    %1487 = vmatprep.subr.mxu0 0.0
    %1488 = vmatpush1.msra.mxu0 0.0
    %1489 = vmatprep.subr.mxu0 0.0
    %1490 = vmatpush1.msra.mxu0 0.0
    %1491 = vmatprep.subr.mxu0 0.0
    %1492 = vmatpush1.msra.mxu0 0.0
    %1493 = vmatprep.subr.mxu0 0.0
    %1494 = vmatpush1.msra.mxu0 0.0
    %1495 = vmatprep.subr.mxu0 0.0
    %1496 = vmatpush1.msra.mxu0 0.0
    %1497 = vmatprep.subr.mxu0 0.0
    %1498 = vmatpush1.msra.mxu0 0.0
    %1499 = vmatprep.subr.mxu0 0.0
    %1500 = vmatpush1.msra.mxu0 0.0
    %1501 = vmatprep.subr.mxu0 0.0
    %1502 = vmatpush1.msra.mxu0 0.0
    %1503 = vmatprep.subr.mxu0 0.0
    %1504 = vmatpush1.msra.mxu0 0.0
    %1505 = vmatprep.subr.mxu0 0.0
    %1506 = vmatpush1.msra.mxu0 0.0
    %1507 = vmatprep.subr.mxu0 0.0
    %1508 = vmatpush1.msra.mxu0 0.0
    %1509 = vmatprep.subr.mxu0 0.0
    %1510 = vmatpush1.msra.mxu0 0.0
    %1511 = vmatprep.subr.mxu0 0.0
    %1512 = vmatpush1.msra.mxu0 0.0
    %1513 = vmatprep.subr.mxu0 0.0
    %1514 = vmatpush1.msra.mxu0 0.0
    %1515 = vmatprep.subr.mxu0 0.0
    %1516 = vmatpush1.msra.mxu0 0.0
    %1517 = vmatprep.subr.mxu0 0.0
    %1518 = vmatpush1.msra.mxu0 0.0
    %1519 = vmatprep.subr.mxu0 0.0
    %1520 = vmatpush1.msra.mxu0 0.0
    %1521 = vmatprep.subr.mxu0 0.0
    %1522 = vmatpush1.msra.mxu0 0.0
    %1523 = vmatprep.subr.mxu0 0.0
    %1524 = vmatpush1.msra.mxu0 0.0
    %1525 = vmatprep.subr.mxu0 0.0
    %1526 = vmatpush1.msra.mxu0 0.0
    %1527 = vmatprep.subr.mxu0 0.0
    %1528 = vmatpush1.msra.mxu0 0.0
    %1529 = vmatprep.subr.mxu0 0.0
    %1530 = vmatpush1.msra.mxu0 0.0
    %1531 = vmatprep.subr.mxu0 0.0
    %1532 = vmatpush1.msra.mxu0 0.0
    %1533 = vmatprep.subr.mxu0 0.0
    %1534 = vmatpush1.msra.mxu0 0.0
    %1535 = vmatprep.subr.mxu0 0.0
    %1536 = vmatpush1.msra.mxu0 0.0
    %1537 = vmatprep.subr.mxu0 0.0
    %1538 = vmatpush1.msra.mxu0 0.0
    %1539 = vmatprep.mubr.f32.mxu0 0.0
    %1540 = vmatmul.mubr.f32.gmra.mrb[0].mxu0 %v1470
    %v1541 = vpop.f32.mrb[0].mxu0
    %v1542 = vadd.f32 0.0, %v1541
    %v1543 = vpop.f32.mrb[0].mxu0
    %1544 = vmatprep.mubr.f32.mxu0 0.0
    %1545 = vmatmul.mubr.f32.gmra.mrb[0].mxu0 %v1473
    %v1546 = vpop.f32.mrb[0].mxu0
    %v1547 = vadd.f32 0.0, %v1546
    %v1548 = vpop.f32.mrb[0].mxu0
    %1549 = vdwg.mxu0
    %v1550 = vadd.f32 %v1119, %v1542
    %v1551 = vadd.f32 %v1124, %v1547
    %v1552 = vlaneseq
    %v1553 = vshrl.u32 %v1552, 7
    %v1554 = vsub.s32 0, %v1553
    %v1555 = vrot.slane %v49, %v1554
    %1556 = vmatprep.subr.mxu0 0.0
    %1557 = vmatpush1.msra.mxu0 %v42
    %1558 = vmatprep.subr.mxu0 0.0
    %1559 = vmatpush1.msra.mxu0 %v43
    %1560 = vmatprep.subr.mxu0 0.0
    %1561 = vmatpush1.msra.mxu0 %v44
    %1562 = vmatprep.subr.mxu0 0.0
    %1563 = vmatpush1.msra.mxu0 %v45
    %1564 = vmatprep.subr.mxu0 0.0
    %1565 = vmatpush1.msra.mxu0 0.0
    %1566 = vmatprep.subr.mxu0 0.0
    %1567 = vmatpush1.msra.mxu0 0.0
    %1568 = vmatprep.subr.mxu0 0.0
    %1569 = vmatpush1.msra.mxu0 0.0
    %1570 = vmatprep.subr.mxu0 0.0
    %1571 = vmatpush1.msra.mxu0 0.0
    %1572 = vmatprep.subr.mxu0 0.0
    %1573 = vmatpush1.msra.mxu0 0.0
    %1574 = vmatprep.subr.mxu0 0.0
    %1575 = vmatpush1.msra.mxu0 0.0
    %1576 = vmatprep.subr.mxu0 0.0
    %1577 = vmatpush1.msra.mxu0 0.0
    %1578 = vmatprep.subr.mxu0 0.0
    %1579 = vmatpush1.msra.mxu0 0.0
    %1580 = vmatprep.subr.mxu0 0.0
    %1581 = vmatpush1.msra.mxu0 0.0
    %1582 = vmatprep.subr.mxu0 0.0
    %1583 = vmatpush1.msra.mxu0 0.0
    %1584 = vmatprep.subr.mxu0 0.0
    %1585 = vmatpush1.msra.mxu0 0.0
    %1586 = vmatprep.subr.mxu0 0.0
    %1587 = vmatpush1.msra.mxu0 0.0
    %1588 = vmatprep.subr.mxu0 0.0
    %1589 = vmatpush1.msra.mxu0 0.0
    %1590 = vmatprep.subr.mxu0 0.0
    %1591 = vmatpush1.msra.mxu0 0.0
    %1592 = vmatprep.subr.mxu0 0.0
    %1593 = vmatpush1.msra.mxu0 0.0
    %1594 = vmatprep.subr.mxu0 0.0
    %1595 = vmatpush1.msra.mxu0 0.0
    %1596 = vmatprep.subr.mxu0 0.0
    %1597 = vmatpush1.msra.mxu0 0.0
    %1598 = vmatprep.subr.mxu0 0.0
    %1599 = vmatpush1.msra.mxu0 0.0
    %1600 = vmatprep.subr.mxu0 0.0
    %1601 = vmatpush1.msra.mxu0 0.0
    %1602 = vmatprep.subr.mxu0 0.0
    %1603 = vmatpush1.msra.mxu0 0.0
    %1604 = vmatprep.subr.mxu0 0.0
    %1605 = vmatpush1.msra.mxu0 0.0
    %1606 = vmatprep.subr.mxu0 0.0
    %1607 = vmatpush1.msra.mxu0 0.0
    %1608 = vmatprep.subr.mxu0 0.0
    %1609 = vmatpush1.msra.mxu0 0.0
    %1610 = vmatprep.subr.mxu0 0.0
    %1611 = vmatpush1.msra.mxu0 0.0
    %1612 = vmatprep.subr.mxu0 0.0
    %1613 = vmatpush1.msra.mxu0 0.0
    %1614 = vmatprep.subr.mxu0 0.0
    %1615 = vmatpush1.msra.mxu0 0.0
    %1616 = vmatprep.subr.mxu0 0.0
    %1617 = vmatpush1.msra.mxu0 0.0
    %1618 = vmatprep.subr.mxu0 0.0
    %1619 = vmatpush1.msra.mxu0 0.0
    %1620 = vmatprep.mubr.f32.mxu0 0.0
    %1621 = vmatmul.mubr.f32.gmra.mrb[0].mxu0 %v279
    %v1622 = vpop.f32.mrb[0].mxu0
    %v1623 = vadd.f32 %v1555, %v1622
    %v1624 = vpop.f32.mrb[0].mxu0
    %1625 = vmatprep.mubr.f32.mxu0 0.0
    %1626 = vmatmul.mubr.f32.gmra.mrb[0].mxu0 %v282
    %v1627 = vpop.f32.mrb[0].mxu0
    %v1628 = vadd.f32 %v1555, %v1627
    %v1629 = vpop.f32.mrb[0].mxu0
    %1630 = vdwg.mxu0
    %v1631 = vlaneseq
    %v1632 = vshrl.u32 %v1631, 7
    %v1633 = vsub.s32 0, %v1632
    %v1634 = vrot.slane %v69, %v1633
    %1635 = vmatprep.subr.mxu0 0.0
    %1636 = vmatpush1.msra.mxu0 %v62
    %1637 = vmatprep.subr.mxu0 0.0
    %1638 = vmatpush1.msra.mxu0 %v63
    %1639 = vmatprep.subr.mxu0 0.0
    %1640 = vmatpush1.msra.mxu0 %v64
    %1641 = vmatprep.subr.mxu0 0.0
    %1642 = vmatpush1.msra.mxu0 %v65
    %1643 = vmatprep.subr.mxu0 0.0
    %1644 = vmatpush1.msra.mxu0 0.0
    %1645 = vmatprep.subr.mxu0 0.0
    %1646 = vmatpush1.msra.mxu0 0.0
    %1647 = vmatprep.subr.mxu0 0.0
    %1648 = vmatpush1.msra.mxu0 0.0
    %1649 = vmatprep.subr.mxu0 0.0
    %1650 = vmatpush1.msra.mxu0 0.0
    %1651 = vmatprep.subr.mxu0 0.0
    %1652 = vmatpush1.msra.mxu0 0.0
    %1653 = vmatprep.subr.mxu0 0.0
    %1654 = vmatpush1.msra.mxu0 0.0
    %1655 = vmatprep.subr.mxu0 0.0
    %1656 = vmatpush1.msra.mxu0 0.0
    %1657 = vmatprep.subr.mxu0 0.0
    %1658 = vmatpush1.msra.mxu0 0.0
    %1659 = vmatprep.subr.mxu0 0.0
    %1660 = vmatpush1.msra.mxu0 0.0
    %1661 = vmatprep.subr.mxu0 0.0
    %1662 = vmatpush1.msra.mxu0 0.0
    %1663 = vmatprep.subr.mxu0 0.0
    %1664 = vmatpush1.msra.mxu0 0.0
    %1665 = vmatprep.subr.mxu0 0.0
    %1666 = vmatpush1.msra.mxu0 0.0
    %1667 = vmatprep.subr.mxu0 0.0
    %1668 = vmatpush1.msra.mxu0 0.0
    %1669 = vmatprep.subr.mxu0 0.0
    %1670 = vmatpush1.msra.mxu0 0.0
    %1671 = vmatprep.subr.mxu0 0.0
    %1672 = vmatpush1.msra.mxu0 0.0
    %1673 = vmatprep.subr.mxu0 0.0
    %1674 = vmatpush1.msra.mxu0 0.0
    %1675 = vmatprep.subr.mxu0 0.0
    %1676 = vmatpush1.msra.mxu0 0.0
    %1677 = vmatprep.subr.mxu0 0.0
    %1678 = vmatpush1.msra.mxu0 0.0
    %1679 = vmatprep.subr.mxu0 0.0
    %1680 = vmatpush1.msra.mxu0 0.0
    %1681 = vmatprep.subr.mxu0 0.0
    %1682 = vmatpush1.msra.mxu0 0.0
    %1683 = vmatprep.subr.mxu0 0.0
    %1684 = vmatpush1.msra.mxu0 0.0
    %1685 = vmatprep.subr.mxu0 0.0
    %1686 = vmatpush1.msra.mxu0 0.0
    %1687 = vmatprep.subr.mxu0 0.0
    %1688 = vmatpush1.msra.mxu0 0.0
    %1689 = vmatprep.subr.mxu0 0.0
    %1690 = vmatpush1.msra.mxu0 0.0
    %1691 = vmatprep.subr.mxu0 0.0
    %1692 = vmatpush1.msra.mxu0 0.0
    %1693 = vmatprep.subr.mxu0 0.0
    %1694 = vmatpush1.msra.mxu0 0.0
    %1695 = vmatprep.subr.mxu0 0.0
    %1696 = vmatpush1.msra.mxu0 0.0
    %1697 = vmatprep.subr.mxu0 0.0
    %1698 = vmatpush1.msra.mxu0 0.0
    %1699 = vmatprep.mubr.f32.mxu0 0.0
    %1700 = vmatmul.mubr.f32.gmra.mrb[0].mxu0 %v279
    %v1701 = vpop.f32.mrb[0].mxu0
    %v1702 = vadd.f32 %v1634, %v1701
    %v1703 = vpop.f32.mrb[0].mxu0
    %1704 = vmatprep.mubr.f32.mxu0 0.0
    %1705 = vmatmul.mubr.f32.gmra.mrb[0].mxu0 %v282
    %v1706 = vpop.f32.mrb[0].mxu0
    %v1707 = vadd.f32 %v1634, %v1706
    %v1708 = vpop.f32.mrb[0].mxu0
    %1709 = vdwg.mxu0
    %v1711 = vsel %vm120, %v1623, 0
    %v1714 = vsel %vm120, %v1628, 0
    %v1717 = vsel %vm120, %v1702, 0
    %v1720 = vsel %vm120, %v1707, 0
    %1722 = vmatprep.subr.mxu0 0.0
    %1723 = vmatpush1.xpose.msra.mxu0 %v1717
    %1724 = vmatprep.subr.mxu0 0.0
    %1725 = vmatpush1.xpose.msra.mxu0 %v1720
    %1726 = vmatprep.subr.mxu0 0.0
    %1727 = vmatpush1.xpose.msra.mxu0 0.0
    %1728 = vmatprep.subr.mxu0 0.0
    %1729 = vmatpush1.xpose.msra.mxu0 0.0
    %1730 = vmatprep.subr.mxu0 0.0
    %1731 = vmatpush1.xpose.msra.mxu0 0.0
    %1732 = vmatprep.subr.mxu0 0.0
    %1733 = vmatpush1.xpose.msra.mxu0 0.0
    %1734 = vmatprep.subr.mxu0 0.0
    %1735 = vmatpush1.xpose.msra.mxu0 0.0
    %1736 = vmatprep.subr.mxu0 0.0
    %1737 = vmatpush1.xpose.msra.mxu0 0.0
    %1738 = vmatprep.subr.mxu0 0.0
    %1739 = vmatpush1.xpose.msra.mxu0 0.0
    %1740 = vmatprep.subr.mxu0 0.0
    %1741 = vmatpush1.xpose.msra.mxu0 0.0
    %1742 = vmatprep.subr.mxu0 0.0
    %1743 = vmatpush1.xpose.msra.mxu0 0.0
    %1744 = vmatprep.subr.mxu0 0.0
    %1745 = vmatpush1.xpose.msra.mxu0 0.0
    %1746 = vmatprep.subr.mxu0 0.0
    %1747 = vmatpush1.xpose.msra.mxu0 0.0
    %1748 = vmatprep.subr.mxu0 0.0
    %1749 = vmatpush1.xpose.msra.mxu0 0.0
    %1750 = vmatprep.subr.mxu0 0.0
    %1751 = vmatpush1.xpose.msra.mxu0 0.0
    %1752 = vmatprep.subr.mxu0 0.0
    %1753 = vmatpush1.xpose.msra.mxu0 0.0
    %1754 = vmatprep.subr.mxu0 0.0
    %1755 = vmatpush1.xpose.msra.mxu0 0.0
    %1756 = vmatprep.subr.mxu0 0.0
    %1757 = vmatpush1.xpose.msra.mxu0 0.0
    %1758 = vmatprep.subr.mxu0 0.0
    %1759 = vmatpush1.xpose.msra.mxu0 0.0
    %1760 = vmatprep.subr.mxu0 0.0
    %1761 = vmatpush1.xpose.msra.mxu0 0.0
    %1762 = vmatprep.subr.mxu0 0.0
    %1763 = vmatpush1.xpose.msra.mxu0 0.0
    %1764 = vmatprep.subr.mxu0 0.0
    %1765 = vmatpush1.xpose.msra.mxu0 0.0
    %1766 = vmatprep.subr.mxu0 0.0
    %1767 = vmatpush1.xpose.msra.mxu0 0.0
    %1768 = vmatprep.subr.mxu0 0.0
    %1769 = vmatpush1.xpose.msra.mxu0 0.0
    %1770 = vmatprep.subr.mxu0 0.0
    %1771 = vmatpush1.xpose.msra.mxu0 0.0
    %1772 = vmatprep.subr.mxu0 0.0
    %1773 = vmatpush1.xpose.msra.mxu0 0.0
    %1774 = vmatprep.subr.mxu0 0.0
    %1775 = vmatpush1.xpose.msra.mxu0 0.0
    %1776 = vmatprep.subr.mxu0 0.0
    %1777 = vmatpush1.xpose.msra.mxu0 0.0
    %1778 = vmatprep.subr.mxu0 0.0
    %1779 = vmatpush1.xpose.msra.mxu0 0.0
    %1780 = vmatprep.subr.mxu0 0.0
    %1781 = vmatpush1.xpose.msra.mxu0 0.0
    %1782 = vmatprep.subr.mxu0 0.0
    %1783 = vmatpush1.xpose.msra.mxu0 0.0
    %1784 = vmatprep.subr.mxu0 0.0
    %1785 = vmatpush1.xpose.msra.mxu0 0.0
    %1786 = vmatprep.mubr.f32.mxu0 0.0
    %1787 = vmatmul.mubr.f32.gmra.mrb[0].mxu0 %v1711
    %v1788 = vpop.f32.mrb[0].mxu0
    %v1789 = vadd.f32 %v110, %v1788
    %v1790 = vpop.f32.mrb[0].mxu0
    %1791 = vmatprep.mubr.f32.mxu0 0.0
    %1792 = vmatmul.mubr.f32.gmra.mrb[0].mxu0 %v1714
    %v1793 = vpop.f32.mrb[0].mxu0
    %v1794 = vadd.f32 %v111, %v1793
    %v1795 = vpop.f32.mrb[0].mxu0
    %1796 = vdwg.mxu0
    %v1797 = vsel %vm525, %v1789, -inf
    %1798 = vmax.xlane.f32.xlu0 %v1797
    %v1799 = vpop.xlane.xlu0 %1798
    %v1800 = vsel %vm525, %v1794, -inf
    %1801 = vmax.xlane.f32.xlu0 %v1800
    %v1802 = vpop.xlane.xlu0 %1801
    %v1803 = vsub.f32 %v1789, %v1799
    %v1804 = vsub.f32 %v1794, %v1802
    %v1805 = vmul.f32 %v1803, 1.442695
    %v1806 = vpow.pop %v1805
    %v1807 = vmul.f32 %v1804, 1.442695
    %v1808 = vpow.pop %v1807
    %v1809 = vsel %vm525, %v1806, 0.0
    %1810 = vadd.xlane.f32.xlu0 %v1809
    %v1811 = vpop.xlane.xlu0 %1810
    %v1812 = vsel %vm525, %v1808, 0.0
    %1813 = vadd.xlane.f32.xlu0 %v1812
    %v1814 = vpop.xlane.xlu0 %1813
    %v1815 = vrcp.pop %v1811
    %v1816 = vrcp.pop %v1814
    %v1817 = vmul.f32 %v1806, %v1815
    %v1818 = vmul.f32 %v1808, %v1816
    %1819 = vmatprep.subr.mxu0 0.0
    %1820 = vmatpush1.msra.mxu0 %v82
    %1821 = vmatprep.subr.mxu0 0.0
    %1822 = vmatpush1.msra.mxu0 %v83
    %1823 = vmatprep.subr.mxu0 0.0
    %1824 = vmatpush1.msra.mxu0 %v84
    %1825 = vmatprep.subr.mxu0 0.0
    %1826 = vmatpush1.msra.mxu0 %v85
    %1827 = vmatprep.subr.mxu0 0.0
    %1828 = vmatpush1.msra.mxu0 0.0
    %1829 = vmatprep.subr.mxu0 0.0
    %1830 = vmatpush1.msra.mxu0 0.0
    %1831 = vmatprep.subr.mxu0 0.0
    %1832 = vmatpush1.msra.mxu0 0.0
    %1833 = vmatprep.subr.mxu0 0.0
    %1834 = vmatpush1.msra.mxu0 0.0
    %1835 = vmatprep.subr.mxu0 0.0
    %1836 = vmatpush1.msra.mxu0 0.0
    %1837 = vmatprep.subr.mxu0 0.0
    %1838 = vmatpush1.msra.mxu0 0.0
    %1839 = vmatprep.subr.mxu0 0.0
    %1840 = vmatpush1.msra.mxu0 0.0
    %1841 = vmatprep.subr.mxu0 0.0
    %1842 = vmatpush1.msra.mxu0 0.0
    %1843 = vmatprep.subr.mxu0 0.0
    %1844 = vmatpush1.msra.mxu0 0.0
    %1845 = vmatprep.subr.mxu0 0.0
    %1846 = vmatpush1.msra.mxu0 0.0
    %1847 = vmatprep.subr.mxu0 0.0
    %1848 = vmatpush1.msra.mxu0 0.0
    %1849 = vmatprep.subr.mxu0 0.0
    %1850 = vmatpush1.msra.mxu0 0.0
    %1851 = vmatprep.subr.mxu0 0.0
    %1852 = vmatpush1.msra.mxu0 0.0
    %1853 = vmatprep.subr.mxu0 0.0
    %1854 = vmatpush1.msra.mxu0 0.0
    %1855 = vmatprep.subr.mxu0 0.0
    %1856 = vmatpush1.msra.mxu0 0.0
    %1857 = vmatprep.subr.mxu0 0.0
    %1858 = vmatpush1.msra.mxu0 0.0
    %1859 = vmatprep.subr.mxu0 0.0
    %1860 = vmatpush1.msra.mxu0 0.0
    %1861 = vmatprep.subr.mxu0 0.0
    %1862 = vmatpush1.msra.mxu0 0.0
    %1863 = vmatprep.subr.mxu0 0.0
    %1864 = vmatpush1.msra.mxu0 0.0
    %1865 = vmatprep.subr.mxu0 0.0
    %1866 = vmatpush1.msra.mxu0 0.0
    %1867 = vmatprep.subr.mxu0 0.0
    %1868 = vmatpush1.msra.mxu0 0.0
    %1869 = vmatprep.subr.mxu0 0.0
    %1870 = vmatpush1.msra.mxu0 0.0
    %1871 = vmatprep.subr.mxu0 0.0
    %1872 = vmatpush1.msra.mxu0 0.0
    %1873 = vmatprep.subr.mxu0 0.0
    %1874 = vmatpush1.msra.mxu0 0.0
    %1875 = vmatprep.subr.mxu0 0.0
    %1876 = vmatpush1.msra.mxu0 0.0
    %1877 = vmatprep.subr.mxu0 0.0
    %1878 = vmatpush1.msra.mxu0 0.0
    %1879 = vmatprep.subr.mxu0 0.0
    %1880 = vmatpush1.msra.mxu0 0.0
    %1881 = vmatprep.subr.mxu0 0.0
    %1882 = vmatpush1.msra.mxu0 0.0
    %1883 = vmatprep.mubr.f32.mxu0 0.0
    %1884 = vmatmul.mubr.f32.gmra.mrb[0].mxu0 %v279
    %v1885 = vpop.f32.mrb[0].mxu0
    %v1886 = vadd.f32 0.0, %v1885
    %v1887 = vpop.f32.mrb[0].mxu0
    %1888 = vmatprep.mubr.f32.mxu0 0.0
    %1889 = vmatmul.mubr.f32.gmra.mrb[0].mxu0 %v282
    %v1890 = vpop.f32.mrb[0].mxu0
    %v1891 = vadd.f32 0.0, %v1890
    %v1892 = vpop.f32.mrb[0].mxu0
    %1893 = vdwg.mxu0
    %v1895 = vsel %vm525, %v1817, 0
    %v1898 = vsel %vm525, %v1818, 0
    %1900 = vmatprep.subr.mxu0 0.0
    %1901 = vmatpush1.msra.mxu0 %v1886
    %1902 = vmatprep.subr.mxu0 0.0
    %1903 = vmatpush1.msra.mxu0 %v1891
    %1904 = vmatprep.subr.mxu0 0.0
    %1905 = vmatpush1.msra.mxu0 0.0
    %1906 = vmatprep.subr.mxu0 0.0
    %1907 = vmatpush1.msra.mxu0 0.0
    %1908 = vmatprep.subr.mxu0 0.0
    %1909 = vmatpush1.msra.mxu0 0.0
    %1910 = vmatprep.subr.mxu0 0.0
    %1911 = vmatpush1.msra.mxu0 0.0
    %1912 = vmatprep.subr.mxu0 0.0
    %1913 = vmatpush1.msra.mxu0 0.0
    %1914 = vmatprep.subr.mxu0 0.0
    %1915 = vmatpush1.msra.mxu0 0.0
    %1916 = vmatprep.subr.mxu0 0.0
    %1917 = vmatpush1.msra.mxu0 0.0
    %1918 = vmatprep.subr.mxu0 0.0
    %1919 = vmatpush1.msra.mxu0 0.0
    %1920 = vmatprep.subr.mxu0 0.0
    %1921 = vmatpush1.msra.mxu0 0.0
    %1922 = vmatprep.subr.mxu0 0.0
    %1923 = vmatpush1.msra.mxu0 0.0
    %1924 = vmatprep.subr.mxu0 0.0
    %1925 = vmatpush1.msra.mxu0 0.0
    %1926 = vmatprep.subr.mxu0 0.0
    %1927 = vmatpush1.msra.mxu0 0.0
    %1928 = vmatprep.subr.mxu0 0.0
    %1929 = vmatpush1.msra.mxu0 0.0
    %1930 = vmatprep.subr.mxu0 0.0
    %1931 = vmatpush1.msra.mxu0 0.0
    %1932 = vmatprep.subr.mxu0 0.0
    %1933 = vmatpush1.msra.mxu0 0.0
    %1934 = vmatprep.subr.mxu0 0.0
    %1935 = vmatpush1.msra.mxu0 0.0
    %1936 = vmatprep.subr.mxu0 0.0
    %1937 = vmatpush1.msra.mxu0 0.0
    %1938 = vmatprep.subr.mxu0 0.0
    %1939 = vmatpush1.msra.mxu0 0.0
    %1940 = vmatprep.subr.mxu0 0.0
    %1941 = vmatpush1.msra.mxu0 0.0
    %1942 = vmatprep.subr.mxu0 0.0
    %1943 = vmatpush1.msra.mxu0 0.0
    %1944 = vmatprep.subr.mxu0 0.0
    %1945 = vmatpush1.msra.mxu0 0.0
    %1946 = vmatprep.subr.mxu0 0.0
    %1947 = vmatpush1.msra.mxu0 0.0
    %1948 = vmatprep.subr.mxu0 0.0
    %1949 = vmatpush1.msra.mxu0 0.0
    %1950 = vmatprep.subr.mxu0 0.0
    %1951 = vmatpush1.msra.mxu0 0.0
    %1952 = vmatprep.subr.mxu0 0.0
    %1953 = vmatpush1.msra.mxu0 0.0
    %1954 = vmatprep.subr.mxu0 0.0
    %1955 = vmatpush1.msra.mxu0 0.0
    %1956 = vmatprep.subr.mxu0 0.0
    %1957 = vmatpush1.msra.mxu0 0.0
    %1958 = vmatprep.subr.mxu0 0.0
    %1959 = vmatpush1.msra.mxu0 0.0
    %1960 = vmatprep.subr.mxu0 0.0
    %1961 = vmatpush1.msra.mxu0 0.0
    %1962 = vmatprep.subr.mxu0 0.0
    %1963 = vmatpush1.msra.mxu0 0.0
    %1964 = vmatprep.mubr.f32.mxu0 0.0
    %1965 = vmatmul.mubr.f32.gmra.mrb[0].mxu0 %v1895
    %v1966 = vpop.f32.mrb[0].mxu0
    %v1967 = vadd.f32 0.0, %v1966
    %v1968 = vpop.f32.mrb[0].mxu0
    %1969 = vmatprep.mubr.f32.mxu0 0.0
    %1970 = vmatmul.mubr.f32.gmra.mrb[0].mxu0 %v1898
    %v1971 = vpop.f32.mrb[0].mxu0
    %v1972 = vadd.f32 0.0, %v1971
    %v1973 = vpop.f32.mrb[0].mxu0
    %1974 = vdwg.mxu0
    %v1975 = vadd.f32 %v1550, %v1967
    %v1976 = vadd.f32 %v1551, %v1972
    %v1977 = vlaneseq
    %v1978 = vshrl.u32 %v1977, 7
    %v1979 = vsub.s32 0, %v1978
    %v1980 = vrot.slane %v86, %v1979
    %v1981 = vadd.f32 %v1975, %v1980
    %v1982 = vadd.f32 %v1976, %v1980
    %v1983 = vlaneseq
    %v1984 = vshrl.u32 %v1983, 7
    %v1985 = vsub.s32 0, %v1984
    %v1986 = vrot.slane %v91, %v1985
    %v1988 = vsel %vm202, %v1981, 0
    %v1991 = vsel %vm202, %v1982, 0
    %1993 = vmatprep.subr.mxu0 0.0
    %1994 = vmatpush1.msra.mxu0 %v87
    %1995 = vmatprep.subr.mxu0 0.0
    %1996 = vmatpush1.msra.mxu0 %v88
    %1997 = vmatprep.subr.mxu0 0.0
    %1998 = vmatpush1.msra.mxu0 %v89
    %1999 = vmatprep.subr.mxu0 0.0
    %2000 = vmatpush1.msra.mxu0 %v90
    %2001 = vmatprep.subr.mxu0 0.0
    %2002 = vmatpush1.msra.mxu0 0.0
    %2003 = vmatprep.subr.mxu0 0.0
    %2004 = vmatpush1.msra.mxu0 0.0
    %2005 = vmatprep.subr.mxu0 0.0
    %2006 = vmatpush1.msra.mxu0 0.0
    %2007 = vmatprep.subr.mxu0 0.0
    %2008 = vmatpush1.msra.mxu0 0.0
    %2009 = vmatprep.subr.mxu0 0.0
    %2010 = vmatpush1.msra.mxu0 0.0
    %2011 = vmatprep.subr.mxu0 0.0
    %2012 = vmatpush1.msra.mxu0 0.0
    %2013 = vmatprep.subr.mxu0 0.0
    %2014 = vmatpush1.msra.mxu0 0.0
    %2015 = vmatprep.subr.mxu0 0.0
    %2016 = vmatpush1.msra.mxu0 0.0
    %2017 = vmatprep.subr.mxu0 0.0
    %2018 = vmatpush1.msra.mxu0 0.0
    %2019 = vmatprep.subr.mxu0 0.0
    %2020 = vmatpush1.msra.mxu0 0.0
    %2021 = vmatprep.subr.mxu0 0.0
    %2022 = vmatpush1.msra.mxu0 0.0
    %2023 = vmatprep.subr.mxu0 0.0
    %2024 = vmatpush1.msra.mxu0 0.0
    %2025 = vmatprep.subr.mxu0 0.0
    %2026 = vmatpush1.msra.mxu0 0.0
    %2027 = vmatprep.subr.mxu0 0.0
    %2028 = vmatpush1.msra.mxu0 0.0
    %2029 = vmatprep.subr.mxu0 0.0
    %2030 = vmatpush1.msra.mxu0 0.0
    %2031 = vmatprep.subr.mxu0 0.0
    %2032 = vmatpush1.msra.mxu0 0.0
    %2033 = vmatprep.subr.mxu0 0.0
    %2034 = vmatpush1.msra.mxu0 0.0
    %2035 = vmatprep.subr.mxu0 0.0
    %2036 = vmatpush1.msra.mxu0 0.0
    %2037 = vmatprep.subr.mxu0 0.0
    %2038 = vmatpush1.msra.mxu0 0.0
    %2039 = vmatprep.subr.mxu0 0.0
    %2040 = vmatpush1.msra.mxu0 0.0
    %2041 = vmatprep.subr.mxu0 0.0
    %2042 = vmatpush1.msra.mxu0 0.0
    %2043 = vmatprep.subr.mxu0 0.0
    %2044 = vmatpush1.msra.mxu0 0.0
    %2045 = vmatprep.subr.mxu0 0.0
    %2046 = vmatpush1.msra.mxu0 0.0
    %2047 = vmatprep.subr.mxu0 0.0
    %2048 = vmatpush1.msra.mxu0 0.0
    %2049 = vmatprep.subr.mxu0 0.0
    %2050 = vmatpush1.msra.mxu0 0.0
    %2051 = vmatprep.subr.mxu0 0.0
    %2052 = vmatpush1.msra.mxu0 0.0
    %2053 = vmatprep.subr.mxu0 0.0
    %2054 = vmatpush1.msra.mxu0 0.0
    %2055 = vmatprep.subr.mxu0 0.0
    %2056 = vmatpush1.msra.mxu0 0.0
    %2057 = vmatprep.mubr.f32.mxu0 0.0
    %2058 = vmatmul.mubr.f32.gmra.mrb[0].mxu0 %v1988
    %v2059 = vpop.f32.mrb[0].mxu0
    %v2060 = vadd.f32 %v1986, %v2059
    %v2061 = vpop.f32.mrb[0].mxu0
    %2062 = vmatprep.mubr.f32.mxu0 0.0
    %2063 = vmatmul.mubr.f32.gmra.mrb[0].mxu0 %v1991
    %v2064 = vpop.f32.mrb[0].mxu0
    %v2065 = vadd.f32 %v1986, %v2064
    %v2066 = vpop.f32.mrb[0].mxu0
    %2067 = vdwg.mxu0
    %v2068 = vsel %vm202, %v2060, 0.0
    %2069 = vadd.xlane.f32.xlu0 %v2068
    %v2070 = vpop.xlane.xlu0 %2069
    %v2071 = vsel %vm202, %v2065, 0.0
    %2072 = vadd.xlane.f32.xlu0 %v2071
    %v2073 = vpop.xlane.xlu0 %2072
    %v2074 = vmul.f32 %v2070, %v209
    %v2075 = vmul.f32 %v2073, %v209
    %v2076 = vsub.f32 %v2060, %v2074
    %v2077 = vsub.f32 %v2065, %v2075
    %v2078 = vmul.f32 %v2076, %v2076
    %v2079 = vmul.f32 %v2077, %v2077
    %v2080 = vsel %vm202, %v2078, 0.0
    %2081 = vadd.xlane.f32.xlu0 %v2080
    %v2082 = vpop.xlane.xlu0 %2081
    %v2083 = vsel %vm202, %v2079, 0.0
    %2084 = vadd.xlane.f32.xlu0 %v2083
    %v2085 = vpop.xlane.xlu0 %2084
    %v2086 = vmul.f32 %v2082, %v209
    %v2087 = vmul.f32 %v2085, %v209
    %v2088 = vadd.f32 %v2086, 1e-12
    %v2089 = vadd.f32 %v2087, 1e-12
    %v2090 = vrsqrt.pop %v2088
    %v2091 = vrsqrt.pop %v2089
    %v2092 = vmul.f32 %v2076, %v2090
    %v2093 = vmul.f32 %v2077, %v2091
    %v2094 = vlaneseq
    %v2095 = vshrl.u32 %v2094, 7
    %v2096 = vsub.s32 0, %v2095
    %v2097 = vrot.slane %v92, %v2096
    %v2098 = vmul.f32 %v2097, %v2092
    %v2099 = vmul.f32 %v2097, %v2093
    %v2100 = vlaneseq
    %v2101 = vshrl.u32 %v2100, 7
    %v2102 = vsub.s32 0, %v2101
    %v2103 = vrot.slane %v93, %v2102
    %v2104 = vadd.f32 %v2098, %v2103
    %v2105 = vadd.f32 %v2099, %v2103
    %v2106 = vlaneseq
    %v2107 = vshrl.u32 %v2106, 7
    %v2108 = vsub.s32 0, %v2107
    %v2109 = vrot.slane %v98, %v2108
    %v2111 = vsel %vm202, %v2104, 0
    %v2114 = vsel %vm202, %v2105, 0
    %2116 = vmatprep.subr.mxu0 0.0
    %2117 = vmatpush1.msra.mxu0 %v94
    %2118 = vmatprep.subr.mxu0 0.0
    %2119 = vmatpush1.msra.mxu0 %v95
    %2120 = vmatprep.subr.mxu0 0.0
    %2121 = vmatpush1.msra.mxu0 %v96
    %2122 = vmatprep.subr.mxu0 0.0
    %2123 = vmatpush1.msra.mxu0 %v97
    %2124 = vmatprep.subr.mxu0 0.0
    %2125 = vmatpush1.msra.mxu0 0.0
    %2126 = vmatprep.subr.mxu0 0.0
    %2127 = vmatpush1.msra.mxu0 0.0
    %2128 = vmatprep.subr.mxu0 0.0
    %2129 = vmatpush1.msra.mxu0 0.0
    %2130 = vmatprep.subr.mxu0 0.0
    %2131 = vmatpush1.msra.mxu0 0.0
    %2132 = vmatprep.subr.mxu0 0.0
    %2133 = vmatpush1.msra.mxu0 0.0
    %2134 = vmatprep.subr.mxu0 0.0
    %2135 = vmatpush1.msra.mxu0 0.0
    %2136 = vmatprep.subr.mxu0 0.0
    %2137 = vmatpush1.msra.mxu0 0.0
    %2138 = vmatprep.subr.mxu0 0.0
    %2139 = vmatpush1.msra.mxu0 0.0
    %2140 = vmatprep.subr.mxu0 0.0
    %2141 = vmatpush1.msra.mxu0 0.0
    %2142 = vmatprep.subr.mxu0 0.0
    %2143 = vmatpush1.msra.mxu0 0.0
    %2144 = vmatprep.subr.mxu0 0.0
    %2145 = vmatpush1.msra.mxu0 0.0
    %2146 = vmatprep.subr.mxu0 0.0
    %2147 = vmatpush1.msra.mxu0 0.0
    %2148 = vmatprep.subr.mxu0 0.0
    %2149 = vmatpush1.msra.mxu0 0.0
    %2150 = vmatprep.subr.mxu0 0.0
    %2151 = vmatpush1.msra.mxu0 0.0
    %2152 = vmatprep.subr.mxu0 0.0
    %2153 = vmatpush1.msra.mxu0 0.0
    %2154 = vmatprep.subr.mxu0 0.0
    %2155 = vmatpush1.msra.mxu0 0.0
    %2156 = vmatprep.subr.mxu0 0.0
    %2157 = vmatpush1.msra.mxu0 0.0
    %2158 = vmatprep.subr.mxu0 0.0
    %2159 = vmatpush1.msra.mxu0 0.0
    %2160 = vmatprep.subr.mxu0 0.0
    %2161 = vmatpush1.msra.mxu0 0.0
    %2162 = vmatprep.subr.mxu0 0.0
    %2163 = vmatpush1.msra.mxu0 0.0
    %2164 = vmatprep.subr.mxu0 0.0
    %2165 = vmatpush1.msra.mxu0 0.0
    %2166 = vmatprep.subr.mxu0 0.0
    %2167 = vmatpush1.msra.mxu0 0.0
    %2168 = vmatprep.subr.mxu0 0.0
    %2169 = vmatpush1.msra.mxu0 0.0
    %2170 = vmatprep.subr.mxu0 0.0
    %2171 = vmatpush1.msra.mxu0 0.0
    %2172 = vmatprep.subr.mxu0 0.0
    %2173 = vmatpush1.msra.mxu0 0.0
    %2174 = vmatprep.subr.mxu0 0.0
    %2175 = vmatpush1.msra.mxu0 0.0
    %2176 = vmatprep.subr.mxu0 0.0
    %2177 = vmatpush1.msra.mxu0 0.0
    %2178 = vmatprep.subr.mxu0 0.0
    %2179 = vmatpush1.msra.mxu0 0.0
    %2180 = vmatprep.mubr.f32.mxu0 0.0
    %2181 = vmatmul.mubr.f32.gmra.mrb[0].mxu0 %v2111
    %v2182 = vpop.f32.mrb[0].mxu0
    %v2183 = vadd.f32 %v2109, %v2182
    %v2184 = vpop.f32.mrb[0].mxu0
    %2185 = vmatprep.mubr.f32.mxu0 0.0
    %2186 = vmatmul.mubr.f32.gmra.mrb[0].mxu0 %v2114
    %v2187 = vpop.f32.mrb[0].mxu0
    %v2188 = vadd.f32 %v2109, %v2187
    %v2189 = vpop.f32.mrb[0].mxu0
    %2190 = vdwg.mxu0
    %v2191 = vmul.f32 %v2183, 0.5
    %v2192 = vmul.f32 %v2188, 0.5
    %v2193 = vmul.f32 %v2183, 0.70710677
    %v2194 = vmul.f32 %v2188, 0.70710677
    %v2195 = vand.u32 2147483647, %v2193
    %v2196 = vand.u32 2147483647, %v2194
    %v2197 = vmul.f32 %v2195, 0.3275911
    %v2198 = vmul.f32 %v2196, 0.3275911
    %v2199 = vadd.f32 %v2197, 1.0
    %v2200 = vadd.f32 %v2198, 1.0
    %v2201 = vrcp.pop %v2199
    %v2202 = vrcp.pop %v2200
    %v2203 = vmul.f32 %v2201, 1.0614054
    %v2204 = vmul.f32 %v2202, 1.0614054
    %v2205 = vadd.f32 %v2203, -1.4531521
    %v2206 = vadd.f32 %v2204, -1.4531521
    %v2207 = vmul.f32 %v2205, %v2201
    %v2208 = vmul.f32 %v2206, %v2202
    %v2209 = vadd.f32 %v2207, 1.4214138
    %v2210 = vadd.f32 %v2208, 1.4214138
    %v2211 = vmul.f32 %v2209, %v2201
    %v2212 = vmul.f32 %v2210, %v2202
    %v2213 = vadd.f32 %v2211, -0.28449672
    %v2214 = vadd.f32 %v2212, -0.28449672
    %v2215 = vmul.f32 %v2213, %v2201
    %v2216 = vmul.f32 %v2214, %v2202
    %v2217 = vadd.f32 %v2215, 0.2548296
    %v2218 = vadd.f32 %v2216, 0.2548296
    %v2219 = vmul.f32 %v2217, %v2201
    %v2220 = vmul.f32 %v2218, %v2202
    %v2221 = vsub.f32 0.0, %v2195
    %v2222 = vsub.f32 0.0, %v2196
    %v2223 = vmul.f32 %v2221, %v2195
    %v2224 = vmul.f32 %v2222, %v2196
    %v2225 = vmul.f32 %v2223, 1.442695
    %v2226 = vpow.pop %v2225
    %v2227 = vmul.f32 %v2224, 1.442695
    %v2228 = vpow.pop %v2227
    %v2229 = vmul.f32 %v2219, %v2226
    %v2230 = vmul.f32 %v2220, %v2228
    %v2231 = vsub.f32 1.0, %v2229
    %v2232 = vsub.f32 1.0, %v2230
    %vm2233 = vcmp.ge.f32.partialorder %v2193, 0.0
    %vm2234 = vcmp.ge.f32.partialorder %v2194, 0.0
    %v2235 = vsub.f32 0.0, %v2231
    %v2236 = vsub.f32 0.0, %v2232
    %v2237 = vsel %vm2233, %v2231, %v2235
    %v2238 = vsel %vm2234, %v2232, %v2236
    %v2239 = vadd.f32 %v2237, 1.0
    %v2240 = vadd.f32 %v2238, 1.0
    %v2241 = vmul.f32 %v2191, %v2239
    %v2242 = vmul.f32 %v2192, %v2240
    %v2243 = vlaneseq
    %v2244 = vshrl.u32 %v2243, 7
    %v2245 = vsub.s32 0, %v2244
    %v2246 = vrot.slane %v107, %v2245
    %vm2247 = vcmask 523264
    %v2249 = vsel %vm2247, %v2241, 0
    %v2252 = vsel %vm2247, %v2242, 0
    %2254 = vmatprep.subr.mxu0 0.0
    %2255 = vmatpush1.msra.mxu0 %v99
    %2256 = vmatprep.subr.mxu0 0.0
    %2257 = vmatpush1.msra.mxu0 %v100
    %2258 = vmatprep.subr.mxu0 0.0
    %2259 = vmatpush1.msra.mxu0 %v101
    %2260 = vmatprep.subr.mxu0 0.0
    %2261 = vmatpush1.msra.mxu0 %v102
    %2262 = vmatprep.subr.mxu0 0.0
    %2263 = vmatpush1.msra.mxu0 %v103
    %2264 = vmatprep.subr.mxu0 0.0
    %2265 = vmatpush1.msra.mxu0 %v104
    %2266 = vmatprep.subr.mxu0 0.0
    %2267 = vmatpush1.msra.mxu0 %v105
    %2268 = vmatprep.subr.mxu0 0.0
    %2269 = vmatpush1.msra.mxu0 %v106
    %2270 = vmatprep.subr.mxu0 0.0
    %2271 = vmatpush1.msra.mxu0 0.0
    %2272 = vmatprep.subr.mxu0 0.0
    %2273 = vmatpush1.msra.mxu0 0.0
    %2274 = vmatprep.subr.mxu0 0.0
    %2275 = vmatpush1.msra.mxu0 0.0
    %2276 = vmatprep.subr.mxu0 0.0
    %2277 = vmatpush1.msra.mxu0 0.0
    %2278 = vmatprep.subr.mxu0 0.0
    %2279 = vmatpush1.msra.mxu0 0.0
    %2280 = vmatprep.subr.mxu0 0.0
    %2281 = vmatpush1.msra.mxu0 0.0
    %2282 = vmatprep.subr.mxu0 0.0
    %2283 = vmatpush1.msra.mxu0 0.0
    %2284 = vmatprep.subr.mxu0 0.0
    %2285 = vmatpush1.msra.mxu0 0.0
    %2286 = vmatprep.subr.mxu0 0.0
    %2287 = vmatpush1.msra.mxu0 0.0
    %2288 = vmatprep.subr.mxu0 0.0
    %2289 = vmatpush1.msra.mxu0 0.0
    %2290 = vmatprep.subr.mxu0 0.0
    %2291 = vmatpush1.msra.mxu0 0.0
    %2292 = vmatprep.subr.mxu0 0.0
    %2293 = vmatpush1.msra.mxu0 0.0
    %2294 = vmatprep.subr.mxu0 0.0
    %2295 = vmatpush1.msra.mxu0 0.0
    %2296 = vmatprep.subr.mxu0 0.0
    %2297 = vmatpush1.msra.mxu0 0.0
    %2298 = vmatprep.subr.mxu0 0.0
    %2299 = vmatpush1.msra.mxu0 0.0
    %2300 = vmatprep.subr.mxu0 0.0
    %2301 = vmatpush1.msra.mxu0 0.0
    %2302 = vmatprep.subr.mxu0 0.0
    %2303 = vmatpush1.msra.mxu0 0.0
    %2304 = vmatprep.subr.mxu0 0.0
    %2305 = vmatpush1.msra.mxu0 0.0
    %2306 = vmatprep.subr.mxu0 0.0
    %2307 = vmatpush1.msra.mxu0 0.0
    %2308 = vmatprep.subr.mxu0 0.0
    %2309 = vmatpush1.msra.mxu0 0.0
    %2310 = vmatprep.subr.mxu0 0.0
    %2311 = vmatpush1.msra.mxu0 0.0
    %2312 = vmatprep.subr.mxu0 0.0
    %2313 = vmatpush1.msra.mxu0 0.0
    %2314 = vmatprep.subr.mxu0 0.0
    %2315 = vmatpush1.msra.mxu0 0.0
    %2316 = vmatprep.subr.mxu0 0.0
    %2317 = vmatpush1.msra.mxu0 0.0
    %2318 = vmatprep.mubr.f32.mxu0 0.0
    %2319 = vmatmul.mubr.f32.gmra.mrb[0].mxu0 %v2249
    %v2320 = vpop.f32.mrb[0].mxu0
    %v2321 = vadd.f32 %v2246, %v2320
    %v2322 = vpop.f32.mrb[0].mxu0
    %2323 = vmatprep.mubr.f32.mxu0 0.0
    %2324 = vmatmul.mubr.f32.gmra.mrb[0].mxu0 %v2252
    %v2325 = vpop.f32.mrb[0].mxu0
    %v2326 = vadd.f32 %v2246, %v2325
    %v2327 = vpop.f32.mrb[0].mxu0
    %2328 = vdwg.mxu0
    %v2329 = vadd.f32 %v2104, %v2321
    %v2330 = vadd.f32 %v2105, %v2326
    %v2331 = vsel %vm202, %v2329, 0.0
    %2332 = vadd.xlane.f32.xlu0 %v2331
    %v2333 = vpop.xlane.xlu0 %2332
    %v2334 = vsel %vm202, %v2330, 0.0
    %2335 = vadd.xlane.f32.xlu0 %v2334
    %v2336 = vpop.xlane.xlu0 %2335
    %v2337 = vmul.f32 %v2333, %v209
    %v2338 = vmul.f32 %v2336, %v209
    %v2339 = vsub.f32 %v2329, %v2337
    %v2340 = vsub.f32 %v2330, %v2338
    %v2341 = vmul.f32 %v2339, %v2339
    %v2342 = vmul.f32 %v2340, %v2340
    %v2343 = vsel %vm202, %v2341, 0.0
    %2344 = vadd.xlane.f32.xlu0 %v2343
    %v2345 = vpop.xlane.xlu0 %2344
    %v2346 = vsel %vm202, %v2342, 0.0
    %2347 = vadd.xlane.f32.xlu0 %v2346
    %v2348 = vpop.xlane.xlu0 %2347
    %v2349 = vmul.f32 %v2345, %v209
    %v2350 = vmul.f32 %v2348, %v209
    %v2351 = vadd.f32 %v2349, 1e-12
    %v2352 = vadd.f32 %v2350, 1e-12
    %v2353 = vrsqrt.pop %v2351
    %v2354 = vrsqrt.pop %v2352
    %v2355 = vmul.f32 %v2339, %v2353
    %v2356 = vmul.f32 %v2340, %v2354
    %v2357 = vlaneseq
    %v2358 = vshrl.u32 %v2357, 7
    %v2359 = vsub.s32 0, %v2358
    %v2360 = vrot.slane %v108, %v2359
    %v2361 = vmul.f32 %v2360, %v2355
    %v2362 = vmul.f32 %v2360, %v2356
    %v2363 = vlaneseq
    %v2364 = vshrl.u32 %v2363, 7
    %v2365 = vsub.s32 0, %v2364
    %v2366 = vrot.slane %v109, %v2365
    %v2367 = vadd.f32 %v2361, %v2366
    %v2368 = vadd.f32 %v2362, %v2366
    %v2370 = vsel %vm202, %v2367, 0
    %v2373 = vsel %vm202, %v2368, 0
    %2375 = vmatprep.subr.mxu0 0.0
    %2376 = vmatpush1.msra.mxu0 %v30
    %2377 = vmatprep.subr.mxu0 0.0
    %2378 = vmatpush1.msra.mxu0 %v31
    %2379 = vmatprep.subr.mxu0 0.0
    %2380 = vmatpush1.msra.mxu0 %v32
    %2381 = vmatprep.subr.mxu0 0.0
    %2382 = vmatpush1.msra.mxu0 %v33
    %2383 = vmatprep.subr.mxu0 0.0
    %2384 = vmatpush1.msra.mxu0 0.0
    %2385 = vmatprep.subr.mxu0 0.0
    %2386 = vmatpush1.msra.mxu0 0.0
    %2387 = vmatprep.subr.mxu0 0.0
    %2388 = vmatpush1.msra.mxu0 0.0
    %2389 = vmatprep.subr.mxu0 0.0
    %2390 = vmatpush1.msra.mxu0 0.0
    %2391 = vmatprep.subr.mxu0 0.0
    %2392 = vmatpush1.msra.mxu0 0.0
    %2393 = vmatprep.subr.mxu0 0.0
    %2394 = vmatpush1.msra.mxu0 0.0
    %2395 = vmatprep.subr.mxu0 0.0
    %2396 = vmatpush1.msra.mxu0 0.0
    %2397 = vmatprep.subr.mxu0 0.0
    %2398 = vmatpush1.msra.mxu0 0.0
    %2399 = vmatprep.subr.mxu0 0.0
    %2400 = vmatpush1.msra.mxu0 0.0
    %2401 = vmatprep.subr.mxu0 0.0
    %2402 = vmatpush1.msra.mxu0 0.0
    %2403 = vmatprep.subr.mxu0 0.0
    %2404 = vmatpush1.msra.mxu0 0.0
    %2405 = vmatprep.subr.mxu0 0.0
    %2406 = vmatpush1.msra.mxu0 0.0
    %2407 = vmatprep.subr.mxu0 0.0
    %2408 = vmatpush1.msra.mxu0 0.0
    %2409 = vmatprep.subr.mxu0 0.0
    %2410 = vmatpush1.msra.mxu0 0.0
    %2411 = vmatprep.subr.mxu0 0.0
    %2412 = vmatpush1.msra.mxu0 0.0
    %2413 = vmatprep.subr.mxu0 0.0
    %2414 = vmatpush1.msra.mxu0 0.0
    %2415 = vmatprep.subr.mxu0 0.0
    %2416 = vmatpush1.msra.mxu0 0.0
    %2417 = vmatprep.subr.mxu0 0.0
    %2418 = vmatpush1.msra.mxu0 0.0
    %2419 = vmatprep.subr.mxu0 0.0
    %2420 = vmatpush1.msra.mxu0 0.0
    %2421 = vmatprep.subr.mxu0 0.0
    %2422 = vmatpush1.msra.mxu0 0.0
    %2423 = vmatprep.subr.mxu0 0.0
    %2424 = vmatpush1.msra.mxu0 0.0
    %2425 = vmatprep.subr.mxu0 0.0
    %2426 = vmatpush1.msra.mxu0 0.0
    %2427 = vmatprep.subr.mxu0 0.0
    %2428 = vmatpush1.msra.mxu0 0.0
    %2429 = vmatprep.subr.mxu0 0.0
    %2430 = vmatpush1.msra.mxu0 0.0
    %2431 = vmatprep.subr.mxu0 0.0
    %2432 = vmatpush1.msra.mxu0 0.0
    %2433 = vmatprep.subr.mxu0 0.0
    %2434 = vmatpush1.msra.mxu0 0.0
    %2435 = vmatprep.subr.mxu0 0.0
    %2436 = vmatpush1.msra.mxu0 0.0
    %2437 = vmatprep.subr.mxu0 0.0
    %2438 = vmatpush1.msra.mxu0 0.0
    %2439 = vmatprep.mubr.f32.mxu0 0.0
    %2440 = vmatmul.mubr.f32.gmra.mrb[0].mxu0 %v2370
    %v2441 = vpop.f32.mrb[0].mxu0
    %v2442 = vadd.f32 %v277, %v2441
    %v2443 = vpop.f32.mrb[0].mxu0
    %2444 = vmatprep.mubr.f32.mxu0 0.0
    %2445 = vmatmul.mubr.f32.gmra.mrb[0].mxu0 %v2373
    %v2446 = vpop.f32.mrb[0].mxu0
    %v2447 = vadd.f32 %v277, %v2446
    %v2448 = vpop.f32.mrb[0].mxu0
    %2449 = vdwg.mxu0
    %2450 = vmatprep.subr.mxu0 0.0
    %2451 = vmatpush1.msra.mxu0 %v50
    %2452 = vmatprep.subr.mxu0 0.0
    %2453 = vmatpush1.msra.mxu0 %v51
    %2454 = vmatprep.subr.mxu0 0.0
    %2455 = vmatpush1.msra.mxu0 %v52
    %2456 = vmatprep.subr.mxu0 0.0
    %2457 = vmatpush1.msra.mxu0 %v53
    %2458 = vmatprep.subr.mxu0 0.0
    %2459 = vmatpush1.msra.mxu0 0.0
    %2460 = vmatprep.subr.mxu0 0.0
    %2461 = vmatpush1.msra.mxu0 0.0
    %2462 = vmatprep.subr.mxu0 0.0
    %2463 = vmatpush1.msra.mxu0 0.0
    %2464 = vmatprep.subr.mxu0 0.0
    %2465 = vmatpush1.msra.mxu0 0.0
    %2466 = vmatprep.subr.mxu0 0.0
    %2467 = vmatpush1.msra.mxu0 0.0
    %2468 = vmatprep.subr.mxu0 0.0
    %2469 = vmatpush1.msra.mxu0 0.0
    %2470 = vmatprep.subr.mxu0 0.0
    %2471 = vmatpush1.msra.mxu0 0.0
    %2472 = vmatprep.subr.mxu0 0.0
    %2473 = vmatpush1.msra.mxu0 0.0
    %2474 = vmatprep.subr.mxu0 0.0
    %2475 = vmatpush1.msra.mxu0 0.0
    %2476 = vmatprep.subr.mxu0 0.0
    %2477 = vmatpush1.msra.mxu0 0.0
    %2478 = vmatprep.subr.mxu0 0.0
    %2479 = vmatpush1.msra.mxu0 0.0
    %2480 = vmatprep.subr.mxu0 0.0
    %2481 = vmatpush1.msra.mxu0 0.0
    %2482 = vmatprep.subr.mxu0 0.0
    %2483 = vmatpush1.msra.mxu0 0.0
    %2484 = vmatprep.subr.mxu0 0.0
    %2485 = vmatpush1.msra.mxu0 0.0
    %2486 = vmatprep.subr.mxu0 0.0
    %2487 = vmatpush1.msra.mxu0 0.0
    %2488 = vmatprep.subr.mxu0 0.0
    %2489 = vmatpush1.msra.mxu0 0.0
    %2490 = vmatprep.subr.mxu0 0.0
    %2491 = vmatpush1.msra.mxu0 0.0
    %2492 = vmatprep.subr.mxu0 0.0
    %2493 = vmatpush1.msra.mxu0 0.0
    %2494 = vmatprep.subr.mxu0 0.0
    %2495 = vmatpush1.msra.mxu0 0.0
    %2496 = vmatprep.subr.mxu0 0.0
    %2497 = vmatpush1.msra.mxu0 0.0
    %2498 = vmatprep.subr.mxu0 0.0
    %2499 = vmatpush1.msra.mxu0 0.0
    %2500 = vmatprep.subr.mxu0 0.0
    %2501 = vmatpush1.msra.mxu0 0.0
    %2502 = vmatprep.subr.mxu0 0.0
    %2503 = vmatpush1.msra.mxu0 0.0
    %2504 = vmatprep.subr.mxu0 0.0
    %2505 = vmatpush1.msra.mxu0 0.0
    %2506 = vmatprep.subr.mxu0 0.0
    %2507 = vmatpush1.msra.mxu0 0.0
    %2508 = vmatprep.subr.mxu0 0.0
    %2509 = vmatpush1.msra.mxu0 0.0
    %2510 = vmatprep.subr.mxu0 0.0
    %2511 = vmatpush1.msra.mxu0 0.0
    %2512 = vmatprep.subr.mxu0 0.0
    %2513 = vmatpush1.msra.mxu0 0.0
    %2514 = vmatprep.mubr.f32.mxu0 0.0
    %2515 = vmatmul.mubr.f32.gmra.mrb[0].mxu0 %v2370
    %v2516 = vpop.f32.mrb[0].mxu0
    %v2517 = vadd.f32 %v362, %v2516
    %v2518 = vpop.f32.mrb[0].mxu0
    %2519 = vmatprep.mubr.f32.mxu0 0.0
    %2520 = vmatmul.mubr.f32.gmra.mrb[0].mxu0 %v2373
    %v2521 = vpop.f32.mrb[0].mxu0
    %v2522 = vadd.f32 %v362, %v2521
    %v2523 = vpop.f32.mrb[0].mxu0
    %2524 = vdwg.mxu0
    %v2526 = vsel %vm120, %v2442, 0
    %v2529 = vsel %vm120, %v2447, 0
    %v2532 = vsel %vm120, %v2517, 0
    %v2535 = vsel %vm120, %v2522, 0
    %2537 = vmatprep.subr.mxu0 0.0
    %2538 = vmatpush1.xpose.msra.mxu0 %v2532
    %2539 = vmatprep.subr.mxu0 0.0
    %2540 = vmatpush1.xpose.msra.mxu0 %v2535
    %2541 = vmatprep.subr.mxu0 0.0
    %2542 = vmatpush1.xpose.msra.mxu0 0.0
    %2543 = vmatprep.subr.mxu0 0.0
    %2544 = vmatpush1.xpose.msra.mxu0 0.0
    %2545 = vmatprep.subr.mxu0 0.0
    %2546 = vmatpush1.xpose.msra.mxu0 0.0
    %2547 = vmatprep.subr.mxu0 0.0
    %2548 = vmatpush1.xpose.msra.mxu0 0.0
    %2549 = vmatprep.subr.mxu0 0.0
    %2550 = vmatpush1.xpose.msra.mxu0 0.0
    %2551 = vmatprep.subr.mxu0 0.0
    %2552 = vmatpush1.xpose.msra.mxu0 0.0
    %2553 = vmatprep.subr.mxu0 0.0
    %2554 = vmatpush1.xpose.msra.mxu0 0.0
    %2555 = vmatprep.subr.mxu0 0.0
    %2556 = vmatpush1.xpose.msra.mxu0 0.0
    %2557 = vmatprep.subr.mxu0 0.0
    %2558 = vmatpush1.xpose.msra.mxu0 0.0
    %2559 = vmatprep.subr.mxu0 0.0
    %2560 = vmatpush1.xpose.msra.mxu0 0.0
    %2561 = vmatprep.subr.mxu0 0.0
    %2562 = vmatpush1.xpose.msra.mxu0 0.0
    %2563 = vmatprep.subr.mxu0 0.0
    %2564 = vmatpush1.xpose.msra.mxu0 0.0
    %2565 = vmatprep.subr.mxu0 0.0
    %2566 = vmatpush1.xpose.msra.mxu0 0.0
    %2567 = vmatprep.subr.mxu0 0.0
    %2568 = vmatpush1.xpose.msra.mxu0 0.0
    %2569 = vmatprep.subr.mxu0 0.0
    %2570 = vmatpush1.xpose.msra.mxu0 0.0
    %2571 = vmatprep.subr.mxu0 0.0
    %2572 = vmatpush1.xpose.msra.mxu0 0.0
    %2573 = vmatprep.subr.mxu0 0.0
    %2574 = vmatpush1.xpose.msra.mxu0 0.0
    %2575 = vmatprep.subr.mxu0 0.0
    %2576 = vmatpush1.xpose.msra.mxu0 0.0
    %2577 = vmatprep.subr.mxu0 0.0
    %2578 = vmatpush1.xpose.msra.mxu0 0.0
    %2579 = vmatprep.subr.mxu0 0.0
    %2580 = vmatpush1.xpose.msra.mxu0 0.0
    %2581 = vmatprep.subr.mxu0 0.0
    %2582 = vmatpush1.xpose.msra.mxu0 0.0
    %2583 = vmatprep.subr.mxu0 0.0
    %2584 = vmatpush1.xpose.msra.mxu0 0.0
    %2585 = vmatprep.subr.mxu0 0.0
    %2586 = vmatpush1.xpose.msra.mxu0 0.0
    %2587 = vmatprep.subr.mxu0 0.0
    %2588 = vmatpush1.xpose.msra.mxu0 0.0
    %2589 = vmatprep.subr.mxu0 0.0
    %2590 = vmatpush1.xpose.msra.mxu0 0.0
    %2591 = vmatprep.subr.mxu0 0.0
    %2592 = vmatpush1.xpose.msra.mxu0 0.0
    %2593 = vmatprep.subr.mxu0 0.0
    %2594 = vmatpush1.xpose.msra.mxu0 0.0
    %2595 = vmatprep.subr.mxu0 0.0
    %2596 = vmatpush1.xpose.msra.mxu0 0.0
    %2597 = vmatprep.subr.mxu0 0.0
    %2598 = vmatpush1.xpose.msra.mxu0 0.0
    %2599 = vmatprep.subr.mxu0 0.0
    %2600 = vmatpush1.xpose.msra.mxu0 0.0
    %2601 = vmatprep.mubr.f32.mxu0 0.0
    %2602 = vmatmul.mubr.f32.gmra.mrb[0].mxu0 %v2526
    %v2603 = vpop.f32.mrb[0].mxu0
    %v2604 = vadd.f32 %v110, %v2603
    %v2605 = vpop.f32.mrb[0].mxu0
    %2606 = vmatprep.mubr.f32.mxu0 0.0
    %2607 = vmatmul.mubr.f32.gmra.mrb[0].mxu0 %v2529
    %v2608 = vpop.f32.mrb[0].mxu0
    %v2609 = vadd.f32 %v111, %v2608
    %v2610 = vpop.f32.mrb[0].mxu0
    %2611 = vdwg.mxu0
    %v2612 = vsel %vm525, %v2604, -inf
    %2613 = vmax.xlane.f32.xlu0 %v2612
    %v2614 = vpop.xlane.xlu0 %2613
    %v2615 = vsel %vm525, %v2609, -inf
    %2616 = vmax.xlane.f32.xlu0 %v2615
    %v2617 = vpop.xlane.xlu0 %2616
    %v2618 = vsub.f32 %v2604, %v2614
    %v2619 = vsub.f32 %v2609, %v2617
    %v2620 = vmul.f32 %v2618, 1.442695
    %v2621 = vpow.pop %v2620
    %v2622 = vmul.f32 %v2619, 1.442695
    %v2623 = vpow.pop %v2622
    %v2624 = vsel %vm525, %v2621, 0.0
    %2625 = vadd.xlane.f32.xlu0 %v2624
    %v2626 = vpop.xlane.xlu0 %2625
    %v2627 = vsel %vm525, %v2623, 0.0
    %2628 = vadd.xlane.f32.xlu0 %v2627
    %v2629 = vpop.xlane.xlu0 %2628
    %v2630 = vrcp.pop %v2626
    %v2631 = vrcp.pop %v2629
    %v2632 = vmul.f32 %v2621, %v2630
    %v2633 = vmul.f32 %v2623, %v2631
    %2634 = vmatprep.subr.mxu0 0.0
    %2635 = vmatpush1.msra.mxu0 %v70
    %2636 = vmatprep.subr.mxu0 0.0
    %2637 = vmatpush1.msra.mxu0 %v71
    %2638 = vmatprep.subr.mxu0 0.0
    %2639 = vmatpush1.msra.mxu0 %v72
    %2640 = vmatprep.subr.mxu0 0.0
    %2641 = vmatpush1.msra.mxu0 %v73
    %2642 = vmatprep.subr.mxu0 0.0
    %2643 = vmatpush1.msra.mxu0 0.0
    %2644 = vmatprep.subr.mxu0 0.0
    %2645 = vmatpush1.msra.mxu0 0.0
    %2646 = vmatprep.subr.mxu0 0.0
    %2647 = vmatpush1.msra.mxu0 0.0
    %2648 = vmatprep.subr.mxu0 0.0
    %2649 = vmatpush1.msra.mxu0 0.0
    %2650 = vmatprep.subr.mxu0 0.0
    %2651 = vmatpush1.msra.mxu0 0.0
    %2652 = vmatprep.subr.mxu0 0.0
    %2653 = vmatpush1.msra.mxu0 0.0
    %2654 = vmatprep.subr.mxu0 0.0
    %2655 = vmatpush1.msra.mxu0 0.0
    %2656 = vmatprep.subr.mxu0 0.0
    %2657 = vmatpush1.msra.mxu0 0.0
    %2658 = vmatprep.subr.mxu0 0.0
    %2659 = vmatpush1.msra.mxu0 0.0
    %2660 = vmatprep.subr.mxu0 0.0
    %2661 = vmatpush1.msra.mxu0 0.0
    %2662 = vmatprep.subr.mxu0 0.0
    %2663 = vmatpush1.msra.mxu0 0.0
    %2664 = vmatprep.subr.mxu0 0.0
    %2665 = vmatpush1.msra.mxu0 0.0
    %2666 = vmatprep.subr.mxu0 0.0
    %2667 = vmatpush1.msra.mxu0 0.0
    %2668 = vmatprep.subr.mxu0 0.0
    %2669 = vmatpush1.msra.mxu0 0.0
    %2670 = vmatprep.subr.mxu0 0.0
    %2671 = vmatpush1.msra.mxu0 0.0
    %2672 = vmatprep.subr.mxu0 0.0
    %2673 = vmatpush1.msra.mxu0 0.0
    %2674 = vmatprep.subr.mxu0 0.0
    %2675 = vmatpush1.msra.mxu0 0.0
    %2676 = vmatprep.subr.mxu0 0.0
    %2677 = vmatpush1.msra.mxu0 0.0
    %2678 = vmatprep.subr.mxu0 0.0
    %2679 = vmatpush1.msra.mxu0 0.0
    %2680 = vmatprep.subr.mxu0 0.0
    %2681 = vmatpush1.msra.mxu0 0.0
    %2682 = vmatprep.subr.mxu0 0.0
    %2683 = vmatpush1.msra.mxu0 0.0
    %2684 = vmatprep.subr.mxu0 0.0
    %2685 = vmatpush1.msra.mxu0 0.0
    %2686 = vmatprep.subr.mxu0 0.0
    %2687 = vmatpush1.msra.mxu0 0.0
    %2688 = vmatprep.subr.mxu0 0.0
    %2689 = vmatpush1.msra.mxu0 0.0
    %2690 = vmatprep.subr.mxu0 0.0
    %2691 = vmatpush1.msra.mxu0 0.0
    %2692 = vmatprep.subr.mxu0 0.0
    %2693 = vmatpush1.msra.mxu0 0.0
    %2694 = vmatprep.subr.mxu0 0.0
    %2695 = vmatpush1.msra.mxu0 0.0
    %2696 = vmatprep.subr.mxu0 0.0
    %2697 = vmatpush1.msra.mxu0 0.0
    %2698 = vmatprep.mubr.f32.mxu0 0.0
    %2699 = vmatmul.mubr.f32.gmra.mrb[0].mxu0 %v2370
    %v2700 = vpop.f32.mrb[0].mxu0
    %v2701 = vadd.f32 0.0, %v2700
    %v2702 = vpop.f32.mrb[0].mxu0
    %2703 = vmatprep.mubr.f32.mxu0 0.0
    %2704 = vmatmul.mubr.f32.gmra.mrb[0].mxu0 %v2373
    %v2705 = vpop.f32.mrb[0].mxu0
    %v2706 = vadd.f32 0.0, %v2705
    %v2707 = vpop.f32.mrb[0].mxu0
    %2708 = vdwg.mxu0
    %2709 = vmatprep.subr.mxu0 0.0
    %2710 = vmatpush1.msra.mxu0 %v34
    %2711 = vmatprep.subr.mxu0 0.0
    %2712 = vmatpush1.msra.mxu0 %v35
    %2713 = vmatprep.subr.mxu0 0.0
    %2714 = vmatpush1.msra.mxu0 %v36
    %2715 = vmatprep.subr.mxu0 0.0
    %2716 = vmatpush1.msra.mxu0 %v37
    %2717 = vmatprep.subr.mxu0 0.0
    %2718 = vmatpush1.msra.mxu0 0.0
    %2719 = vmatprep.subr.mxu0 0.0
    %2720 = vmatpush1.msra.mxu0 0.0
    %2721 = vmatprep.subr.mxu0 0.0
    %2722 = vmatpush1.msra.mxu0 0.0
    %2723 = vmatprep.subr.mxu0 0.0
    %2724 = vmatpush1.msra.mxu0 0.0
    %2725 = vmatprep.subr.mxu0 0.0
    %2726 = vmatpush1.msra.mxu0 0.0
    %2727 = vmatprep.subr.mxu0 0.0
    %2728 = vmatpush1.msra.mxu0 0.0
    %2729 = vmatprep.subr.mxu0 0.0
    %2730 = vmatpush1.msra.mxu0 0.0
    %2731 = vmatprep.subr.mxu0 0.0
    %2732 = vmatpush1.msra.mxu0 0.0
    %2733 = vmatprep.subr.mxu0 0.0
    %2734 = vmatpush1.msra.mxu0 0.0
    %2735 = vmatprep.subr.mxu0 0.0
    %2736 = vmatpush1.msra.mxu0 0.0
    %2737 = vmatprep.subr.mxu0 0.0
    %2738 = vmatpush1.msra.mxu0 0.0
    %2739 = vmatprep.subr.mxu0 0.0
    %2740 = vmatpush1.msra.mxu0 0.0
    %2741 = vmatprep.subr.mxu0 0.0
    %2742 = vmatpush1.msra.mxu0 0.0
    %2743 = vmatprep.subr.mxu0 0.0
    %2744 = vmatpush1.msra.mxu0 0.0
    %2745 = vmatprep.subr.mxu0 0.0
    %2746 = vmatpush1.msra.mxu0 0.0
    %2747 = vmatprep.subr.mxu0 0.0
    %2748 = vmatpush1.msra.mxu0 0.0
    %2749 = vmatprep.subr.mxu0 0.0
    %2750 = vmatpush1.msra.mxu0 0.0
    %2751 = vmatprep.subr.mxu0 0.0
    %2752 = vmatpush1.msra.mxu0 0.0
    %2753 = vmatprep.subr.mxu0 0.0
    %2754 = vmatpush1.msra.mxu0 0.0
    %2755 = vmatprep.subr.mxu0 0.0
    %2756 = vmatpush1.msra.mxu0 0.0
    %2757 = vmatprep.subr.mxu0 0.0
    %2758 = vmatpush1.msra.mxu0 0.0
    %2759 = vmatprep.subr.mxu0 0.0
    %2760 = vmatpush1.msra.mxu0 0.0
    %2761 = vmatprep.subr.mxu0 0.0
    %2762 = vmatpush1.msra.mxu0 0.0
    %2763 = vmatprep.subr.mxu0 0.0
    %2764 = vmatpush1.msra.mxu0 0.0
    %2765 = vmatprep.subr.mxu0 0.0
    %2766 = vmatpush1.msra.mxu0 0.0
    %2767 = vmatprep.subr.mxu0 0.0
    %2768 = vmatpush1.msra.mxu0 0.0
    %2769 = vmatprep.subr.mxu0 0.0
    %2770 = vmatpush1.msra.mxu0 0.0
    %2771 = vmatprep.subr.mxu0 0.0
    %2772 = vmatpush1.msra.mxu0 0.0
    %2773 = vmatprep.mubr.f32.mxu0 0.0
    %2774 = vmatmul.mubr.f32.gmra.mrb[0].mxu0 %v2370
    %v2775 = vpop.f32.mrb[0].mxu0
    %v2776 = vadd.f32 %v626, %v2775
    %v2777 = vpop.f32.mrb[0].mxu0
    %2778 = vmatprep.mubr.f32.mxu0 0.0
    %2779 = vmatmul.mubr.f32.gmra.mrb[0].mxu0 %v2373
    %v2780 = vpop.f32.mrb[0].mxu0
    %v2781 = vadd.f32 %v626, %v2780
    %v2782 = vpop.f32.mrb[0].mxu0
    %2783 = vdwg.mxu0
    %2784 = vmatprep.subr.mxu0 0.0
    %2785 = vmatpush1.msra.mxu0 %v54
    %2786 = vmatprep.subr.mxu0 0.0
    %2787 = vmatpush1.msra.mxu0 %v55
    %2788 = vmatprep.subr.mxu0 0.0
    %2789 = vmatpush1.msra.mxu0 %v56
    %2790 = vmatprep.subr.mxu0 0.0
    %2791 = vmatpush1.msra.mxu0 %v57
    %2792 = vmatprep.subr.mxu0 0.0
    %2793 = vmatpush1.msra.mxu0 0.0
    %2794 = vmatprep.subr.mxu0 0.0
    %2795 = vmatpush1.msra.mxu0 0.0
    %2796 = vmatprep.subr.mxu0 0.0
    %2797 = vmatpush1.msra.mxu0 0.0
    %2798 = vmatprep.subr.mxu0 0.0
    %2799 = vmatpush1.msra.mxu0 0.0
    %2800 = vmatprep.subr.mxu0 0.0
    %2801 = vmatpush1.msra.mxu0 0.0
    %2802 = vmatprep.subr.mxu0 0.0
    %2803 = vmatpush1.msra.mxu0 0.0
    %2804 = vmatprep.subr.mxu0 0.0
    %2805 = vmatpush1.msra.mxu0 0.0
    %2806 = vmatprep.subr.mxu0 0.0
    %2807 = vmatpush1.msra.mxu0 0.0
    %2808 = vmatprep.subr.mxu0 0.0
    %2809 = vmatpush1.msra.mxu0 0.0
    %2810 = vmatprep.subr.mxu0 0.0
    %2811 = vmatpush1.msra.mxu0 0.0
    %2812 = vmatprep.subr.mxu0 0.0
    %2813 = vmatpush1.msra.mxu0 0.0
    %2814 = vmatprep.subr.mxu0 0.0
    %2815 = vmatpush1.msra.mxu0 0.0
    %2816 = vmatprep.subr.mxu0 0.0
    %2817 = vmatpush1.msra.mxu0 0.0
    %2818 = vmatprep.subr.mxu0 0.0
    %2819 = vmatpush1.msra.mxu0 0.0
    %2820 = vmatprep.subr.mxu0 0.0
    %2821 = vmatpush1.msra.mxu0 0.0
    %2822 = vmatprep.subr.mxu0 0.0
    %2823 = vmatpush1.msra.mxu0 0.0
    %2824 = vmatprep.subr.mxu0 0.0
    %2825 = vmatpush1.msra.mxu0 0.0
    %2826 = vmatprep.subr.mxu0 0.0
    %2827 = vmatpush1.msra.mxu0 0.0
    %2828 = vmatprep.subr.mxu0 0.0
    %2829 = vmatpush1.msra.mxu0 0.0
    %2830 = vmatprep.subr.mxu0 0.0
    %2831 = vmatpush1.msra.mxu0 0.0
    %2832 = vmatprep.subr.mxu0 0.0
    %2833 = vmatpush1.msra.mxu0 0.0
    %2834 = vmatprep.subr.mxu0 0.0
    %2835 = vmatpush1.msra.mxu0 0.0
    %2836 = vmatprep.subr.mxu0 0.0
    %2837 = vmatpush1.msra.mxu0 0.0
    %2838 = vmatprep.subr.mxu0 0.0
    %2839 = vmatpush1.msra.mxu0 0.0
    %2840 = vmatprep.subr.mxu0 0.0
    %2841 = vmatpush1.msra.mxu0 0.0
    %2842 = vmatprep.subr.mxu0 0.0
    %2843 = vmatpush1.msra.mxu0 0.0
    %2844 = vmatprep.subr.mxu0 0.0
    %2845 = vmatpush1.msra.mxu0 0.0
    %2846 = vmatprep.subr.mxu0 0.0
    %2847 = vmatpush1.msra.mxu0 0.0
    %2848 = vmatprep.mubr.f32.mxu0 0.0
    %2849 = vmatmul.mubr.f32.gmra.mrb[0].mxu0 %v2370
    %v2850 = vpop.f32.mrb[0].mxu0
    %v2851 = vadd.f32 %v705, %v2850
    %v2852 = vpop.f32.mrb[0].mxu0
    %2853 = vmatprep.mubr.f32.mxu0 0.0
    %2854 = vmatmul.mubr.f32.gmra.mrb[0].mxu0 %v2373
    %v2855 = vpop.f32.mrb[0].mxu0
    %v2856 = vadd.f32 %v705, %v2855
    %v2857 = vpop.f32.mrb[0].mxu0
    %2858 = vdwg.mxu0
    %v2860 = vsel %vm120, %v2776, 0
    %v2863 = vsel %vm120, %v2781, 0
    %v2866 = vsel %vm120, %v2851, 0
    %v2869 = vsel %vm120, %v2856, 0
    %2871 = vmatprep.subr.mxu0 0.0
    %2872 = vmatpush1.xpose.msra.mxu0 %v2866
    %2873 = vmatprep.subr.mxu0 0.0
    %2874 = vmatpush1.xpose.msra.mxu0 %v2869
    %2875 = vmatprep.subr.mxu0 0.0
    %2876 = vmatpush1.xpose.msra.mxu0 0.0
    %2877 = vmatprep.subr.mxu0 0.0
    %2878 = vmatpush1.xpose.msra.mxu0 0.0
    %2879 = vmatprep.subr.mxu0 0.0
    %2880 = vmatpush1.xpose.msra.mxu0 0.0
    %2881 = vmatprep.subr.mxu0 0.0
    %2882 = vmatpush1.xpose.msra.mxu0 0.0
    %2883 = vmatprep.subr.mxu0 0.0
    %2884 = vmatpush1.xpose.msra.mxu0 0.0
    %2885 = vmatprep.subr.mxu0 0.0
    %2886 = vmatpush1.xpose.msra.mxu0 0.0
    %2887 = vmatprep.subr.mxu0 0.0
    %2888 = vmatpush1.xpose.msra.mxu0 0.0
    %2889 = vmatprep.subr.mxu0 0.0
    %2890 = vmatpush1.xpose.msra.mxu0 0.0
    %2891 = vmatprep.subr.mxu0 0.0
    %2892 = vmatpush1.xpose.msra.mxu0 0.0
    %2893 = vmatprep.subr.mxu0 0.0
    %2894 = vmatpush1.xpose.msra.mxu0 0.0
    %2895 = vmatprep.subr.mxu0 0.0
    %2896 = vmatpush1.xpose.msra.mxu0 0.0
    %2897 = vmatprep.subr.mxu0 0.0
    %2898 = vmatpush1.xpose.msra.mxu0 0.0
    %2899 = vmatprep.subr.mxu0 0.0
    %2900 = vmatpush1.xpose.msra.mxu0 0.0
    %2901 = vmatprep.subr.mxu0 0.0
    %2902 = vmatpush1.xpose.msra.mxu0 0.0
    %2903 = vmatprep.subr.mxu0 0.0
    %2904 = vmatpush1.xpose.msra.mxu0 0.0
    %2905 = vmatprep.subr.mxu0 0.0
    %2906 = vmatpush1.xpose.msra.mxu0 0.0
    %2907 = vmatprep.subr.mxu0 0.0
    %2908 = vmatpush1.xpose.msra.mxu0 0.0
    %2909 = vmatprep.subr.mxu0 0.0
    %2910 = vmatpush1.xpose.msra.mxu0 0.0
    %2911 = vmatprep.subr.mxu0 0.0
    %2912 = vmatpush1.xpose.msra.mxu0 0.0
    %2913 = vmatprep.subr.mxu0 0.0
    %2914 = vmatpush1.xpose.msra.mxu0 0.0
    %2915 = vmatprep.subr.mxu0 0.0
    %2916 = vmatpush1.xpose.msra.mxu0 0.0
    %2917 = vmatprep.subr.mxu0 0.0
    %2918 = vmatpush1.xpose.msra.mxu0 0.0
    %2919 = vmatprep.subr.mxu0 0.0
    %2920 = vmatpush1.xpose.msra.mxu0 0.0
    %2921 = vmatprep.subr.mxu0 0.0
    %2922 = vmatpush1.xpose.msra.mxu0 0.0
    %2923 = vmatprep.subr.mxu0 0.0
    %2924 = vmatpush1.xpose.msra.mxu0 0.0
    %2925 = vmatprep.subr.mxu0 0.0
    %2926 = vmatpush1.xpose.msra.mxu0 0.0
    %2927 = vmatprep.subr.mxu0 0.0
    %2928 = vmatpush1.xpose.msra.mxu0 0.0
    %2929 = vmatprep.subr.mxu0 0.0
    %2930 = vmatpush1.xpose.msra.mxu0 0.0
    %2931 = vmatprep.subr.mxu0 0.0
    %2932 = vmatpush1.xpose.msra.mxu0 0.0
    %2933 = vmatprep.subr.mxu0 0.0
    %2934 = vmatpush1.xpose.msra.mxu0 0.0
    %2935 = vmatprep.mubr.f32.mxu0 0.0
    %2936 = vmatmul.mubr.f32.gmra.mrb[0].mxu0 %v2860
    %v2937 = vpop.f32.mrb[0].mxu0
    %v2938 = vadd.f32 %v110, %v2937
    %v2939 = vpop.f32.mrb[0].mxu0
    %2940 = vmatprep.mubr.f32.mxu0 0.0
    %2941 = vmatmul.mubr.f32.gmra.mrb[0].mxu0 %v2863
    %v2942 = vpop.f32.mrb[0].mxu0
    %v2943 = vadd.f32 %v111, %v2942
    %v2944 = vpop.f32.mrb[0].mxu0
    %2945 = vdwg.mxu0
    %v2946 = vsel %vm525, %v2938, -inf
    %2947 = vmax.xlane.f32.xlu0 %v2946
    %v2948 = vpop.xlane.xlu0 %2947
    %v2949 = vsel %vm525, %v2943, -inf
    %2950 = vmax.xlane.f32.xlu0 %v2949
    %v2951 = vpop.xlane.xlu0 %2950
    %v2952 = vsub.f32 %v2938, %v2948
    %v2953 = vsub.f32 %v2943, %v2951
    %v2954 = vmul.f32 %v2952, 1.442695
    %v2955 = vpow.pop %v2954
    %v2956 = vmul.f32 %v2953, 1.442695
    %v2957 = vpow.pop %v2956
    %v2958 = vsel %vm525, %v2955, 0.0
    %2959 = vadd.xlane.f32.xlu0 %v2958
    %v2960 = vpop.xlane.xlu0 %2959
    %v2961 = vsel %vm525, %v2957, 0.0
    %2962 = vadd.xlane.f32.xlu0 %v2961
    %v2963 = vpop.xlane.xlu0 %2962
    %v2964 = vrcp.pop %v2960
    %v2965 = vrcp.pop %v2963
    %v2966 = vmul.f32 %v2955, %v2964
    %v2967 = vmul.f32 %v2957, %v2965
    %2968 = vmatprep.subr.mxu0 0.0
    %2969 = vmatpush1.msra.mxu0 %v74
    %2970 = vmatprep.subr.mxu0 0.0
    %2971 = vmatpush1.msra.mxu0 %v75
    %2972 = vmatprep.subr.mxu0 0.0
    %2973 = vmatpush1.msra.mxu0 %v76
    %2974 = vmatprep.subr.mxu0 0.0
    %2975 = vmatpush1.msra.mxu0 %v77
    %2976 = vmatprep.subr.mxu0 0.0
    %2977 = vmatpush1.msra.mxu0 0.0
    %2978 = vmatprep.subr.mxu0 0.0
    %2979 = vmatpush1.msra.mxu0 0.0
    %2980 = vmatprep.subr.mxu0 0.0
    %2981 = vmatpush1.msra.mxu0 0.0
    %2982 = vmatprep.subr.mxu0 0.0
    %2983 = vmatpush1.msra.mxu0 0.0
    %2984 = vmatprep.subr.mxu0 0.0
    %2985 = vmatpush1.msra.mxu0 0.0
    %2986 = vmatprep.subr.mxu0 0.0
    %2987 = vmatpush1.msra.mxu0 0.0
    %2988 = vmatprep.subr.mxu0 0.0
    %2989 = vmatpush1.msra.mxu0 0.0
    %2990 = vmatprep.subr.mxu0 0.0
    %2991 = vmatpush1.msra.mxu0 0.0
    %2992 = vmatprep.subr.mxu0 0.0
    %2993 = vmatpush1.msra.mxu0 0.0
    %2994 = vmatprep.subr.mxu0 0.0
    %2995 = vmatpush1.msra.mxu0 0.0
    %2996 = vmatprep.subr.mxu0 0.0
    %2997 = vmatpush1.msra.mxu0 0.0
    %2998 = vmatprep.subr.mxu0 0.0
    %2999 = vmatpush1.msra.mxu0 0.0
    %3000 = vmatprep.subr.mxu0 0.0
    %3001 = vmatpush1.msra.mxu0 0.0
    %3002 = vmatprep.subr.mxu0 0.0
    %3003 = vmatpush1.msra.mxu0 0.0
    %3004 = vmatprep.subr.mxu0 0.0
    %3005 = vmatpush1.msra.mxu0 0.0
    %3006 = vmatprep.subr.mxu0 0.0
    %3007 = vmatpush1.msra.mxu0 0.0
    %3008 = vmatprep.subr.mxu0 0.0
    %3009 = vmatpush1.msra.mxu0 0.0
    %3010 = vmatprep.subr.mxu0 0.0
    %3011 = vmatpush1.msra.mxu0 0.0
    %3012 = vmatprep.subr.mxu0 0.0
    %3013 = vmatpush1.msra.mxu0 0.0
    %3014 = vmatprep.subr.mxu0 0.0
    %3015 = vmatpush1.msra.mxu0 0.0
    %3016 = vmatprep.subr.mxu0 0.0
    %3017 = vmatpush1.msra.mxu0 0.0
    %3018 = vmatprep.subr.mxu0 0.0
    %3019 = vmatpush1.msra.mxu0 0.0
    %3020 = vmatprep.subr.mxu0 0.0
    %3021 = vmatpush1.msra.mxu0 0.0
    %3022 = vmatprep.subr.mxu0 0.0
    %3023 = vmatpush1.msra.mxu0 0.0
    %3024 = vmatprep.subr.mxu0 0.0
    %3025 = vmatpush1.msra.mxu0 0.0
    %3026 = vmatprep.subr.mxu0 0.0
    %3027 = vmatpush1.msra.mxu0 0.0
    %3028 = vmatprep.subr.mxu0 0.0
    %3029 = vmatpush1.msra.mxu0 0.0
    %3030 = vmatprep.subr.mxu0 0.0
    %3031 = vmatpush1.msra.mxu0 0.0
    %3032 = vmatprep.mubr.f32.mxu0 0.0
    %3033 = vmatmul.mubr.f32.gmra.mrb[0].mxu0 %v2370
    %v3034 = vpop.f32.mrb[0].mxu0
    %v3035 = vadd.f32 0.0, %v3034
    %v3036 = vpop.f32.mrb[0].mxu0
    %3037 = vmatprep.mubr.f32.mxu0 0.0
    %3038 = vmatmul.mubr.f32.gmra.mrb[0].mxu0 %v2373
    %v3039 = vpop.f32.mrb[0].mxu0
    %v3040 = vadd.f32 0.0, %v3039
    %v3041 = vpop.f32.mrb[0].mxu0
    %3042 = vdwg.mxu0
    %v3044 = vsel %vm525, %v2966, 0
    %v3047 = vsel %vm525, %v2967, 0
    %3049 = vmatprep.subr.mxu0 0.0
    %3050 = vmatpush1.msra.mxu0 %v3035
    %3051 = vmatprep.subr.mxu0 0.0
    %3052 = vmatpush1.msra.mxu0 %v3040
    %3053 = vmatprep.subr.mxu0 0.0
    %3054 = vmatpush1.msra.mxu0 0.0
    %3055 = vmatprep.subr.mxu0 0.0
    %3056 = vmatpush1.msra.mxu0 0.0
    %3057 = vmatprep.subr.mxu0 0.0
    %3058 = vmatpush1.msra.mxu0 0.0
    %3059 = vmatprep.subr.mxu0 0.0
    %3060 = vmatpush1.msra.mxu0 0.0
    %3061 = vmatprep.subr.mxu0 0.0
    %3062 = vmatpush1.msra.mxu0 0.0
    %3063 = vmatprep.subr.mxu0 0.0
    %3064 = vmatpush1.msra.mxu0 0.0
    %3065 = vmatprep.subr.mxu0 0.0
    %3066 = vmatpush1.msra.mxu0 0.0
    %3067 = vmatprep.subr.mxu0 0.0
    %3068 = vmatpush1.msra.mxu0 0.0
    %3069 = vmatprep.subr.mxu0 0.0
    %3070 = vmatpush1.msra.mxu0 0.0
    %3071 = vmatprep.subr.mxu0 0.0
    %3072 = vmatpush1.msra.mxu0 0.0
    %3073 = vmatprep.subr.mxu0 0.0
    %3074 = vmatpush1.msra.mxu0 0.0
    %3075 = vmatprep.subr.mxu0 0.0
    %3076 = vmatpush1.msra.mxu0 0.0
    %3077 = vmatprep.subr.mxu0 0.0
    %3078 = vmatpush1.msra.mxu0 0.0
    %3079 = vmatprep.subr.mxu0 0.0
    %3080 = vmatpush1.msra.mxu0 0.0
    %3081 = vmatprep.subr.mxu0 0.0
    %3082 = vmatpush1.msra.mxu0 0.0
    %3083 = vmatprep.subr.mxu0 0.0
    %3084 = vmatpush1.msra.mxu0 0.0
    %3085 = vmatprep.subr.mxu0 0.0
    %3086 = vmatpush1.msra.mxu0 0.0
    %3087 = vmatprep.subr.mxu0 0.0
    %3088 = vmatpush1.msra.mxu0 0.0
    %3089 = vmatprep.subr.mxu0 0.0
    %3090 = vmatpush1.msra.mxu0 0.0
    %3091 = vmatprep.subr.mxu0 0.0
    %3092 = vmatpush1.msra.mxu0 0.0
    %3093 = vmatprep.subr.mxu0 0.0
    %3094 = vmatpush1.msra.mxu0 0.0
    %3095 = vmatprep.subr.mxu0 0.0
    %3096 = vmatpush1.msra.mxu0 0.0
    %3097 = vmatprep.subr.mxu0 0.0
    %3098 = vmatpush1.msra.mxu0 0.0
    %3099 = vmatprep.subr.mxu0 0.0
    %3100 = vmatpush1.msra.mxu0 0.0
    %3101 = vmatprep.subr.mxu0 0.0
    %3102 = vmatpush1.msra.mxu0 0.0
    %3103 = vmatprep.subr.mxu0 0.0
    %3104 = vmatpush1.msra.mxu0 0.0
    %3105 = vmatprep.subr.mxu0 0.0
    %3106 = vmatpush1.msra.mxu0 0.0
    %3107 = vmatprep.subr.mxu0 0.0
    %3108 = vmatpush1.msra.mxu0 0.0
    %3109 = vmatprep.subr.mxu0 0.0
    %3110 = vmatpush1.msra.mxu0 0.0
    %3111 = vmatprep.subr.mxu0 0.0
    %3112 = vmatpush1.msra.mxu0 0.0
    %3113 = vmatprep.mubr.f32.mxu0 0.0
    %3114 = vmatmul.mubr.f32.gmra.mrb[0].mxu0 %v3044
    %v3115 = vpop.f32.mrb[0].mxu0
    %v3116 = vadd.f32 0.0, %v3115
    %v3117 = vpop.f32.mrb[0].mxu0
    %3118 = vmatprep.mubr.f32.mxu0 0.0
    %3119 = vmatmul.mubr.f32.gmra.mrb[0].mxu0 %v3047
    %v3120 = vpop.f32.mrb[0].mxu0
    %v3121 = vadd.f32 0.0, %v3120
    %v3122 = vpop.f32.mrb[0].mxu0
    %3123 = vdwg.mxu0
    %v3125 = vsel %vm525, %v2632, 0
    %v3128 = vsel %vm525, %v2633, 0
    %3130 = vmatprep.subr.mxu0 0.0
    %3131 = vmatpush1.msra.mxu0 %v2701
    %3132 = vmatprep.subr.mxu0 0.0
    %3133 = vmatpush1.msra.mxu0 %v2706
    %3134 = vmatprep.subr.mxu0 0.0
    %3135 = vmatpush1.msra.mxu0 0.0
    %3136 = vmatprep.subr.mxu0 0.0
    %3137 = vmatpush1.msra.mxu0 0.0
    %3138 = vmatprep.subr.mxu0 0.0
    %3139 = vmatpush1.msra.mxu0 0.0
    %3140 = vmatprep.subr.mxu0 0.0
    %3141 = vmatpush1.msra.mxu0 0.0
    %3142 = vmatprep.subr.mxu0 0.0
    %3143 = vmatpush1.msra.mxu0 0.0
    %3144 = vmatprep.subr.mxu0 0.0
    %3145 = vmatpush1.msra.mxu0 0.0
    %3146 = vmatprep.subr.mxu0 0.0
    %3147 = vmatpush1.msra.mxu0 0.0
    %3148 = vmatprep.subr.mxu0 0.0
    %3149 = vmatpush1.msra.mxu0 0.0
    %3150 = vmatprep.subr.mxu0 0.0
    %3151 = vmatpush1.msra.mxu0 0.0
    %3152 = vmatprep.subr.mxu0 0.0
    %3153 = vmatpush1.msra.mxu0 0.0
    %3154 = vmatprep.subr.mxu0 0.0
    %3155 = vmatpush1.msra.mxu0 0.0
    %3156 = vmatprep.subr.mxu0 0.0
    %3157 = vmatpush1.msra.mxu0 0.0
    %3158 = vmatprep.subr.mxu0 0.0
    %3159 = vmatpush1.msra.mxu0 0.0
    %3160 = vmatprep.subr.mxu0 0.0
    %3161 = vmatpush1.msra.mxu0 0.0
    %3162 = vmatprep.subr.mxu0 0.0
    %3163 = vmatpush1.msra.mxu0 0.0
    %3164 = vmatprep.subr.mxu0 0.0
    %3165 = vmatpush1.msra.mxu0 0.0
    %3166 = vmatprep.subr.mxu0 0.0
    %3167 = vmatpush1.msra.mxu0 0.0
    %3168 = vmatprep.subr.mxu0 0.0
    %3169 = vmatpush1.msra.mxu0 0.0
    %3170 = vmatprep.subr.mxu0 0.0
    %3171 = vmatpush1.msra.mxu0 0.0
    %3172 = vmatprep.subr.mxu0 0.0
    %3173 = vmatpush1.msra.mxu0 0.0
    %3174 = vmatprep.subr.mxu0 0.0
    %3175 = vmatpush1.msra.mxu0 0.0
    %3176 = vmatprep.subr.mxu0 0.0
    %3177 = vmatpush1.msra.mxu0 0.0
    %3178 = vmatprep.subr.mxu0 0.0
    %3179 = vmatpush1.msra.mxu0 0.0
    %3180 = vmatprep.subr.mxu0 0.0
    %3181 = vmatpush1.msra.mxu0 0.0
    %3182 = vmatprep.subr.mxu0 0.0
    %3183 = vmatpush1.msra.mxu0 0.0
    %3184 = vmatprep.subr.mxu0 0.0
    %3185 = vmatpush1.msra.mxu0 0.0
    %3186 = vmatprep.subr.mxu0 0.0
    %3187 = vmatpush1.msra.mxu0 0.0
    %3188 = vmatprep.subr.mxu0 0.0
    %3189 = vmatpush1.msra.mxu0 0.0
    %3190 = vmatprep.subr.mxu0 0.0
    %3191 = vmatpush1.msra.mxu0 0.0
    %3192 = vmatprep.subr.mxu0 0.0
    %3193 = vmatpush1.msra.mxu0 0.0
    %3194 = vmatprep.mubr.f32.mxu0 0.0
    %3195 = vmatmul.mubr.f32.gmra.mrb[0].mxu0 %v3125
    %v3196 = vpop.f32.mrb[0].mxu0
    %v3197 = vadd.f32 %v3116, %v3196
    %v3198 = vpop.f32.mrb[0].mxu0
    %3199 = vmatprep.mubr.f32.mxu0 0.0
    %3200 = vmatmul.mubr.f32.gmra.mrb[0].mxu0 %v3128
    %v3201 = vpop.f32.mrb[0].mxu0
    %v3202 = vadd.f32 %v3121, %v3201
    %v3203 = vpop.f32.mrb[0].mxu0
    %3204 = vdwg.mxu0
    %3205 = vmatprep.subr.mxu0 0.0
    %3206 = vmatpush1.msra.mxu0 %v38
    %3207 = vmatprep.subr.mxu0 0.0
    %3208 = vmatpush1.msra.mxu0 %v39
    %3209 = vmatprep.subr.mxu0 0.0
    %3210 = vmatpush1.msra.mxu0 %v40
    %3211 = vmatprep.subr.mxu0 0.0
    %3212 = vmatpush1.msra.mxu0 %v41
    %3213 = vmatprep.subr.mxu0 0.0
    %3214 = vmatpush1.msra.mxu0 0.0
    %3215 = vmatprep.subr.mxu0 0.0
    %3216 = vmatpush1.msra.mxu0 0.0
    %3217 = vmatprep.subr.mxu0 0.0
    %3218 = vmatpush1.msra.mxu0 0.0
    %3219 = vmatprep.subr.mxu0 0.0
    %3220 = vmatpush1.msra.mxu0 0.0
    %3221 = vmatprep.subr.mxu0 0.0
    %3222 = vmatpush1.msra.mxu0 0.0
    %3223 = vmatprep.subr.mxu0 0.0
    %3224 = vmatpush1.msra.mxu0 0.0
    %3225 = vmatprep.subr.mxu0 0.0
    %3226 = vmatpush1.msra.mxu0 0.0
    %3227 = vmatprep.subr.mxu0 0.0
    %3228 = vmatpush1.msra.mxu0 0.0
    %3229 = vmatprep.subr.mxu0 0.0
    %3230 = vmatpush1.msra.mxu0 0.0
    %3231 = vmatprep.subr.mxu0 0.0
    %3232 = vmatpush1.msra.mxu0 0.0
    %3233 = vmatprep.subr.mxu0 0.0
    %3234 = vmatpush1.msra.mxu0 0.0
    %3235 = vmatprep.subr.mxu0 0.0
    %3236 = vmatpush1.msra.mxu0 0.0
    %3237 = vmatprep.subr.mxu0 0.0
    %3238 = vmatpush1.msra.mxu0 0.0
    %3239 = vmatprep.subr.mxu0 0.0
    %3240 = vmatpush1.msra.mxu0 0.0
    %3241 = vmatprep.subr.mxu0 0.0
    %3242 = vmatpush1.msra.mxu0 0.0
    %3243 = vmatprep.subr.mxu0 0.0
    %3244 = vmatpush1.msra.mxu0 0.0
    %3245 = vmatprep.subr.mxu0 0.0
    %3246 = vmatpush1.msra.mxu0 0.0
    %3247 = vmatprep.subr.mxu0 0.0
    %3248 = vmatpush1.msra.mxu0 0.0
    %3249 = vmatprep.subr.mxu0 0.0
    %3250 = vmatpush1.msra.mxu0 0.0
    %3251 = vmatprep.subr.mxu0 0.0
    %3252 = vmatpush1.msra.mxu0 0.0
    %3253 = vmatprep.subr.mxu0 0.0
    %3254 = vmatpush1.msra.mxu0 0.0
    %3255 = vmatprep.subr.mxu0 0.0
    %3256 = vmatpush1.msra.mxu0 0.0
    %3257 = vmatprep.subr.mxu0 0.0
    %3258 = vmatpush1.msra.mxu0 0.0
    %3259 = vmatprep.subr.mxu0 0.0
    %3260 = vmatpush1.msra.mxu0 0.0
    %3261 = vmatprep.subr.mxu0 0.0
    %3262 = vmatpush1.msra.mxu0 0.0
    %3263 = vmatprep.subr.mxu0 0.0
    %3264 = vmatpush1.msra.mxu0 0.0
    %3265 = vmatprep.subr.mxu0 0.0
    %3266 = vmatpush1.msra.mxu0 0.0
    %3267 = vmatprep.subr.mxu0 0.0
    %3268 = vmatpush1.msra.mxu0 0.0
    %3269 = vmatprep.mubr.f32.mxu0 0.0
    %3270 = vmatmul.mubr.f32.gmra.mrb[0].mxu0 %v2370
    %v3271 = vpop.f32.mrb[0].mxu0
    %v3272 = vadd.f32 %v1130, %v3271
    %v3273 = vpop.f32.mrb[0].mxu0
    %3274 = vmatprep.mubr.f32.mxu0 0.0
    %3275 = vmatmul.mubr.f32.gmra.mrb[0].mxu0 %v2373
    %v3276 = vpop.f32.mrb[0].mxu0
    %v3277 = vadd.f32 %v1130, %v3276
    %v3278 = vpop.f32.mrb[0].mxu0
    %3279 = vdwg.mxu0
    %3280 = vmatprep.subr.mxu0 0.0
    %3281 = vmatpush1.msra.mxu0 %v58
    %3282 = vmatprep.subr.mxu0 0.0
    %3283 = vmatpush1.msra.mxu0 %v59
    %3284 = vmatprep.subr.mxu0 0.0
    %3285 = vmatpush1.msra.mxu0 %v60
    %3286 = vmatprep.subr.mxu0 0.0
    %3287 = vmatpush1.msra.mxu0 %v61
    %3288 = vmatprep.subr.mxu0 0.0
    %3289 = vmatpush1.msra.mxu0 0.0
    %3290 = vmatprep.subr.mxu0 0.0
    %3291 = vmatpush1.msra.mxu0 0.0
    %3292 = vmatprep.subr.mxu0 0.0
    %3293 = vmatpush1.msra.mxu0 0.0
    %3294 = vmatprep.subr.mxu0 0.0
    %3295 = vmatpush1.msra.mxu0 0.0
    %3296 = vmatprep.subr.mxu0 0.0
    %3297 = vmatpush1.msra.mxu0 0.0
    %3298 = vmatprep.subr.mxu0 0.0
    %3299 = vmatpush1.msra.mxu0 0.0
    %3300 = vmatprep.subr.mxu0 0.0
    %3301 = vmatpush1.msra.mxu0 0.0
    %3302 = vmatprep.subr.mxu0 0.0
    %3303 = vmatpush1.msra.mxu0 0.0
    %3304 = vmatprep.subr.mxu0 0.0
    %3305 = vmatpush1.msra.mxu0 0.0
    %3306 = vmatprep.subr.mxu0 0.0
    %3307 = vmatpush1.msra.mxu0 0.0
    %3308 = vmatprep.subr.mxu0 0.0
    %3309 = vmatpush1.msra.mxu0 0.0
    %3310 = vmatprep.subr.mxu0 0.0
    %3311 = vmatpush1.msra.mxu0 0.0
    %3312 = vmatprep.subr.mxu0 0.0
    %3313 = vmatpush1.msra.mxu0 0.0
    %3314 = vmatprep.subr.mxu0 0.0
    %3315 = vmatpush1.msra.mxu0 0.0
    %3316 = vmatprep.subr.mxu0 0.0
    %3317 = vmatpush1.msra.mxu0 0.0
    %3318 = vmatprep.subr.mxu0 0.0
    %3319 = vmatpush1.msra.mxu0 0.0
    %3320 = vmatprep.subr.mxu0 0.0
    %3321 = vmatpush1.msra.mxu0 0.0
    %3322 = vmatprep.subr.mxu0 0.0
    %3323 = vmatpush1.msra.mxu0 0.0
    %3324 = vmatprep.subr.mxu0 0.0
    %3325 = vmatpush1.msra.mxu0 0.0
    %3326 = vmatprep.subr.mxu0 0.0
    %3327 = vmatpush1.msra.mxu0 0.0
    %3328 = vmatprep.subr.mxu0 0.0
    %3329 = vmatpush1.msra.mxu0 0.0
    %3330 = vmatprep.subr.mxu0 0.0
    %3331 = vmatpush1.msra.mxu0 0.0
    %3332 = vmatprep.subr.mxu0 0.0
    %3333 = vmatpush1.msra.mxu0 0.0
    %3334 = vmatprep.subr.mxu0 0.0
    %3335 = vmatpush1.msra.mxu0 0.0
    %3336 = vmatprep.subr.mxu0 0.0
    %3337 = vmatpush1.msra.mxu0 0.0
    %3338 = vmatprep.subr.mxu0 0.0
    %3339 = vmatpush1.msra.mxu0 0.0
    %3340 = vmatprep.subr.mxu0 0.0
    %3341 = vmatpush1.msra.mxu0 0.0
    %3342 = vmatprep.subr.mxu0 0.0
    %3343 = vmatpush1.msra.mxu0 0.0
    %3344 = vmatprep.mubr.f32.mxu0 0.0
    %3345 = vmatmul.mubr.f32.gmra.mrb[0].mxu0 %v2370
    %v3346 = vpop.f32.mrb[0].mxu0
    %v3347 = vadd.f32 %v1209, %v3346
    %v3348 = vpop.f32.mrb[0].mxu0
    %3349 = vmatprep.mubr.f32.mxu0 0.0
    %3350 = vmatmul.mubr.f32.gmra.mrb[0].mxu0 %v2373
    %v3351 = vpop.f32.mrb[0].mxu0
    %v3352 = vadd.f32 %v1209, %v3351
    %v3353 = vpop.f32.mrb[0].mxu0
    %3354 = vdwg.mxu0
    %v3356 = vsel %vm120, %v3272, 0
    %v3359 = vsel %vm120, %v3277, 0
    %v3362 = vsel %vm120, %v3347, 0
    %v3365 = vsel %vm120, %v3352, 0
    %3367 = vmatprep.subr.mxu0 0.0
    %3368 = vmatpush1.xpose.msra.mxu0 %v3362
    %3369 = vmatprep.subr.mxu0 0.0
    %3370 = vmatpush1.xpose.msra.mxu0 %v3365
    %3371 = vmatprep.subr.mxu0 0.0
    %3372 = vmatpush1.xpose.msra.mxu0 0.0
    %3373 = vmatprep.subr.mxu0 0.0
    %3374 = vmatpush1.xpose.msra.mxu0 0.0
    %3375 = vmatprep.subr.mxu0 0.0
    %3376 = vmatpush1.xpose.msra.mxu0 0.0
    %3377 = vmatprep.subr.mxu0 0.0
    %3378 = vmatpush1.xpose.msra.mxu0 0.0
    %3379 = vmatprep.subr.mxu0 0.0
    %3380 = vmatpush1.xpose.msra.mxu0 0.0
    %3381 = vmatprep.subr.mxu0 0.0
    %3382 = vmatpush1.xpose.msra.mxu0 0.0
    %3383 = vmatprep.subr.mxu0 0.0
    %3384 = vmatpush1.xpose.msra.mxu0 0.0
    %3385 = vmatprep.subr.mxu0 0.0
    %3386 = vmatpush1.xpose.msra.mxu0 0.0
    %3387 = vmatprep.subr.mxu0 0.0
    %3388 = vmatpush1.xpose.msra.mxu0 0.0
    %3389 = vmatprep.subr.mxu0 0.0
    %3390 = vmatpush1.xpose.msra.mxu0 0.0
    %3391 = vmatprep.subr.mxu0 0.0
    %3392 = vmatpush1.xpose.msra.mxu0 0.0
    %3393 = vmatprep.subr.mxu0 0.0
    %3394 = vmatpush1.xpose.msra.mxu0 0.0
    %3395 = vmatprep.subr.mxu0 0.0
    %3396 = vmatpush1.xpose.msra.mxu0 0.0
    %3397 = vmatprep.subr.mxu0 0.0
    %3398 = vmatpush1.xpose.msra.mxu0 0.0
    %3399 = vmatprep.subr.mxu0 0.0
    %3400 = vmatpush1.xpose.msra.mxu0 0.0
    %3401 = vmatprep.subr.mxu0 0.0
    %3402 = vmatpush1.xpose.msra.mxu0 0.0
    %3403 = vmatprep.subr.mxu0 0.0
    %3404 = vmatpush1.xpose.msra.mxu0 0.0
    %3405 = vmatprep.subr.mxu0 0.0
    %3406 = vmatpush1.xpose.msra.mxu0 0.0
    %3407 = vmatprep.subr.mxu0 0.0
    %3408 = vmatpush1.xpose.msra.mxu0 0.0
    %3409 = vmatprep.subr.mxu0 0.0
    %3410 = vmatpush1.xpose.msra.mxu0 0.0
    %3411 = vmatprep.subr.mxu0 0.0
    %3412 = vmatpush1.xpose.msra.mxu0 0.0
    %3413 = vmatprep.subr.mxu0 0.0
    %3414 = vmatpush1.xpose.msra.mxu0 0.0
    %3415 = vmatprep.subr.mxu0 0.0
    %3416 = vmatpush1.xpose.msra.mxu0 0.0
    %3417 = vmatprep.subr.mxu0 0.0
    %3418 = vmatpush1.xpose.msra.mxu0 0.0
    %3419 = vmatprep.subr.mxu0 0.0
    %3420 = vmatpush1.xpose.msra.mxu0 0.0
    %3421 = vmatprep.subr.mxu0 0.0
    %3422 = vmatpush1.xpose.msra.mxu0 0.0
    %3423 = vmatprep.subr.mxu0 0.0
    %3424 = vmatpush1.xpose.msra.mxu0 0.0
    %3425 = vmatprep.subr.mxu0 0.0
    %3426 = vmatpush1.xpose.msra.mxu0 0.0
    %3427 = vmatprep.subr.mxu0 0.0
    %3428 = vmatpush1.xpose.msra.mxu0 0.0
    %3429 = vmatprep.subr.mxu0 0.0
    %3430 = vmatpush1.xpose.msra.mxu0 0.0
    %3431 = vmatprep.mubr.f32.mxu0 0.0
    %3432 = vmatmul.mubr.f32.gmra.mrb[0].mxu0 %v3356
    %v3433 = vpop.f32.mrb[0].mxu0
    %v3434 = vadd.f32 %v110, %v3433
    %v3435 = vpop.f32.mrb[0].mxu0
    %3436 = vmatprep.mubr.f32.mxu0 0.0
    %3437 = vmatmul.mubr.f32.gmra.mrb[0].mxu0 %v3359
    %v3438 = vpop.f32.mrb[0].mxu0
    %v3439 = vadd.f32 %v111, %v3438
    %v3440 = vpop.f32.mrb[0].mxu0
    %3441 = vdwg.mxu0
    %v3442 = vsel %vm525, %v3434, -inf
    %3443 = vmax.xlane.f32.xlu0 %v3442
    %v3444 = vpop.xlane.xlu0 %3443
    %v3445 = vsel %vm525, %v3439, -inf
    %3446 = vmax.xlane.f32.xlu0 %v3445
    %v3447 = vpop.xlane.xlu0 %3446
    %v3448 = vsub.f32 %v3434, %v3444
    %v3449 = vsub.f32 %v3439, %v3447
    %v3450 = vmul.f32 %v3448, 1.442695
    %v3451 = vpow.pop %v3450
    %v3452 = vmul.f32 %v3449, 1.442695
    %v3453 = vpow.pop %v3452
    %v3454 = vsel %vm525, %v3451, 0.0
    %3455 = vadd.xlane.f32.xlu0 %v3454
    %v3456 = vpop.xlane.xlu0 %3455
    %v3457 = vsel %vm525, %v3453, 0.0
    %3458 = vadd.xlane.f32.xlu0 %v3457
    %v3459 = vpop.xlane.xlu0 %3458
    %v3460 = vrcp.pop %v3456
    %v3461 = vrcp.pop %v3459
    %v3462 = vmul.f32 %v3451, %v3460
    %v3463 = vmul.f32 %v3453, %v3461
    %3464 = vmatprep.subr.mxu0 0.0
    %3465 = vmatpush1.msra.mxu0 %v78
    %3466 = vmatprep.subr.mxu0 0.0
    %3467 = vmatpush1.msra.mxu0 %v79
    %3468 = vmatprep.subr.mxu0 0.0
    %3469 = vmatpush1.msra.mxu0 %v80
    %3470 = vmatprep.subr.mxu0 0.0
    %3471 = vmatpush1.msra.mxu0 %v81
    %3472 = vmatprep.subr.mxu0 0.0
    %3473 = vmatpush1.msra.mxu0 0.0
    %3474 = vmatprep.subr.mxu0 0.0
    %3475 = vmatpush1.msra.mxu0 0.0
    %3476 = vmatprep.subr.mxu0 0.0
    %3477 = vmatpush1.msra.mxu0 0.0
    %3478 = vmatprep.subr.mxu0 0.0
    %3479 = vmatpush1.msra.mxu0 0.0
    %3480 = vmatprep.subr.mxu0 0.0
    %3481 = vmatpush1.msra.mxu0 0.0
    %3482 = vmatprep.subr.mxu0 0.0
    %3483 = vmatpush1.msra.mxu0 0.0
    %3484 = vmatprep.subr.mxu0 0.0
    %3485 = vmatpush1.msra.mxu0 0.0
    %3486 = vmatprep.subr.mxu0 0.0
    %3487 = vmatpush1.msra.mxu0 0.0
    %3488 = vmatprep.subr.mxu0 0.0
    %3489 = vmatpush1.msra.mxu0 0.0
    %3490 = vmatprep.subr.mxu0 0.0
    %3491 = vmatpush1.msra.mxu0 0.0
    %3492 = vmatprep.subr.mxu0 0.0
    %3493 = vmatpush1.msra.mxu0 0.0
    %3494 = vmatprep.subr.mxu0 0.0
    %3495 = vmatpush1.msra.mxu0 0.0
    %3496 = vmatprep.subr.mxu0 0.0
    %3497 = vmatpush1.msra.mxu0 0.0
    %3498 = vmatprep.subr.mxu0 0.0
    %3499 = vmatpush1.msra.mxu0 0.0
    %3500 = vmatprep.subr.mxu0 0.0
    %3501 = vmatpush1.msra.mxu0 0.0
    %3502 = vmatprep.subr.mxu0 0.0
    %3503 = vmatpush1.msra.mxu0 0.0
    %3504 = vmatprep.subr.mxu0 0.0
    %3505 = vmatpush1.msra.mxu0 0.0
    %3506 = vmatprep.subr.mxu0 0.0
    %3507 = vmatpush1.msra.mxu0 0.0
    %3508 = vmatprep.subr.mxu0 0.0
    %3509 = vmatpush1.msra.mxu0 0.0
    %3510 = vmatprep.subr.mxu0 0.0
    %3511 = vmatpush1.msra.mxu0 0.0
    %3512 = vmatprep.subr.mxu0 0.0
    %3513 = vmatpush1.msra.mxu0 0.0
    %3514 = vmatprep.subr.mxu0 0.0
    %3515 = vmatpush1.msra.mxu0 0.0
    %3516 = vmatprep.subr.mxu0 0.0
    %3517 = vmatpush1.msra.mxu0 0.0
    %3518 = vmatprep.subr.mxu0 0.0
    %3519 = vmatpush1.msra.mxu0 0.0
    %3520 = vmatprep.subr.mxu0 0.0
    %3521 = vmatpush1.msra.mxu0 0.0
    %3522 = vmatprep.subr.mxu0 0.0
    %3523 = vmatpush1.msra.mxu0 0.0
    %3524 = vmatprep.subr.mxu0 0.0
    %3525 = vmatpush1.msra.mxu0 0.0
    %3526 = vmatprep.subr.mxu0 0.0
    %3527 = vmatpush1.msra.mxu0 0.0
    %3528 = vmatprep.mubr.f32.mxu0 0.0
    %3529 = vmatmul.mubr.f32.gmra.mrb[0].mxu0 %v2370
    %v3530 = vpop.f32.mrb[0].mxu0
    %v3531 = vadd.f32 0.0, %v3530
    %v3532 = vpop.f32.mrb[0].mxu0
    %3533 = vmatprep.mubr.f32.mxu0 0.0
    %3534 = vmatmul.mubr.f32.gmra.mrb[0].mxu0 %v2373
    %v3535 = vpop.f32.mrb[0].mxu0
    %v3536 = vadd.f32 0.0, %v3535
    %v3537 = vpop.f32.mrb[0].mxu0
    %3538 = vdwg.mxu0
    %v3540 = vsel %vm525, %v3462, 0
    %v3543 = vsel %vm525, %v3463, 0
    %3545 = vmatprep.subr.mxu0 0.0
    %3546 = vmatpush1.msra.mxu0 %v3531
    %3547 = vmatprep.subr.mxu0 0.0
    %3548 = vmatpush1.msra.mxu0 %v3536
    %3549 = vmatprep.subr.mxu0 0.0
    %3550 = vmatpush1.msra.mxu0 0.0
    %3551 = vmatprep.subr.mxu0 0.0
    %3552 = vmatpush1.msra.mxu0 0.0
    %3553 = vmatprep.subr.mxu0 0.0
    %3554 = vmatpush1.msra.mxu0 0.0
    %3555 = vmatprep.subr.mxu0 0.0
    %3556 = vmatpush1.msra.mxu0 0.0
    %3557 = vmatprep.subr.mxu0 0.0
    %3558 = vmatpush1.msra.mxu0 0.0
    %3559 = vmatprep.subr.mxu0 0.0
    %3560 = vmatpush1.msra.mxu0 0.0
    %3561 = vmatprep.subr.mxu0 0.0
    %3562 = vmatpush1.msra.mxu0 0.0
    %3563 = vmatprep.subr.mxu0 0.0
    %3564 = vmatpush1.msra.mxu0 0.0
    %3565 = vmatprep.subr.mxu0 0.0
    %3566 = vmatpush1.msra.mxu0 0.0
    %3567 = vmatprep.subr.mxu0 0.0
    %3568 = vmatpush1.msra.mxu0 0.0
    %3569 = vmatprep.subr.mxu0 0.0
    %3570 = vmatpush1.msra.mxu0 0.0
    %3571 = vmatprep.subr.mxu0 0.0
    %3572 = vmatpush1.msra.mxu0 0.0
    %3573 = vmatprep.subr.mxu0 0.0
    %3574 = vmatpush1.msra.mxu0 0.0
    %3575 = vmatprep.subr.mxu0 0.0
    %3576 = vmatpush1.msra.mxu0 0.0
    %3577 = vmatprep.subr.mxu0 0.0
    %3578 = vmatpush1.msra.mxu0 0.0
    %3579 = vmatprep.subr.mxu0 0.0
    %3580 = vmatpush1.msra.mxu0 0.0
    %3581 = vmatprep.subr.mxu0 0.0
    %3582 = vmatpush1.msra.mxu0 0.0
    %3583 = vmatprep.subr.mxu0 0.0
    %3584 = vmatpush1.msra.mxu0 0.0
    %3585 = vmatprep.subr.mxu0 0.0
    %3586 = vmatpush1.msra.mxu0 0.0
    %3587 = vmatprep.subr.mxu0 0.0
    %3588 = vmatpush1.msra.mxu0 0.0
    %3589 = vmatprep.subr.mxu0 0.0
    %3590 = vmatpush1.msra.mxu0 0.0
    %3591 = vmatprep.subr.mxu0 0.0
    %3592 = vmatpush1.msra.mxu0 0.0
    %3593 = vmatprep.subr.mxu0 0.0
    %3594 = vmatpush1.msra.mxu0 0.0
    %3595 = vmatprep.subr.mxu0 0.0
    %3596 = vmatpush1.msra.mxu0 0.0
    %3597 = vmatprep.subr.mxu0 0.0
    %3598 = vmatpush1.msra.mxu0 0.0
    %3599 = vmatprep.subr.mxu0 0.0
    %3600 = vmatpush1.msra.mxu0 0.0
    %3601 = vmatprep.subr.mxu0 0.0
    %3602 = vmatpush1.msra.mxu0 0.0
    %3603 = vmatprep.subr.mxu0 0.0
    %3604 = vmatpush1.msra.mxu0 0.0
    %3605 = vmatprep.subr.mxu0 0.0
    %3606 = vmatpush1.msra.mxu0 0.0
    %3607 = vmatprep.subr.mxu0 0.0
    %3608 = vmatpush1.msra.mxu0 0.0
    %3609 = vmatprep.mubr.f32.mxu0 0.0
    %3610 = vmatmul.mubr.f32.gmra.mrb[0].mxu0 %v3540
    %v3611 = vpop.f32.mrb[0].mxu0
    %v3612 = vadd.f32 0.0, %v3611
    %v3613 = vpop.f32.mrb[0].mxu0
    %3614 = vmatprep.mubr.f32.mxu0 0.0
    %3615 = vmatmul.mubr.f32.gmra.mrb[0].mxu0 %v3543
    %v3616 = vpop.f32.mrb[0].mxu0
    %v3617 = vadd.f32 0.0, %v3616
    %v3618 = vpop.f32.mrb[0].mxu0
    %3619 = vdwg.mxu0
    %v3620 = vadd.f32 %v3197, %v3612
    %v3621 = vadd.f32 %v3202, %v3617
    %3622 = vmatprep.subr.mxu0 0.0
    %3623 = vmatpush1.msra.mxu0 %v42
    %3624 = vmatprep.subr.mxu0 0.0
    %3625 = vmatpush1.msra.mxu0 %v43
    %3626 = vmatprep.subr.mxu0 0.0
    %3627 = vmatpush1.msra.mxu0 %v44
    %3628 = vmatprep.subr.mxu0 0.0
    %3629 = vmatpush1.msra.mxu0 %v45
    %3630 = vmatprep.subr.mxu0 0.0
    %3631 = vmatpush1.msra.mxu0 0.0
    %3632 = vmatprep.subr.mxu0 0.0
    %3633 = vmatpush1.msra.mxu0 0.0
    %3634 = vmatprep.subr.mxu0 0.0
    %3635 = vmatpush1.msra.mxu0 0.0
    %3636 = vmatprep.subr.mxu0 0.0
    %3637 = vmatpush1.msra.mxu0 0.0
    %3638 = vmatprep.subr.mxu0 0.0
    %3639 = vmatpush1.msra.mxu0 0.0
    %3640 = vmatprep.subr.mxu0 0.0
    %3641 = vmatpush1.msra.mxu0 0.0
    %3642 = vmatprep.subr.mxu0 0.0
    %3643 = vmatpush1.msra.mxu0 0.0
    %3644 = vmatprep.subr.mxu0 0.0
    %3645 = vmatpush1.msra.mxu0 0.0
    %3646 = vmatprep.subr.mxu0 0.0
    %3647 = vmatpush1.msra.mxu0 0.0
    %3648 = vmatprep.subr.mxu0 0.0
    %3649 = vmatpush1.msra.mxu0 0.0
    %3650 = vmatprep.subr.mxu0 0.0
    %3651 = vmatpush1.msra.mxu0 0.0
    %3652 = vmatprep.subr.mxu0 0.0
    %3653 = vmatpush1.msra.mxu0 0.0
    %3654 = vmatprep.subr.mxu0 0.0
    %3655 = vmatpush1.msra.mxu0 0.0
    %3656 = vmatprep.subr.mxu0 0.0
    %3657 = vmatpush1.msra.mxu0 0.0
    %3658 = vmatprep.subr.mxu0 0.0
    %3659 = vmatpush1.msra.mxu0 0.0
    %3660 = vmatprep.subr.mxu0 0.0
    %3661 = vmatpush1.msra.mxu0 0.0
    %3662 = vmatprep.subr.mxu0 0.0
    %3663 = vmatpush1.msra.mxu0 0.0
    %3664 = vmatprep.subr.mxu0 0.0
    %3665 = vmatpush1.msra.mxu0 0.0
    %3666 = vmatprep.subr.mxu0 0.0
    %3667 = vmatpush1.msra.mxu0 0.0
    %3668 = vmatprep.subr.mxu0 0.0
    %3669 = vmatpush1.msra.mxu0 0.0
    %3670 = vmatprep.subr.mxu0 0.0
    %3671 = vmatpush1.msra.mxu0 0.0
    %3672 = vmatprep.subr.mxu0 0.0
    %3673 = vmatpush1.msra.mxu0 0.0
    %3674 = vmatprep.subr.mxu0 0.0
    %3675 = vmatpush1.msra.mxu0 0.0
    %3676 = vmatprep.subr.mxu0 0.0
    %3677 = vmatpush1.msra.mxu0 0.0
    %3678 = vmatprep.subr.mxu0 0.0
    %3679 = vmatpush1.msra.mxu0 0.0
    %3680 = vmatprep.subr.mxu0 0.0
    %3681 = vmatpush1.msra.mxu0 0.0
    %3682 = vmatprep.subr.mxu0 0.0
    %3683 = vmatpush1.msra.mxu0 0.0
    %3684 = vmatprep.subr.mxu0 0.0
    %3685 = vmatpush1.msra.mxu0 0.0
    %3686 = vmatprep.mubr.f32.mxu0 0.0
    %3687 = vmatmul.mubr.f32.gmra.mrb[0].mxu0 %v2370
    %v3688 = vpop.f32.mrb[0].mxu0
    %v3689 = vadd.f32 %v1555, %v3688
    %v3690 = vpop.f32.mrb[0].mxu0
    %3691 = vmatprep.mubr.f32.mxu0 0.0
    %3692 = vmatmul.mubr.f32.gmra.mrb[0].mxu0 %v2373
    %v3693 = vpop.f32.mrb[0].mxu0
    %v3694 = vadd.f32 %v1555, %v3693
    %v3695 = vpop.f32.mrb[0].mxu0
    %3696 = vdwg.mxu0
    %3697 = vmatprep.subr.mxu0 0.0
    %3698 = vmatpush1.msra.mxu0 %v62
    %3699 = vmatprep.subr.mxu0 0.0
    %3700 = vmatpush1.msra.mxu0 %v63
    %3701 = vmatprep.subr.mxu0 0.0
    %3702 = vmatpush1.msra.mxu0 %v64
    %3703 = vmatprep.subr.mxu0 0.0
    %3704 = vmatpush1.msra.mxu0 %v65
    %3705 = vmatprep.subr.mxu0 0.0
    %3706 = vmatpush1.msra.mxu0 0.0
    %3707 = vmatprep.subr.mxu0 0.0
    %3708 = vmatpush1.msra.mxu0 0.0
    %3709 = vmatprep.subr.mxu0 0.0
    %3710 = vmatpush1.msra.mxu0 0.0
    %3711 = vmatprep.subr.mxu0 0.0
    %3712 = vmatpush1.msra.mxu0 0.0
    %3713 = vmatprep.subr.mxu0 0.0
    %3714 = vmatpush1.msra.mxu0 0.0
    %3715 = vmatprep.subr.mxu0 0.0
    %3716 = vmatpush1.msra.mxu0 0.0
    %3717 = vmatprep.subr.mxu0 0.0
    %3718 = vmatpush1.msra.mxu0 0.0
    %3719 = vmatprep.subr.mxu0 0.0
    %3720 = vmatpush1.msra.mxu0 0.0
    %3721 = vmatprep.subr.mxu0 0.0
    %3722 = vmatpush1.msra.mxu0 0.0
    %3723 = vmatprep.subr.mxu0 0.0
    %3724 = vmatpush1.msra.mxu0 0.0
    %3725 = vmatprep.subr.mxu0 0.0
    %3726 = vmatpush1.msra.mxu0 0.0
    %3727 = vmatprep.subr.mxu0 0.0
    %3728 = vmatpush1.msra.mxu0 0.0
    %3729 = vmatprep.subr.mxu0 0.0
    %3730 = vmatpush1.msra.mxu0 0.0
    %3731 = vmatprep.subr.mxu0 0.0
    %3732 = vmatpush1.msra.mxu0 0.0
    %3733 = vmatprep.subr.mxu0 0.0
    %3734 = vmatpush1.msra.mxu0 0.0
    %3735 = vmatprep.subr.mxu0 0.0
    %3736 = vmatpush1.msra.mxu0 0.0
    %3737 = vmatprep.subr.mxu0 0.0
    %3738 = vmatpush1.msra.mxu0 0.0
    %3739 = vmatprep.subr.mxu0 0.0
    %3740 = vmatpush1.msra.mxu0 0.0
    %3741 = vmatprep.subr.mxu0 0.0
    %3742 = vmatpush1.msra.mxu0 0.0
    %3743 = vmatprep.subr.mxu0 0.0
    %3744 = vmatpush1.msra.mxu0 0.0
    %3745 = vmatprep.subr.mxu0 0.0
    %3746 = vmatpush1.msra.mxu0 0.0
    %3747 = vmatprep.subr.mxu0 0.0
    %3748 = vmatpush1.msra.mxu0 0.0
    %3749 = vmatprep.subr.mxu0 0.0
    %3750 = vmatpush1.msra.mxu0 0.0
    %3751 = vmatprep.subr.mxu0 0.0
    %3752 = vmatpush1.msra.mxu0 0.0
    %3753 = vmatprep.subr.mxu0 0.0
    %3754 = vmatpush1.msra.mxu0 0.0
    %3755 = vmatprep.subr.mxu0 0.0
    %3756 = vmatpush1.msra.mxu0 0.0
    %3757 = vmatprep.subr.mxu0 0.0
    %3758 = vmatpush1.msra.mxu0 0.0
    %3759 = vmatprep.subr.mxu0 0.0
    %3760 = vmatpush1.msra.mxu0 0.0
    %3761 = vmatprep.mubr.f32.mxu0 0.0
    %3762 = vmatmul.mubr.f32.gmra.mrb[0].mxu0 %v2370
    %v3763 = vpop.f32.mrb[0].mxu0
    %v3764 = vadd.f32 %v1634, %v3763
    %v3765 = vpop.f32.mrb[0].mxu0
    %3766 = vmatprep.mubr.f32.mxu0 0.0
    %3767 = vmatmul.mubr.f32.gmra.mrb[0].mxu0 %v2373
    %v3768 = vpop.f32.mrb[0].mxu0
    %v3769 = vadd.f32 %v1634, %v3768
    %v3770 = vpop.f32.mrb[0].mxu0
    %3771 = vdwg.mxu0
    %v3773 = vsel %vm120, %v3689, 0
    %v3776 = vsel %vm120, %v3694, 0
    %v3779 = vsel %vm120, %v3764, 0
    %v3782 = vsel %vm120, %v3769, 0
    %3784 = vmatprep.subr.mxu0 0.0
    %3785 = vmatpush1.xpose.msra.mxu0 %v3779
    %3786 = vmatprep.subr.mxu0 0.0
    %3787 = vmatpush1.xpose.msra.mxu0 %v3782
    %3788 = vmatprep.subr.mxu0 0.0
    %3789 = vmatpush1.xpose.msra.mxu0 0.0
    %3790 = vmatprep.subr.mxu0 0.0
    %3791 = vmatpush1.xpose.msra.mxu0 0.0
    %3792 = vmatprep.subr.mxu0 0.0
    %3793 = vmatpush1.xpose.msra.mxu0 0.0
    %3794 = vmatprep.subr.mxu0 0.0
    %3795 = vmatpush1.xpose.msra.mxu0 0.0
    %3796 = vmatprep.subr.mxu0 0.0
    %3797 = vmatpush1.xpose.msra.mxu0 0.0
    %3798 = vmatprep.subr.mxu0 0.0
    %3799 = vmatpush1.xpose.msra.mxu0 0.0
    %3800 = vmatprep.subr.mxu0 0.0
    %3801 = vmatpush1.xpose.msra.mxu0 0.0
    %3802 = vmatprep.subr.mxu0 0.0
    %3803 = vmatpush1.xpose.msra.mxu0 0.0
    %3804 = vmatprep.subr.mxu0 0.0
    %3805 = vmatpush1.xpose.msra.mxu0 0.0
    %3806 = vmatprep.subr.mxu0 0.0
    %3807 = vmatpush1.xpose.msra.mxu0 0.0
    %3808 = vmatprep.subr.mxu0 0.0
    %3809 = vmatpush1.xpose.msra.mxu0 0.0
    %3810 = vmatprep.subr.mxu0 0.0
    %3811 = vmatpush1.xpose.msra.mxu0 0.0
    %3812 = vmatprep.subr.mxu0 0.0
    %3813 = vmatpush1.xpose.msra.mxu0 0.0
    %3814 = vmatprep.subr.mxu0 0.0
    %3815 = vmatpush1.xpose.msra.mxu0 0.0
    %3816 = vmatprep.subr.mxu0 0.0
    %3817 = vmatpush1.xpose.msra.mxu0 0.0
    %3818 = vmatprep.subr.mxu0 0.0
    %3819 = vmatpush1.xpose.msra.mxu0 0.0
    %3820 = vmatprep.subr.mxu0 0.0
    %3821 = vmatpush1.xpose.msra.mxu0 0.0
    %3822 = vmatprep.subr.mxu0 0.0
    %3823 = vmatpush1.xpose.msra.mxu0 0.0
    %3824 = vmatprep.subr.mxu0 0.0
    %3825 = vmatpush1.xpose.msra.mxu0 0.0
    %3826 = vmatprep.subr.mxu0 0.0
    %3827 = vmatpush1.xpose.msra.mxu0 0.0
    %3828 = vmatprep.subr.mxu0 0.0
    %3829 = vmatpush1.xpose.msra.mxu0 0.0
    %3830 = vmatprep.subr.mxu0 0.0
    %3831 = vmatpush1.xpose.msra.mxu0 0.0
    %3832 = vmatprep.subr.mxu0 0.0
    %3833 = vmatpush1.xpose.msra.mxu0 0.0
    %3834 = vmatprep.subr.mxu0 0.0
    %3835 = vmatpush1.xpose.msra.mxu0 0.0
    %3836 = vmatprep.subr.mxu0 0.0
    %3837 = vmatpush1.xpose.msra.mxu0 0.0
    %3838 = vmatprep.subr.mxu0 0.0
    %3839 = vmatpush1.xpose.msra.mxu0 0.0
    %3840 = vmatprep.subr.mxu0 0.0
    %3841 = vmatpush1.xpose.msra.mxu0 0.0
    %3842 = vmatprep.subr.mxu0 0.0
    %3843 = vmatpush1.xpose.msra.mxu0 0.0
    %3844 = vmatprep.subr.mxu0 0.0
    %3845 = vmatpush1.xpose.msra.mxu0 0.0
    %3846 = vmatprep.subr.mxu0 0.0
    %3847 = vmatpush1.xpose.msra.mxu0 0.0
    %3848 = vmatprep.mubr.f32.mxu0 0.0
    %3849 = vmatmul.mubr.f32.gmra.mrb[0].mxu0 %v3773
    %v3850 = vpop.f32.mrb[0].mxu0
    %v3851 = vadd.f32 %v110, %v3850
    %v3852 = vpop.f32.mrb[0].mxu0
    %3853 = vmatprep.mubr.f32.mxu0 0.0
    %3854 = vmatmul.mubr.f32.gmra.mrb[0].mxu0 %v3776
    %v3855 = vpop.f32.mrb[0].mxu0
    %v3856 = vadd.f32 %v111, %v3855
    %v3857 = vpop.f32.mrb[0].mxu0
    %3858 = vdwg.mxu0
    %v3859 = vsel %vm525, %v3851, -inf
    %3860 = vmax.xlane.f32.xlu0 %v3859
    %v3861 = vpop.xlane.xlu0 %3860
    %v3862 = vsel %vm525, %v3856, -inf
    %3863 = vmax.xlane.f32.xlu0 %v3862
    %v3864 = vpop.xlane.xlu0 %3863
    %v3865 = vsub.f32 %v3851, %v3861
    %v3866 = vsub.f32 %v3856, %v3864
    %v3867 = vmul.f32 %v3865, 1.442695
    %v3868 = vpow.pop %v3867
    %v3869 = vmul.f32 %v3866, 1.442695
    %v3870 = vpow.pop %v3869
    %v3871 = vsel %vm525, %v3868, 0.0
    %3872 = vadd.xlane.f32.xlu0 %v3871
    %v3873 = vpop.xlane.xlu0 %3872
    %v3874 = vsel %vm525, %v3870, 0.0
    %3875 = vadd.xlane.f32.xlu0 %v3874
    %v3876 = vpop.xlane.xlu0 %3875
    %v3877 = vrcp.pop %v3873
    %v3878 = vrcp.pop %v3876
    %v3879 = vmul.f32 %v3868, %v3877
    %v3880 = vmul.f32 %v3870, %v3878
    %3881 = vmatprep.subr.mxu0 0.0
    %3882 = vmatpush1.msra.mxu0 %v82
    %3883 = vmatprep.subr.mxu0 0.0
    %3884 = vmatpush1.msra.mxu0 %v83
    %3885 = vmatprep.subr.mxu0 0.0
    %3886 = vmatpush1.msra.mxu0 %v84
    %3887 = vmatprep.subr.mxu0 0.0
    %3888 = vmatpush1.msra.mxu0 %v85
    %3889 = vmatprep.subr.mxu0 0.0
    %3890 = vmatpush1.msra.mxu0 0.0
    %3891 = vmatprep.subr.mxu0 0.0
    %3892 = vmatpush1.msra.mxu0 0.0
    %3893 = vmatprep.subr.mxu0 0.0
    %3894 = vmatpush1.msra.mxu0 0.0
    %3895 = vmatprep.subr.mxu0 0.0
    %3896 = vmatpush1.msra.mxu0 0.0
    %3897 = vmatprep.subr.mxu0 0.0
    %3898 = vmatpush1.msra.mxu0 0.0
    %3899 = vmatprep.subr.mxu0 0.0
    %3900 = vmatpush1.msra.mxu0 0.0
    %3901 = vmatprep.subr.mxu0 0.0
    %3902 = vmatpush1.msra.mxu0 0.0
    %3903 = vmatprep.subr.mxu0 0.0
    %3904 = vmatpush1.msra.mxu0 0.0
    %3905 = vmatprep.subr.mxu0 0.0
    %3906 = vmatpush1.msra.mxu0 0.0
    %3907 = vmatprep.subr.mxu0 0.0
    %3908 = vmatpush1.msra.mxu0 0.0
    %3909 = vmatprep.subr.mxu0 0.0
    %3910 = vmatpush1.msra.mxu0 0.0
    %3911 = vmatprep.subr.mxu0 0.0
    %3912 = vmatpush1.msra.mxu0 0.0
    %3913 = vmatprep.subr.mxu0 0.0
    %3914 = vmatpush1.msra.mxu0 0.0
    %3915 = vmatprep.subr.mxu0 0.0
    %3916 = vmatpush1.msra.mxu0 0.0
    %3917 = vmatprep.subr.mxu0 0.0
    %3918 = vmatpush1.msra.mxu0 0.0
    %3919 = vmatprep.subr.mxu0 0.0
    %3920 = vmatpush1.msra.mxu0 0.0
    %3921 = vmatprep.subr.mxu0 0.0
    %3922 = vmatpush1.msra.mxu0 0.0
    %3923 = vmatprep.subr.mxu0 0.0
    %3924 = vmatpush1.msra.mxu0 0.0
    %3925 = vmatprep.subr.mxu0 0.0
    %3926 = vmatpush1.msra.mxu0 0.0
    %3927 = vmatprep.subr.mxu0 0.0
    %3928 = vmatpush1.msra.mxu0 0.0
    %3929 = vmatprep.subr.mxu0 0.0
    %3930 = vmatpush1.msra.mxu0 0.0
    %3931 = vmatprep.subr.mxu0 0.0
    %3932 = vmatpush1.msra.mxu0 0.0
    %3933 = vmatprep.subr.mxu0 0.0
    %3934 = vmatpush1.msra.mxu0 0.0
    %3935 = vmatprep.subr.mxu0 0.0
    %3936 = vmatpush1.msra.mxu0 0.0
    %3937 = vmatprep.subr.mxu0 0.0
    %3938 = vmatpush1.msra.mxu0 0.0
    %3939 = vmatprep.subr.mxu0 0.0
    %3940 = vmatpush1.msra.mxu0 0.0
    %3941 = vmatprep.subr.mxu0 0.0
    %3942 = vmatpush1.msra.mxu0 0.0
    %3943 = vmatprep.subr.mxu0 0.0
    %3944 = vmatpush1.msra.mxu0 0.0
    %3945 = vmatprep.mubr.f32.mxu0 0.0
    %3946 = vmatmul.mubr.f32.gmra.mrb[0].mxu0 %v2370
    %v3947 = vpop.f32.mrb[0].mxu0
    %v3948 = vadd.f32 0.0, %v3947
    %v3949 = vpop.f32.mrb[0].mxu0
    %3950 = vmatprep.mubr.f32.mxu0 0.0
    %3951 = vmatmul.mubr.f32.gmra.mrb[0].mxu0 %v2373
    %v3952 = vpop.f32.mrb[0].mxu0
    %v3953 = vadd.f32 0.0, %v3952
    %v3954 = vpop.f32.mrb[0].mxu0
    %3955 = vdwg.mxu0
    %v3957 = vsel %vm525, %v3879, 0
    %v3960 = vsel %vm525, %v3880, 0
    %3962 = vmatprep.subr.mxu0 0.0
    %3963 = vmatpush1.msra.mxu0 %v3948
    %3964 = vmatprep.subr.mxu0 0.0
    %3965 = vmatpush1.msra.mxu0 %v3953
    %3966 = vmatprep.subr.mxu0 0.0
    %3967 = vmatpush1.msra.mxu0 0.0
    %3968 = vmatprep.subr.mxu0 0.0
    %3969 = vmatpush1.msra.mxu0 0.0
    %3970 = vmatprep.subr.mxu0 0.0
    %3971 = vmatpush1.msra.mxu0 0.0
    %3972 = vmatprep.subr.mxu0 0.0
    %3973 = vmatpush1.msra.mxu0 0.0
    %3974 = vmatprep.subr.mxu0 0.0
    %3975 = vmatpush1.msra.mxu0 0.0
    %3976 = vmatprep.subr.mxu0 0.0
    %3977 = vmatpush1.msra.mxu0 0.0
    %3978 = vmatprep.subr.mxu0 0.0
    %3979 = vmatpush1.msra.mxu0 0.0
    %3980 = vmatprep.subr.mxu0 0.0
    %3981 = vmatpush1.msra.mxu0 0.0
    %3982 = vmatprep.subr.mxu0 0.0
    %3983 = vmatpush1.msra.mxu0 0.0
    %3984 = vmatprep.subr.mxu0 0.0
    %3985 = vmatpush1.msra.mxu0 0.0
    %3986 = vmatprep.subr.mxu0 0.0
    %3987 = vmatpush1.msra.mxu0 0.0
    %3988 = vmatprep.subr.mxu0 0.0
    %3989 = vmatpush1.msra.mxu0 0.0
    %3990 = vmatprep.subr.mxu0 0.0
    %3991 = vmatpush1.msra.mxu0 0.0
    %3992 = vmatprep.subr.mxu0 0.0
    %3993 = vmatpush1.msra.mxu0 0.0
    %3994 = vmatprep.subr.mxu0 0.0
    %3995 = vmatpush1.msra.mxu0 0.0
    %3996 = vmatprep.subr.mxu0 0.0
    %3997 = vmatpush1.msra.mxu0 0.0
    %3998 = vmatprep.subr.mxu0 0.0
    %3999 = vmatpush1.msra.mxu0 0.0
    %4000 = vmatprep.subr.mxu0 0.0
    %4001 = vmatpush1.msra.mxu0 0.0
    %4002 = vmatprep.subr.mxu0 0.0
    %4003 = vmatpush1.msra.mxu0 0.0
    %4004 = vmatprep.subr.mxu0 0.0
    %4005 = vmatpush1.msra.mxu0 0.0
    %4006 = vmatprep.subr.mxu0 0.0
    %4007 = vmatpush1.msra.mxu0 0.0
    %4008 = vmatprep.subr.mxu0 0.0
    %4009 = vmatpush1.msra.mxu0 0.0
    %4010 = vmatprep.subr.mxu0 0.0
    %4011 = vmatpush1.msra.mxu0 0.0
    %4012 = vmatprep.subr.mxu0 0.0
    %4013 = vmatpush1.msra.mxu0 0.0
    %4014 = vmatprep.subr.mxu0 0.0
    %4015 = vmatpush1.msra.mxu0 0.0
    %4016 = vmatprep.subr.mxu0 0.0
    %4017 = vmatpush1.msra.mxu0 0.0
    %4018 = vmatprep.subr.mxu0 0.0
    %4019 = vmatpush1.msra.mxu0 0.0
    %4020 = vmatprep.subr.mxu0 0.0
    %4021 = vmatpush1.msra.mxu0 0.0
    %4022 = vmatprep.subr.mxu0 0.0
    %4023 = vmatpush1.msra.mxu0 0.0
    %4024 = vmatprep.subr.mxu0 0.0
    %4025 = vmatpush1.msra.mxu0 0.0
    %4026 = vmatprep.mubr.f32.mxu0 0.0
    %4027 = vmatmul.mubr.f32.gmra.mrb[0].mxu0 %v3957
    %v4028 = vpop.f32.mrb[0].mxu0
    %v4029 = vadd.f32 0.0, %v4028
    %v4030 = vpop.f32.mrb[0].mxu0
    %4031 = vmatprep.mubr.f32.mxu0 0.0
    %4032 = vmatmul.mubr.f32.gmra.mrb[0].mxu0 %v3960
    %v4033 = vpop.f32.mrb[0].mxu0
    %v4034 = vadd.f32 0.0, %v4033
    %v4035 = vpop.f32.mrb[0].mxu0
    %4036 = vdwg.mxu0
    %v4037 = vadd.f32 %v3620, %v4029
    %v4038 = vadd.f32 %v3621, %v4034
    %v4039 = vadd.f32 %v4037, %v1980
    %v4040 = vadd.f32 %v4038, %v1980
    %v4042 = vsel %vm202, %v4039, 0
    %v4045 = vsel %vm202, %v4040, 0
    %4047 = vmatprep.subr.mxu0 0.0
    %4048 = vmatpush1.msra.mxu0 %v87
    %4049 = vmatprep.subr.mxu0 0.0
    %4050 = vmatpush1.msra.mxu0 %v88
    %4051 = vmatprep.subr.mxu0 0.0
    %4052 = vmatpush1.msra.mxu0 %v89
    %4053 = vmatprep.subr.mxu0 0.0
    %4054 = vmatpush1.msra.mxu0 %v90
    %4055 = vmatprep.subr.mxu0 0.0
    %4056 = vmatpush1.msra.mxu0 0.0
    %4057 = vmatprep.subr.mxu0 0.0
    %4058 = vmatpush1.msra.mxu0 0.0
    %4059 = vmatprep.subr.mxu0 0.0
    %4060 = vmatpush1.msra.mxu0 0.0
    %4061 = vmatprep.subr.mxu0 0.0
    %4062 = vmatpush1.msra.mxu0 0.0
    %4063 = vmatprep.subr.mxu0 0.0
    %4064 = vmatpush1.msra.mxu0 0.0
    %4065 = vmatprep.subr.mxu0 0.0
    %4066 = vmatpush1.msra.mxu0 0.0
    %4067 = vmatprep.subr.mxu0 0.0
    %4068 = vmatpush1.msra.mxu0 0.0
    %4069 = vmatprep.subr.mxu0 0.0
    %4070 = vmatpush1.msra.mxu0 0.0
    %4071 = vmatprep.subr.mxu0 0.0
    %4072 = vmatpush1.msra.mxu0 0.0
    %4073 = vmatprep.subr.mxu0 0.0
    %4074 = vmatpush1.msra.mxu0 0.0
    %4075 = vmatprep.subr.mxu0 0.0
    %4076 = vmatpush1.msra.mxu0 0.0
    %4077 = vmatprep.subr.mxu0 0.0
    %4078 = vmatpush1.msra.mxu0 0.0
    %4079 = vmatprep.subr.mxu0 0.0
    %4080 = vmatpush1.msra.mxu0 0.0
    %4081 = vmatprep.subr.mxu0 0.0
    %4082 = vmatpush1.msra.mxu0 0.0
    %4083 = vmatprep.subr.mxu0 0.0
    %4084 = vmatpush1.msra.mxu0 0.0
    %4085 = vmatprep.subr.mxu0 0.0
    %4086 = vmatpush1.msra.mxu0 0.0
    %4087 = vmatprep.subr.mxu0 0.0
    %4088 = vmatpush1.msra.mxu0 0.0
    %4089 = vmatprep.subr.mxu0 0.0
    %4090 = vmatpush1.msra.mxu0 0.0
    %4091 = vmatprep.subr.mxu0 0.0
    %4092 = vmatpush1.msra.mxu0 0.0
    %4093 = vmatprep.subr.mxu0 0.0
    %4094 = vmatpush1.msra.mxu0 0.0
    %4095 = vmatprep.subr.mxu0 0.0
    %4096 = vmatpush1.msra.mxu0 0.0
    %4097 = vmatprep.subr.mxu0 0.0
    %4098 = vmatpush1.msra.mxu0 0.0
    %4099 = vmatprep.subr.mxu0 0.0
    %4100 = vmatpush1.msra.mxu0 0.0
    %4101 = vmatprep.subr.mxu0 0.0
    %4102 = vmatpush1.msra.mxu0 0.0
    %4103 = vmatprep.subr.mxu0 0.0
    %4104 = vmatpush1.msra.mxu0 0.0
    %4105 = vmatprep.subr.mxu0 0.0
    %4106 = vmatpush1.msra.mxu0 0.0
    %4107 = vmatprep.subr.mxu0 0.0
    %4108 = vmatpush1.msra.mxu0 0.0
    %4109 = vmatprep.subr.mxu0 0.0
    %4110 = vmatpush1.msra.mxu0 0.0
    %4111 = vmatprep.mubr.f32.mxu0 0.0
    %4112 = vmatmul.mubr.f32.gmra.mrb[0].mxu0 %v4042
    %v4113 = vpop.f32.mrb[0].mxu0
    %v4114 = vadd.f32 %v1986, %v4113
    %v4115 = vpop.f32.mrb[0].mxu0
    %4116 = vmatprep.mubr.f32.mxu0 0.0
    %4117 = vmatmul.mubr.f32.gmra.mrb[0].mxu0 %v4045
    %v4118 = vpop.f32.mrb[0].mxu0
    %v4119 = vadd.f32 %v1986, %v4118
    %v4120 = vpop.f32.mrb[0].mxu0
    %4121 = vdwg.mxu0
    %v4122 = vsel %vm202, %v4114, 0.0
    %4123 = vadd.xlane.f32.xlu0 %v4122
    %v4124 = vpop.xlane.xlu0 %4123
    %v4125 = vsel %vm202, %v4119, 0.0
    %4126 = vadd.xlane.f32.xlu0 %v4125
    %v4127 = vpop.xlane.xlu0 %4126
    %v4128 = vmul.f32 %v4124, %v209
    %v4129 = vmul.f32 %v4127, %v209
    %v4130 = vsub.f32 %v4114, %v4128
    %v4131 = vsub.f32 %v4119, %v4129
    %v4132 = vmul.f32 %v4130, %v4130
    %v4133 = vmul.f32 %v4131, %v4131
    %v4134 = vsel %vm202, %v4132, 0.0
    %4135 = vadd.xlane.f32.xlu0 %v4134
    %v4136 = vpop.xlane.xlu0 %4135
    %v4137 = vsel %vm202, %v4133, 0.0
    %4138 = vadd.xlane.f32.xlu0 %v4137
    %v4139 = vpop.xlane.xlu0 %4138
    %v4140 = vmul.f32 %v4136, %v209
    %v4141 = vmul.f32 %v4139, %v209
    %v4142 = vadd.f32 %v4140, 1e-12
    %v4143 = vadd.f32 %v4141, 1e-12
    %v4144 = vrsqrt.pop %v4142
    %v4145 = vrsqrt.pop %v4143
    %v4146 = vmul.f32 %v4130, %v4144
    %v4147 = vmul.f32 %v4131, %v4145
    %v4148 = vmul.f32 %v2097, %v4146
    %v4149 = vmul.f32 %v2097, %v4147
    %v4150 = vadd.f32 %v4148, %v2103
    %v4151 = vadd.f32 %v4149, %v2103
    %v4153 = vsel %vm202, %v4150, 0
    %v4156 = vsel %vm202, %v4151, 0
    %4158 = vmatprep.subr.mxu0 0.0
    %4159 = vmatpush1.msra.mxu0 %v94
    %4160 = vmatprep.subr.mxu0 0.0
    %4161 = vmatpush1.msra.mxu0 %v95
    %4162 = vmatprep.subr.mxu0 0.0
    %4163 = vmatpush1.msra.mxu0 %v96
    %4164 = vmatprep.subr.mxu0 0.0
    %4165 = vmatpush1.msra.mxu0 %v97
    %4166 = vmatprep.subr.mxu0 0.0
    %4167 = vmatpush1.msra.mxu0 0.0
    %4168 = vmatprep.subr.mxu0 0.0
    %4169 = vmatpush1.msra.mxu0 0.0
    %4170 = vmatprep.subr.mxu0 0.0
    %4171 = vmatpush1.msra.mxu0 0.0
    %4172 = vmatprep.subr.mxu0 0.0
    %4173 = vmatpush1.msra.mxu0 0.0
    %4174 = vmatprep.subr.mxu0 0.0
    %4175 = vmatpush1.msra.mxu0 0.0
    %4176 = vmatprep.subr.mxu0 0.0
    %4177 = vmatpush1.msra.mxu0 0.0
    %4178 = vmatprep.subr.mxu0 0.0
    %4179 = vmatpush1.msra.mxu0 0.0
    %4180 = vmatprep.subr.mxu0 0.0
    %4181 = vmatpush1.msra.mxu0 0.0
    %4182 = vmatprep.subr.mxu0 0.0
    %4183 = vmatpush1.msra.mxu0 0.0
    %4184 = vmatprep.subr.mxu0 0.0
    %4185 = vmatpush1.msra.mxu0 0.0
    %4186 = vmatprep.subr.mxu0 0.0
    %4187 = vmatpush1.msra.mxu0 0.0
    %4188 = vmatprep.subr.mxu0 0.0
    %4189 = vmatpush1.msra.mxu0 0.0
    %4190 = vmatprep.subr.mxu0 0.0
    %4191 = vmatpush1.msra.mxu0 0.0
    %4192 = vmatprep.subr.mxu0 0.0
    %4193 = vmatpush1.msra.mxu0 0.0
    %4194 = vmatprep.subr.mxu0 0.0
    %4195 = vmatpush1.msra.mxu0 0.0
    %4196 = vmatprep.subr.mxu0 0.0
    %4197 = vmatpush1.msra.mxu0 0.0
    %4198 = vmatprep.subr.mxu0 0.0
    %4199 = vmatpush1.msra.mxu0 0.0
    %4200 = vmatprep.subr.mxu0 0.0
    %4201 = vmatpush1.msra.mxu0 0.0
    %4202 = vmatprep.subr.mxu0 0.0
    %4203 = vmatpush1.msra.mxu0 0.0
    %4204 = vmatprep.subr.mxu0 0.0
    %4205 = vmatpush1.msra.mxu0 0.0
    %4206 = vmatprep.subr.mxu0 0.0
    %4207 = vmatpush1.msra.mxu0 0.0
    %4208 = vmatprep.subr.mxu0 0.0
    %4209 = vmatpush1.msra.mxu0 0.0
    %4210 = vmatprep.subr.mxu0 0.0
    %4211 = vmatpush1.msra.mxu0 0.0
    %4212 = vmatprep.subr.mxu0 0.0
    %4213 = vmatpush1.msra.mxu0 0.0
    %4214 = vmatprep.subr.mxu0 0.0
    %4215 = vmatpush1.msra.mxu0 0.0
    %4216 = vmatprep.subr.mxu0 0.0
    %4217 = vmatpush1.msra.mxu0 0.0
    %4218 = vmatprep.subr.mxu0 0.0
    %4219 = vmatpush1.msra.mxu0 0.0
    %4220 = vmatprep.subr.mxu0 0.0
    %4221 = vmatpush1.msra.mxu0 0.0
    %4222 = vmatprep.mubr.f32.mxu0 0.0
    %4223 = vmatmul.mubr.f32.gmra.mrb[0].mxu0 %v4153
    %v4224 = vpop.f32.mrb[0].mxu0
    %v4225 = vadd.f32 %v2109, %v4224
    %v4226 = vpop.f32.mrb[0].mxu0
    %4227 = vmatprep.mubr.f32.mxu0 0.0
    %4228 = vmatmul.mubr.f32.gmra.mrb[0].mxu0 %v4156
    %v4229 = vpop.f32.mrb[0].mxu0
    %v4230 = vadd.f32 %v2109, %v4229
    %v4231 = vpop.f32.mrb[0].mxu0
    %4232 = vdwg.mxu0
    %v4233 = vmul.f32 %v4225, 0.5
    %v4234 = vmul.f32 %v4230, 0.5
    %v4235 = vmul.f32 %v4225, 0.70710677
    %v4236 = vmul.f32 %v4230, 0.70710677
    %v4237 = vand.u32 2147483647, %v4235
    %v4238 = vand.u32 2147483647, %v4236
    %v4239 = vmul.f32 %v4237, 0.3275911
    %v4240 = vmul.f32 %v4238, 0.3275911
    %v4241 = vadd.f32 %v4239, 1.0
    %v4242 = vadd.f32 %v4240, 1.0
    %v4243 = vrcp.pop %v4241
    %v4244 = vrcp.pop %v4242
    %v4245 = vmul.f32 %v4243, 1.0614054
    %v4246 = vmul.f32 %v4244, 1.0614054
    %v4247 = vadd.f32 %v4245, -1.4531521
    %v4248 = vadd.f32 %v4246, -1.4531521
    %v4249 = vmul.f32 %v4247, %v4243
    %v4250 = vmul.f32 %v4248, %v4244
    %v4251 = vadd.f32 %v4249, 1.4214138
    %v4252 = vadd.f32 %v4250, 1.4214138
    %v4253 = vmul.f32 %v4251, %v4243
    %v4254 = vmul.f32 %v4252, %v4244
    %v4255 = vadd.f32 %v4253, -0.28449672
    %v4256 = vadd.f32 %v4254, -0.28449672
    %v4257 = vmul.f32 %v4255, %v4243
    %v4258 = vmul.f32 %v4256, %v4244
    %v4259 = vadd.f32 %v4257, 0.2548296
    %v4260 = vadd.f32 %v4258, 0.2548296
    %v4261 = vmul.f32 %v4259, %v4243
    %v4262 = vmul.f32 %v4260, %v4244
    %v4263 = vsub.f32 0.0, %v4237
    %v4264 = vsub.f32 0.0, %v4238
    %v4265 = vmul.f32 %v4263, %v4237
    %v4266 = vmul.f32 %v4264, %v4238
    %v4267 = vmul.f32 %v4265, 1.442695
    %v4268 = vpow.pop %v4267
    %v4269 = vmul.f32 %v4266, 1.442695
    %v4270 = vpow.pop %v4269
    %v4271 = vmul.f32 %v4261, %v4268
    %v4272 = vmul.f32 %v4262, %v4270
    %v4273 = vsub.f32 1.0, %v4271
    %v4274 = vsub.f32 1.0, %v4272
    %vm4275 = vcmp.ge.f32.partialorder %v4235, 0.0
    %vm4276 = vcmp.ge.f32.partialorder %v4236, 0.0
    %v4277 = vsub.f32 0.0, %v4273
    %v4278 = vsub.f32 0.0, %v4274
    %v4279 = vsel %vm4275, %v4273, %v4277
    %v4280 = vsel %vm4276, %v4274, %v4278
    %v4281 = vadd.f32 %v4279, 1.0
    %v4282 = vadd.f32 %v4280, 1.0
    %v4283 = vmul.f32 %v4233, %v4281
    %v4284 = vmul.f32 %v4234, %v4282
    %v4286 = vsel %vm2247, %v4283, 0
    %v4289 = vsel %vm2247, %v4284, 0
    %4291 = vmatprep.subr.mxu0 0.0
    %4292 = vmatpush1.msra.mxu0 %v99
    %4293 = vmatprep.subr.mxu0 0.0
    %4294 = vmatpush1.msra.mxu0 %v100
    %4295 = vmatprep.subr.mxu0 0.0
    %4296 = vmatpush1.msra.mxu0 %v101
    %4297 = vmatprep.subr.mxu0 0.0
    %4298 = vmatpush1.msra.mxu0 %v102
    %4299 = vmatprep.subr.mxu0 0.0
    %4300 = vmatpush1.msra.mxu0 %v103
    %4301 = vmatprep.subr.mxu0 0.0
    %4302 = vmatpush1.msra.mxu0 %v104
    %4303 = vmatprep.subr.mxu0 0.0
    %4304 = vmatpush1.msra.mxu0 %v105
    %4305 = vmatprep.subr.mxu0 0.0
    %4306 = vmatpush1.msra.mxu0 %v106
    %4307 = vmatprep.subr.mxu0 0.0
    %4308 = vmatpush1.msra.mxu0 0.0
    %4309 = vmatprep.subr.mxu0 0.0
    %4310 = vmatpush1.msra.mxu0 0.0
    %4311 = vmatprep.subr.mxu0 0.0
    %4312 = vmatpush1.msra.mxu0 0.0
    %4313 = vmatprep.subr.mxu0 0.0
    %4314 = vmatpush1.msra.mxu0 0.0
    %4315 = vmatprep.subr.mxu0 0.0
    %4316 = vmatpush1.msra.mxu0 0.0
    %4317 = vmatprep.subr.mxu0 0.0
    %4318 = vmatpush1.msra.mxu0 0.0
    %4319 = vmatprep.subr.mxu0 0.0
    %4320 = vmatpush1.msra.mxu0 0.0
    %4321 = vmatprep.subr.mxu0 0.0
    %4322 = vmatpush1.msra.mxu0 0.0
    %4323 = vmatprep.subr.mxu0 0.0
    %4324 = vmatpush1.msra.mxu0 0.0
    %4325 = vmatprep.subr.mxu0 0.0
    %4326 = vmatpush1.msra.mxu0 0.0
    %4327 = vmatprep.subr.mxu0 0.0
    %4328 = vmatpush1.msra.mxu0 0.0
    %4329 = vmatprep.subr.mxu0 0.0
    %4330 = vmatpush1.msra.mxu0 0.0
    %4331 = vmatprep.subr.mxu0 0.0
    %4332 = vmatpush1.msra.mxu0 0.0
    %4333 = vmatprep.subr.mxu0 0.0
    %4334 = vmatpush1.msra.mxu0 0.0
    %4335 = vmatprep.subr.mxu0 0.0
    %4336 = vmatpush1.msra.mxu0 0.0
    %4337 = vmatprep.subr.mxu0 0.0
    %4338 = vmatpush1.msra.mxu0 0.0
    %4339 = vmatprep.subr.mxu0 0.0
    %4340 = vmatpush1.msra.mxu0 0.0
    %4341 = vmatprep.subr.mxu0 0.0
    %4342 = vmatpush1.msra.mxu0 0.0
    %4343 = vmatprep.subr.mxu0 0.0
    %4344 = vmatpush1.msra.mxu0 0.0
    %4345 = vmatprep.subr.mxu0 0.0
    %4346 = vmatpush1.msra.mxu0 0.0
    %4347 = vmatprep.subr.mxu0 0.0
    %4348 = vmatpush1.msra.mxu0 0.0
    %4349 = vmatprep.subr.mxu0 0.0
    %4350 = vmatpush1.msra.mxu0 0.0
    %4351 = vmatprep.subr.mxu0 0.0
    %4352 = vmatpush1.msra.mxu0 0.0
    %4353 = vmatprep.subr.mxu0 0.0
    %4354 = vmatpush1.msra.mxu0 0.0
    %4355 = vmatprep.mubr.f32.mxu0 0.0
    %4356 = vmatmul.mubr.f32.gmra.mrb[0].mxu0 %v4286
    %v4357 = vpop.f32.mrb[0].mxu0
    %v4358 = vadd.f32 %v2246, %v4357
    %v4359 = vpop.f32.mrb[0].mxu0
    %4360 = vmatprep.mubr.f32.mxu0 0.0
    %4361 = vmatmul.mubr.f32.gmra.mrb[0].mxu0 %v4289
    %v4362 = vpop.f32.mrb[0].mxu0
    %v4363 = vadd.f32 %v2246, %v4362
    %v4364 = vpop.f32.mrb[0].mxu0
    %4365 = vdwg.mxu0
    %v4366 = vadd.f32 %v4150, %v4358
    %v4367 = vadd.f32 %v4151, %v4363
    %v4368 = vsel %vm202, %v4366, 0.0
    %4369 = vadd.xlane.f32.xlu0 %v4368
    %v4370 = vpop.xlane.xlu0 %4369
    %v4371 = vsel %vm202, %v4367, 0.0
    %4372 = vadd.xlane.f32.xlu0 %v4371
    %v4373 = vpop.xlane.xlu0 %4372
    %v4374 = vmul.f32 %v4370, %v209
    %v4375 = vmul.f32 %v4373, %v209
    %v4376 = vsub.f32 %v4366, %v4374
    %v4377 = vsub.f32 %v4367, %v4375
    %v4378 = vmul.f32 %v4376, %v4376
    %v4379 = vmul.f32 %v4377, %v4377
    %v4380 = vsel %vm202, %v4378, 0.0
    %4381 = vadd.xlane.f32.xlu0 %v4380
    %v4382 = vpop.xlane.xlu0 %4381
    %v4383 = vsel %vm202, %v4379, 0.0
    %4384 = vadd.xlane.f32.xlu0 %v4383
    %v4385 = vpop.xlane.xlu0 %4384
    %v4386 = vmul.f32 %v4382, %v209
    %v4387 = vmul.f32 %v4385, %v209
    %v4388 = vadd.f32 %v4386, 1e-12
    %v4389 = vadd.f32 %v4387, 1e-12
    %v4390 = vrsqrt.pop %v4388
    %v4391 = vrsqrt.pop %v4389
    %v4392 = vmul.f32 %v4376, %v4390
    %v4393 = vmul.f32 %v4377, %v4391
    %v4394 = vmul.f32 %v2360, %v4392
    %v4395 = vmul.f32 %v2360, %v4393
    %v4396 = vadd.f32 %v4394, %v2366
    %v4397 = vadd.f32 %v4395, %v2366
    %v4398 = vld [vmem:[#allocation2 + $0x350] sm:$0x1]
    %v4399 = vld [vmem:[#allocation2 + $0x2c0] sm:$0xff]
    %v4400 = vld [vmem:[#allocation2 + $0x2c8] sm:$0xff]
    %v4402 = vsel %vm525, %v4399, 0
    %v4405 = vsel %vm525, %v4400, 0
    %4407 = vmatprep.subr.mxu0 0.0
    %4408 = vmatpush1.msra.mxu0 %v4396
    %4409 = vmatprep.subr.mxu0 0.0
    %4410 = vmatpush1.msra.mxu0 %v4397
    %4411 = vmatprep.subr.mxu0 0.0
    %4412 = vmatpush1.msra.mxu0 0.0
    %4413 = vmatprep.subr.mxu0 0.0
    %4414 = vmatpush1.msra.mxu0 0.0
    %4415 = vmatprep.subr.mxu0 0.0
    %4416 = vmatpush1.msra.mxu0 0.0
    %4417 = vmatprep.subr.mxu0 0.0
    %4418 = vmatpush1.msra.mxu0 0.0
    %4419 = vmatprep.subr.mxu0 0.0
    %4420 = vmatpush1.msra.mxu0 0.0
    %4421 = vmatprep.subr.mxu0 0.0
    %4422 = vmatpush1.msra.mxu0 0.0
    %4423 = vmatprep.subr.mxu0 0.0
    %4424 = vmatpush1.msra.mxu0 0.0
    %4425 = vmatprep.subr.mxu0 0.0
    %4426 = vmatpush1.msra.mxu0 0.0
    %4427 = vmatprep.subr.mxu0 0.0
    %4428 = vmatpush1.msra.mxu0 0.0
    %4429 = vmatprep.subr.mxu0 0.0
    %4430 = vmatpush1.msra.mxu0 0.0
    %4431 = vmatprep.subr.mxu0 0.0
    %4432 = vmatpush1.msra.mxu0 0.0
    %4433 = vmatprep.subr.mxu0 0.0
    %4434 = vmatpush1.msra.mxu0 0.0
    %4435 = vmatprep.subr.mxu0 0.0
    %4436 = vmatpush1.msra.mxu0 0.0
    %4437 = vmatprep.subr.mxu0 0.0
    %4438 = vmatpush1.msra.mxu0 0.0
    %4439 = vmatprep.subr.mxu0 0.0
    %4440 = vmatpush1.msra.mxu0 0.0
    %4441 = vmatprep.subr.mxu0 0.0
    %4442 = vmatpush1.msra.mxu0 0.0
    %4443 = vmatprep.subr.mxu0 0.0
    %4444 = vmatpush1.msra.mxu0 0.0
    %4445 = vmatprep.subr.mxu0 0.0
    %4446 = vmatpush1.msra.mxu0 0.0
    %4447 = vmatprep.subr.mxu0 0.0
    %4448 = vmatpush1.msra.mxu0 0.0
    %4449 = vmatprep.subr.mxu0 0.0
    %4450 = vmatpush1.msra.mxu0 0.0
    %4451 = vmatprep.subr.mxu0 0.0
    %4452 = vmatpush1.msra.mxu0 0.0
    %4453 = vmatprep.subr.mxu0 0.0
    %4454 = vmatpush1.msra.mxu0 0.0
    %4455 = vmatprep.subr.mxu0 0.0
    %4456 = vmatpush1.msra.mxu0 0.0
    %4457 = vmatprep.subr.mxu0 0.0
    %4458 = vmatpush1.msra.mxu0 0.0
    %4459 = vmatprep.subr.mxu0 0.0
    %4460 = vmatpush1.msra.mxu0 0.0
    %4461 = vmatprep.subr.mxu0 0.0
    %4462 = vmatpush1.msra.mxu0 0.0
    %4463 = vmatprep.subr.mxu0 0.0
    %4464 = vmatpush1.msra.mxu0 0.0
    %4465 = vmatprep.subr.mxu0 0.0
    %4466 = vmatpush1.msra.mxu0 0.0
    %4467 = vmatprep.subr.mxu0 0.0
    %4468 = vmatpush1.msra.mxu0 0.0
    %4469 = vmatprep.subr.mxu0 0.0
    %4470 = vmatpush1.msra.mxu0 0.0
    %4471 = vmatprep.mubr.f32.mxu0 0.0
    %4472 = vmatmul.mubr.f32.gmra.mrb[0].mxu0 %v4402
    %v4473 = vpop.f32.mrb[0].mxu0
    %v4474 = vadd.f32 0.0, %v4473
    %v4475 = vpop.f32.mrb[0].mxu0
    %4476 = vmatprep.mubr.f32.mxu0 0.0
    %4477 = vmatmul.mubr.f32.gmra.mrb[0].mxu0 %v4405
    %v4478 = vpop.f32.mrb[0].mxu0
    %v4479 = vadd.f32 0.0, %v4478
    %v4480 = vpop.f32.mrb[0].mxu0
    %4481 = vdwg.mxu0
    %v4482 = vld [vmem:[#allocation2 + $0x2d0] sm:$0xff]
    %v4483 = vld [vmem:[#allocation2 + $0x2d8] sm:$0xff]
    %v4484 = vld [vmem:[#allocation2 + $0x2e0] sm:$0xff]
    %v4485 = vld [vmem:[#allocation2 + $0x2e8] sm:$0xff]
    %v4487 = vsel %vm202, %v4474, 0
    %v4490 = vsel %vm202, %v4479, 0
    %4492 = vmatprep.subr.mxu0 0.0
    %4493 = vmatpush1.msra.mxu0 %v4482
    %4494 = vmatprep.subr.mxu0 0.0
    %4495 = vmatpush1.msra.mxu0 %v4483
    %4496 = vmatprep.subr.mxu0 0.0
    %4497 = vmatpush1.msra.mxu0 %v4484
    %4498 = vmatprep.subr.mxu0 0.0
    %4499 = vmatpush1.msra.mxu0 %v4485
    %4500 = vmatprep.subr.mxu0 0.0
    %4501 = vmatpush1.msra.mxu0 0.0
    %4502 = vmatprep.subr.mxu0 0.0
    %4503 = vmatpush1.msra.mxu0 0.0
    %4504 = vmatprep.subr.mxu0 0.0
    %4505 = vmatpush1.msra.mxu0 0.0
    %4506 = vmatprep.subr.mxu0 0.0
    %4507 = vmatpush1.msra.mxu0 0.0
    %4508 = vmatprep.subr.mxu0 0.0
    %4509 = vmatpush1.msra.mxu0 0.0
    %4510 = vmatprep.subr.mxu0 0.0
    %4511 = vmatpush1.msra.mxu0 0.0
    %4512 = vmatprep.subr.mxu0 0.0
    %4513 = vmatpush1.msra.mxu0 0.0
    %4514 = vmatprep.subr.mxu0 0.0
    %4515 = vmatpush1.msra.mxu0 0.0
    %4516 = vmatprep.subr.mxu0 0.0
    %4517 = vmatpush1.msra.mxu0 0.0
    %4518 = vmatprep.subr.mxu0 0.0
    %4519 = vmatpush1.msra.mxu0 0.0
    %4520 = vmatprep.subr.mxu0 0.0
    %4521 = vmatpush1.msra.mxu0 0.0
    %4522 = vmatprep.subr.mxu0 0.0
    %4523 = vmatpush1.msra.mxu0 0.0
    %4524 = vmatprep.subr.mxu0 0.0
    %4525 = vmatpush1.msra.mxu0 0.0
    %4526 = vmatprep.subr.mxu0 0.0
    %4527 = vmatpush1.msra.mxu0 0.0
    %4528 = vmatprep.subr.mxu0 0.0
    %4529 = vmatpush1.msra.mxu0 0.0
    %4530 = vmatprep.subr.mxu0 0.0
    %4531 = vmatpush1.msra.mxu0 0.0
    %4532 = vmatprep.subr.mxu0 0.0
    %4533 = vmatpush1.msra.mxu0 0.0
    %4534 = vmatprep.subr.mxu0 0.0
    %4535 = vmatpush1.msra.mxu0 0.0
    %4536 = vmatprep.subr.mxu0 0.0
    %4537 = vmatpush1.msra.mxu0 0.0
    %4538 = vmatprep.subr.mxu0 0.0
    %4539 = vmatpush1.msra.mxu0 0.0
    %4540 = vmatprep.subr.mxu0 0.0
    %4541 = vmatpush1.msra.mxu0 0.0
    %4542 = vmatprep.subr.mxu0 0.0
    %4543 = vmatpush1.msra.mxu0 0.0
    %4544 = vmatprep.subr.mxu0 0.0
    %4545 = vmatpush1.msra.mxu0 0.0
    %4546 = vmatprep.subr.mxu0 0.0
    %4547 = vmatpush1.msra.mxu0 0.0
    %4548 = vmatprep.subr.mxu0 0.0
    %4549 = vmatpush1.msra.mxu0 0.0
    %4550 = vmatprep.subr.mxu0 0.0
    %4551 = vmatpush1.msra.mxu0 0.0
    %4552 = vmatprep.subr.mxu0 0.0
    %4553 = vmatpush1.msra.mxu0 0.0
    %4554 = vmatprep.subr.mxu0 0.0
    %4555 = vmatpush1.msra.mxu0 0.0
    %4556 = vmatprep.mubr.f32.mxu0 0.0
    %4557 = vmatmul.mubr.f32.gmra.mrb[0].mxu0 %v4487
    %v4558 = vpop.f32.mrb[0].mxu0
    %v4559 = vadd.f32 0.0, %v4558
    %v4560 = vpop.f32.mrb[0].mxu0
    %4561 = vmatprep.mubr.f32.mxu0 0.0
    %4562 = vmatmul.mubr.f32.gmra.mrb[0].mxu0 %v4490
    %v4563 = vpop.f32.mrb[0].mxu0
    %v4564 = vadd.f32 0.0, %v4563
    %v4565 = vpop.f32.mrb[0].mxu0
    %4566 = vdwg.mxu0
    %v4567 = vlaneseq
    %v4568 = vshrl.u32 %v4567, 7
    %v4569 = vsub.s32 0, %v4568
    %v4570 = vrot.slane %v4398, %v4569
    %v4571 = vadd.f32 %v4570, %v4559
    %v4572 = vadd.f32 %v4570, %v4564
    %v4573 = vld [vmem:[#allocation2 + $0x2f0] sm:$0xff]
    %v4574 = vld [vmem:[#allocation2 + $0x2f8] sm:$0xff]
    %v4576 = vsel %vm525, %v4573, 0
    %v4579 = vsel %vm525, %v4574, 0
    %4581 = vmatprep.subr.mxu0 0.0
    %4582 = vmatpush1.msra.mxu0 %v4396
    %4583 = vmatprep.subr.mxu0 0.0
    %4584 = vmatpush1.msra.mxu0 %v4397
    %4585 = vmatprep.subr.mxu0 0.0
    %4586 = vmatpush1.msra.mxu0 0.0
    %4587 = vmatprep.subr.mxu0 0.0
    %4588 = vmatpush1.msra.mxu0 0.0
    %4589 = vmatprep.subr.mxu0 0.0
    %4590 = vmatpush1.msra.mxu0 0.0
    %4591 = vmatprep.subr.mxu0 0.0
    %4592 = vmatpush1.msra.mxu0 0.0
    %4593 = vmatprep.subr.mxu0 0.0
    %4594 = vmatpush1.msra.mxu0 0.0
    %4595 = vmatprep.subr.mxu0 0.0
    %4596 = vmatpush1.msra.mxu0 0.0
    %4597 = vmatprep.subr.mxu0 0.0
    %4598 = vmatpush1.msra.mxu0 0.0
    %4599 = vmatprep.subr.mxu0 0.0
    %4600 = vmatpush1.msra.mxu0 0.0
    %4601 = vmatprep.subr.mxu0 0.0
    %4602 = vmatpush1.msra.mxu0 0.0
    %4603 = vmatprep.subr.mxu0 0.0
    %4604 = vmatpush1.msra.mxu0 0.0
    %4605 = vmatprep.subr.mxu0 0.0
    %4606 = vmatpush1.msra.mxu0 0.0
    %4607 = vmatprep.subr.mxu0 0.0
    %4608 = vmatpush1.msra.mxu0 0.0
    %4609 = vmatprep.subr.mxu0 0.0
    %4610 = vmatpush1.msra.mxu0 0.0
    %4611 = vmatprep.subr.mxu0 0.0
    %4612 = vmatpush1.msra.mxu0 0.0
    %4613 = vmatprep.subr.mxu0 0.0
    %4614 = vmatpush1.msra.mxu0 0.0
    %4615 = vmatprep.subr.mxu0 0.0
    %4616 = vmatpush1.msra.mxu0 0.0
    %4617 = vmatprep.subr.mxu0 0.0
    %4618 = vmatpush1.msra.mxu0 0.0
    %4619 = vmatprep.subr.mxu0 0.0
    %4620 = vmatpush1.msra.mxu0 0.0
    %4621 = vmatprep.subr.mxu0 0.0
    %4622 = vmatpush1.msra.mxu0 0.0
    %4623 = vmatprep.subr.mxu0 0.0
    %4624 = vmatpush1.msra.mxu0 0.0
    %4625 = vmatprep.subr.mxu0 0.0
    %4626 = vmatpush1.msra.mxu0 0.0
    %4627 = vmatprep.subr.mxu0 0.0
    %4628 = vmatpush1.msra.mxu0 0.0
    %4629 = vmatprep.subr.mxu0 0.0
    %4630 = vmatpush1.msra.mxu0 0.0
    %4631 = vmatprep.subr.mxu0 0.0
    %4632 = vmatpush1.msra.mxu0 0.0
    %4633 = vmatprep.subr.mxu0 0.0
    %4634 = vmatpush1.msra.mxu0 0.0
    %4635 = vmatprep.subr.mxu0 0.0
    %4636 = vmatpush1.msra.mxu0 0.0
    %4637 = vmatprep.subr.mxu0 0.0
    %4638 = vmatpush1.msra.mxu0 0.0
    %4639 = vmatprep.subr.mxu0 0.0
    %4640 = vmatpush1.msra.mxu0 0.0
    %4641 = vmatprep.subr.mxu0 0.0
    %4642 = vmatpush1.msra.mxu0 0.0
    %4643 = vmatprep.subr.mxu0 0.0
    %4644 = vmatpush1.msra.mxu0 0.0
    %4645 = vmatprep.mubr.f32.mxu0 0.0
    %4646 = vmatmul.mubr.f32.gmra.mrb[0].mxu0 %v4576
    %v4647 = vpop.f32.mrb[0].mxu0
    %v4648 = vadd.f32 0.0, %v4647
    %v4649 = vpop.f32.mrb[0].mxu0
    %4650 = vmatprep.mubr.f32.mxu0 0.0
    %4651 = vmatmul.mubr.f32.gmra.mrb[0].mxu0 %v4579
    %v4652 = vpop.f32.mrb[0].mxu0
    %v4653 = vadd.f32 0.0, %v4652
    %v4654 = vpop.f32.mrb[0].mxu0
    %4655 = vdwg.mxu0
    %v4656 = vld [vmem:[#allocation2 + $0x300] sm:$0xff]
    %v4657 = vld [vmem:[#allocation2 + $0x308] sm:$0xff]
    %v4658 = vld [vmem:[#allocation2 + $0x310] sm:$0xff]
    %v4659 = vld [vmem:[#allocation2 + $0x318] sm:$0xff]
    %v4661 = vsel %vm202, %v4648, 0
    %v4664 = vsel %vm202, %v4653, 0
    %4666 = vmatprep.subr.mxu0 0.0
    %4667 = vmatpush1.msra.mxu0 %v4656
    %4668 = vmatprep.subr.mxu0 0.0
    %4669 = vmatpush1.msra.mxu0 %v4657
    %4670 = vmatprep.subr.mxu0 0.0
    %4671 = vmatpush1.msra.mxu0 %v4658
    %4672 = vmatprep.subr.mxu0 0.0
    %4673 = vmatpush1.msra.mxu0 %v4659
    %4674 = vmatprep.subr.mxu0 0.0
    %4675 = vmatpush1.msra.mxu0 0.0
    %4676 = vmatprep.subr.mxu0 0.0
    %4677 = vmatpush1.msra.mxu0 0.0
    %4678 = vmatprep.subr.mxu0 0.0
    %4679 = vmatpush1.msra.mxu0 0.0
    %4680 = vmatprep.subr.mxu0 0.0
    %4681 = vmatpush1.msra.mxu0 0.0
    %4682 = vmatprep.subr.mxu0 0.0
    %4683 = vmatpush1.msra.mxu0 0.0
    %4684 = vmatprep.subr.mxu0 0.0
    %4685 = vmatpush1.msra.mxu0 0.0
    %4686 = vmatprep.subr.mxu0 0.0
    %4687 = vmatpush1.msra.mxu0 0.0
    %4688 = vmatprep.subr.mxu0 0.0
    %4689 = vmatpush1.msra.mxu0 0.0
    %4690 = vmatprep.subr.mxu0 0.0
    %4691 = vmatpush1.msra.mxu0 0.0
    %4692 = vmatprep.subr.mxu0 0.0
    %4693 = vmatpush1.msra.mxu0 0.0
    %4694 = vmatprep.subr.mxu0 0.0
    %4695 = vmatpush1.msra.mxu0 0.0
    %4696 = vmatprep.subr.mxu0 0.0
    %4697 = vmatpush1.msra.mxu0 0.0
    %4698 = vmatprep.subr.mxu0 0.0
    %4699 = vmatpush1.msra.mxu0 0.0
    %4700 = vmatprep.subr.mxu0 0.0
    %4701 = vmatpush1.msra.mxu0 0.0
    %4702 = vmatprep.subr.mxu0 0.0
    %4703 = vmatpush1.msra.mxu0 0.0
    %4704 = vmatprep.subr.mxu0 0.0
    %4705 = vmatpush1.msra.mxu0 0.0
    %4706 = vmatprep.subr.mxu0 0.0
    %4707 = vmatpush1.msra.mxu0 0.0
    %4708 = vmatprep.subr.mxu0 0.0
    %4709 = vmatpush1.msra.mxu0 0.0
    %4710 = vmatprep.subr.mxu0 0.0
    %4711 = vmatpush1.msra.mxu0 0.0
    %4712 = vmatprep.subr.mxu0 0.0
    %4713 = vmatpush1.msra.mxu0 0.0
    %4714 = vmatprep.subr.mxu0 0.0
    %4715 = vmatpush1.msra.mxu0 0.0
    %4716 = vmatprep.subr.mxu0 0.0
    %4717 = vmatpush1.msra.mxu0 0.0
    %4718 = vmatprep.subr.mxu0 0.0
    %4719 = vmatpush1.msra.mxu0 0.0
    %4720 = vmatprep.subr.mxu0 0.0
    %4721 = vmatpush1.msra.mxu0 0.0
    %4722 = vmatprep.subr.mxu0 0.0
    %4723 = vmatpush1.msra.mxu0 0.0
    %4724 = vmatprep.subr.mxu0 0.0
    %4725 = vmatpush1.msra.mxu0 0.0
    %4726 = vmatprep.subr.mxu0 0.0
    %4727 = vmatpush1.msra.mxu0 0.0
    %4728 = vmatprep.subr.mxu0 0.0
    %4729 = vmatpush1.msra.mxu0 0.0
    %4730 = vmatprep.mubr.f32.mxu0 0.0
    %4731 = vmatmul.mubr.f32.gmra.mrb[0].mxu0 %v4661
    %v4732 = vpop.f32.mrb[0].mxu0
    %v4733 = vadd.f32 0.0, %v4732
    %v4734 = vpop.f32.mrb[0].mxu0
    %4735 = vmatprep.mubr.f32.mxu0 0.0
    %4736 = vmatmul.mubr.f32.gmra.mrb[0].mxu0 %v4664
    %v4737 = vpop.f32.mrb[0].mxu0
    %v4738 = vadd.f32 0.0, %v4737
    %v4739 = vpop.f32.mrb[0].mxu0
    %4740 = vdwg.mxu0
    %v4741 = vadd.f32 %v4571, %v4733
    %v4742 = vadd.f32 %v4572, %v4738
    %v4743 = vld [vmem:[#allocation2 + $0x320] sm:$0xff]
    %v4744 = vld [vmem:[#allocation2 + $0x328] sm:$0xff]
    %v4746 = vsel %vm525, %v4743, 0
    %v4749 = vsel %vm525, %v4744, 0
    %4751 = vmatprep.subr.mxu0 0.0
    %4752 = vmatpush1.msra.mxu0 %v4396
    %4753 = vmatprep.subr.mxu0 0.0
    %4754 = vmatpush1.msra.mxu0 %v4397
    %4755 = vmatprep.subr.mxu0 0.0
    %4756 = vmatpush1.msra.mxu0 0.0
    %4757 = vmatprep.subr.mxu0 0.0
    %4758 = vmatpush1.msra.mxu0 0.0
    %4759 = vmatprep.subr.mxu0 0.0
    %4760 = vmatpush1.msra.mxu0 0.0
    %4761 = vmatprep.subr.mxu0 0.0
    %4762 = vmatpush1.msra.mxu0 0.0
    %4763 = vmatprep.subr.mxu0 0.0
    %4764 = vmatpush1.msra.mxu0 0.0
    %4765 = vmatprep.subr.mxu0 0.0
    %4766 = vmatpush1.msra.mxu0 0.0
    %4767 = vmatprep.subr.mxu0 0.0
    %4768 = vmatpush1.msra.mxu0 0.0
    %4769 = vmatprep.subr.mxu0 0.0
    %4770 = vmatpush1.msra.mxu0 0.0
    %4771 = vmatprep.subr.mxu0 0.0
    %4772 = vmatpush1.msra.mxu0 0.0
    %4773 = vmatprep.subr.mxu0 0.0
    %4774 = vmatpush1.msra.mxu0 0.0
    %4775 = vmatprep.subr.mxu0 0.0
    %4776 = vmatpush1.msra.mxu0 0.0
    %4777 = vmatprep.subr.mxu0 0.0
    %4778 = vmatpush1.msra.mxu0 0.0
    %4779 = vmatprep.subr.mxu0 0.0
    %4780 = vmatpush1.msra.mxu0 0.0
    %4781 = vmatprep.subr.mxu0 0.0
    %4782 = vmatpush1.msra.mxu0 0.0
    %4783 = vmatprep.subr.mxu0 0.0
    %4784 = vmatpush1.msra.mxu0 0.0
    %4785 = vmatprep.subr.mxu0 0.0
    %4786 = vmatpush1.msra.mxu0 0.0
    %4787 = vmatprep.subr.mxu0 0.0
    %4788 = vmatpush1.msra.mxu0 0.0
    %4789 = vmatprep.subr.mxu0 0.0
    %4790 = vmatpush1.msra.mxu0 0.0
    %4791 = vmatprep.subr.mxu0 0.0
    %4792 = vmatpush1.msra.mxu0 0.0
    %4793 = vmatprep.subr.mxu0 0.0
    %4794 = vmatpush1.msra.mxu0 0.0
    %4795 = vmatprep.subr.mxu0 0.0
    %4796 = vmatpush1.msra.mxu0 0.0
    %4797 = vmatprep.subr.mxu0 0.0
    %4798 = vmatpush1.msra.mxu0 0.0
    %4799 = vmatprep.subr.mxu0 0.0
    %4800 = vmatpush1.msra.mxu0 0.0
    %4801 = vmatprep.subr.mxu0 0.0
    %4802 = vmatpush1.msra.mxu0 0.0
    %4803 = vmatprep.subr.mxu0 0.0
    %4804 = vmatpush1.msra.mxu0 0.0
    %4805 = vmatprep.subr.mxu0 0.0
    %4806 = vmatpush1.msra.mxu0 0.0
    %4807 = vmatprep.subr.mxu0 0.0
    %4808 = vmatpush1.msra.mxu0 0.0
    %4809 = vmatprep.subr.mxu0 0.0
    %4810 = vmatpush1.msra.mxu0 0.0
    %4811 = vmatprep.subr.mxu0 0.0
    %4812 = vmatpush1.msra.mxu0 0.0
    %4813 = vmatprep.subr.mxu0 0.0
    %4814 = vmatpush1.msra.mxu0 0.0
    %4815 = vmatprep.mubr.f32.mxu0 0.0
    %4816 = vmatmul.mubr.f32.gmra.mrb[0].mxu0 %v4746
    %v4817 = vpop.f32.mrb[0].mxu0
    %v4818 = vadd.f32 0.0, %v4817
    %v4819 = vpop.f32.mrb[0].mxu0
    %4820 = vmatprep.mubr.f32.mxu0 0.0
    %4821 = vmatmul.mubr.f32.gmra.mrb[0].mxu0 %v4749
    %v4822 = vpop.f32.mrb[0].mxu0
    %v4823 = vadd.f32 0.0, %v4822
    %v4824 = vpop.f32.mrb[0].mxu0
    %4825 = vdwg.mxu0
    %v4826 = vld [vmem:[#allocation2 + $0x330] sm:$0xff]
    %v4827 = vld [vmem:[#allocation2 + $0x338] sm:$0xff]
    %v4828 = vld [vmem:[#allocation2 + $0x340] sm:$0xff]
    %v4829 = vld [vmem:[#allocation2 + $0x348] sm:$0xff]
    %v4831 = vsel %vm202, %v4818, 0
    %v4834 = vsel %vm202, %v4823, 0
    %4836 = vmatprep.subr.mxu0 0.0
    %4837 = vmatpush1.msra.mxu0 %v4826
    %4838 = vmatprep.subr.mxu0 0.0
    %4839 = vmatpush1.msra.mxu0 %v4827
    %4840 = vmatprep.subr.mxu0 0.0
    %4841 = vmatpush1.msra.mxu0 %v4828
    %4842 = vmatprep.subr.mxu0 0.0
    %4843 = vmatpush1.msra.mxu0 %v4829
    %4844 = vmatprep.subr.mxu0 0.0
    %4845 = vmatpush1.msra.mxu0 0.0
    %4846 = vmatprep.subr.mxu0 0.0
    %4847 = vmatpush1.msra.mxu0 0.0
    %4848 = vmatprep.subr.mxu0 0.0
    %4849 = vmatpush1.msra.mxu0 0.0
    %4850 = vmatprep.subr.mxu0 0.0
    %4851 = vmatpush1.msra.mxu0 0.0
    %4852 = vmatprep.subr.mxu0 0.0
    %4853 = vmatpush1.msra.mxu0 0.0
    %4854 = vmatprep.subr.mxu0 0.0
    %4855 = vmatpush1.msra.mxu0 0.0
    %4856 = vmatprep.subr.mxu0 0.0
    %4857 = vmatpush1.msra.mxu0 0.0
    %4858 = vmatprep.subr.mxu0 0.0
    %4859 = vmatpush1.msra.mxu0 0.0
    %4860 = vmatprep.subr.mxu0 0.0
    %4861 = vmatpush1.msra.mxu0 0.0
    %4862 = vmatprep.subr.mxu0 0.0
    %4863 = vmatpush1.msra.mxu0 0.0
    %4864 = vmatprep.subr.mxu0 0.0
    %4865 = vmatpush1.msra.mxu0 0.0
    %4866 = vmatprep.subr.mxu0 0.0
    %4867 = vmatpush1.msra.mxu0 0.0
    %4868 = vmatprep.subr.mxu0 0.0
    %4869 = vmatpush1.msra.mxu0 0.0
    %4870 = vmatprep.subr.mxu0 0.0
    %4871 = vmatpush1.msra.mxu0 0.0
    %4872 = vmatprep.subr.mxu0 0.0
    %4873 = vmatpush1.msra.mxu0 0.0
    %4874 = vmatprep.subr.mxu0 0.0
    %4875 = vmatpush1.msra.mxu0 0.0
    %4876 = vmatprep.subr.mxu0 0.0
    %4877 = vmatpush1.msra.mxu0 0.0
    %4878 = vmatprep.subr.mxu0 0.0
    %4879 = vmatpush1.msra.mxu0 0.0
    %4880 = vmatprep.subr.mxu0 0.0
    %4881 = vmatpush1.msra.mxu0 0.0
    %4882 = vmatprep.subr.mxu0 0.0
    %4883 = vmatpush1.msra.mxu0 0.0
    %4884 = vmatprep.subr.mxu0 0.0
    %4885 = vmatpush1.msra.mxu0 0.0
    %4886 = vmatprep.subr.mxu0 0.0
    %4887 = vmatpush1.msra.mxu0 0.0
    %4888 = vmatprep.subr.mxu0 0.0
    %4889 = vmatpush1.msra.mxu0 0.0
    %4890 = vmatprep.subr.mxu0 0.0
    %4891 = vmatpush1.msra.mxu0 0.0
    %4892 = vmatprep.subr.mxu0 0.0
    %4893 = vmatpush1.msra.mxu0 0.0
    %4894 = vmatprep.subr.mxu0 0.0
    %4895 = vmatpush1.msra.mxu0 0.0
    %4896 = vmatprep.subr.mxu0 0.0
    %4897 = vmatpush1.msra.mxu0 0.0
    %4898 = vmatprep.subr.mxu0 0.0
    %4899 = vmatpush1.msra.mxu0 0.0
    %4900 = vmatprep.mubr.f32.mxu0 0.0
    %4901 = vmatmul.mubr.f32.gmra.mrb[0].mxu0 %v4831
    %v4902 = vpop.f32.mrb[0].mxu0
    %v4903 = vadd.f32 0.0, %v4902
    %v4904 = vpop.f32.mrb[0].mxu0
    %4905 = vmatprep.mubr.f32.mxu0 0.0
    %4906 = vmatmul.mubr.f32.gmra.mrb[0].mxu0 %v4834
    %v4907 = vpop.f32.mrb[0].mxu0
    %v4908 = vadd.f32 0.0, %v4907
    %v4909 = vpop.f32.mrb[0].mxu0
    %4910 = vdwg.mxu0
    %v4911 = vadd.f32 %v4741, %v4903
    %v4912 = vadd.f32 %v4742, %v4908
    %v4913 = vmax.f32 %v4911, 0.0
    %v4914 = vmax.f32 %v4912, 0.0
    %v4915 = vld [vmem:[#allocation2 + $0x358] sm:$0xff]
    %v4917 = vsel %vm525, %v4915, 0
    %4919 = vmatprep.subr.mxu0 0.0
    %4920 = vmatpush1.msra.mxu0 %v4913
    %4921 = vmatprep.subr.mxu0 0.0
    %4922 = vmatpush1.msra.mxu0 %v4914
    %4923 = vmatprep.subr.mxu0 0.0
    %4924 = vmatpush1.msra.mxu0 0.0
    %4925 = vmatprep.subr.mxu0 0.0
    %4926 = vmatpush1.msra.mxu0 0.0
    %4927 = vmatprep.subr.mxu0 0.0
    %4928 = vmatpush1.msra.mxu0 0.0
    %4929 = vmatprep.subr.mxu0 0.0
    %4930 = vmatpush1.msra.mxu0 0.0
    %4931 = vmatprep.subr.mxu0 0.0
    %4932 = vmatpush1.msra.mxu0 0.0
    %4933 = vmatprep.subr.mxu0 0.0
    %4934 = vmatpush1.msra.mxu0 0.0
    %4935 = vmatprep.subr.mxu0 0.0
    %4936 = vmatpush1.msra.mxu0 0.0
    %4937 = vmatprep.subr.mxu0 0.0
    %4938 = vmatpush1.msra.mxu0 0.0
    %4939 = vmatprep.subr.mxu0 0.0
    %4940 = vmatpush1.msra.mxu0 0.0
    %4941 = vmatprep.subr.mxu0 0.0
    %4942 = vmatpush1.msra.mxu0 0.0
    %4943 = vmatprep.subr.mxu0 0.0
    %4944 = vmatpush1.msra.mxu0 0.0
    %4945 = vmatprep.subr.mxu0 0.0
    %4946 = vmatpush1.msra.mxu0 0.0
    %4947 = vmatprep.subr.mxu0 0.0
    %4948 = vmatpush1.msra.mxu0 0.0
    %4949 = vmatprep.subr.mxu0 0.0
    %4950 = vmatpush1.msra.mxu0 0.0
    %4951 = vmatprep.subr.mxu0 0.0
    %4952 = vmatpush1.msra.mxu0 0.0
    %4953 = vmatprep.subr.mxu0 0.0
    %4954 = vmatpush1.msra.mxu0 0.0
    %4955 = vmatprep.subr.mxu0 0.0
    %4956 = vmatpush1.msra.mxu0 0.0
    %4957 = vmatprep.subr.mxu0 0.0
    %4958 = vmatpush1.msra.mxu0 0.0
    %4959 = vmatprep.subr.mxu0 0.0
    %4960 = vmatpush1.msra.mxu0 0.0
    %4961 = vmatprep.subr.mxu0 0.0
    %4962 = vmatpush1.msra.mxu0 0.0
    %4963 = vmatprep.subr.mxu0 0.0
    %4964 = vmatpush1.msra.mxu0 0.0
    %4965 = vmatprep.subr.mxu0 0.0
    %4966 = vmatpush1.msra.mxu0 0.0
    %4967 = vmatprep.subr.mxu0 0.0
    %4968 = vmatpush1.msra.mxu0 0.0
    %4969 = vmatprep.subr.mxu0 0.0
    %4970 = vmatpush1.msra.mxu0 0.0
    %4971 = vmatprep.subr.mxu0 0.0
    %4972 = vmatpush1.msra.mxu0 0.0
    %4973 = vmatprep.subr.mxu0 0.0
    %4974 = vmatpush1.msra.mxu0 0.0
    %4975 = vmatprep.subr.mxu0 0.0
    %4976 = vmatpush1.msra.mxu0 0.0
    %4977 = vmatprep.subr.mxu0 0.0
    %4978 = vmatpush1.msra.mxu0 0.0
    %4979 = vmatprep.subr.mxu0 0.0
    %4980 = vmatpush1.msra.mxu0 0.0
    %4981 = vmatprep.subr.mxu0 0.0
    %4982 = vmatpush1.msra.mxu0 0.0
    %4983 = vmatprep.mubr.f32.mxu0 0.0
    %4984 = vmatmul.mubr.f32.gmra.mrb[0].mxu0 %v4917
    %v4985 = vpop.f32.mrb[0].mxu0
    %v4986 = vadd.f32 0.0, %v4985
    %v4987 = vpop.f32.mrb[0].mxu0
    %4988 = vdwg.mxu0
    %v4989 = vld [vmem:[#allocation2 + $0x3e0] sm:$0xff]
    %v4991 = vsel %vm525, %v4989, 0
    %4993 = vmatprep.subr.mxu0 0.0
    %4994 = vmatpush1.msra.mxu0 %v4913
    %4995 = vmatprep.subr.mxu0 0.0
    %4996 = vmatpush1.msra.mxu0 %v4914
    %4997 = vmatprep.subr.mxu0 0.0
    %4998 = vmatpush1.msra.mxu0 0.0
    %4999 = vmatprep.subr.mxu0 0.0
    %5000 = vmatpush1.msra.mxu0 0.0
    %5001 = vmatprep.subr.mxu0 0.0
    %5002 = vmatpush1.msra.mxu0 0.0
    %5003 = vmatprep.subr.mxu0 0.0
    %5004 = vmatpush1.msra.mxu0 0.0
    %5005 = vmatprep.subr.mxu0 0.0
    %5006 = vmatpush1.msra.mxu0 0.0
    %5007 = vmatprep.subr.mxu0 0.0
    %5008 = vmatpush1.msra.mxu0 0.0
    %5009 = vmatprep.subr.mxu0 0.0
    %5010 = vmatpush1.msra.mxu0 0.0
    %5011 = vmatprep.subr.mxu0 0.0
    %5012 = vmatpush1.msra.mxu0 0.0
    %5013 = vmatprep.subr.mxu0 0.0
    %5014 = vmatpush1.msra.mxu0 0.0
    %5015 = vmatprep.subr.mxu0 0.0
    %5016 = vmatpush1.msra.mxu0 0.0
    %5017 = vmatprep.subr.mxu0 0.0
    %5018 = vmatpush1.msra.mxu0 0.0
    %5019 = vmatprep.subr.mxu0 0.0
    %5020 = vmatpush1.msra.mxu0 0.0
    %5021 = vmatprep.subr.mxu0 0.0
    %5022 = vmatpush1.msra.mxu0 0.0
    %5023 = vmatprep.subr.mxu0 0.0
    %5024 = vmatpush1.msra.mxu0 0.0
    %5025 = vmatprep.subr.mxu0 0.0
    %5026 = vmatpush1.msra.mxu0 0.0
    %5027 = vmatprep.subr.mxu0 0.0
    %5028 = vmatpush1.msra.mxu0 0.0
    %5029 = vmatprep.subr.mxu0 0.0
    %5030 = vmatpush1.msra.mxu0 0.0
    %5031 = vmatprep.subr.mxu0 0.0
    %5032 = vmatpush1.msra.mxu0 0.0
    %5033 = vmatprep.subr.mxu0 0.0
    %5034 = vmatpush1.msra.mxu0 0.0
    %5035 = vmatprep.subr.mxu0 0.0
    %5036 = vmatpush1.msra.mxu0 0.0
    %5037 = vmatprep.subr.mxu0 0.0
    %5038 = vmatpush1.msra.mxu0 0.0
    %5039 = vmatprep.subr.mxu0 0.0
    %5040 = vmatpush1.msra.mxu0 0.0
    %5041 = vmatprep.subr.mxu0 0.0
    %5042 = vmatpush1.msra.mxu0 0.0
    %5043 = vmatprep.subr.mxu0 0.0
    %5044 = vmatpush1.msra.mxu0 0.0
    %5045 = vmatprep.subr.mxu0 0.0
    %5046 = vmatpush1.msra.mxu0 0.0
    %5047 = vmatprep.subr.mxu0 0.0
    %5048 = vmatpush1.msra.mxu0 0.0
    %5049 = vmatprep.subr.mxu0 0.0
    %5050 = vmatpush1.msra.mxu0 0.0
    %5051 = vmatprep.subr.mxu0 0.0
    %5052 = vmatpush1.msra.mxu0 0.0
    %5053 = vmatprep.subr.mxu0 0.0
    %5054 = vmatpush1.msra.mxu0 0.0
    %5055 = vmatprep.subr.mxu0 0.0
    %5056 = vmatpush1.msra.mxu0 0.0
    %5057 = vmatprep.mubr.f32.mxu0 0.0
    %5058 = vmatmul.mubr.f32.gmra.mrb[0].mxu0 %v4991
    %v5059 = vpop.f32.mrb[0].mxu0
    %v5060 = vadd.f32 0.0, %v5059
    %v5061 = vpop.f32.mrb[0].mxu0
    %5062 = vdwg.mxu0
    %v5063 = vmax.f32 %v4986, %v5060
    %v5064 = vld [vmem:[#allocation2 + $0x360] sm:$0xff]
    %v5065 = vld [vmem:[#allocation2 + $0x368] sm:$0xff]
    %v5066 = vld [vmem:[#allocation2 + $0x370] sm:$0xff]
    %v5067 = vld [vmem:[#allocation2 + $0x378] sm:$0xff]
    %v5068 = vld [vmem:[#allocation2 + $0x380] sm:$0xff]
    %v5069 = vld [vmem:[#allocation2 + $0x388] sm:$0xff]
    %v5070 = vld [vmem:[#allocation2 + $0x390] sm:$0xff]
    %v5071 = vld [vmem:[#allocation2 + $0x398] sm:$0xff]
    %v5072 = vld [vmem:[#allocation2 + $0x3a0] sm:$0xff]
    %v5073 = vld [vmem:[#allocation2 + $0x3a8] sm:$0xff]
    %v5074 = vld [vmem:[#allocation2 + $0x3b0] sm:$0xff]
    %v5075 = vld [vmem:[#allocation2 + $0x3b8] sm:$0xff]
    %v5076 = vld [vmem:[#allocation2 + $0x3c0] sm:$0xff]
    %v5077 = vld [vmem:[#allocation2 + $0x3c8] sm:$0xff]
    %v5078 = vld [vmem:[#allocation2 + $0x3d0] sm:$0xff]
    %v5079 = vld [vmem:[#allocation2 + $0x3d8] sm:$0xff]
    %5080 = vmatprep.subr.mxu0 0.0
    %5081 = vmatpush1.msra.mxu0 %v5064
    %5082 = vmatprep.subr.mxu0 0.0
    %5083 = vmatpush1.msra.mxu0 %v5065
    %5084 = vmatprep.subr.mxu0 0.0
    %5085 = vmatpush1.msra.mxu0 %v5066
    %5086 = vmatprep.subr.mxu0 0.0
    %5087 = vmatpush1.msra.mxu0 %v5067
    %5088 = vmatprep.subr.mxu0 0.0
    %5089 = vmatpush1.msra.mxu0 %v5068
    %5090 = vmatprep.subr.mxu0 0.0
    %5091 = vmatpush1.msra.mxu0 %v5069
    %5092 = vmatprep.subr.mxu0 0.0
    %5093 = vmatpush1.msra.mxu0 %v5070
    %5094 = vmatprep.subr.mxu0 0.0
    %5095 = vmatpush1.msra.mxu0 %v5071
    %5096 = vmatprep.subr.mxu0 0.0
    %5097 = vmatpush1.msra.mxu0 %v5072
    %5098 = vmatprep.subr.mxu0 0.0
    %5099 = vmatpush1.msra.mxu0 %v5073
    %5100 = vmatprep.subr.mxu0 0.0
    %5101 = vmatpush1.msra.mxu0 %v5074
    %5102 = vmatprep.subr.mxu0 0.0
    %5103 = vmatpush1.msra.mxu0 %v5075
    %5104 = vmatprep.subr.mxu0 0.0
    %5105 = vmatpush1.msra.mxu0 %v5076
    %5106 = vmatprep.subr.mxu0 0.0
    %5107 = vmatpush1.msra.mxu0 %v5077
    %5108 = vmatprep.subr.mxu0 0.0
    %5109 = vmatpush1.msra.mxu0 %v5078
    %5110 = vmatprep.subr.mxu0 0.0
    %5111 = vmatpush1.msra.mxu0 %v5079
    %5112 = vmatprep.subr.mxu0 0.0
    %5113 = vmatpush1.msra.mxu0 0.0
    %5114 = vmatprep.subr.mxu0 0.0
    %5115 = vmatpush1.msra.mxu0 0.0
    %5116 = vmatprep.subr.mxu0 0.0
    %5117 = vmatpush1.msra.mxu0 0.0
    %5118 = vmatprep.subr.mxu0 0.0
    %5119 = vmatpush1.msra.mxu0 0.0
    %5120 = vmatprep.subr.mxu0 0.0
    %5121 = vmatpush1.msra.mxu0 0.0
    %5122 = vmatprep.subr.mxu0 0.0
    %5123 = vmatpush1.msra.mxu0 0.0
    %5124 = vmatprep.subr.mxu0 0.0
    %5125 = vmatpush1.msra.mxu0 0.0
    %5126 = vmatprep.subr.mxu0 0.0
    %5127 = vmatpush1.msra.mxu0 0.0
    %5128 = vmatprep.subr.mxu0 0.0
    %5129 = vmatpush1.msra.mxu0 0.0
    %5130 = vmatprep.subr.mxu0 0.0
    %5131 = vmatpush1.msra.mxu0 0.0
    %5132 = vmatprep.subr.mxu0 0.0
    %5133 = vmatpush1.msra.mxu0 0.0
    %5134 = vmatprep.subr.mxu0 0.0
    %5135 = vmatpush1.msra.mxu0 0.0
    %5136 = vmatprep.subr.mxu0 0.0
    %5137 = vmatpush1.msra.mxu0 0.0
    %5138 = vmatprep.subr.mxu0 0.0
    %5139 = vmatpush1.msra.mxu0 0.0
    %5140 = vmatprep.subr.mxu0 0.0
    %5141 = vmatpush1.msra.mxu0 0.0
    %5142 = vmatprep.subr.mxu0 0.0
    %5143 = vmatpush1.msra.mxu0 0.0
    %5144 = vmatprep.mubr.f32.mxu0 0.0
    %5145 = vmatmul.mubr.f32.gmra.mrb[0].mxu0 %v5063
    %v5146 = vpop.f32.mrb[0].mxu0
    %v5147 = vadd.f32 0.0, %v5146
    %v5148 = vpop.f32.mrb[0].mxu0
    %5149 = vdwg.mxu0
    %v5150 = vld [vmem:[#allocation2 + $0x3e8] sm:$0xff]
    %v5151 = vld [vmem:[#allocation2 + $0x3f0] sm:$0xff]
    %v5152 = vld [vmem:[#allocation2 + $0x3f8] sm:$0xff]
    %v5153 = vld [vmem:[#allocation2 + $0x400] sm:$0xff]
    %v5154 = vld [vmem:[#allocation2 + $0x408] sm:$0xff]
    %v5155 = vld [vmem:[#allocation2 + $0x410] sm:$0xff]
    %v5156 = vld [vmem:[#allocation2 + $0x418] sm:$0xff]
    %v5157 = vld [vmem:[#allocation2 + $0x420] sm:$0xff]
    %v5158 = vld [vmem:[#allocation2 + $0x428] sm:$0xff]
    %v5159 = vld [vmem:[#allocation2 + $0x430] sm:$0xff]
    %v5160 = vld [vmem:[#allocation2 + $0x438] sm:$0xff]
    %v5161 = vld [vmem:[#allocation2 + $0x440] sm:$0xff]
    %v5162 = vld [vmem:[#allocation2 + $0x448] sm:$0xff]
    %v5163 = vld [vmem:[#allocation2 + $0x450] sm:$0xff]
    %v5164 = vld [vmem:[#allocation2 + $0x458] sm:$0xff]
    %v5165 = vld [vmem:[#allocation2 + $0x460] sm:$0xff]
    %5166 = vmatprep.subr.mxu0 0.0
    %5167 = vmatpush1.msra.mxu0 %v5150
    %5168 = vmatprep.subr.mxu0 0.0
    %5169 = vmatpush1.msra.mxu0 %v5151
    %5170 = vmatprep.subr.mxu0 0.0
    %5171 = vmatpush1.msra.mxu0 %v5152
    %5172 = vmatprep.subr.mxu0 0.0
    %5173 = vmatpush1.msra.mxu0 %v5153
    %5174 = vmatprep.subr.mxu0 0.0
    %5175 = vmatpush1.msra.mxu0 %v5154
    %5176 = vmatprep.subr.mxu0 0.0
    %5177 = vmatpush1.msra.mxu0 %v5155
    %5178 = vmatprep.subr.mxu0 0.0
    %5179 = vmatpush1.msra.mxu0 %v5156
    %5180 = vmatprep.subr.mxu0 0.0
    %5181 = vmatpush1.msra.mxu0 %v5157
    %5182 = vmatprep.subr.mxu0 0.0
    %5183 = vmatpush1.msra.mxu0 %v5158
    %5184 = vmatprep.subr.mxu0 0.0
    %5185 = vmatpush1.msra.mxu0 %v5159
    %5186 = vmatprep.subr.mxu0 0.0
    %5187 = vmatpush1.msra.mxu0 %v5160
    %5188 = vmatprep.subr.mxu0 0.0
    %5189 = vmatpush1.msra.mxu0 %v5161
    %5190 = vmatprep.subr.mxu0 0.0
    %5191 = vmatpush1.msra.mxu0 %v5162
    %5192 = vmatprep.subr.mxu0 0.0
    %5193 = vmatpush1.msra.mxu0 %v5163
    %5194 = vmatprep.subr.mxu0 0.0
    %5195 = vmatpush1.msra.mxu0 %v5164
    %5196 = vmatprep.subr.mxu0 0.0
    %5197 = vmatpush1.msra.mxu0 %v5165
    %5198 = vmatprep.subr.mxu0 0.0
    %5199 = vmatpush1.msra.mxu0 0.0
    %5200 = vmatprep.subr.mxu0 0.0
    %5201 = vmatpush1.msra.mxu0 0.0
    %5202 = vmatprep.subr.mxu0 0.0
    %5203 = vmatpush1.msra.mxu0 0.0
    %5204 = vmatprep.subr.mxu0 0.0
    %5205 = vmatpush1.msra.mxu0 0.0
    %5206 = vmatprep.subr.mxu0 0.0
    %5207 = vmatpush1.msra.mxu0 0.0
    %5208 = vmatprep.subr.mxu0 0.0
    %5209 = vmatpush1.msra.mxu0 0.0
    %5210 = vmatprep.subr.mxu0 0.0
    %5211 = vmatpush1.msra.mxu0 0.0
    %5212 = vmatprep.subr.mxu0 0.0
    %5213 = vmatpush1.msra.mxu0 0.0
    %5214 = vmatprep.subr.mxu0 0.0
    %5215 = vmatpush1.msra.mxu0 0.0
    %5216 = vmatprep.subr.mxu0 0.0
    %5217 = vmatpush1.msra.mxu0 0.0
    %5218 = vmatprep.subr.mxu0 0.0
    %5219 = vmatpush1.msra.mxu0 0.0
    %5220 = vmatprep.subr.mxu0 0.0
    %5221 = vmatpush1.msra.mxu0 0.0
    %5222 = vmatprep.subr.mxu0 0.0
    %5223 = vmatpush1.msra.mxu0 0.0
    %5224 = vmatprep.subr.mxu0 0.0
    %5225 = vmatpush1.msra.mxu0 0.0
    %5226 = vmatprep.subr.mxu0 0.0
    %5227 = vmatpush1.msra.mxu0 0.0
    %5228 = vmatprep.subr.mxu0 0.0
    %5229 = vmatpush1.msra.mxu0 0.0
    %5230 = vmatprep.mubr.f32.mxu0 0.0
    %5231 = vmatmul.mubr.f32.gmra.mrb[0].mxu0 %v5063
    %v5232 = vpop.f32.mrb[0].mxu0
    %v5233 = vadd.f32 0.0, %v5232
    %v5234 = vpop.f32.mrb[0].mxu0
    %5235 = vdwg.mxu0
    %v5236 = vmax.f32 %v5147, %v5233
    %v5237 = vld [vmem:[#allocation2 + $0x468] sm:$0x1]
    %v5238 = vlaneseq
    %v5239 = vshrl.u32 %v5238, 7
    %v5240 = vsub.s32 0, %v5239
    %v5241 = vrot.slane %v5237, %v5240
    %v5242 = vmul.f32 %v5236, %v5241
    %v5243 = vld [vmem:[#allocation2 + $0x470] sm:$0x1]
    %v5244 = vlaneseq
    %v5245 = vshrl.u32 %v5244, 7
    %v5246 = vsub.s32 0, %v5245
    %v5247 = vrot.slane %v5243, %v5246
    %v5248 = vadd.f32 %v5242, %v5247
    %v5249 = vld [vmem:[#allocation2 + $0x550] sm:$0x1]
    %v5250 = vld [vmem:[#allocation2 + $0x478] sm:$0xff]
    %v5252 = vsel %vm120, %v5250, 0
    %5254 = vmatprep.subr.mxu0 0.0
    %5255 = vmatpush1.msra.mxu0 %v5248
    %5256 = vmatprep.subr.mxu0 0.0
    %5257 = vmatpush1.msra.mxu0 0.0
    %5258 = vmatprep.subr.mxu0 0.0
    %5259 = vmatpush1.msra.mxu0 0.0
    %5260 = vmatprep.subr.mxu0 0.0
    %5261 = vmatpush1.msra.mxu0 0.0
    %5262 = vmatprep.subr.mxu0 0.0
    %5263 = vmatpush1.msra.mxu0 0.0
    %5264 = vmatprep.subr.mxu0 0.0
    %5265 = vmatpush1.msra.mxu0 0.0
    %5266 = vmatprep.subr.mxu0 0.0
    %5267 = vmatpush1.msra.mxu0 0.0
    %5268 = vmatprep.subr.mxu0 0.0
    %5269 = vmatpush1.msra.mxu0 0.0
    %5270 = vmatprep.subr.mxu0 0.0
    %5271 = vmatpush1.msra.mxu0 0.0
    %5272 = vmatprep.subr.mxu0 0.0
    %5273 = vmatpush1.msra.mxu0 0.0
    %5274 = vmatprep.subr.mxu0 0.0
    %5275 = vmatpush1.msra.mxu0 0.0
    %5276 = vmatprep.subr.mxu0 0.0
    %5277 = vmatpush1.msra.mxu0 0.0
    %5278 = vmatprep.subr.mxu0 0.0
    %5279 = vmatpush1.msra.mxu0 0.0
    %5280 = vmatprep.subr.mxu0 0.0
    %5281 = vmatpush1.msra.mxu0 0.0
    %5282 = vmatprep.subr.mxu0 0.0
    %5283 = vmatpush1.msra.mxu0 0.0
    %5284 = vmatprep.subr.mxu0 0.0
    %5285 = vmatpush1.msra.mxu0 0.0
    %5286 = vmatprep.subr.mxu0 0.0
    %5287 = vmatpush1.msra.mxu0 0.0
    %5288 = vmatprep.subr.mxu0 0.0
    %5289 = vmatpush1.msra.mxu0 0.0
    %5290 = vmatprep.subr.mxu0 0.0
    %5291 = vmatpush1.msra.mxu0 0.0
    %5292 = vmatprep.subr.mxu0 0.0
    %5293 = vmatpush1.msra.mxu0 0.0
    %5294 = vmatprep.subr.mxu0 0.0
    %5295 = vmatpush1.msra.mxu0 0.0
    %5296 = vmatprep.subr.mxu0 0.0
    %5297 = vmatpush1.msra.mxu0 0.0
    %5298 = vmatprep.subr.mxu0 0.0
    %5299 = vmatpush1.msra.mxu0 0.0
    %5300 = vmatprep.subr.mxu0 0.0
    %5301 = vmatpush1.msra.mxu0 0.0
    %5302 = vmatprep.subr.mxu0 0.0
    %5303 = vmatpush1.msra.mxu0 0.0
    %5304 = vmatprep.subr.mxu0 0.0
    %5305 = vmatpush1.msra.mxu0 0.0
    %5306 = vmatprep.subr.mxu0 0.0
    %5307 = vmatpush1.msra.mxu0 0.0
    %5308 = vmatprep.subr.mxu0 0.0
    %5309 = vmatpush1.msra.mxu0 0.0
    %5310 = vmatprep.subr.mxu0 0.0
    %5311 = vmatpush1.msra.mxu0 0.0
    %5312 = vmatprep.subr.mxu0 0.0
    %5313 = vmatpush1.msra.mxu0 0.0
    %5314 = vmatprep.subr.mxu0 0.0
    %5315 = vmatpush1.msra.mxu0 0.0
    %5316 = vmatprep.subr.mxu0 0.0
    %5317 = vmatpush1.msra.mxu0 0.0
    %5318 = vmatprep.mubr.f32.mxu0 0.0
    %5319 = vmatmul.mubr.f32.gmra.mrb[0].mxu0 %v5252
    %v5320 = vpop.f32.mrb[0].mxu0
    %v5321 = vadd.f32 0.0, %v5320
    %v5322 = vpop.f32.mrb[0].mxu0
    %5323 = vdwg.mxu0
    %v5324 = vld [vmem:[#allocation2 + $0x480] sm:$0xff]
    %v5325 = vld [vmem:[#allocation2 + $0x488] sm:$0xff]
    %v5326 = vld [vmem:[#allocation2 + $0x490] sm:$0xff]
    %v5327 = vld [vmem:[#allocation2 + $0x498] sm:$0xff]
    %v5328 = vld [vmem:[#allocation2 + $0x4a0] sm:$0xff]
    %v5329 = vld [vmem:[#allocation2 + $0x4a8] sm:$0xff]
    %v5330 = vld [vmem:[#allocation2 + $0x4b0] sm:$0xff]
    %v5331 = vld [vmem:[#allocation2 + $0x4b8] sm:$0xff]
    %v5333 = vsel %vm2247, %v5321, 0
    %5335 = vmatprep.subr.mxu0 0.0
    %5336 = vmatpush1.msra.mxu0 %v5324
    %5337 = vmatprep.subr.mxu0 0.0
    %5338 = vmatpush1.msra.mxu0 %v5325
    %5339 = vmatprep.subr.mxu0 0.0
    %5340 = vmatpush1.msra.mxu0 %v5326
    %5341 = vmatprep.subr.mxu0 0.0
    %5342 = vmatpush1.msra.mxu0 %v5327
    %5343 = vmatprep.subr.mxu0 0.0
    %5344 = vmatpush1.msra.mxu0 %v5328
    %5345 = vmatprep.subr.mxu0 0.0
    %5346 = vmatpush1.msra.mxu0 %v5329
    %5347 = vmatprep.subr.mxu0 0.0
    %5348 = vmatpush1.msra.mxu0 %v5330
    %5349 = vmatprep.subr.mxu0 0.0
    %5350 = vmatpush1.msra.mxu0 %v5331
    %5351 = vmatprep.subr.mxu0 0.0
    %5352 = vmatpush1.msra.mxu0 0.0
    %5353 = vmatprep.subr.mxu0 0.0
    %5354 = vmatpush1.msra.mxu0 0.0
    %5355 = vmatprep.subr.mxu0 0.0
    %5356 = vmatpush1.msra.mxu0 0.0
    %5357 = vmatprep.subr.mxu0 0.0
    %5358 = vmatpush1.msra.mxu0 0.0
    %5359 = vmatprep.subr.mxu0 0.0
    %5360 = vmatpush1.msra.mxu0 0.0
    %5361 = vmatprep.subr.mxu0 0.0
    %5362 = vmatpush1.msra.mxu0 0.0
    %5363 = vmatprep.subr.mxu0 0.0
    %5364 = vmatpush1.msra.mxu0 0.0
    %5365 = vmatprep.subr.mxu0 0.0
    %5366 = vmatpush1.msra.mxu0 0.0
    %5367 = vmatprep.subr.mxu0 0.0
    %5368 = vmatpush1.msra.mxu0 0.0
    %5369 = vmatprep.subr.mxu0 0.0
    %5370 = vmatpush1.msra.mxu0 0.0
    %5371 = vmatprep.subr.mxu0 0.0
    %5372 = vmatpush1.msra.mxu0 0.0
    %5373 = vmatprep.subr.mxu0 0.0
    %5374 = vmatpush1.msra.mxu0 0.0
    %5375 = vmatprep.subr.mxu0 0.0
    %5376 = vmatpush1.msra.mxu0 0.0
    %5377 = vmatprep.subr.mxu0 0.0
    %5378 = vmatpush1.msra.mxu0 0.0
    %5379 = vmatprep.subr.mxu0 0.0
    %5380 = vmatpush1.msra.mxu0 0.0
    %5381 = vmatprep.subr.mxu0 0.0
    %5382 = vmatpush1.msra.mxu0 0.0
    %5383 = vmatprep.subr.mxu0 0.0
    %5384 = vmatpush1.msra.mxu0 0.0
    %5385 = vmatprep.subr.mxu0 0.0
    %5386 = vmatpush1.msra.mxu0 0.0
    %5387 = vmatprep.subr.mxu0 0.0
    %5388 = vmatpush1.msra.mxu0 0.0
    %5389 = vmatprep.subr.mxu0 0.0
    %5390 = vmatpush1.msra.mxu0 0.0
    %5391 = vmatprep.subr.mxu0 0.0
    %5392 = vmatpush1.msra.mxu0 0.0
    %5393 = vmatprep.subr.mxu0 0.0
    %5394 = vmatpush1.msra.mxu0 0.0
    %5395 = vmatprep.subr.mxu0 0.0
    %5396 = vmatpush1.msra.mxu0 0.0
    %5397 = vmatprep.subr.mxu0 0.0
    %5398 = vmatpush1.msra.mxu0 0.0
    %5399 = vmatprep.mubr.f32.mxu0 0.0
    %5400 = vmatmul.mubr.f32.gmra.mrb[0].mxu0 %v5333
    %v5401 = vpop.f32.mrb[0].mxu0
    %v5402 = vadd.f32 0.0, %v5401
    %v5403 = vpop.f32.mrb[0].mxu0
    %5404 = vdwg.mxu0
    %v5405 = vlaneseq
    %v5406 = vshrl.u32 %v5405, 7
    %v5407 = vsub.s32 0, %v5406
    %v5408 = vrot.slane %v5249, %v5407
    %v5409 = vadd.f32 %v5408, %v5402
    %v5410 = vld [vmem:[#allocation2 + $0x4c0] sm:$0xff]
    %v5412 = vsel %vm120, %v5410, 0
    %5414 = vmatprep.subr.mxu0 0.0
    %5415 = vmatpush1.msra.mxu0 %v5248
    %5416 = vmatprep.subr.mxu0 0.0
    %5417 = vmatpush1.msra.mxu0 0.0
    %5418 = vmatprep.subr.mxu0 0.0
    %5419 = vmatpush1.msra.mxu0 0.0
    %5420 = vmatprep.subr.mxu0 0.0
    %5421 = vmatpush1.msra.mxu0 0.0
    %5422 = vmatprep.subr.mxu0 0.0
    %5423 = vmatpush1.msra.mxu0 0.0
    %5424 = vmatprep.subr.mxu0 0.0
    %5425 = vmatpush1.msra.mxu0 0.0
    %5426 = vmatprep.subr.mxu0 0.0
    %5427 = vmatpush1.msra.mxu0 0.0
    %5428 = vmatprep.subr.mxu0 0.0
    %5429 = vmatpush1.msra.mxu0 0.0
    %5430 = vmatprep.subr.mxu0 0.0
    %5431 = vmatpush1.msra.mxu0 0.0
    %5432 = vmatprep.subr.mxu0 0.0
    %5433 = vmatpush1.msra.mxu0 0.0
    %5434 = vmatprep.subr.mxu0 0.0
    %5435 = vmatpush1.msra.mxu0 0.0
    %5436 = vmatprep.subr.mxu0 0.0
    %5437 = vmatpush1.msra.mxu0 0.0
    %5438 = vmatprep.subr.mxu0 0.0
    %5439 = vmatpush1.msra.mxu0 0.0
    %5440 = vmatprep.subr.mxu0 0.0
    %5441 = vmatpush1.msra.mxu0 0.0
    %5442 = vmatprep.subr.mxu0 0.0
    %5443 = vmatpush1.msra.mxu0 0.0
    %5444 = vmatprep.subr.mxu0 0.0
    %5445 = vmatpush1.msra.mxu0 0.0
    %5446 = vmatprep.subr.mxu0 0.0
    %5447 = vmatpush1.msra.mxu0 0.0
    %5448 = vmatprep.subr.mxu0 0.0
    %5449 = vmatpush1.msra.mxu0 0.0
    %5450 = vmatprep.subr.mxu0 0.0
    %5451 = vmatpush1.msra.mxu0 0.0
    %5452 = vmatprep.subr.mxu0 0.0
    %5453 = vmatpush1.msra.mxu0 0.0
    %5454 = vmatprep.subr.mxu0 0.0
    %5455 = vmatpush1.msra.mxu0 0.0
    %5456 = vmatprep.subr.mxu0 0.0
    %5457 = vmatpush1.msra.mxu0 0.0
    %5458 = vmatprep.subr.mxu0 0.0
    %5459 = vmatpush1.msra.mxu0 0.0
    %5460 = vmatprep.subr.mxu0 0.0
    %5461 = vmatpush1.msra.mxu0 0.0
    %5462 = vmatprep.subr.mxu0 0.0
    %5463 = vmatpush1.msra.mxu0 0.0
    %5464 = vmatprep.subr.mxu0 0.0
    %5465 = vmatpush1.msra.mxu0 0.0
    %5466 = vmatprep.subr.mxu0 0.0
    %5467 = vmatpush1.msra.mxu0 0.0
    %5468 = vmatprep.subr.mxu0 0.0
    %5469 = vmatpush1.msra.mxu0 0.0
    %5470 = vmatprep.subr.mxu0 0.0
    %5471 = vmatpush1.msra.mxu0 0.0
    %5472 = vmatprep.subr.mxu0 0.0
    %5473 = vmatpush1.msra.mxu0 0.0
    %5474 = vmatprep.subr.mxu0 0.0
    %5475 = vmatpush1.msra.mxu0 0.0
    %5476 = vmatprep.subr.mxu0 0.0
    %5477 = vmatpush1.msra.mxu0 0.0
    %5478 = vmatprep.mubr.f32.mxu0 0.0
    %5479 = vmatmul.mubr.f32.gmra.mrb[0].mxu0 %v5412
    %v5480 = vpop.f32.mrb[0].mxu0
    %v5481 = vadd.f32 0.0, %v5480
    %v5482 = vpop.f32.mrb[0].mxu0
    %5483 = vdwg.mxu0
    %v5484 = vld [vmem:[#allocation2 + $0x4c8] sm:$0xff]
    %v5485 = vld [vmem:[#allocation2 + $0x4d0] sm:$0xff]
    %v5486 = vld [vmem:[#allocation2 + $0x4d8] sm:$0xff]
    %v5487 = vld [vmem:[#allocation2 + $0x4e0] sm:$0xff]
    %v5488 = vld [vmem:[#allocation2 + $0x4e8] sm:$0xff]
    %v5489 = vld [vmem:[#allocation2 + $0x4f0] sm:$0xff]
    %v5490 = vld [vmem:[#allocation2 + $0x4f8] sm:$0xff]
    %v5491 = vld [vmem:[#allocation2 + $0x500] sm:$0xff]
    %v5493 = vsel %vm2247, %v5481, 0
    %5495 = vmatprep.subr.mxu0 0.0
    %5496 = vmatpush1.msra.mxu0 %v5484
    %5497 = vmatprep.subr.mxu0 0.0
    %5498 = vmatpush1.msra.mxu0 %v5485
    %5499 = vmatprep.subr.mxu0 0.0
    %5500 = vmatpush1.msra.mxu0 %v5486
    %5501 = vmatprep.subr.mxu0 0.0
    %5502 = vmatpush1.msra.mxu0 %v5487
    %5503 = vmatprep.subr.mxu0 0.0
    %5504 = vmatpush1.msra.mxu0 %v5488
    %5505 = vmatprep.subr.mxu0 0.0
    %5506 = vmatpush1.msra.mxu0 %v5489
    %5507 = vmatprep.subr.mxu0 0.0
    %5508 = vmatpush1.msra.mxu0 %v5490
    %5509 = vmatprep.subr.mxu0 0.0
    %5510 = vmatpush1.msra.mxu0 %v5491
    %5511 = vmatprep.subr.mxu0 0.0
    %5512 = vmatpush1.msra.mxu0 0.0
    %5513 = vmatprep.subr.mxu0 0.0
    %5514 = vmatpush1.msra.mxu0 0.0
    %5515 = vmatprep.subr.mxu0 0.0
    %5516 = vmatpush1.msra.mxu0 0.0
    %5517 = vmatprep.subr.mxu0 0.0
    %5518 = vmatpush1.msra.mxu0 0.0
    %5519 = vmatprep.subr.mxu0 0.0
    %5520 = vmatpush1.msra.mxu0 0.0
    %5521 = vmatprep.subr.mxu0 0.0
    %5522 = vmatpush1.msra.mxu0 0.0
    %5523 = vmatprep.subr.mxu0 0.0
    %5524 = vmatpush1.msra.mxu0 0.0
    %5525 = vmatprep.subr.mxu0 0.0
    %5526 = vmatpush1.msra.mxu0 0.0
    %5527 = vmatprep.subr.mxu0 0.0
    %5528 = vmatpush1.msra.mxu0 0.0
    %5529 = vmatprep.subr.mxu0 0.0
    %5530 = vmatpush1.msra.mxu0 0.0
    %5531 = vmatprep.subr.mxu0 0.0
    %5532 = vmatpush1.msra.mxu0 0.0
    %5533 = vmatprep.subr.mxu0 0.0
    %5534 = vmatpush1.msra.mxu0 0.0
    %5535 = vmatprep.subr.mxu0 0.0
    %5536 = vmatpush1.msra.mxu0 0.0
    %5537 = vmatprep.subr.mxu0 0.0
    %5538 = vmatpush1.msra.mxu0 0.0
    %5539 = vmatprep.subr.mxu0 0.0
    %5540 = vmatpush1.msra.mxu0 0.0
    %5541 = vmatprep.subr.mxu0 0.0
    %5542 = vmatpush1.msra.mxu0 0.0
    %5543 = vmatprep.subr.mxu0 0.0
    %5544 = vmatpush1.msra.mxu0 0.0
    %5545 = vmatprep.subr.mxu0 0.0
    %5546 = vmatpush1.msra.mxu0 0.0
    %5547 = vmatprep.subr.mxu0 0.0
    %5548 = vmatpush1.msra.mxu0 0.0
    %5549 = vmatprep.subr.mxu0 0.0
    %5550 = vmatpush1.msra.mxu0 0.0
    %5551 = vmatprep.subr.mxu0 0.0
    %5552 = vmatpush1.msra.mxu0 0.0
    %5553 = vmatprep.subr.mxu0 0.0
    %5554 = vmatpush1.msra.mxu0 0.0
    %5555 = vmatprep.subr.mxu0 0.0
    %5556 = vmatpush1.msra.mxu0 0.0
    %5557 = vmatprep.subr.mxu0 0.0
    %5558 = vmatpush1.msra.mxu0 0.0
    %5559 = vmatprep.mubr.f32.mxu0 0.0
    %5560 = vmatmul.mubr.f32.gmra.mrb[0].mxu0 %v5493
    %v5561 = vpop.f32.mrb[0].mxu0
    %v5562 = vadd.f32 0.0, %v5561
    %v5563 = vpop.f32.mrb[0].mxu0
    %5564 = vdwg.mxu0
    %v5565 = vadd.f32 %v5409, %v5562
    %v5566 = vld [vmem:[#allocation2 + $0x508] sm:$0xff]
    %v5568 = vsel %vm120, %v5566, 0
    %5570 = vmatprep.subr.mxu0 0.0
    %5571 = vmatpush1.msra.mxu0 %v5248
    %5572 = vmatprep.subr.mxu0 0.0
    %5573 = vmatpush1.msra.mxu0 0.0
    %5574 = vmatprep.subr.mxu0 0.0
    %5575 = vmatpush1.msra.mxu0 0.0
    %5576 = vmatprep.subr.mxu0 0.0
    %5577 = vmatpush1.msra.mxu0 0.0
    %5578 = vmatprep.subr.mxu0 0.0
    %5579 = vmatpush1.msra.mxu0 0.0
    %5580 = vmatprep.subr.mxu0 0.0
    %5581 = vmatpush1.msra.mxu0 0.0
    %5582 = vmatprep.subr.mxu0 0.0
    %5583 = vmatpush1.msra.mxu0 0.0
    %5584 = vmatprep.subr.mxu0 0.0
    %5585 = vmatpush1.msra.mxu0 0.0
    %5586 = vmatprep.subr.mxu0 0.0
    %5587 = vmatpush1.msra.mxu0 0.0
    %5588 = vmatprep.subr.mxu0 0.0
    %5589 = vmatpush1.msra.mxu0 0.0
    %5590 = vmatprep.subr.mxu0 0.0
    %5591 = vmatpush1.msra.mxu0 0.0
    %5592 = vmatprep.subr.mxu0 0.0
    %5593 = vmatpush1.msra.mxu0 0.0
    %5594 = vmatprep.subr.mxu0 0.0
    %5595 = vmatpush1.msra.mxu0 0.0
    %5596 = vmatprep.subr.mxu0 0.0
    %5597 = vmatpush1.msra.mxu0 0.0
    %5598 = vmatprep.subr.mxu0 0.0
    %5599 = vmatpush1.msra.mxu0 0.0
    %5600 = vmatprep.subr.mxu0 0.0
    %5601 = vmatpush1.msra.mxu0 0.0
    %5602 = vmatprep.subr.mxu0 0.0
    %5603 = vmatpush1.msra.mxu0 0.0
    %5604 = vmatprep.subr.mxu0 0.0
    %5605 = vmatpush1.msra.mxu0 0.0
    %5606 = vmatprep.subr.mxu0 0.0
    %5607 = vmatpush1.msra.mxu0 0.0
    %5608 = vmatprep.subr.mxu0 0.0
    %5609 = vmatpush1.msra.mxu0 0.0
    %5610 = vmatprep.subr.mxu0 0.0
    %5611 = vmatpush1.msra.mxu0 0.0
    %5612 = vmatprep.subr.mxu0 0.0
    %5613 = vmatpush1.msra.mxu0 0.0
    %5614 = vmatprep.subr.mxu0 0.0
    %5615 = vmatpush1.msra.mxu0 0.0
    %5616 = vmatprep.subr.mxu0 0.0
    %5617 = vmatpush1.msra.mxu0 0.0
    %5618 = vmatprep.subr.mxu0 0.0
    %5619 = vmatpush1.msra.mxu0 0.0
    %5620 = vmatprep.subr.mxu0 0.0
    %5621 = vmatpush1.msra.mxu0 0.0
    %5622 = vmatprep.subr.mxu0 0.0
    %5623 = vmatpush1.msra.mxu0 0.0
    %5624 = vmatprep.subr.mxu0 0.0
    %5625 = vmatpush1.msra.mxu0 0.0
    %5626 = vmatprep.subr.mxu0 0.0
    %5627 = vmatpush1.msra.mxu0 0.0
    %5628 = vmatprep.subr.mxu0 0.0
    %5629 = vmatpush1.msra.mxu0 0.0
    %5630 = vmatprep.subr.mxu0 0.0
    %5631 = vmatpush1.msra.mxu0 0.0
    %5632 = vmatprep.subr.mxu0 0.0
    %5633 = vmatpush1.msra.mxu0 0.0
    %5634 = vmatprep.mubr.f32.mxu0 0.0
    %5635 = vmatmul.mubr.f32.gmra.mrb[0].mxu0 %v5568
    %v5636 = vpop.f32.mrb[0].mxu0
    %v5637 = vadd.f32 0.0, %v5636
    %v5638 = vpop.f32.mrb[0].mxu0
    %5639 = vdwg.mxu0
    %v5640 = vld [vmem:[#allocation2 + $0x510] sm:$0xff]
    %v5641 = vld [vmem:[#allocation2 + $0x518] sm:$0xff]
    %v5642 = vld [vmem:[#allocation2 + $0x520] sm:$0xff]
    %v5643 = vld [vmem:[#allocation2 + $0x528] sm:$0xff]
    %v5644 = vld [vmem:[#allocation2 + $0x530] sm:$0xff]
    %v5645 = vld [vmem:[#allocation2 + $0x538] sm:$0xff]
    %v5646 = vld [vmem:[#allocation2 + $0x540] sm:$0xff]
    %v5647 = vld [vmem:[#allocation2 + $0x548] sm:$0xff]
    %v5649 = vsel %vm2247, %v5637, 0
    %5651 = vmatprep.subr.mxu0 0.0
    %5652 = vmatpush1.msra.mxu0 %v5640
    %5653 = vmatprep.subr.mxu0 0.0
    %5654 = vmatpush1.msra.mxu0 %v5641
    %5655 = vmatprep.subr.mxu0 0.0
    %5656 = vmatpush1.msra.mxu0 %v5642
    %5657 = vmatprep.subr.mxu0 0.0
    %5658 = vmatpush1.msra.mxu0 %v5643
    %5659 = vmatprep.subr.mxu0 0.0
    %5660 = vmatpush1.msra.mxu0 %v5644
    %5661 = vmatprep.subr.mxu0 0.0
    %5662 = vmatpush1.msra.mxu0 %v5645
    %5663 = vmatprep.subr.mxu0 0.0
    %5664 = vmatpush1.msra.mxu0 %v5646
    %5665 = vmatprep.subr.mxu0 0.0
    %5666 = vmatpush1.msra.mxu0 %v5647
    %5667 = vmatprep.subr.mxu0 0.0
    %5668 = vmatpush1.msra.mxu0 0.0
    %5669 = vmatprep.subr.mxu0 0.0
    %5670 = vmatpush1.msra.mxu0 0.0
    %5671 = vmatprep.subr.mxu0 0.0
    %5672 = vmatpush1.msra.mxu0 0.0
    %5673 = vmatprep.subr.mxu0 0.0
    %5674 = vmatpush1.msra.mxu0 0.0
    %5675 = vmatprep.subr.mxu0 0.0
    %5676 = vmatpush1.msra.mxu0 0.0
    %5677 = vmatprep.subr.mxu0 0.0
    %5678 = vmatpush1.msra.mxu0 0.0
    %5679 = vmatprep.subr.mxu0 0.0
    %5680 = vmatpush1.msra.mxu0 0.0
    %5681 = vmatprep.subr.mxu0 0.0
    %5682 = vmatpush1.msra.mxu0 0.0
    %5683 = vmatprep.subr.mxu0 0.0
    %5684 = vmatpush1.msra.mxu0 0.0
    %5685 = vmatprep.subr.mxu0 0.0
    %5686 = vmatpush1.msra.mxu0 0.0
    %5687 = vmatprep.subr.mxu0 0.0
    %5688 = vmatpush1.msra.mxu0 0.0
    %5689 = vmatprep.subr.mxu0 0.0
    %5690 = vmatpush1.msra.mxu0 0.0
    %5691 = vmatprep.subr.mxu0 0.0
    %5692 = vmatpush1.msra.mxu0 0.0
    %5693 = vmatprep.subr.mxu0 0.0
    %5694 = vmatpush1.msra.mxu0 0.0
    %5695 = vmatprep.subr.mxu0 0.0
    %5696 = vmatpush1.msra.mxu0 0.0
    %5697 = vmatprep.subr.mxu0 0.0
    %5698 = vmatpush1.msra.mxu0 0.0
    %5699 = vmatprep.subr.mxu0 0.0
    %5700 = vmatpush1.msra.mxu0 0.0
    %5701 = vmatprep.subr.mxu0 0.0
    %5702 = vmatpush1.msra.mxu0 0.0
    %5703 = vmatprep.subr.mxu0 0.0
    %5704 = vmatpush1.msra.mxu0 0.0
    %5705 = vmatprep.subr.mxu0 0.0
    %5706 = vmatpush1.msra.mxu0 0.0
    %5707 = vmatprep.subr.mxu0 0.0
    %5708 = vmatpush1.msra.mxu0 0.0
    %5709 = vmatprep.subr.mxu0 0.0
    %5710 = vmatpush1.msra.mxu0 0.0
    %5711 = vmatprep.subr.mxu0 0.0
    %5712 = vmatpush1.msra.mxu0 0.0
    %5713 = vmatprep.subr.mxu0 0.0
    %5714 = vmatpush1.msra.mxu0 0.0
    %5715 = vmatprep.mubr.f32.mxu0 0.0
    %5716 = vmatmul.mubr.f32.gmra.mrb[0].mxu0 %v5649
    %v5717 = vpop.f32.mrb[0].mxu0
    %v5718 = vadd.f32 0.0, %v5717
    %v5719 = vpop.f32.mrb[0].mxu0
    %5720 = vdwg.mxu0
    %v5721 = vadd.f32 %v5565, %v5718
    %v5722 = vmax.f32 %v5721, 0.0
    %v5723 = vld [vmem:[#allocation2 + $0x558] sm:$0xff]
    %v5725 = vsel %vm120, %v5723, 0
    %5727 = vmatprep.subr.mxu0 0.0
    %5728 = vmatpush1.msra.mxu0 %v5722
    %5729 = vmatprep.subr.mxu0 0.0
    %5730 = vmatpush1.msra.mxu0 0.0
    %5731 = vmatprep.subr.mxu0 0.0
    %5732 = vmatpush1.msra.mxu0 0.0
    %5733 = vmatprep.subr.mxu0 0.0
    %5734 = vmatpush1.msra.mxu0 0.0
    %5735 = vmatprep.subr.mxu0 0.0
    %5736 = vmatpush1.msra.mxu0 0.0
    %5737 = vmatprep.subr.mxu0 0.0
    %5738 = vmatpush1.msra.mxu0 0.0
    %5739 = vmatprep.subr.mxu0 0.0
    %5740 = vmatpush1.msra.mxu0 0.0
    %5741 = vmatprep.subr.mxu0 0.0
    %5742 = vmatpush1.msra.mxu0 0.0
    %5743 = vmatprep.subr.mxu0 0.0
    %5744 = vmatpush1.msra.mxu0 0.0
    %5745 = vmatprep.subr.mxu0 0.0
    %5746 = vmatpush1.msra.mxu0 0.0
    %5747 = vmatprep.subr.mxu0 0.0
    %5748 = vmatpush1.msra.mxu0 0.0
    %5749 = vmatprep.subr.mxu0 0.0
    %5750 = vmatpush1.msra.mxu0 0.0
    %5751 = vmatprep.subr.mxu0 0.0
    %5752 = vmatpush1.msra.mxu0 0.0
    %5753 = vmatprep.subr.mxu0 0.0
    %5754 = vmatpush1.msra.mxu0 0.0
    %5755 = vmatprep.subr.mxu0 0.0
    %5756 = vmatpush1.msra.mxu0 0.0
    %5757 = vmatprep.subr.mxu0 0.0
    %5758 = vmatpush1.msra.mxu0 0.0
    %5759 = vmatprep.subr.mxu0 0.0
    %5760 = vmatpush1.msra.mxu0 0.0
    %5761 = vmatprep.subr.mxu0 0.0
    %5762 = vmatpush1.msra.mxu0 0.0
    %5763 = vmatprep.subr.mxu0 0.0
    %5764 = vmatpush1.msra.mxu0 0.0
    %5765 = vmatprep.subr.mxu0 0.0
    %5766 = vmatpush1.msra.mxu0 0.0
    %5767 = vmatprep.subr.mxu0 0.0
    %5768 = vmatpush1.msra.mxu0 0.0
    %5769 = vmatprep.subr.mxu0 0.0
    %5770 = vmatpush1.msra.mxu0 0.0
    %5771 = vmatprep.subr.mxu0 0.0
    %5772 = vmatpush1.msra.mxu0 0.0
    %5773 = vmatprep.subr.mxu0 0.0
    %5774 = vmatpush1.msra.mxu0 0.0
    %5775 = vmatprep.subr.mxu0 0.0
    %5776 = vmatpush1.msra.mxu0 0.0
    %5777 = vmatprep.subr.mxu0 0.0
    %5778 = vmatpush1.msra.mxu0 0.0
    %5779 = vmatprep.subr.mxu0 0.0
    %5780 = vmatpush1.msra.mxu0 0.0
    %5781 = vmatprep.subr.mxu0 0.0
    %5782 = vmatpush1.msra.mxu0 0.0
    %5783 = vmatprep.subr.mxu0 0.0
    %5784 = vmatpush1.msra.mxu0 0.0
    %5785 = vmatprep.subr.mxu0 0.0
    %5786 = vmatpush1.msra.mxu0 0.0
    %5787 = vmatprep.subr.mxu0 0.0
    %5788 = vmatpush1.msra.mxu0 0.0
    %5789 = vmatprep.subr.mxu0 0.0
    %5790 = vmatpush1.msra.mxu0 0.0
    %5791 = vmatprep.mubr.f32.mxu0 0.0
    %5792 = vmatmul.mubr.f32.gmra.mrb[0].mxu0 %v5725
    %v5793 = vpop.f32.mrb[0].mxu0
    %v5794 = vadd.f32 0.0, %v5793
    %v5795 = vpop.f32.mrb[0].mxu0
    %5796 = vdwg.mxu0
    %v5797 = vld [vmem:[#allocation2 + $0x5e0] sm:$0xff]
    %v5799 = vsel %vm120, %v5797, 0
    %5801 = vmatprep.subr.mxu0 0.0
    %5802 = vmatpush1.msra.mxu0 %v5722
    %5803 = vmatprep.subr.mxu0 0.0
    %5804 = vmatpush1.msra.mxu0 0.0
    %5805 = vmatprep.subr.mxu0 0.0
    %5806 = vmatpush1.msra.mxu0 0.0
    %5807 = vmatprep.subr.mxu0 0.0
    %5808 = vmatpush1.msra.mxu0 0.0
    %5809 = vmatprep.subr.mxu0 0.0
    %5810 = vmatpush1.msra.mxu0 0.0
    %5811 = vmatprep.subr.mxu0 0.0
    %5812 = vmatpush1.msra.mxu0 0.0
    %5813 = vmatprep.subr.mxu0 0.0
    %5814 = vmatpush1.msra.mxu0 0.0
    %5815 = vmatprep.subr.mxu0 0.0
    %5816 = vmatpush1.msra.mxu0 0.0
    %5817 = vmatprep.subr.mxu0 0.0
    %5818 = vmatpush1.msra.mxu0 0.0
    %5819 = vmatprep.subr.mxu0 0.0
    %5820 = vmatpush1.msra.mxu0 0.0
    %5821 = vmatprep.subr.mxu0 0.0
    %5822 = vmatpush1.msra.mxu0 0.0
    %5823 = vmatprep.subr.mxu0 0.0
    %5824 = vmatpush1.msra.mxu0 0.0
    %5825 = vmatprep.subr.mxu0 0.0
    %5826 = vmatpush1.msra.mxu0 0.0
    %5827 = vmatprep.subr.mxu0 0.0
    %5828 = vmatpush1.msra.mxu0 0.0
    %5829 = vmatprep.subr.mxu0 0.0
    %5830 = vmatpush1.msra.mxu0 0.0
    %5831 = vmatprep.subr.mxu0 0.0
    %5832 = vmatpush1.msra.mxu0 0.0
    %5833 = vmatprep.subr.mxu0 0.0
    %5834 = vmatpush1.msra.mxu0 0.0
    %5835 = vmatprep.subr.mxu0 0.0
    %5836 = vmatpush1.msra.mxu0 0.0
    %5837 = vmatprep.subr.mxu0 0.0
    %5838 = vmatpush1.msra.mxu0 0.0
    %5839 = vmatprep.subr.mxu0 0.0
    %5840 = vmatpush1.msra.mxu0 0.0
    %5841 = vmatprep.subr.mxu0 0.0
    %5842 = vmatpush1.msra.mxu0 0.0
    %5843 = vmatprep.subr.mxu0 0.0
    %5844 = vmatpush1.msra.mxu0 0.0
    %5845 = vmatprep.subr.mxu0 0.0
    %5846 = vmatpush1.msra.mxu0 0.0
    %5847 = vmatprep.subr.mxu0 0.0
    %5848 = vmatpush1.msra.mxu0 0.0
    %5849 = vmatprep.subr.mxu0 0.0
    %5850 = vmatpush1.msra.mxu0 0.0
    %5851 = vmatprep.subr.mxu0 0.0
    %5852 = vmatpush1.msra.mxu0 0.0
    %5853 = vmatprep.subr.mxu0 0.0
    %5854 = vmatpush1.msra.mxu0 0.0
    %5855 = vmatprep.subr.mxu0 0.0
    %5856 = vmatpush1.msra.mxu0 0.0
    %5857 = vmatprep.subr.mxu0 0.0
    %5858 = vmatpush1.msra.mxu0 0.0
    %5859 = vmatprep.subr.mxu0 0.0
    %5860 = vmatpush1.msra.mxu0 0.0
    %5861 = vmatprep.subr.mxu0 0.0
    %5862 = vmatpush1.msra.mxu0 0.0
    %5863 = vmatprep.subr.mxu0 0.0
    %5864 = vmatpush1.msra.mxu0 0.0
    %5865 = vmatprep.mubr.f32.mxu0 0.0
    %5866 = vmatmul.mubr.f32.gmra.mrb[0].mxu0 %v5799
    %v5867 = vpop.f32.mrb[0].mxu0
    %v5868 = vadd.f32 0.0, %v5867
    %v5869 = vpop.f32.mrb[0].mxu0
    %5870 = vdwg.mxu0
    %v5871 = vmax.f32 %v5794, %v5868
    %v5872 = vld [vmem:[#allocation2 + $0x560] sm:$0xff]
    %v5873 = vld [vmem:[#allocation2 + $0x568] sm:$0xff]
    %v5874 = vld [vmem:[#allocation2 + $0x570] sm:$0xff]
    %v5875 = vld [vmem:[#allocation2 + $0x578] sm:$0xff]
    %v5876 = vld [vmem:[#allocation2 + $0x580] sm:$0xff]
    %v5877 = vld [vmem:[#allocation2 + $0x588] sm:$0xff]
    %v5878 = vld [vmem:[#allocation2 + $0x590] sm:$0xff]
    %v5879 = vld [vmem:[#allocation2 + $0x598] sm:$0xff]
    %v5880 = vld [vmem:[#allocation2 + $0x5a0] sm:$0xff]
    %v5881 = vld [vmem:[#allocation2 + $0x5a8] sm:$0xff]
    %v5882 = vld [vmem:[#allocation2 + $0x5b0] sm:$0xff]
    %v5883 = vld [vmem:[#allocation2 + $0x5b8] sm:$0xff]
    %v5884 = vld [vmem:[#allocation2 + $0x5c0] sm:$0xff]
    %v5885 = vld [vmem:[#allocation2 + $0x5c8] sm:$0xff]
    %v5886 = vld [vmem:[#allocation2 + $0x5d0] sm:$0xff]
    %v5887 = vld [vmem:[#allocation2 + $0x5d8] sm:$0xff]
    %5888 = vmatprep.subr.mxu0 0.0
    %5889 = vmatpush1.msra.mxu0 %v5872
    %5890 = vmatprep.subr.mxu0 0.0
    %5891 = vmatpush1.msra.mxu0 %v5873
    %5892 = vmatprep.subr.mxu0 0.0
    %5893 = vmatpush1.msra.mxu0 %v5874
    %5894 = vmatprep.subr.mxu0 0.0
    %5895 = vmatpush1.msra.mxu0 %v5875
    %5896 = vmatprep.subr.mxu0 0.0
    %5897 = vmatpush1.msra.mxu0 %v5876
    %5898 = vmatprep.subr.mxu0 0.0
    %5899 = vmatpush1.msra.mxu0 %v5877
    %5900 = vmatprep.subr.mxu0 0.0
    %5901 = vmatpush1.msra.mxu0 %v5878
    %5902 = vmatprep.subr.mxu0 0.0
    %5903 = vmatpush1.msra.mxu0 %v5879
    %5904 = vmatprep.subr.mxu0 0.0
    %5905 = vmatpush1.msra.mxu0 %v5880
    %5906 = vmatprep.subr.mxu0 0.0
    %5907 = vmatpush1.msra.mxu0 %v5881
    %5908 = vmatprep.subr.mxu0 0.0
    %5909 = vmatpush1.msra.mxu0 %v5882
    %5910 = vmatprep.subr.mxu0 0.0
    %5911 = vmatpush1.msra.mxu0 %v5883
    %5912 = vmatprep.subr.mxu0 0.0
    %5913 = vmatpush1.msra.mxu0 %v5884
    %5914 = vmatprep.subr.mxu0 0.0
    %5915 = vmatpush1.msra.mxu0 %v5885
    %5916 = vmatprep.subr.mxu0 0.0
    %5917 = vmatpush1.msra.mxu0 %v5886
    %5918 = vmatprep.subr.mxu0 0.0
    %5919 = vmatpush1.msra.mxu0 %v5887
    %5920 = vmatprep.subr.mxu0 0.0
    %5921 = vmatpush1.msra.mxu0 0.0
    %5922 = vmatprep.subr.mxu0 0.0
    %5923 = vmatpush1.msra.mxu0 0.0
    %5924 = vmatprep.subr.mxu0 0.0
    %5925 = vmatpush1.msra.mxu0 0.0
    %5926 = vmatprep.subr.mxu0 0.0
    %5927 = vmatpush1.msra.mxu0 0.0
    %5928 = vmatprep.subr.mxu0 0.0
    %5929 = vmatpush1.msra.mxu0 0.0
    %5930 = vmatprep.subr.mxu0 0.0
    %5931 = vmatpush1.msra.mxu0 0.0
    %5932 = vmatprep.subr.mxu0 0.0
    %5933 = vmatpush1.msra.mxu0 0.0
    %5934 = vmatprep.subr.mxu0 0.0
    %5935 = vmatpush1.msra.mxu0 0.0
    %5936 = vmatprep.subr.mxu0 0.0
    %5937 = vmatpush1.msra.mxu0 0.0
    %5938 = vmatprep.subr.mxu0 0.0
    %5939 = vmatpush1.msra.mxu0 0.0
    %5940 = vmatprep.subr.mxu0 0.0
    %5941 = vmatpush1.msra.mxu0 0.0
    %5942 = vmatprep.subr.mxu0 0.0
    %5943 = vmatpush1.msra.mxu0 0.0
    %5944 = vmatprep.subr.mxu0 0.0
    %5945 = vmatpush1.msra.mxu0 0.0
    %5946 = vmatprep.subr.mxu0 0.0
    %5947 = vmatpush1.msra.mxu0 0.0
    %5948 = vmatprep.subr.mxu0 0.0
    %5949 = vmatpush1.msra.mxu0 0.0
    %5950 = vmatprep.subr.mxu0 0.0
    %5951 = vmatpush1.msra.mxu0 0.0
    %5952 = vmatprep.mubr.f32.mxu0 0.0
    %5953 = vmatmul.mubr.f32.gmra.mrb[0].mxu0 %v5871
    %v5954 = vpop.f32.mrb[0].mxu0
    %v5955 = vadd.f32 0.0, %v5954
    %v5956 = vpop.f32.mrb[0].mxu0
    %5957 = vdwg.mxu0
    %v5958 = vld [vmem:[#allocation2 + $0x5e8] sm:$0xff]
    %v5959 = vld [vmem:[#allocation2 + $0x5f0] sm:$0xff]
    %v5960 = vld [vmem:[#allocation2 + $0x5f8] sm:$0xff]
    %v5961 = vld [vmem:[#allocation2 + $0x600] sm:$0xff]
    %v5962 = vld [vmem:[#allocation2 + $0x608] sm:$0xff]
    %v5963 = vld [vmem:[#allocation2 + $0x610] sm:$0xff]
    %v5964 = vld [vmem:[#allocation2 + $0x618] sm:$0xff]
    %v5965 = vld [vmem:[#allocation2 + $0x620] sm:$0xff]
    %v5966 = vld [vmem:[#allocation2 + $0x628] sm:$0xff]
    %v5967 = vld [vmem:[#allocation2 + $0x630] sm:$0xff]
    %v5968 = vld [vmem:[#allocation2 + $0x638] sm:$0xff]
    %v5969 = vld [vmem:[#allocation2 + $0x640] sm:$0xff]
    %v5970 = vld [vmem:[#allocation2 + $0x648] sm:$0xff]
    %v5971 = vld [vmem:[#allocation2 + $0x650] sm:$0xff]
    %v5972 = vld [vmem:[#allocation2 + $0x658] sm:$0xff]
    %v5973 = vld [vmem:[#allocation2 + $0x660] sm:$0xff]
    %5974 = vmatprep.subr.mxu0 0.0
    %5975 = vmatpush1.msra.mxu0 %v5958
    %5976 = vmatprep.subr.mxu0 0.0
    %5977 = vmatpush1.msra.mxu0 %v5959
    %5978 = vmatprep.subr.mxu0 0.0
    %5979 = vmatpush1.msra.mxu0 %v5960
    %5980 = vmatprep.subr.mxu0 0.0
    %5981 = vmatpush1.msra.mxu0 %v5961
    %5982 = vmatprep.subr.mxu0 0.0
    %5983 = vmatpush1.msra.mxu0 %v5962
    %5984 = vmatprep.subr.mxu0 0.0
    %5985 = vmatpush1.msra.mxu0 %v5963
    %5986 = vmatprep.subr.mxu0 0.0
    %5987 = vmatpush1.msra.mxu0 %v5964
    %5988 = vmatprep.subr.mxu0 0.0
    %5989 = vmatpush1.msra.mxu0 %v5965
    %5990 = vmatprep.subr.mxu0 0.0
    %5991 = vmatpush1.msra.mxu0 %v5966
    %5992 = vmatprep.subr.mxu0 0.0
    %5993 = vmatpush1.msra.mxu0 %v5967
    %5994 = vmatprep.subr.mxu0 0.0
    %5995 = vmatpush1.msra.mxu0 %v5968
    %5996 = vmatprep.subr.mxu0 0.0
    %5997 = vmatpush1.msra.mxu0 %v5969
    %5998 = vmatprep.subr.mxu0 0.0
    %5999 = vmatpush1.msra.mxu0 %v5970
    %6000 = vmatprep.subr.mxu0 0.0
    %6001 = vmatpush1.msra.mxu0 %v5971
    %6002 = vmatprep.subr.mxu0 0.0
    %6003 = vmatpush1.msra.mxu0 %v5972
    %6004 = vmatprep.subr.mxu0 0.0
    %6005 = vmatpush1.msra.mxu0 %v5973
    %6006 = vmatprep.subr.mxu0 0.0
    %6007 = vmatpush1.msra.mxu0 0.0
    %6008 = vmatprep.subr.mxu0 0.0
    %6009 = vmatpush1.msra.mxu0 0.0
    %6010 = vmatprep.subr.mxu0 0.0
    %6011 = vmatpush1.msra.mxu0 0.0
    %6012 = vmatprep.subr.mxu0 0.0
    %6013 = vmatpush1.msra.mxu0 0.0
    %6014 = vmatprep.subr.mxu0 0.0
    %6015 = vmatpush1.msra.mxu0 0.0
    %6016 = vmatprep.subr.mxu0 0.0
    %6017 = vmatpush1.msra.mxu0 0.0
    %6018 = vmatprep.subr.mxu0 0.0
    %6019 = vmatpush1.msra.mxu0 0.0
    %6020 = vmatprep.subr.mxu0 0.0
    %6021 = vmatpush1.msra.mxu0 0.0
    %6022 = vmatprep.subr.mxu0 0.0
    %6023 = vmatpush1.msra.mxu0 0.0
    %6024 = vmatprep.subr.mxu0 0.0
    %6025 = vmatpush1.msra.mxu0 0.0
    %6026 = vmatprep.subr.mxu0 0.0
    %6027 = vmatpush1.msra.mxu0 0.0
    %6028 = vmatprep.subr.mxu0 0.0
    %6029 = vmatpush1.msra.mxu0 0.0
    %6030 = vmatprep.subr.mxu0 0.0
    %6031 = vmatpush1.msra.mxu0 0.0
    %6032 = vmatprep.subr.mxu0 0.0
    %6033 = vmatpush1.msra.mxu0 0.0
    %6034 = vmatprep.subr.mxu0 0.0
    %6035 = vmatpush1.msra.mxu0 0.0
    %6036 = vmatprep.subr.mxu0 0.0
    %6037 = vmatpush1.msra.mxu0 0.0
    %6038 = vmatprep.mubr.f32.mxu0 0.0
    %6039 = vmatmul.mubr.f32.gmra.mrb[0].mxu0 %v5871
    %v6040 = vpop.f32.mrb[0].mxu0
    %v6041 = vadd.f32 0.0, %v6040
    %v6042 = vpop.f32.mrb[0].mxu0
    %6043 = vdwg.mxu0
    %v6044 = vmax.f32 %v5955, %v6041
    %v6045 = vld [vmem:[#allocation2 + $0x668] sm:$0x1]
    %v6046 = vlaneseq
    %v6047 = vshrl.u32 %v6046, 7
    %v6048 = vsub.s32 0, %v6047
    %v6049 = vrot.slane %v6045, %v6048
    %v6050 = vmul.f32 %v6044, %v6049
    %v6051 = vld [vmem:[#allocation2 + $0x670] sm:$0x1]
    %v6052 = vlaneseq
    %v6053 = vshrl.u32 %v6052, 7
    %v6054 = vsub.s32 0, %v6053
    %v6055 = vrot.slane %v6051, %v6054
    %v6056 = vadd.f32 %v6050, %v6055
    %v6057 = vld [vmem:[#allocation2 + $0x708] sm:$0x1]
    %v6058 = vld [vmem:[#allocation2 + $0x678] sm:$0xff]
    %v6060 = vsel %vm120, %v6058, 0
    %6062 = vmatprep.subr.mxu0 0.0
    %6063 = vmatpush1.msra.mxu0 %v6056
    %6064 = vmatprep.subr.mxu0 0.0
    %6065 = vmatpush1.msra.mxu0 0.0
    %6066 = vmatprep.subr.mxu0 0.0
    %6067 = vmatpush1.msra.mxu0 0.0
    %6068 = vmatprep.subr.mxu0 0.0
    %6069 = vmatpush1.msra.mxu0 0.0
    %6070 = vmatprep.subr.mxu0 0.0
    %6071 = vmatpush1.msra.mxu0 0.0
    %6072 = vmatprep.subr.mxu0 0.0
    %6073 = vmatpush1.msra.mxu0 0.0
    %6074 = vmatprep.subr.mxu0 0.0
    %6075 = vmatpush1.msra.mxu0 0.0
    %6076 = vmatprep.subr.mxu0 0.0
    %6077 = vmatpush1.msra.mxu0 0.0
    %6078 = vmatprep.subr.mxu0 0.0
    %6079 = vmatpush1.msra.mxu0 0.0
    %6080 = vmatprep.subr.mxu0 0.0
    %6081 = vmatpush1.msra.mxu0 0.0
    %6082 = vmatprep.subr.mxu0 0.0
    %6083 = vmatpush1.msra.mxu0 0.0
    %6084 = vmatprep.subr.mxu0 0.0
    %6085 = vmatpush1.msra.mxu0 0.0
    %6086 = vmatprep.subr.mxu0 0.0
    %6087 = vmatpush1.msra.mxu0 0.0
    %6088 = vmatprep.subr.mxu0 0.0
    %6089 = vmatpush1.msra.mxu0 0.0
    %6090 = vmatprep.subr.mxu0 0.0
    %6091 = vmatpush1.msra.mxu0 0.0
    %6092 = vmatprep.subr.mxu0 0.0
    %6093 = vmatpush1.msra.mxu0 0.0
    %6094 = vmatprep.subr.mxu0 0.0
    %6095 = vmatpush1.msra.mxu0 0.0
    %6096 = vmatprep.subr.mxu0 0.0
    %6097 = vmatpush1.msra.mxu0 0.0
    %6098 = vmatprep.subr.mxu0 0.0
    %6099 = vmatpush1.msra.mxu0 0.0
    %6100 = vmatprep.subr.mxu0 0.0
    %6101 = vmatpush1.msra.mxu0 0.0
    %6102 = vmatprep.subr.mxu0 0.0
    %6103 = vmatpush1.msra.mxu0 0.0
    %6104 = vmatprep.subr.mxu0 0.0
    %6105 = vmatpush1.msra.mxu0 0.0
    %6106 = vmatprep.subr.mxu0 0.0
    %6107 = vmatpush1.msra.mxu0 0.0
    %6108 = vmatprep.subr.mxu0 0.0
    %6109 = vmatpush1.msra.mxu0 0.0
    %6110 = vmatprep.subr.mxu0 0.0
    %6111 = vmatpush1.msra.mxu0 0.0
    %6112 = vmatprep.subr.mxu0 0.0
    %6113 = vmatpush1.msra.mxu0 0.0
    %6114 = vmatprep.subr.mxu0 0.0
    %6115 = vmatpush1.msra.mxu0 0.0
    %6116 = vmatprep.subr.mxu0 0.0
    %6117 = vmatpush1.msra.mxu0 0.0
    %6118 = vmatprep.subr.mxu0 0.0
    %6119 = vmatpush1.msra.mxu0 0.0
    %6120 = vmatprep.subr.mxu0 0.0
    %6121 = vmatpush1.msra.mxu0 0.0
    %6122 = vmatprep.subr.mxu0 0.0
    %6123 = vmatpush1.msra.mxu0 0.0
    %6124 = vmatprep.subr.mxu0 0.0
    %6125 = vmatpush1.msra.mxu0 0.0
    %6126 = vmatprep.mubr.f32.mxu0 0.0
    %6127 = vmatmul.mubr.f32.gmra.mrb[0].mxu0 %v6060
    %v6128 = vpop.f32.mrb[0].mxu0
    %v6129 = vadd.f32 0.0, %v6128
    %v6130 = vpop.f32.mrb[0].mxu0
    %6131 = vdwg.mxu0
    %v6132 = vld [vmem:[#allocation2 + $0x680] sm:$0xff]
    %v6133 = vld [vmem:[#allocation2 + $0x688] sm:$0xff]
    %v6134 = vld [vmem:[#allocation2 + $0x690] sm:$0xff]
    %v6135 = vld [vmem:[#allocation2 + $0x698] sm:$0xff]
    %v6136 = vld [vmem:[#allocation2 + $0x6a0] sm:$0xff]
    %v6137 = vld [vmem:[#allocation2 + $0x6a8] sm:$0xff]
    %v6138 = vld [vmem:[#allocation2 + $0x6b0] sm:$0xff]
    %v6139 = vld [vmem:[#allocation2 + $0x6b8] sm:$0xff]
    %v6141 = vsel %vm2247, %v6129, 0
    %6143 = vmatprep.subr.mxu0 0.0
    %6144 = vmatpush1.msra.mxu0 %v6132
    %6145 = vmatprep.subr.mxu0 0.0
    %6146 = vmatpush1.msra.mxu0 %v6133
    %6147 = vmatprep.subr.mxu0 0.0
    %6148 = vmatpush1.msra.mxu0 %v6134
    %6149 = vmatprep.subr.mxu0 0.0
    %6150 = vmatpush1.msra.mxu0 %v6135
    %6151 = vmatprep.subr.mxu0 0.0
    %6152 = vmatpush1.msra.mxu0 %v6136
    %6153 = vmatprep.subr.mxu0 0.0
    %6154 = vmatpush1.msra.mxu0 %v6137
    %6155 = vmatprep.subr.mxu0 0.0
    %6156 = vmatpush1.msra.mxu0 %v6138
    %6157 = vmatprep.subr.mxu0 0.0
    %6158 = vmatpush1.msra.mxu0 %v6139
    %6159 = vmatprep.subr.mxu0 0.0
    %6160 = vmatpush1.msra.mxu0 0.0
    %6161 = vmatprep.subr.mxu0 0.0
    %6162 = vmatpush1.msra.mxu0 0.0
    %6163 = vmatprep.subr.mxu0 0.0
    %6164 = vmatpush1.msra.mxu0 0.0
    %6165 = vmatprep.subr.mxu0 0.0
    %6166 = vmatpush1.msra.mxu0 0.0
    %6167 = vmatprep.subr.mxu0 0.0
    %6168 = vmatpush1.msra.mxu0 0.0
    %6169 = vmatprep.subr.mxu0 0.0
    %6170 = vmatpush1.msra.mxu0 0.0
    %6171 = vmatprep.subr.mxu0 0.0
    %6172 = vmatpush1.msra.mxu0 0.0
    %6173 = vmatprep.subr.mxu0 0.0
    %6174 = vmatpush1.msra.mxu0 0.0
    %6175 = vmatprep.subr.mxu0 0.0
    %6176 = vmatpush1.msra.mxu0 0.0
    %6177 = vmatprep.subr.mxu0 0.0
    %6178 = vmatpush1.msra.mxu0 0.0
    %6179 = vmatprep.subr.mxu0 0.0
    %6180 = vmatpush1.msra.mxu0 0.0
    %6181 = vmatprep.subr.mxu0 0.0
    %6182 = vmatpush1.msra.mxu0 0.0
    %6183 = vmatprep.subr.mxu0 0.0
    %6184 = vmatpush1.msra.mxu0 0.0
    %6185 = vmatprep.subr.mxu0 0.0
    %6186 = vmatpush1.msra.mxu0 0.0
    %6187 = vmatprep.subr.mxu0 0.0
    %6188 = vmatpush1.msra.mxu0 0.0
    %6189 = vmatprep.subr.mxu0 0.0
    %6190 = vmatpush1.msra.mxu0 0.0
    %6191 = vmatprep.subr.mxu0 0.0
    %6192 = vmatpush1.msra.mxu0 0.0
    %6193 = vmatprep.subr.mxu0 0.0
    %6194 = vmatpush1.msra.mxu0 0.0
    %6195 = vmatprep.subr.mxu0 0.0
    %6196 = vmatpush1.msra.mxu0 0.0
    %6197 = vmatprep.subr.mxu0 0.0
    %6198 = vmatpush1.msra.mxu0 0.0
    %6199 = vmatprep.subr.mxu0 0.0
    %6200 = vmatpush1.msra.mxu0 0.0
    %6201 = vmatprep.subr.mxu0 0.0
    %6202 = vmatpush1.msra.mxu0 0.0
    %6203 = vmatprep.subr.mxu0 0.0
    %6204 = vmatpush1.msra.mxu0 0.0
    %6205 = vmatprep.subr.mxu0 0.0
    %6206 = vmatpush1.msra.mxu0 0.0
    %6207 = vmatprep.mubr.f32.mxu0 0.0
    %6208 = vmatmul.mubr.f32.gmra.mrb[0].mxu0 %v6141
    %v6209 = vpop.f32.mrb[0].mxu0
    %v6210 = vadd.f32 0.0, %v6209
    %v6211 = vpop.f32.mrb[0].mxu0
    %6212 = vdwg.mxu0
    %v6213 = vlaneseq
    %v6214 = vshrl.u32 %v6213, 7
    %v6215 = vsub.s32 0, %v6214
    %v6216 = vrot.slane %v6057, %v6215
    %v6217 = vadd.f32 %v6216, %v6210
    %v6218 = vld [vmem:[#allocation2 + $0x6c0] sm:$0xff]
    %v6220 = vsel %vm120, %v6218, 0
    %6222 = vmatprep.subr.mxu0 0.0
    %6223 = vmatpush1.msra.mxu0 %v6056
    %6224 = vmatprep.subr.mxu0 0.0
    %6225 = vmatpush1.msra.mxu0 0.0
    %6226 = vmatprep.subr.mxu0 0.0
    %6227 = vmatpush1.msra.mxu0 0.0
    %6228 = vmatprep.subr.mxu0 0.0
    %6229 = vmatpush1.msra.mxu0 0.0
    %6230 = vmatprep.subr.mxu0 0.0
    %6231 = vmatpush1.msra.mxu0 0.0
    %6232 = vmatprep.subr.mxu0 0.0
    %6233 = vmatpush1.msra.mxu0 0.0
    %6234 = vmatprep.subr.mxu0 0.0
    %6235 = vmatpush1.msra.mxu0 0.0
    %6236 = vmatprep.subr.mxu0 0.0
    %6237 = vmatpush1.msra.mxu0 0.0
    %6238 = vmatprep.subr.mxu0 0.0
    %6239 = vmatpush1.msra.mxu0 0.0
    %6240 = vmatprep.subr.mxu0 0.0
    %6241 = vmatpush1.msra.mxu0 0.0
    %6242 = vmatprep.subr.mxu0 0.0
    %6243 = vmatpush1.msra.mxu0 0.0
    %6244 = vmatprep.subr.mxu0 0.0
    %6245 = vmatpush1.msra.mxu0 0.0
    %6246 = vmatprep.subr.mxu0 0.0
    %6247 = vmatpush1.msra.mxu0 0.0
    %6248 = vmatprep.subr.mxu0 0.0
    %6249 = vmatpush1.msra.mxu0 0.0
    %6250 = vmatprep.subr.mxu0 0.0
    %6251 = vmatpush1.msra.mxu0 0.0
    %6252 = vmatprep.subr.mxu0 0.0
    %6253 = vmatpush1.msra.mxu0 0.0
    %6254 = vmatprep.subr.mxu0 0.0
    %6255 = vmatpush1.msra.mxu0 0.0
    %6256 = vmatprep.subr.mxu0 0.0
    %6257 = vmatpush1.msra.mxu0 0.0
    %6258 = vmatprep.subr.mxu0 0.0
    %6259 = vmatpush1.msra.mxu0 0.0
    %6260 = vmatprep.subr.mxu0 0.0
    %6261 = vmatpush1.msra.mxu0 0.0
    %6262 = vmatprep.subr.mxu0 0.0
    %6263 = vmatpush1.msra.mxu0 0.0
    %6264 = vmatprep.subr.mxu0 0.0
    %6265 = vmatpush1.msra.mxu0 0.0
    %6266 = vmatprep.subr.mxu0 0.0
    %6267 = vmatpush1.msra.mxu0 0.0
    %6268 = vmatprep.subr.mxu0 0.0
    %6269 = vmatpush1.msra.mxu0 0.0
    %6270 = vmatprep.subr.mxu0 0.0
    %6271 = vmatpush1.msra.mxu0 0.0
    %6272 = vmatprep.subr.mxu0 0.0
    %6273 = vmatpush1.msra.mxu0 0.0
    %6274 = vmatprep.subr.mxu0 0.0
    %6275 = vmatpush1.msra.mxu0 0.0
    %6276 = vmatprep.subr.mxu0 0.0
    %6277 = vmatpush1.msra.mxu0 0.0
    %6278 = vmatprep.subr.mxu0 0.0
    %6279 = vmatpush1.msra.mxu0 0.0
    %6280 = vmatprep.subr.mxu0 0.0
    %6281 = vmatpush1.msra.mxu0 0.0
    %6282 = vmatprep.subr.mxu0 0.0
    %6283 = vmatpush1.msra.mxu0 0.0
    %6284 = vmatprep.subr.mxu0 0.0
    %6285 = vmatpush1.msra.mxu0 0.0
    %6286 = vmatprep.mubr.f32.mxu0 0.0
    %6287 = vmatmul.mubr.f32.gmra.mrb[0].mxu0 %v6220
    %v6288 = vpop.f32.mrb[0].mxu0
    %v6289 = vadd.f32 0.0, %v6288
    %v6290 = vpop.f32.mrb[0].mxu0
    %6291 = vdwg.mxu0
    %v6292 = vld [vmem:[#allocation2 + $0x6c8] sm:$0xff]
    %v6293 = vld [vmem:[#allocation2 + $0x6d0] sm:$0xff]
    %v6294 = vld [vmem:[#allocation2 + $0x6d8] sm:$0xff]
    %v6295 = vld [vmem:[#allocation2 + $0x6e0] sm:$0xff]
    %v6296 = vld [vmem:[#allocation2 + $0x6e8] sm:$0xff]
    %v6297 = vld [vmem:[#allocation2 + $0x6f0] sm:$0xff]
    %v6298 = vld [vmem:[#allocation2 + $0x6f8] sm:$0xff]
    %v6299 = vld [vmem:[#allocation2 + $0x700] sm:$0xff]
    %v6301 = vsel %vm2247, %v6289, 0
    %6303 = vmatprep.subr.mxu0 0.0
    %6304 = vmatpush1.msra.mxu0 %v6292
    %6305 = vmatprep.subr.mxu0 0.0
    %6306 = vmatpush1.msra.mxu0 %v6293
    %6307 = vmatprep.subr.mxu0 0.0
    %6308 = vmatpush1.msra.mxu0 %v6294
    %6309 = vmatprep.subr.mxu0 0.0
    %6310 = vmatpush1.msra.mxu0 %v6295
    %6311 = vmatprep.subr.mxu0 0.0
    %6312 = vmatpush1.msra.mxu0 %v6296
    %6313 = vmatprep.subr.mxu0 0.0
    %6314 = vmatpush1.msra.mxu0 %v6297
    %6315 = vmatprep.subr.mxu0 0.0
    %6316 = vmatpush1.msra.mxu0 %v6298
    %6317 = vmatprep.subr.mxu0 0.0
    %6318 = vmatpush1.msra.mxu0 %v6299
    %6319 = vmatprep.subr.mxu0 0.0
    %6320 = vmatpush1.msra.mxu0 0.0
    %6321 = vmatprep.subr.mxu0 0.0
    %6322 = vmatpush1.msra.mxu0 0.0
    %6323 = vmatprep.subr.mxu0 0.0
    %6324 = vmatpush1.msra.mxu0 0.0
    %6325 = vmatprep.subr.mxu0 0.0
    %6326 = vmatpush1.msra.mxu0 0.0
    %6327 = vmatprep.subr.mxu0 0.0
    %6328 = vmatpush1.msra.mxu0 0.0
    %6329 = vmatprep.subr.mxu0 0.0
    %6330 = vmatpush1.msra.mxu0 0.0
    %6331 = vmatprep.subr.mxu0 0.0
    %6332 = vmatpush1.msra.mxu0 0.0
    %6333 = vmatprep.subr.mxu0 0.0
    %6334 = vmatpush1.msra.mxu0 0.0
    %6335 = vmatprep.subr.mxu0 0.0
    %6336 = vmatpush1.msra.mxu0 0.0
    %6337 = vmatprep.subr.mxu0 0.0
    %6338 = vmatpush1.msra.mxu0 0.0
    %6339 = vmatprep.subr.mxu0 0.0
    %6340 = vmatpush1.msra.mxu0 0.0
    %6341 = vmatprep.subr.mxu0 0.0
    %6342 = vmatpush1.msra.mxu0 0.0
    %6343 = vmatprep.subr.mxu0 0.0
    %6344 = vmatpush1.msra.mxu0 0.0
    %6345 = vmatprep.subr.mxu0 0.0
    %6346 = vmatpush1.msra.mxu0 0.0
    %6347 = vmatprep.subr.mxu0 0.0
    %6348 = vmatpush1.msra.mxu0 0.0
    %6349 = vmatprep.subr.mxu0 0.0
    %6350 = vmatpush1.msra.mxu0 0.0
    %6351 = vmatprep.subr.mxu0 0.0
    %6352 = vmatpush1.msra.mxu0 0.0
    %6353 = vmatprep.subr.mxu0 0.0
    %6354 = vmatpush1.msra.mxu0 0.0
    %6355 = vmatprep.subr.mxu0 0.0
    %6356 = vmatpush1.msra.mxu0 0.0
    %6357 = vmatprep.subr.mxu0 0.0
    %6358 = vmatpush1.msra.mxu0 0.0
    %6359 = vmatprep.subr.mxu0 0.0
    %6360 = vmatpush1.msra.mxu0 0.0
    %6361 = vmatprep.subr.mxu0 0.0
    %6362 = vmatpush1.msra.mxu0 0.0
    %6363 = vmatprep.subr.mxu0 0.0
    %6364 = vmatpush1.msra.mxu0 0.0
    %6365 = vmatprep.subr.mxu0 0.0
    %6366 = vmatpush1.msra.mxu0 0.0
    %6367 = vmatprep.mubr.f32.mxu0 0.0
    %6368 = vmatmul.mubr.f32.gmra.mrb[0].mxu0 %v6301
    %v6369 = vpop.f32.mrb[0].mxu0
    %v6370 = vadd.f32 0.0, %v6369
    %v6371 = vpop.f32.mrb[0].mxu0
    %6372 = vdwg.mxu0
    %v6373 = vadd.f32 %v6217, %v6370
    %v6374 = vmax.f32 %v6373, 0.0
    %v6375 = vld [vmem:[#allocation2 + $0x710] sm:$0xff]
    %v6376 = vld [vmem:[#allocation2 + $0x718] sm:$0xff]
    %v6377 = vld [vmem:[#allocation2 + $0x720] sm:$0xff]
    %v6378 = vld [vmem:[#allocation2 + $0x728] sm:$0xff]
    %v6379 = vld [vmem:[#allocation2 + $0x730] sm:$0x1]
    %v6380 = vlaneseq
    %v6381 = vshrl.u32 %v6380, 7
    %v6382 = vsub.s32 0, %v6381
    %v6383 = vrot.slane %v6379, %v6382
    %v6385 = vsel %vm202, %v6374, 0
    %6387 = vmatprep.subr.mxu0 0.0
    %6388 = vmatpush1.msra.mxu0 %v6375
    %6389 = vmatprep.subr.mxu0 0.0
    %6390 = vmatpush1.msra.mxu0 %v6376
    %6391 = vmatprep.subr.mxu0 0.0
    %6392 = vmatpush1.msra.mxu0 %v6377
    %6393 = vmatprep.subr.mxu0 0.0
    %6394 = vmatpush1.msra.mxu0 %v6378
    %6395 = vmatprep.subr.mxu0 0.0
    %6396 = vmatpush1.msra.mxu0 0.0
    %6397 = vmatprep.subr.mxu0 0.0
    %6398 = vmatpush1.msra.mxu0 0.0
    %6399 = vmatprep.subr.mxu0 0.0
    %6400 = vmatpush1.msra.mxu0 0.0
    %6401 = vmatprep.subr.mxu0 0.0
    %6402 = vmatpush1.msra.mxu0 0.0
    %6403 = vmatprep.subr.mxu0 0.0
    %6404 = vmatpush1.msra.mxu0 0.0
    %6405 = vmatprep.subr.mxu0 0.0
    %6406 = vmatpush1.msra.mxu0 0.0
    %6407 = vmatprep.subr.mxu0 0.0
    %6408 = vmatpush1.msra.mxu0 0.0
    %6409 = vmatprep.subr.mxu0 0.0
    %6410 = vmatpush1.msra.mxu0 0.0
    %6411 = vmatprep.subr.mxu0 0.0
    %6412 = vmatpush1.msra.mxu0 0.0
    %6413 = vmatprep.subr.mxu0 0.0
    %6414 = vmatpush1.msra.mxu0 0.0
    %6415 = vmatprep.subr.mxu0 0.0
    %6416 = vmatpush1.msra.mxu0 0.0
    %6417 = vmatprep.subr.mxu0 0.0
    %6418 = vmatpush1.msra.mxu0 0.0
    %6419 = vmatprep.subr.mxu0 0.0
    %6420 = vmatpush1.msra.mxu0 0.0
    %6421 = vmatprep.subr.mxu0 0.0
    %6422 = vmatpush1.msra.mxu0 0.0
    %6423 = vmatprep.subr.mxu0 0.0
    %6424 = vmatpush1.msra.mxu0 0.0
    %6425 = vmatprep.subr.mxu0 0.0
    %6426 = vmatpush1.msra.mxu0 0.0
    %6427 = vmatprep.subr.mxu0 0.0
    %6428 = vmatpush1.msra.mxu0 0.0
    %6429 = vmatprep.subr.mxu0 0.0
    %6430 = vmatpush1.msra.mxu0 0.0
    %6431 = vmatprep.subr.mxu0 0.0
    %6432 = vmatpush1.msra.mxu0 0.0
    %6433 = vmatprep.subr.mxu0 0.0
    %6434 = vmatpush1.msra.mxu0 0.0
    %6435 = vmatprep.subr.mxu0 0.0
    %6436 = vmatpush1.msra.mxu0 0.0
    %6437 = vmatprep.subr.mxu0 0.0
    %6438 = vmatpush1.msra.mxu0 0.0
    %6439 = vmatprep.subr.mxu0 0.0
    %6440 = vmatpush1.msra.mxu0 0.0
    %6441 = vmatprep.subr.mxu0 0.0
    %6442 = vmatpush1.msra.mxu0 0.0
    %6443 = vmatprep.subr.mxu0 0.0
    %6444 = vmatpush1.msra.mxu0 0.0
    %6445 = vmatprep.subr.mxu0 0.0
    %6446 = vmatpush1.msra.mxu0 0.0
    %6447 = vmatprep.subr.mxu0 0.0
    %6448 = vmatpush1.msra.mxu0 0.0
    %6449 = vmatprep.subr.mxu0 0.0
    %6450 = vmatpush1.msra.mxu0 0.0
    %6451 = vmatprep.mubr.f32.mxu0 0.0
    %6452 = vmatmul.mubr.f32.gmra.mrb[0].mxu0 %v6385
    %v6453 = vpop.f32.mrb[0].mxu0
    %v6454 = vadd.f32 %v6383, %v6453
    %v6455 = vpop.f32.mrb[0].mxu0
    %6456 = vdwg.mxu0
    %6457 = vst [vmem:[#allocation5] sm:$0xff] %v6454
    // Predicated region
    $region14: #{tpu_custom_call.1} parent=1 // pred_check
      _
    $region15: #{tpu_custom_call.1} parent=1 // pred_check_branch
      %6459 = sbr.rel (0) target = $region17
    $region16: #{tpu_custom_call.1} parent=1 // pred_region
      %s6461 = ssub.s32 128, 128
      %6462 = vsyncadd [#allocation4], %s6461
      %s6464 = sshll.u32 [#allocation5], 4
      %s6465 = int_to_ptr.vmem [resolvable:$true] %s6464
      %6467 = dma.vmem_to_hbm [thread:$0]  %s6465, 128, %s2, [#allocation4]
    $region17: #{tpu_custom_call.1} parent=1 // pred_fallthru
      _
    // Predicated region
    $region18: #{tpu_custom_call.1} parent=1 // pred_check
      _
    $region19: #{tpu_custom_call.1} parent=1 // pred_check_branch
      %6469 = sbr.rel (0) target = $region21
    $region20: #{tpu_custom_call.1} parent=1 // pred_region
      %6470 = dma.done [#allocation4], 128
    $region21: #{tpu_custom_call.1} parent=1 // pred_fallthru
      _
    %6471 = vsyncpa [#allocation3], 1
    %6472 = vsyncpa [#allocation4], 1

</llo_original>
